<compile_context>
chip_gen: v7x
topology: tpu7x:2x2x1
jax: 0.10.0
libtpu: 0.0.40
codegen_flags: <defaults>
</compile_context>

<pallas_src>
import numpy as np

import jax
import jax.numpy as jnp
from jax.experimental import pallas as pl
from jax.experimental.pallas import tpu as pltpu


# ----------------------------------------------------------------------------
# Init-time constant construction (plain numpy)
# ----------------------------------------------------------------------------
def _fold_conv(w, b, src_hw, out_hw, stride, pad, up):
    """Fold a PyTorch-layout 3x3 conv (Cout,Cin,3,3) + zero pad + stride + optional pre-conv
    2x nearest upsample into one dense matrix acting on column-batch activations.

    Activation layout: rows r = pixel*C + channel (NHWC-flattened per sample), batch in columns.
    Returns (W_full bf16 (Rout*Cout, Rin*Cin), bias f32 (Rout*Cout, 1)).
    """
    w = np.asarray(w, np.float32)
    b = np.asarray(b, np.float32)
    cout, cin, kh, kw = w.shape
    assert (kh, kw) == (3, 3)
    hs, ws = src_hw
    ho, wo = out_hw
    hi, wi = hs * up, ws * up
    W = np.zeros((ho * wo * cout, hs * ws * cin), np.float32)
    for oy in range(ho):
        for ox in range(wo):
            po = oy * wo + ox
            for ki in range(3):
                iy = oy * stride + ki - pad
                if iy < 0 or iy >= hi:
                    continue
                for kj in range(3):
                    ix = ox * stride + kj - pad
                    if ix < 0 or ix >= wi:
                        continue
                    pi = (iy // up) * ws + (ix // up)
                    # '+=' because with 2x nearest upsample several taps hit the same source pixel.
                    W[po * cout:(po + 1) * cout, pi * cin:(pi + 1) * cin] += w[:, :, ki, kj]
    bias = np.tile(b, ho * wo).reshape(ho * wo * cout, 1)
    return jnp.asarray(W, jnp.bfloat16), jnp.asarray(bias, jnp.float32)


# ----------------------------------------------------------------------------
# In-kernel building blocks (traced inside the pallas kernels)
# ----------------------------------------------------------------------------
def _dense_layer(x, w_ref, b_ref, relu):
    """One folded conv layer: bf16 (Rout,Rin) @ bf16 (Rin,B) -> f32, + bias, optional ReLU."""
    y = jnp.dot(w_ref[...], x.astype(jnp.bfloat16), preferred_element_type=jnp.float32)
    y = y + b_ref[...]
    if relu:
        y = jnp.maximum(y, 0.0)
    return y


def _nearest_code(zp, e_ref, esq_ref):
    """zp: (D, B) f32 -> (1, B) int32 index of nearest codebook row (f32 distances/argmin)."""
    cross = jnp.dot(e_ref[...], zp, preferred_element_type=jnp.float32)      # (Kpad, B)
    score = 2.0 * cross - esq_ref[...]     # argmax score == argmin ||z-e||^2 ; padded rows -> -1e30
    best = jnp.max(score, axis=0, keepdims=True)
    ks = jax.lax.broadcasted_iota(jnp.int32, score.shape, 0)
    idx = jnp.min(jnp.where(score >= best, ks, score.shape[0]), axis=0, keepdims=True)
    return idx.astype(jnp.int32)           # first (lowest-index) argmin, torch-style


def _embed_code(idx_p, et_ref):
    """idx_p: (1, B) int32 -> (D, B) f32 codebook rows via an exact bf16 one-hot matmul."""
    kpad = et_ref.shape[1]
    ks = jax.lax.broadcasted_iota(jnp.int32, (kpad, idx_p.shape[1]), 0)
    onehot = (ks == idx_p).astype(jnp.bfloat16)                              # (Kpad, B)
    return jnp.dot(et_ref[...], onehot, preferred_element_type=jnp.float32)  # (D, B)


# ----------------------------------------------------------------------------
# Fused kernels: one grid step == one tile of B_TILE samples (batch in lanes)
# ----------------------------------------------------------------------------
def _encode_kernel(x_ref, w1, b1, w2, b2, e_ref, esq_ref, idx_ref, z_ref):
    h = _dense_layer(x_ref[...], w1, b1, relu=True)          # 16x16 -> 8x8 (stride 2)
    z = _dense_layer(h, w2, b2, relu=False)                  # 8x8  -> 4x4 (stride 2): (n_lat*D, B)
    d = e_ref.shape[1]
    for p in range(z.shape[0] // d):                         # 16 latent pixels
        idx_ref[pl.ds(p, 1), :] = _nearest_code(z[p * d:(p + 1) * d, :], e_ref, esq_ref)
    z_ref[...] = z


def _decode_kernel(idx_ref, et_ref, w1, b1, w2, b2, w3, b3, pred_ref, zq_ref):
    d = et_ref.shape[0]
    for p in range(idx_ref.shape[0]):
        zq_ref[pl.ds(p * d, d), :] = _embed_code(idx_ref[pl.ds(p, 1), :], et_ref)
    h = _dense_layer(zq_ref[...], w1, b1, relu=True)         # 4x4 -> 4x4
    h = _dense_layer(h, w2, b2, relu=True)                   # (2x up) -> 8x8
    pred_ref[...] = _dense_layer(h, w3, b3, relu=False)      # (2x up) -> 16x16


def _recon_kernel(x_ref, we1, be1, we2, be2, e_ref, esq_ref, et_ref,
                  wd1, bd1, wd2, bd2, wd3, bd3, stats_ref, zq_ref):
    x = x_ref[...]
    h = _dense_layer(x, we1, be1, relu=True)
    z = _dense_layer(h, we2, be2, relu=False)
    d = e_ref.shape[1]
    for p in range(z.shape[0] // d):
        zp = z[p * d:(p + 1) * d, :]
        zq_ref[pl.ds(p * d, d), :] = _embed_code(_nearest_code(zp, e_ref, esq_ref), et_ref)
    zq = zq_ref[...]
    h = _dense_layer(zq, wd1, bd1, relu=True)
    h = _dense_layer(h, wd2, bd2, relu=True)
    pred = _dense_layer(h, wd3, bd3, relu=False)
    qcol = jnp.sum((z - zq) ** 2, axis=0, keepdims=True)     # (1, B) per-sample quant SSE
    rcol = jnp.sum((x - pred) ** 2, axis=0, keepdims=True)   # (1, B) per-sample recon SSE
    rows = jax.lax.broadcasted_iota(jnp.int32, stats_ref.shape, 0)
    stats_ref[...] = jnp.where(rows == 0, qcol, 0.0) + jnp.where(rows == 1, rcol, 0.0)


# ----------------------------------------------------------------------------
# BlockSpec helpers
# ----------------------------------------------------------------------------
def _const_spec(shape):
    nd = len(shape)
    return pl.BlockSpec(shape, lambda i, _nd=nd: (0,) * _nd)


def _tile_spec(rows, cols):
    # batch tiles move along the lane (column) axis
    return pl.BlockSpec((rows, cols), lambda i: (0, i))


# ----------------------------------------------------------------------------
# StftModel in JAX/Pallas
# ----------------------------------------------------------------------------
class StftPallasModel:
    """Synthetic StftEncoder/StftDecoder/VectorQuantizer with deterministic init.

    opt: stft_num = 64 (codebook size), stft_size = 32 (code dim),
         stft_shape = [4, 4] (latent grid) for 16x16 single-channel stft input.
    """

    KPAD = 128  # codebook padded to a full lane width

    def __init__(self, key, stft_channels=1, hidden=16, stft_size=32,
                 stft_num=64, stft_shape=(4, 4), beta=0.25, b_tile=128):
        assert stft_num <= self.KPAD
        self.stft_size = stft_size
        self.stft_num = stft_num
        self.stft_shape = tuple(stft_shape)
        self.stft_channels = stft_channels
        self.beta = beta
        self.b_tile = b_tile                                   # 128 lanes; use 256 on v6e/v7x
        self.in_hw = (4 * stft_shape[0], 4 * stft_shape[1])    # 16 x 16
        self.n_lat = stft_shape[0] * stft_shape[1]             # 16 latent pixels
        self.n_pix = self.in_hw[0] * self.in_hw[1]             # 256 stft pixels

        def conv_init(k, cout, cin):
            kw_, kb_ = jax.random.split(k)
            fan_in = cin * 9
            w = jax.random.normal(kw_, (cout, cin, 3, 3), jnp.float32) * (2.0 / fan_in) ** 0.5
            b = jax.random.normal(kb_, (cout,), jnp.float32) * 0.01
            return w, b

        keys = jax.random.split(key, 6)
        # Encoder: 16x16 -> 8x8 -> 4x4 ; channels stft_channels -> hidden -> stft_size
        self.e1_w, self.e1_b = conv_init(keys[0], hidden, stft_channels)
        self.e2_w, self.e2_b = conv_init(keys[1], stft_size, hidden)
        # Decoder: 4x4 -> 4x4 -> (2x) 8x8 -> (2x) 16x16 ; stft_size -> hidden -> hidden -> C
        self.d1_w, self.d1_b = conv_init(keys[2], hidden, stft_size)
        self.d2_w, self.d2_b = conv_init(keys[3], hidden, hidden)
        self.d3_w, self.d3_b = conv_init(keys[4], stft_channels, hidden)
        # VectorQuantizer codebook, uniform(-1/K, 1/K) (nn.Embedding VQ-VAE init).
        self.codebook = jax.random.uniform(
            keys[5], (stft_num, stft_size), jnp.float32,
            minval=-1.0 / stft_num, maxval=1.0 / stft_num)

        h0, w0 = self.in_hw
        h1, w1 = h0 // 2, w0 // 2
        h2, w2 = self.stft_shape
        # Each layer folded to one (W_full bf16, bias f32) pair; 2x upsample folded into d2/d3.
        self.e1 = _fold_conv(self.e1_w, self.e1_b, (h0, w0), (h1, w1), 2, 1, 1)   # (1024, 256)
        self.e2 = _fold_conv(self.e2_w, self.e2_b, (h1, w1), (h2, w2), 2, 1, 1)   # (512, 1024)
        self.d1 = _fold_conv(self.d1_w, self.d1_b, (h2, w2), (h2, w2), 1, 1, 1)   # (256, 512)
        self.d2 = _fold_conv(self.d2_w, self.d2_b, (h2, w2), (h1, w1), 1, 1, 2)   # (1024, 256)
        self.d3 = _fold_conv(self.d3_w, self.d3_b, (h1, w1), (h0, w0), 1, 1, 2)   # (256, 1024)

        # Codebook padded to 128 rows; padded entries carry a huge squared norm.
        self.e_pad = jnp.zeros((self.KPAD, stft_size), jnp.float32).at[:stft_num].set(self.codebook)
        self.e_sq = jnp.full((self.KPAD, 1), 1e30, jnp.float32).at[:stft_num, 0].set(
            jnp.sum(self.codebook ** 2, axis=1))
        self.e_t = self.e_pad.T.astype(jnp.bfloat16)          # (D, KPAD) for one-hot embeds

    # --- small helpers --------------------------------------------------------
    @staticmethod
    def _nbytes(arrs):
        return int(sum(int(a.size) * a.dtype.itemsize for a in arrs))

    def _params(self):
        return pltpu.CompilerParams(dimension_semantics=("parallel",))

    def _pad_cols(self, cols):
        """Pad the batch (column) axis up to a multiple of b_tile."""
        b = cols.shape[1]
        b_pad = ((b + self.b_tile - 1) // self.b_tile) * self.b_tile
        if b_pad != b:
            cols = jnp.pad(cols, ((0, 0), (0, b_pad - b)))
        return cols, b_pad

    # --- net_e + net_q (indices) ---------------------------------------------
    def _encode_cols(self, x_cols):
        """x_cols: (n_pix*C, B) f32 -> (idx (n_lat, B_pad) i32, z (n_lat*D, B_pad) f32)."""
        x_cols, b_pad = self._pad_cols(x_cols)
        bt = self.b_tile
        w1, bias1 = self.e1
        w2, bias2 = self.e2
        arrs = [x_cols, w1, bias1, w2, bias2, self.e_pad, self.e_sq]
        in_specs = [_tile_spec(x_cols.shape[0], bt)] + [_const_spec(a.shape) for a in arrs[1:]]
        flops = b_pad * 2 * (w1.shape[0] * w1.shape[1] + w2.shape[0] * w2.shape[1]
                             + 2 * self.n_lat * self.KPAD * self.stft_size)
        out_bytes = b_pad * self.n_lat * (4 + 4 * self.stft_size)
        return pl.pallas_call(
            _encode_kernel,
            out_shape=(jax.ShapeDtypeStruct((self.n_lat, b_pad), jnp.int32),
                       jax.ShapeDtypeStruct((self.n_lat * self.stft_size, b_pad), jnp.float32)),
            grid=(b_pad // bt,),
            in_specs=in_specs,
            out_specs=(_tile_spec(self.n_lat, bt),
                       _tile_spec(self.n_lat * self.stft_size, bt)),
            compiler_params=self._params(),
            cost_estimate=pl.CostEstimate(flops=int(flops), transcendentals=0,
                                          bytes_accessed=self._nbytes(arrs) + out_bytes),
        )(*arrs)

    # --- embed_code + net_d ---------------------------------------------------
    def _decode_cols(self, idx_cols):
        """idx_cols: (n_lat, B) int32 -> decoded stft columns (n_pix*C, B_pad) f32."""
        idx_cols, b_pad = self._pad_cols(idx_cols)
        bt = self.b_tile
        w1, bias1 = self.d1
        w2, bias2 = self.d2
        w3, bias3 = self.d3
        arrs = [idx_cols, self.e_t, w1, bias1, w2, bias2, w3, bias3]
        in_specs = [_tile_spec(self.n_lat, bt)] + [_const_spec(a.shape) for a in arrs[1:]]
        flops = b_pad * 2 * (self.n_lat * self.KPAD * self.stft_size
                             + w1.shape[0] * w1.shape[1] + w2.shape[0] * w2.shape[1]
                             + w3.shape[0] * w3.shape[1])
        out_bytes = b_pad * self.n_pix * self.stft_channels * 4
        return pl.pallas_call(
            _decode_kernel,
            out_shape=jax.ShapeDtypeStruct((self.n_pix * self.stft_channels, b_pad), jnp.float32),
            grid=(b_pad // bt,),
            in_specs=in_specs,
            out_specs=_tile_spec(self.n_pix * self.stft_channels, bt),
            scratch_shapes=[pltpu.VMEM((self.n_lat * self.stft_size, bt), jnp.float32)],
            compiler_params=self._params(),
            cost_estimate=pl.CostEstimate(flops=int(flops), transcendentals=0,
                                          bytes_accessed=self._nbytes(arrs) + out_bytes),
        )(*arrs)

    # --- full encoder + VQ + decoder + per-sample loss sums --------------------
    def _recon_cols(self, x_cols):
        """x_cols: (n_pix*C, B) f32 -> stats (8, B_pad): row0 quant SSE, row1 recon SSE."""
        x_cols, b_pad = self._pad_cols(x_cols)
        bt = self.b_tile
        we1, be1 = self.e1
        we2, be2 = self.e2
        wd1, bd1 = self.d1
        wd2, bd2 = self.d2
        wd3, bd3 = self.d3
        arrs = [x_cols, we1, be1, we2, be2, self.e_pad, self.e_sq, self.e_t,
                wd1, bd1, wd2, bd2, wd3, bd3]
        in_specs = [_tile_spec(x_cols.shape[0], bt)] + [_const_spec(a.shape) for a in arrs[1:]]
        mm = sum(w.shape[0] * w.shape[1] for w in (we1, we2, wd1, wd2, wd3))
        flops = b_pad * 2 * (mm + 2 * self.n_lat * self.KPAD * self.stft_size)
        out_bytes = b_pad * 8 * 4
        return pl.pallas_call(
            _recon_kernel,
            out_shape=jax.ShapeDtypeStruct((8, b_pad), jnp.float32),
            grid=(b_pad // bt,),
            in_specs=in_specs,
            out_specs=_tile_spec(8, bt),
            scratch_shapes=[pltpu.VMEM((self.n_lat * self.stft_size, bt), jnp.float32)],
            compiler_params=self._params(),
            cost_estimate=pl.CostEstimate(flops=int(flops), transcendentals=0,
                                          bytes_accessed=self._nbytes(arrs) + out_bytes),
        )(*arrs)

    # --- boundary glue (one layout conversion per call, plain XLA) -------------
    def _stft_to_cols(self, stft):
        b, c, h, w = stft.shape
        return stft.astype(jnp.float32).transpose(0, 2, 3, 1).reshape(b, h * w * c).T

    def encode(self, stft):
        b = stft.shape[0]
        idx, _ = self._encode_cols(self._stft_to_cols(stft))
        return {'state_code': idx[:, :b].T}                       # (b, n_lat) int32

    def decode(self, state_code):
        code = state_code.reshape(-1, self.n_lat).astype(jnp.int32)  # vid mode folds time into batch
        # PyTorch F.embedding would raise on out-of-range codes; clamp for determinism instead.
        code = jnp.clip(code, 0, self.stft_num - 1)
        b = code.shape[0]
        pred = self._decode_cols(code.T)
        h0, w0 = self.in_hw
        stft = pred[:, :b].T.reshape(b, h0, w0, self.stft_channels).transpose(0, 3, 1, 2)
        return {'stft': stft}

    def reconstruction_losses(self, stft):
        b = stft.shape[0]
        stats = self._recon_cols(self._stft_to_cols(stft))
        qsum = jnp.sum(stats[0, :b])                              # padded columns excluded
        rsum = jnp.sum(stats[1, :b])
        # forward value of  mse(sg(z), z_q) + beta * mse(z, sg(z_q))
        quant_loss = (1.0 + self.beta) * qsum / jnp.float32(b * self.n_lat * self.stft_size)
        rec_loss = rsum / jnp.float32(stft.size)
        return quant_loss, rec_loss

    # --- StftModel.forward -----------------------------------------------------
    def forward(self, data, mode=''):
        stft = data.get('stft')
        stft_code = data.get('state_code')

        if mode == 'stft_reconstruction':
            quant_loss, rec_loss = self.reconstruction_losses(stft)
            # TODO(synk): VGGLoss uses a pretrained VGG19 feature extractor; no Pallas equivalent here.
            return quant_loss + rec_loss
        if mode == 'eval_stft_reconstruction':
            _, rec_loss = self.reconstruction_losses(stft)
            return rec_loss
        if mode in ('img_encoder', 'vid_encoder'):
            return self.encode(stft)
        if mode in ('img_decoder', 'vid_decoder'):
            return self.decode(stft_code)
        raise ValueError(f"mode '{mode}' is invalid")

    # --- pure-JAX f32 references (correctness checks only) ---------------------
    def _ref_conv(self, x, w, b, stride):
        y = jax.lax.conv_general_dilated(x, w, (stride, stride), [(1, 1), (1, 1)],
                                         dimension_numbers=('NCHW', 'OIHW', 'NCHW'))
        return y + b.reshape(1, -1, 1, 1)

    def _ref_encode_z(self, stft):
        h = jax.nn.relu(self._ref_conv(stft, self.e1_w, self.e1_b, 2))
        z = self._ref_conv(h, self.e2_w, self.e2_b, 2)
        return z.transpose(0, 2, 3, 1).reshape(stft.shape[0], self.n_lat, self.stft_size)

    def _ref_decode(self, state_code):
        b = state_code.shape[0]
        hh, ww = self.stft_shape
        z = self.codebook[state_code.reshape(-1)]
        z = z.reshape(b, hh, ww, self.stft_size).transpose(0, 3, 1, 2)
        h = jax.nn.relu(self._ref_conv(z, self.d1_w, self.d1_b, 1))
        h = jnp.repeat(jnp.repeat(h, 2, axis=2), 2, axis=3)
        h = jax.nn.relu(self._ref_conv(h, self.d2_w, self.d2_b, 1))
        h = jnp.repeat(jnp.repeat(h, 2, axis=2), 2, axis=3)
        return self._ref_conv(h, self.d3_w, self.d3_b, 1)


# ----------------------------------------------------------------------------
# Demo
# ----------------------------------------------------------------------------
if __name__ == "__main__":
    key = jax.random.PRNGKey(0)
    k_model, k_stft, k_code = jax.random.split(key, 3)

    model = StftPallasModel(k_model)

    batch = 2
    stft = jax.random.normal(k_stft, (batch, 1, 16, 16), jnp.float32)              # NCHW
    state_code = jax.random.randint(k_code, (batch, 16), 0, model.stft_num, dtype=jnp.int32)
    data = {'stft': stft, 'state_code': state_code}

    enc = model.forward(data, mode='img_encoder')
    dec = model.forward(data, mode='img_decoder')
    eval_loss = model.forward(data, mode='eval_stft_reconstruction')
    train_loss = model.forward(data, mode='stft_reconstruction')
    jax.block_until_ready((enc['state_code'], dec['stft'], eval_loss, train_loss))

    assert enc['state_code'].shape == (batch, 16)
    assert dec['stft'].shape == (batch, 1, 16, 16)
    assert eval_loss.shape == () and train_loss.shape == ()
    assert bool(jnp.isfinite(eval_loss)) and bool(jnp.isfinite(train_loss))
    assert int(enc['state_code'].min()) >= 0 and int(enc['state_code'].max()) < model.stft_num

    # Correctness vs. pure-JAX f32 references (loose tolerance: bf16 MXU operands).
    _, z_cols = model._encode_cols(model._stft_to_cols(stft))
    z_pallas = z_cols[:, :batch].T.reshape(batch, model.n_lat, model.stft_size)
    z_ref = model._ref_encode_z(stft)
    tol_z = 5e-2 * float(jnp.max(jnp.abs(z_ref))) + 1e-3
    assert float(jnp.max(jnp.abs(z_pallas - z_ref))) < tol_z, "encoder mismatch vs reference"

    dec_ref = model._ref_decode(state_code)
    tol_d = 5e-2 * float(jnp.max(jnp.abs(dec_ref))) + 1e-3
    assert float(jnp.max(jnp.abs(dec['stft'] - dec_ref))) < tol_d, "decoder mismatch vs reference"

    print("KERNEL_OK")
</pallas_src>

<mosaic_0001>
module attributes {stable_mosaic.version = 11 : i64} {
  func.func @_encode_kernel(%arg0: i32, %arg1: memref<256x128xf32, #tpu.memory_space<vmem>>, %arg2: memref<1024x256xbf16, #tpu.memory_space<vmem>>, %arg3: memref<1024x1xf32, #tpu.memory_space<vmem>>, %arg4: memref<512x1024xbf16, #tpu.memory_space<vmem>>, %arg5: memref<512x1xf32, #tpu.memory_space<vmem>>, %arg6: memref<128x32xf32, #tpu.memory_space<vmem>>, %arg7: memref<128x1xf32, #tpu.memory_space<vmem>>, %arg8: memref<16x128xi32, #tpu.memory_space<vmem>>, %arg9: memref<512x128xf32, #tpu.memory_space<vmem>>) attributes {dimension_semantics = [#tpu.dimension_semantics<parallel>], iteration_bounds = array<i64: 1>, scalar_prefetch = 0 : i64, scratch_operands = 0 : i64, tpu.core_type = #tpu.core_type<tc>, window_params = [{transform_indices = @transform_0, window_bounds = array<i64: 256, 128>}, {pipeline_mode = #tpu.pipeline_mode<synchronous>, transform_indices = @transform_1, window_bounds = array<i64: 1024, 256>}, {pipeline_mode = #tpu.pipeline_mode<synchronous>, transform_indices = @transform_2, window_bounds = array<i64: 1024, 1>}, {pipeline_mode = #tpu.pipeline_mode<synchronous>, transform_indices = @transform_3, window_bounds = array<i64: 512, 1024>}, {pipeline_mode = #tpu.pipeline_mode<synchronous>, transform_indices = @transform_4, window_bounds = array<i64: 512, 1>}, {pipeline_mode = #tpu.pipeline_mode<synchronous>, transform_indices = @transform_5, window_bounds = array<i64: 128, 32>}, {pipeline_mode = #tpu.pipeline_mode<synchronous>, transform_indices = @transform_6, window_bounds = array<i64: 128, 1>}, {transform_indices = @transform_7, window_bounds = array<i64: 16, 128>}, {transform_indices = @transform_8, window_bounds = array<i64: 512, 128>}]} {
    %c0 = arith.constant 0 : index
    %c0_0 = arith.constant 0 : index
    %0 = vector.load %arg1[%c0, %c0_0] : memref<256x128xf32, #tpu.memory_space<vmem>>, vector<256x128xf32>
    %c0_1 = arith.constant 0 : index
    %c0_2 = arith.constant 0 : index
    %1 = vector.load %arg2[%c0_1, %c0_2] : memref<1024x256xbf16, #tpu.memory_space<vmem>>, vector<1024x256xbf16>
    %2 = arith.truncf %0 : vector<256x128xf32> to vector<256x128xbf16>
    %cst = arith.constant dense<0.000000e+00> : vector<1024x128xf32>
    %3 = tpu.matmul %1, %2, %cst {dimension_numbers = #tpu.dot_dimension_numbers<[1], [0], [0], [1], [0, 0, 1, 1], [], []>} : vector<1024x256xbf16>, vector<256x128xbf16>, vector<1024x128xf32> -> vector<1024x128xf32>
    %c0_3 = arith.constant 0 : index
    %c0_4 = arith.constant 0 : index
    %4 = vector.load %arg3[%c0_3, %c0_4] : memref<1024x1xf32, #tpu.memory_space<vmem>>, vector<1024x1xf32>
    %5 = vector.broadcast %4 : vector<1024x1xf32> to vector<1024x128xf32>
    %6 = arith.addf %3, %5 : vector<1024x128xf32>
    %cst_5 = arith.constant 0.000000e+00 : f32
    %7 = vector.broadcast %cst_5 : f32 to vector<1024x128xf32>
    %8 = arith.maximumf %6, %7 : vector<1024x128xf32>
    %c0_6 = arith.constant 0 : index
    %c0_7 = arith.constant 0 : index
    %9 = vector.load %arg4[%c0_6, %c0_7] : memref<512x1024xbf16, #tpu.memory_space<vmem>>, vector<512x1024xbf16>
    %10 = arith.truncf %8 : vector<1024x128xf32> to vector<1024x128xbf16>
    %cst_8 = arith.constant dense<0.000000e+00> : vector<512x128xf32>
    %11 = tpu.matmul %9, %10, %cst_8 {dimension_numbers = #tpu.dot_dimension_numbers<[1], [0], [0], [1], [0, 0, 1, 1], [], []>} : vector<512x1024xbf16>, vector<1024x128xbf16>, vector<512x128xf32> -> vector<512x128xf32>
    %c0_9 = arith.constant 0 : index
    %c0_10 = arith.constant 0 : index
    %12 = vector.load %arg5[%c0_9, %c0_10] : memref<512x1xf32, #tpu.memory_space<vmem>>, vector<512x1xf32>
    %13 = vector.broadcast %12 : vector<512x1xf32> to vector<512x128xf32>
    %14 = arith.addf %11, %13 : vector<512x128xf32>
    %15 = vector.extract_strided_slice %14 {offsets = [0, 0], sizes = [32, 128], strides = [1, 1]} : vector<512x128xf32> to vector<32x128xf32>
    %c0_11 = arith.constant 0 : index
    %c0_12 = arith.constant 0 : index
    %16 = vector.load %arg6[%c0_11, %c0_12] : memref<128x32xf32, #tpu.memory_space<vmem>>, vector<128x32xf32>
    %cst_13 = arith.constant dense<0.000000e+00> : vector<128x128xf32>
    %17 = tpu.matmul %16, %15, %cst_13 {dimension_numbers = #tpu.dot_dimension_numbers<[1], [0], [0], [1], [0, 0, 1, 1], [], []>} : vector<128x32xf32>, vector<32x128xf32>, vector<128x128xf32> -> vector<128x128xf32>
    %cst_14 = arith.constant 2.000000e+00 : f32
    %18 = vector.broadcast %cst_14 : f32 to vector<128x128xf32>
    %19 = arith.mulf %18, %17 : vector<128x128xf32>
    %c0_15 = arith.constant 0 : index
    %c0_16 = arith.constant 0 : index
    %20 = vector.load %arg7[%c0_15, %c0_16] : memref<128x1xf32, #tpu.memory_space<vmem>>, vector<128x1xf32>
    %21 = vector.broadcast %20 : vector<128x1xf32> to vector<128x128xf32>
    %22 = arith.subf %19, %21 : vector<128x128xf32>
    %cst_17 = arith.constant dense<0xFF800000> : vector<128xf32>
    %23 = vector.multi_reduction <maximumf>, %22, %cst_17 [0] : vector<128x128xf32> to vector<128xf32>
    %24 = vector.shape_cast %23 : vector<128xf32> to vector<1x128xf32>
    %25 = tpu.iota {dimensions = array<i32: 0>} : vector<128x128xi32>
    %26 = vector.broadcast %24 : vector<1x128xf32> to vector<128x128xf32>
    %27 = arith.cmpf oge, %22, %26 : vector<128x128xf32>
    %c128_i32 = arith.constant 128 : i32
    %28 = vector.broadcast %c128_i32 : i32 to vector<128x128xi32>
    %29 = arith.select %27, %25, %28 : vector<128x128xi1>, vector<128x128xi32>
    %cst_18 = arith.constant dense<2147483647> : vector<128xi32>
    %30 = vector.multi_reduction <minsi>, %29, %cst_18 [0] : vector<128x128xi32> to vector<128xi32>
    %31 = vector.shape_cast %30 : vector<128xi32> to vector<1x128xi32>
    %c0_19 = arith.constant 0 : index
    %c0_20 = arith.constant 0 : index
    %32 = vector.load %arg8[%c0_19, %c0_20] : memref<16x128xi32, #tpu.memory_space<vmem>>, vector<1x128xi32>
    tpu.vector_store %arg8[%c0_19, %c0_20], %31 {strides = array<i32>} : memref<16x128xi32, #tpu.memory_space<vmem>>, vector<1x128xi32>,
    %33 = vector.extract_strided_slice %14 {offsets = [32, 0], sizes = [32, 128], strides = [1, 1]} : vector<512x128xf32> to vector<32x128xf32>
    %c0_21 = arith.constant 0 : index
    %c0_22 = arith.constant 0 : index
    %34 = vector.load %arg6[%c0_21, %c0_22] : memref<128x32xf32, #tpu.memory_space<vmem>>, vector<128x32xf32>
    %cst_23 = arith.constant dense<0.000000e+00> : vector<128x128xf32>
    %35 = tpu.matmul %34, %33, %cst_23 {dimension_numbers = #tpu.dot_dimension_numbers<[1], [0], [0], [1], [0, 0, 1, 1], [], []>} : vector<128x32xf32>, vector<32x128xf32>, vector<128x128xf32> -> vector<128x128xf32>
    %cst_24 = arith.constant 2.000000e+00 : f32
    %36 = vector.broadcast %cst_24 : f32 to vector<128x128xf32>
    %37 = arith.mulf %36, %35 : vector<128x128xf32>
    %c0_25 = arith.constant 0 : index
    %c0_26 = arith.constant 0 : index
    %38 = vector.load %arg7[%c0_25, %c0_26] : memref<128x1xf32, #tpu.memory_space<vmem>>, vector<128x1xf32>
    %39 = vector.broadcast %38 : vector<128x1xf32> to vector<128x128xf32>
    %40 = arith.subf %37, %39 : vector<128x128xf32>
    %cst_27 = arith.constant dense<0xFF800000> : vector<128xf32>
    %41 = vector.multi_reduction <maximumf>, %40, %cst_27 [0] : vector<128x128xf32> to vector<128xf32>
    %42 = vector.shape_cast %41 : vector<128xf32> to vector<1x128xf32>
    %43 = tpu.iota {dimensions = array<i32: 0>} : vector<128x128xi32>
    %44 = vector.broadcast %42 : vector<1x128xf32> to vector<128x128xf32>
    %45 = arith.cmpf oge, %40, %44 : vector<128x128xf32>
    %c128_i32_28 = arith.constant 128 : i32
    %46 = vector.broadcast %c128_i32_28 : i32 to vector<128x128xi32>
    %47 = arith.select %45, %43, %46 : vector<128x128xi1>, vector<128x128xi32>
    %cst_29 = arith.constant dense<2147483647> : vector<128xi32>
    %48 = vector.multi_reduction <minsi>, %47, %cst_29 [0] : vector<128x128xi32> to vector<128xi32>
    %49 = vector.shape_cast %48 : vector<128xi32> to vector<1x128xi32>
    %c1 = arith.constant 1 : index
    %c0_30 = arith.constant 0 : index
    %50 = vector.load %arg8[%c1, %c0_30] : memref<16x128xi32, #tpu.memory_space<vmem>>, vector<1x128xi32>
    tpu.vector_store %arg8[%c1, %c0_30], %49 {strides = array<i32>} : memref<16x128xi32, #tpu.memory_space<vmem>>, vector<1x128xi32>,
    %51 = vector.extract_strided_slice %14 {offsets = [64, 0], sizes = [32, 128], strides = [1, 1]} : vector<512x128xf32> to vector<32x128xf32>
    %c0_31 = arith.constant 0 : index
    %c0_32 = arith.constant 0 : index
    %52 = vector.load %arg6[%c0_31, %c0_32] : memref<128x32xf32, #tpu.memory_space<vmem>>, vector<128x32xf32>
    %cst_33 = arith.constant dense<0.000000e+00> : vector<128x128xf32>
    %53 = tpu.matmul %52, %51, %cst_33 {dimension_numbers = #tpu.dot_dimension_numbers<[1], [0], [0], [1], [0, 0, 1, 1], [], []>} : vector<128x32xf32>, vector<32x128xf32>, vector<128x128xf32> -> vector<128x128xf32>
    %cst_34 = arith.constant 2.000000e+00 : f32
    %54 = vector.broadcast %cst_34 : f32 to vector<128x128xf32>
    %55 = arith.mulf %54, %53 : vector<128x128xf32>
    %c0_35 = arith.constant 0 : index
    %c0_36 = arith.constant 0 : index
    %56 = vector.load %arg7[%c0_35, %c0_36] : memref<128x1xf32, #tpu.memory_space<vmem>>, vector<128x1xf32>
    %57 = vector.broadcast %56 : vector<128x1xf32> to vector<128x128xf32>
    %58 = arith.subf %55, %57 : vector<128x128xf32>
    %cst_37 = arith.constant dense<0xFF800000> : vector<128xf32>
    %59 = vector.multi_reduction <maximumf>, %58, %cst_37 [0] : vector<128x128xf32> to vector<128xf32>
    %60 = vector.shape_cast %59 : vector<128xf32> to vector<1x128xf32>
    %61 = tpu.iota {dimensions = array<i32: 0>} : vector<128x128xi32>
    %62 = vector.broadcast %60 : vector<1x128xf32> to vector<128x128xf32>
    %63 = arith.cmpf oge, %58, %62 : vector<128x128xf32>
    %c128_i32_38 = arith.constant 128 : i32
    %64 = vector.broadcast %c128_i32_38 : i32 to vector<128x128xi32>
    %65 = arith.select %63, %61, %64 : vector<128x128xi1>, vector<128x128xi32>
    %cst_39 = arith.constant dense<2147483647> : vector<128xi32>
    %66 = vector.multi_reduction <minsi>, %65, %cst_39 [0] : vector<128x128xi32> to vector<128xi32>
    %67 = vector.shape_cast %66 : vector<128xi32> to vector<1x128xi32>
    %c2 = arith.constant 2 : index
    %c0_40 = arith.constant 0 : index
    %68 = vector.load %arg8[%c2, %c0_40] : memref<16x128xi32, #tpu.memory_space<vmem>>, vector<1x128xi32>
    tpu.vector_store %arg8[%c2, %c0_40], %67 {strides = array<i32>} : memref<16x128xi32, #tpu.memory_space<vmem>>, vector<1x128xi32>,
    %69 = vector.extract_strided_slice %14 {offsets = [96, 0], sizes = [32, 128], strides = [1, 1]} : vector<512x128xf32> to vector<32x128xf32>
    %c0_41 = arith.constant 0 : index
    %c0_42 = arith.constant 0 : index
    %70 = vector.load %arg6[%c0_41, %c0_42] : memref<128x32xf32, #tpu.memory_space<vmem>>, vector<128x32xf32>
    %cst_43 = arith.constant dense<0.000000e+00> : vector<128x128xf32>
    %71 = tpu.matmul %70, %69, %cst_43 {dimension_numbers = #tpu.dot_dimension_numbers<[1], [0], [0], [1], [0, 0, 1, 1], [], []>} : vector<128x32xf32>, vector<32x128xf32>, vector<128x128xf32> -> vector<128x128xf32>
    %cst_44 = arith.constant 2.000000e+00 : f32
    %72 = vector.broadcast %cst_44 : f32 to vector<128x128xf32>
    %73 = arith.mulf %72, %71 : vector<128x128xf32>
    %c0_45 = arith.constant 0 : index
    %c0_46 = arith.constant 0 : index
    %74 = vector.load %arg7[%c0_45, %c0_46] : memref<128x1xf32, #tpu.memory_space<vmem>>, vector<128x1xf32>
    %75 = vector.broadcast %74 : vector<128x1xf32> to vector<128x128xf32>
    %76 = arith.subf %73, %75 : vector<128x128xf32>
    %cst_47 = arith.constant dense<0xFF800000> : vector<128xf32>
    %77 = vector.multi_reduction <maximumf>, %76, %cst_47 [0] : vector<128x128xf32> to vector<128xf32>
    %78 = vector.shape_cast %77 : vector<128xf32> to vector<1x128xf32>
    %79 = tpu.iota {dimensions = array<i32: 0>} : vector<128x128xi32>
    %80 = vector.broadcast %78 : vector<1x128xf32> to vector<128x128xf32>
    %81 = arith.cmpf oge, %76, %80 : vector<128x128xf32>
    %c128_i32_48 = arith.constant 128 : i32
    %82 = vector.broadcast %c128_i32_48 : i32 to vector<128x128xi32>
    %83 = arith.select %81, %79, %82 : vector<128x128xi1>, vector<128x128xi32>
    %cst_49 = arith.constant dense<2147483647> : vector<128xi32>
    %84 = vector.multi_reduction <minsi>, %83, %cst_49 [0] : vector<128x128xi32> to vector<128xi32>
    %85 = vector.shape_cast %84 : vector<128xi32> to vector<1x128xi32>
    %c3 = arith.constant 3 : index
    %c0_50 = arith.constant 0 : index
    %86 = vector.load %arg8[%c3, %c0_50] : memref<16x128xi32, #tpu.memory_space<vmem>>, vector<1x128xi32>
    tpu.vector_store %arg8[%c3, %c0_50], %85 {strides = array<i32>} : memref<16x128xi32, #tpu.memory_space<vmem>>, vector<1x128xi32>,
    %87 = vector.extract_strided_slice %14 {offsets = [128, 0], sizes = [32, 128], strides = [1, 1]} : vector<512x128xf32> to vector<32x128xf32>
    %c0_51 = arith.constant 0 : index
    %c0_52 = arith.constant 0 : index
    %88 = vector.load %arg6[%c0_51, %c0_52] : memref<128x32xf32, #tpu.memory_space<vmem>>, vector<128x32xf32>
    %cst_53 = arith.constant dense<0.000000e+00> : vector<128x128xf32>
    %89 = tpu.matmul %88, %87, %cst_53 {dimension_numbers = #tpu.dot_dimension_numbers<[1], [0], [0], [1], [0, 0, 1, 1], [], []>} : vector<128x32xf32>, vector<32x128xf32>, vector<128x128xf32> -> vector<128x128xf32>
    %cst_54 = arith.constant 2.000000e+00 : f32
    %90 = vector.broadcast %cst_54 : f32 to vector<128x128xf32>
    %91 = arith.mulf %90, %89 : vector<128x128xf32>
    %c0_55 = arith.constant 0 : index
    %c0_56 = arith.constant 0 : index
    %92 = vector.load %arg7[%c0_55, %c0_56] : memref<128x1xf32, #tpu.memory_space<vmem>>, vector<128x1xf32>
    %93 = vector.broadcast %92 : vector<128x1xf32> to vector<128x128xf32>
    %94 = arith.subf %91, %93 : vector<128x128xf32>
    %cst_57 = arith.constant dense<0xFF800000> : vector<128xf32>
    %95 = vector.multi_reduction <maximumf>, %94, %cst_57 [0] : vector<128x128xf32> to vector<128xf32>
    %96 = vector.shape_cast %95 : vector<128xf32> to vector<1x128xf32>
    %97 = tpu.iota {dimensions = array<i32: 0>} : vector<128x128xi32>
    %98 = vector.broadcast %96 : vector<1x128xf32> to vector<128x128xf32>
    %99 = arith.cmpf oge, %94, %98 : vector<128x128xf32>
    %c128_i32_58 = arith.constant 128 : i32
    %100 = vector.broadcast %c128_i32_58 : i32 to vector<128x128xi32>
    %101 = arith.select %99, %97, %100 : vector<128x128xi1>, vector<128x128xi32>
    %cst_59 = arith.constant dense<2147483647> : vector<128xi32>
    %102 = vector.multi_reduction <minsi>, %101, %cst_59 [0] : vector<128x128xi32> to vector<128xi32>
    %103 = vector.shape_cast %102 : vector<128xi32> to vector<1x128xi32>
    %c4 = arith.constant 4 : index
    %c0_60 = arith.constant 0 : index
    %104 = vector.load %arg8[%c4, %c0_60] : memref<16x128xi32, #tpu.memory_space<vmem>>, vector<1x128xi32>
    tpu.vector_store %arg8[%c4, %c0_60], %103 {strides = array<i32>} : memref<16x128xi32, #tpu.memory_space<vmem>>, vector<1x128xi32>,
    %105 = vector.extract_strided_slice %14 {offsets = [160, 0], sizes = [32, 128], strides = [1, 1]} : vector<512x128xf32> to vector<32x128xf32>
    %c0_61 = arith.constant 0 : index
    %c0_62 = arith.constant 0 : index
    %106 = vector.load %arg6[%c0_61, %c0_62] : memref<128x32xf32, #tpu.memory_space<vmem>>, vector<128x32xf32>
    %cst_63 = arith.constant dense<0.000000e+00> : vector<128x128xf32>
    %107 = tpu.matmul %106, %105, %cst_63 {dimension_numbers = #tpu.dot_dimension_numbers<[1], [0], [0], [1], [0, 0, 1, 1], [], []>} : vector<128x32xf32>, vector<32x128xf32>, vector<128x128xf32> -> vector<128x128xf32>
    %cst_64 = arith.constant 2.000000e+00 : f32
    %108 = vector.broadcast %cst_64 : f32 to vector<128x128xf32>
    %109 = arith.mulf %108, %107 : vector<128x128xf32>
    %c0_65 = arith.constant 0 : index
    %c0_66 = arith.constant 0 : index
    %110 = vector.load %arg7[%c0_65, %c0_66] : memref<128x1xf32, #tpu.memory_space<vmem>>, vector<128x1xf32>
    %111 = vector.broadcast %110 : vector<128x1xf32> to vector<128x128xf32>
    %112 = arith.subf %109, %111 : vector<128x128xf32>
    %cst_67 = arith.constant dense<0xFF800000> : vector<128xf32>
    %113 = vector.multi_reduction <maximumf>, %112, %cst_67 [0] : vector<128x128xf32> to vector<128xf32>
    %114 = vector.shape_cast %113 : vector<128xf32> to vector<1x128xf32>
    %115 = tpu.iota {dimensions = array<i32: 0>} : vector<128x128xi32>
    %116 = vector.broadcast %114 : vector<1x128xf32> to vector<128x128xf32>
    %117 = arith.cmpf oge, %112, %116 : vector<128x128xf32>
    %c128_i32_68 = arith.constant 128 : i32
    %118 = vector.broadcast %c128_i32_68 : i32 to vector<128x128xi32>
    %119 = arith.select %117, %115, %118 : vector<128x128xi1>, vector<128x128xi32>
    %cst_69 = arith.constant dense<2147483647> : vector<128xi32>
    %120 = vector.multi_reduction <minsi>, %119, %cst_69 [0] : vector<128x128xi32> to vector<128xi32>
    %121 = vector.shape_cast %120 : vector<128xi32> to vector<1x128xi32>
    %c5 = arith.constant 5 : index
    %c0_70 = arith.constant 0 : index
    %122 = vector.load %arg8[%c5, %c0_70] : memref<16x128xi32, #tpu.memory_space<vmem>>, vector<1x128xi32>
    tpu.vector_store %arg8[%c5, %c0_70], %121 {strides = array<i32>} : memref<16x128xi32, #tpu.memory_space<vmem>>, vector<1x128xi32>,
    %123 = vector.extract_strided_slice %14 {offsets = [192, 0], sizes = [32, 128], strides = [1, 1]} : vector<512x128xf32> to vector<32x128xf32>
    %c0_71 = arith.constant 0 : index
    %c0_72 = arith.constant 0 : index
    %124 = vector.load %arg6[%c0_71, %c0_72] : memref<128x32xf32, #tpu.memory_space<vmem>>, vector<128x32xf32>
    %cst_73 = arith.constant dense<0.000000e+00> : vector<128x128xf32>
    %125 = tpu.matmul %124, %123, %cst_73 {dimension_numbers = #tpu.dot_dimension_numbers<[1], [0], [0], [1], [0, 0, 1, 1], [], []>} : vector<128x32xf32>, vector<32x128xf32>, vector<128x128xf32> -> vector<128x128xf32>
    %cst_74 = arith.constant 2.000000e+00 : f32
    %126 = vector.broadcast %cst_74 : f32 to vector<128x128xf32>
    %127 = arith.mulf %126, %125 : vector<128x128xf32>
    %c0_75 = arith.constant 0 : index
    %c0_76 = arith.constant 0 : index
    %128 = vector.load %arg7[%c0_75, %c0_76] : memref<128x1xf32, #tpu.memory_space<vmem>>, vector<128x1xf32>
    %129 = vector.broadcast %128 : vector<128x1xf32> to vector<128x128xf32>
    %130 = arith.subf %127, %129 : vector<128x128xf32>
    %cst_77 = arith.constant dense<0xFF800000> : vector<128xf32>
    %131 = vector.multi_reduction <maximumf>, %130, %cst_77 [0] : vector<128x128xf32> to vector<128xf32>
    %132 = vector.shape_cast %131 : vector<128xf32> to vector<1x128xf32>
    %133 = tpu.iota {dimensions = array<i32: 0>} : vector<128x128xi32>
    %134 = vector.broadcast %132 : vector<1x128xf32> to vector<128x128xf32>
    %135 = arith.cmpf oge, %130, %134 : vector<128x128xf32>
    %c128_i32_78 = arith.constant 128 : i32
    %136 = vector.broadcast %c128_i32_78 : i32 to vector<128x128xi32>
    %137 = arith.select %135, %133, %136 : vector<128x128xi1>, vector<128x128xi32>
    %cst_79 = arith.constant dense<2147483647> : vector<128xi32>
    %138 = vector.multi_reduction <minsi>, %137, %cst_79 [0] : vector<128x128xi32> to vector<128xi32>
    %139 = vector.shape_cast %138 : vector<128xi32> to vector<1x128xi32>
    %c6 = arith.constant 6 : index
    %c0_80 = arith.constant 0 : index
    %140 = vector.load %arg8[%c6, %c0_80] : memref<16x128xi32, #tpu.memory_space<vmem>>, vector<1x128xi32>
    tpu.vector_store %arg8[%c6, %c0_80], %139 {strides = array<i32>} : memref<16x128xi32, #tpu.memory_space<vmem>>, vector<1x128xi32>,
    %141 = vector.extract_strided_slice %14 {offsets = [224, 0], sizes = [32, 128], strides = [1, 1]} : vector<512x128xf32> to vector<32x128xf32>
    %c0_81 = arith.constant 0 : index
    %c0_82 = arith.constant 0 : index
    %142 = vector.load %arg6[%c0_81, %c0_82] : memref<128x32xf32, #tpu.memory_space<vmem>>, vector<128x32xf32>
    %cst_83 = arith.constant dense<0.000000e+00> : vector<128x128xf32>
    %143 = tpu.matmul %142, %141, %cst_83 {dimension_numbers = #tpu.dot_dimension_numbers<[1], [0], [0], [1], [0, 0, 1, 1], [], []>} : vector<128x32xf32>, vector<32x128xf32>, vector<128x128xf32> -> vector<128x128xf32>
    %cst_84 = arith.constant 2.000000e+00 : f32
    %144 = vector.broadcast %cst_84 : f32 to vector<128x128xf32>
    %145 = arith.mulf %144, %143 : vector<128x128xf32>
    %c0_85 = arith.constant 0 : index
    %c0_86 = arith.constant 0 : index
    %146 = vector.load %arg7[%c0_85, %c0_86] : memref<128x1xf32, #tpu.memory_space<vmem>>, vector<128x1xf32>
    %147 = vector.broadcast %146 : vector<128x1xf32> to vector<128x128xf32>
    %148 = arith.subf %145, %147 : vector<128x128xf32>
    %cst_87 = arith.constant dense<0xFF800000> : vector<128xf32>
    %149 = vector.multi_reduction <maximumf>, %148, %cst_87 [0] : vector<128x128xf32> to vector<128xf32>
    %150 = vector.shape_cast %149 : vector<128xf32> to vector<1x128xf32>
    %151 = tpu.iota {dimensions = array<i32: 0>} : vector<128x128xi32>
    %152 = vector.broadcast %150 : vector<1x128xf32> to vector<128x128xf32>
    %153 = arith.cmpf oge, %148, %152 : vector<128x128xf32>
    %c128_i32_88 = arith.constant 128 : i32
    %154 = vector.broadcast %c128_i32_88 : i32 to vector<128x128xi32>
    %155 = arith.select %153, %151, %154 : vector<128x128xi1>, vector<128x128xi32>
    %cst_89 = arith.constant dense<2147483647> : vector<128xi32>
    %156 = vector.multi_reduction <minsi>, %155, %cst_89 [0] : vector<128x128xi32> to vector<128xi32>
    %157 = vector.shape_cast %156 : vector<128xi32> to vector<1x128xi32>
    %c7 = arith.constant 7 : index
    %c0_90 = arith.constant 0 : index
    %158 = vector.load %arg8[%c7, %c0_90] : memref<16x128xi32, #tpu.memory_space<vmem>>, vector<1x128xi32>
    tpu.vector_store %arg8[%c7, %c0_90], %157 {strides = array<i32>} : memref<16x128xi32, #tpu.memory_space<vmem>>, vector<1x128xi32>,
    %159 = vector.extract_strided_slice %14 {offsets = [256, 0], sizes = [32, 128], strides = [1, 1]} : vector<512x128xf32> to vector<32x128xf32>
    %c0_91 = arith.constant 0 : index
    %c0_92 = arith.constant 0 : index
    %160 = vector.load %arg6[%c0_91, %c0_92] : memref<128x32xf32, #tpu.memory_space<vmem>>, vector<128x32xf32>
    %cst_93 = arith.constant dense<0.000000e+00> : vector<128x128xf32>
    %161 = tpu.matmul %160, %159, %cst_93 {dimension_numbers = #tpu.dot_dimension_numbers<[1], [0], [0], [1], [0, 0, 1, 1], [], []>} : vector<128x32xf32>, vector<32x128xf32>, vector<128x128xf32> -> vector<128x128xf32>
    %cst_94 = arith.constant 2.000000e+00 : f32
    %162 = vector.broadcast %cst_94 : f32 to vector<128x128xf32>
    %163 = arith.mulf %162, %161 : vector<128x128xf32>
    %c0_95 = arith.constant 0 : index
    %c0_96 = arith.constant 0 : index
    %164 = vector.load %arg7[%c0_95, %c0_96] : memref<128x1xf32, #tpu.memory_space<vmem>>, vector<128x1xf32>
    %165 = vector.broadcast %164 : vector<128x1xf32> to vector<128x128xf32>
    %166 = arith.subf %163, %165 : vector<128x128xf32>
    %cst_97 = arith.constant dense<0xFF800000> : vector<128xf32>
    %167 = vector.multi_reduction <maximumf>, %166, %cst_97 [0] : vector<128x128xf32> to vector<128xf32>
    %168 = vector.shape_cast %167 : vector<128xf32> to vector<1x128xf32>
    %169 = tpu.iota {dimensions = array<i32: 0>} : vector<128x128xi32>
    %170 = vector.broadcast %168 : vector<1x128xf32> to vector<128x128xf32>
    %171 = arith.cmpf oge, %166, %170 : vector<128x128xf32>
    %c128_i32_98 = arith.constant 128 : i32
    %172 = vector.broadcast %c128_i32_98 : i32 to vector<128x128xi32>
    %173 = arith.select %171, %169, %172 : vector<128x128xi1>, vector<128x128xi32>
    %cst_99 = arith.constant dense<2147483647> : vector<128xi32>
    %174 = vector.multi_reduction <minsi>, %173, %cst_99 [0] : vector<128x128xi32> to vector<128xi32>
    %175 = vector.shape_cast %174 : vector<128xi32> to vector<1x128xi32>
    %c8 = arith.constant 8 : index
    %c0_100 = arith.constant 0 : index
    %176 = vector.load %arg8[%c8, %c0_100] : memref<16x128xi32, #tpu.memory_space<vmem>>, vector<1x128xi32>
    tpu.vector_store %arg8[%c8, %c0_100], %175 {strides = array<i32>} : memref<16x128xi32, #tpu.memory_space<vmem>>, vector<1x128xi32>,
    %177 = vector.extract_strided_slice %14 {offsets = [288, 0], sizes = [32, 128], strides = [1, 1]} : vector<512x128xf32> to vector<32x128xf32>
    %c0_101 = arith.constant 0 : index
    %c0_102 = arith.constant 0 : index
    %178 = vector.load %arg6[%c0_101, %c0_102] : memref<128x32xf32, #tpu.memory_space<vmem>>, vector<128x32xf32>
    %cst_103 = arith.constant dense<0.000000e+00> : vector<128x128xf32>
    %179 = tpu.matmul %178, %177, %cst_103 {dimension_numbers = #tpu.dot_dimension_numbers<[1], [0], [0], [1], [0, 0, 1, 1], [], []>} : vector<128x32xf32>, vector<32x128xf32>, vector<128x128xf32> -> vector<128x128xf32>
    %cst_104 = arith.constant 2.000000e+00 : f32
    %180 = vector.broadcast %cst_104 : f32 to vector<128x128xf32>
    %181 = arith.mulf %180, %179 : vector<128x128xf32>
    %c0_105 = arith.constant 0 : index
    %c0_106 = arith.constant 0 : index
    %182 = vector.load %arg7[%c0_105, %c0_106] : memref<128x1xf32, #tpu.memory_space<vmem>>, vector<128x1xf32>
    %183 = vector.broadcast %182 : vector<128x1xf32> to vector<128x128xf32>
    %184 = arith.subf %181, %183 : vector<128x128xf32>
    %cst_107 = arith.constant dense<0xFF800000> : vector<128xf32>
    %185 = vector.multi_reduction <maximumf>, %184, %cst_107 [0] : vector<128x128xf32> to vector<128xf32>
    %186 = vector.shape_cast %185 : vector<128xf32> to vector<1x128xf32>
    %187 = tpu.iota {dimensions = array<i32: 0>} : vector<128x128xi32>
    %188 = vector.broadcast %186 : vector<1x128xf32> to vector<128x128xf32>
    %189 = arith.cmpf oge, %184, %188 : vector<128x128xf32>
    %c128_i32_108 = arith.constant 128 : i32
    %190 = vector.broadcast %c128_i32_108 : i32 to vector<128x128xi32>
    %191 = arith.select %189, %187, %190 : vector<128x128xi1>, vector<128x128xi32>
    %cst_109 = arith.constant dense<2147483647> : vector<128xi32>
    %192 = vector.multi_reduction <minsi>, %191, %cst_109 [0] : vector<128x128xi32> to vector<128xi32>
    %193 = vector.shape_cast %192 : vector<128xi32> to vector<1x128xi32>
    %c9 = arith.constant 9 : index
    %c0_110 = arith.constant 0 : index
    %194 = vector.load %arg8[%c9, %c0_110] : memref<16x128xi32, #tpu.memory_space<vmem>>, vector<1x128xi32>
    tpu.vector_store %arg8[%c9, %c0_110], %193 {strides = array<i32>} : memref<16x128xi32, #tpu.memory_space<vmem>>, vector<1x128xi32>,
    %195 = vector.extract_strided_slice %14 {offsets = [320, 0], sizes = [32, 128], strides = [1, 1]} : vector<512x128xf32> to vector<32x128xf32>
    %c0_111 = arith.constant 0 : index
    %c0_112 = arith.constant 0 : index
    %196 = vector.load %arg6[%c0_111, %c0_112] : memref<128x32xf32, #tpu.memory_space<vmem>>, vector<128x32xf32>
    %cst_113 = arith.constant dense<0.000000e+00> : vector<128x128xf32>
    %197 = tpu.matmul %196, %195, %cst_113 {dimension_numbers = #tpu.dot_dimension_numbers<[1], [0], [0], [1], [0, 0, 1, 1], [], []>} : vector<128x32xf32>, vector<32x128xf32>, vector<128x128xf32> -> vector<128x128xf32>
    %cst_114 = arith.constant 2.000000e+00 : f32
    %198 = vector.broadcast %cst_114 : f32 to vector<128x128xf32>
    %199 = arith.mulf %198, %197 : vector<128x128xf32>
    %c0_115 = arith.constant 0 : index
    %c0_116 = arith.constant 0 : index
    %200 = vector.load %arg7[%c0_115, %c0_116] : memref<128x1xf32, #tpu.memory_space<vmem>>, vector<128x1xf32>
    %201 = vector.broadcast %200 : vector<128x1xf32> to vector<128x128xf32>
    %202 = arith.subf %199, %201 : vector<128x128xf32>
    %cst_117 = arith.constant dense<0xFF800000> : vector<128xf32>
    %203 = vector.multi_reduction <maximumf>, %202, %cst_117 [0] : vector<128x128xf32> to vector<128xf32>
    %204 = vector.shape_cast %203 : vector<128xf32> to vector<1x128xf32>
    %205 = tpu.iota {dimensions = array<i32: 0>} : vector<128x128xi32>
    %206 = vector.broadcast %204 : vector<1x128xf32> to vector<128x128xf32>
    %207 = arith.cmpf oge, %202, %206 : vector<128x128xf32>
    %c128_i32_118 = arith.constant 128 : i32
    %208 = vector.broadcast %c128_i32_118 : i32 to vector<128x128xi32>
    %209 = arith.select %207, %205, %208 : vector<128x128xi1>, vector<128x128xi32>
    %cst_119 = arith.constant dense<2147483647> : vector<128xi32>
    %210 = vector.multi_reduction <minsi>, %209, %cst_119 [0] : vector<128x128xi32> to vector<128xi32>
    %211 = vector.shape_cast %210 : vector<128xi32> to vector<1x128xi32>
    %c10 = arith.constant 10 : index
    %c0_120 = arith.constant 0 : index
    %212 = vector.load %arg8[%c10, %c0_120] : memref<16x128xi32, #tpu.memory_space<vmem>>, vector<1x128xi32>
    tpu.vector_store %arg8[%c10, %c0_120], %211 {strides = array<i32>} : memref<16x128xi32, #tpu.memory_space<vmem>>, vector<1x128xi32>,
    %213 = vector.extract_strided_slice %14 {offsets = [352, 0], sizes = [32, 128], strides = [1, 1]} : vector<512x128xf32> to vector<32x128xf32>
    %c0_121 = arith.constant 0 : index
    %c0_122 = arith.constant 0 : index
    %214 = vector.load %arg6[%c0_121, %c0_122] : memref<128x32xf32, #tpu.memory_space<vmem>>, vector<128x32xf32>
    %cst_123 = arith.constant dense<0.000000e+00> : vector<128x128xf32>
    %215 = tpu.matmul %214, %213, %cst_123 {dimension_numbers = #tpu.dot_dimension_numbers<[1], [0], [0], [1], [0, 0, 1, 1], [], []>} : vector<128x32xf32>, vector<32x128xf32>, vector<128x128xf32> -> vector<128x128xf32>
    %cst_124 = arith.constant 2.000000e+00 : f32
    %216 = vector.broadcast %cst_124 : f32 to vector<128x128xf32>
    %217 = arith.mulf %216, %215 : vector<128x128xf32>
    %c0_125 = arith.constant 0 : index
    %c0_126 = arith.constant 0 : index
    %218 = vector.load %arg7[%c0_125, %c0_126] : memref<128x1xf32, #tpu.memory_space<vmem>>, vector<128x1xf32>
    %219 = vector.broadcast %218 : vector<128x1xf32> to vector<128x128xf32>
    %220 = arith.subf %217, %219 : vector<128x128xf32>
    %cst_127 = arith.constant dense<0xFF800000> : vector<128xf32>
    %221 = vector.multi_reduction <maximumf>, %220, %cst_127 [0] : vector<128x128xf32> to vector<128xf32>
    %222 = vector.shape_cast %221 : vector<128xf32> to vector<1x128xf32>
    %223 = tpu.iota {dimensions = array<i32: 0>} : vector<128x128xi32>
    %224 = vector.broadcast %222 : vector<1x128xf32> to vector<128x128xf32>
    %225 = arith.cmpf oge, %220, %224 : vector<128x128xf32>
    %c128_i32_128 = arith.constant 128 : i32
    %226 = vector.broadcast %c128_i32_128 : i32 to vector<128x128xi32>
    %227 = arith.select %225, %223, %226 : vector<128x128xi1>, vector<128x128xi32>
    %cst_129 = arith.constant dense<2147483647> : vector<128xi32>
    %228 = vector.multi_reduction <minsi>, %227, %cst_129 [0] : vector<128x128xi32> to vector<128xi32>
    %229 = vector.shape_cast %228 : vector<128xi32> to vector<1x128xi32>
    %c11 = arith.constant 11 : index
    %c0_130 = arith.constant 0 : index
    %230 = vector.load %arg8[%c11, %c0_130] : memref<16x128xi32, #tpu.memory_space<vmem>>, vector<1x128xi32>
    tpu.vector_store %arg8[%c11, %c0_130], %229 {strides = array<i32>} : memref<16x128xi32, #tpu.memory_space<vmem>>, vector<1x128xi32>,
    %231 = vector.extract_strided_slice %14 {offsets = [384, 0], sizes = [32, 128], strides = [1, 1]} : vector<512x128xf32> to vector<32x128xf32>
    %c0_131 = arith.constant 0 : index
    %c0_132 = arith.constant 0 : index
    %232 = vector.load %arg6[%c0_131, %c0_132] : memref<128x32xf32, #tpu.memory_space<vmem>>, vector<128x32xf32>
    %cst_133 = arith.constant dense<0.000000e+00> : vector<128x128xf32>
    %233 = tpu.matmul %232, %231, %cst_133 {dimension_numbers = #tpu.dot_dimension_numbers<[1], [0], [0], [1], [0, 0, 1, 1], [], []>} : vector<128x32xf32>, vector<32x128xf32>, vector<128x128xf32> -> vector<128x128xf32>
    %cst_134 = arith.constant 2.000000e+00 : f32
    %234 = vector.broadcast %cst_134 : f32 to vector<128x128xf32>
    %235 = arith.mulf %234, %233 : vector<128x128xf32>
    %c0_135 = arith.constant 0 : index
    %c0_136 = arith.constant 0 : index
    %236 = vector.load %arg7[%c0_135, %c0_136] : memref<128x1xf32, #tpu.memory_space<vmem>>, vector<128x1xf32>
    %237 = vector.broadcast %236 : vector<128x1xf32> to vector<128x128xf32>
    %238 = arith.subf %235, %237 : vector<128x128xf32>
    %cst_137 = arith.constant dense<0xFF800000> : vector<128xf32>
    %239 = vector.multi_reduction <maximumf>, %238, %cst_137 [0] : vector<128x128xf32> to vector<128xf32>
    %240 = vector.shape_cast %239 : vector<128xf32> to vector<1x128xf32>
    %241 = tpu.iota {dimensions = array<i32: 0>} : vector<128x128xi32>
    %242 = vector.broadcast %240 : vector<1x128xf32> to vector<128x128xf32>
    %243 = arith.cmpf oge, %238, %242 : vector<128x128xf32>
    %c128_i32_138 = arith.constant 128 : i32
    %244 = vector.broadcast %c128_i32_138 : i32 to vector<128x128xi32>
    %245 = arith.select %243, %241, %244 : vector<128x128xi1>, vector<128x128xi32>
    %cst_139 = arith.constant dense<2147483647> : vector<128xi32>
    %246 = vector.multi_reduction <minsi>, %245, %cst_139 [0] : vector<128x128xi32> to vector<128xi32>
    %247 = vector.shape_cast %246 : vector<128xi32> to vector<1x128xi32>
    %c12 = arith.constant 12 : index
    %c0_140 = arith.constant 0 : index
    %248 = vector.load %arg8[%c12, %c0_140] : memref<16x128xi32, #tpu.memory_space<vmem>>, vector<1x128xi32>
    tpu.vector_store %arg8[%c12, %c0_140], %247 {strides = array<i32>} : memref<16x128xi32, #tpu.memory_space<vmem>>, vector<1x128xi32>,
    %249 = vector.extract_strided_slice %14 {offsets = [416, 0], sizes = [32, 128], strides = [1, 1]} : vector<512x128xf32> to vector<32x128xf32>
    %c0_141 = arith.constant 0 : index
    %c0_142 = arith.constant 0 : index
    %250 = vector.load %arg6[%c0_141, %c0_142] : memref<128x32xf32, #tpu.memory_space<vmem>>, vector<128x32xf32>
    %cst_143 = arith.constant dense<0.000000e+00> : vector<128x128xf32>
    %251 = tpu.matmul %250, %249, %cst_143 {dimension_numbers = #tpu.dot_dimension_numbers<[1], [0], [0], [1], [0, 0, 1, 1], [], []>} : vector<128x32xf32>, vector<32x128xf32>, vector<128x128xf32> -> vector<128x128xf32>
    %cst_144 = arith.constant 2.000000e+00 : f32
    %252 = vector.broadcast %cst_144 : f32 to vector<128x128xf32>
    %253 = arith.mulf %252, %251 : vector<128x128xf32>
    %c0_145 = arith.constant 0 : index
    %c0_146 = arith.constant 0 : index
    %254 = vector.load %arg7[%c0_145, %c0_146] : memref<128x1xf32, #tpu.memory_space<vmem>>, vector<128x1xf32>
    %255 = vector.broadcast %254 : vector<128x1xf32> to vector<128x128xf32>
    %256 = arith.subf %253, %255 : vector<128x128xf32>
    %cst_147 = arith.constant dense<0xFF800000> : vector<128xf32>
    %257 = vector.multi_reduction <maximumf>, %256, %cst_147 [0] : vector<128x128xf32> to vector<128xf32>
    %258 = vector.shape_cast %257 : vector<128xf32> to vector<1x128xf32>
    %259 = tpu.iota {dimensions = array<i32: 0>} : vector<128x128xi32>
    %260 = vector.broadcast %258 : vector<1x128xf32> to vector<128x128xf32>
    %261 = arith.cmpf oge, %256, %260 : vector<128x128xf32>
    %c128_i32_148 = arith.constant 128 : i32
    %262 = vector.broadcast %c128_i32_148 : i32 to vector<128x128xi32>
    %263 = arith.select %261, %259, %262 : vector<128x128xi1>, vector<128x128xi32>
    %cst_149 = arith.constant dense<2147483647> : vector<128xi32>
    %264 = vector.multi_reduction <minsi>, %263, %cst_149 [0] : vector<128x128xi32> to vector<128xi32>
    %265 = vector.shape_cast %264 : vector<128xi32> to vector<1x128xi32>
    %c13 = arith.constant 13 : index
    %c0_150 = arith.constant 0 : index
    %266 = vector.load %arg8[%c13, %c0_150] : memref<16x128xi32, #tpu.memory_space<vmem>>, vector<1x128xi32>
    tpu.vector_store %arg8[%c13, %c0_150], %265 {strides = array<i32>} : memref<16x128xi32, #tpu.memory_space<vmem>>, vector<1x128xi32>,
    %267 = vector.extract_strided_slice %14 {offsets = [448, 0], sizes = [32, 128], strides = [1, 1]} : vector<512x128xf32> to vector<32x128xf32>
    %c0_151 = arith.constant 0 : index
    %c0_152 = arith.constant 0 : index
    %268 = vector.load %arg6[%c0_151, %c0_152] : memref<128x32xf32, #tpu.memory_space<vmem>>, vector<128x32xf32>
    %cst_153 = arith.constant dense<0.000000e+00> : vector<128x128xf32>
    %269 = tpu.matmul %268, %267, %cst_153 {dimension_numbers = #tpu.dot_dimension_numbers<[1], [0], [0], [1], [0, 0, 1, 1], [], []>} : vector<128x32xf32>, vector<32x128xf32>, vector<128x128xf32> -> vector<128x128xf32>
    %cst_154 = arith.constant 2.000000e+00 : f32
    %270 = vector.broadcast %cst_154 : f32 to vector<128x128xf32>
    %271 = arith.mulf %270, %269 : vector<128x128xf32>
    %c0_155 = arith.constant 0 : index
    %c0_156 = arith.constant 0 : index
    %272 = vector.load %arg7[%c0_155, %c0_156] : memref<128x1xf32, #tpu.memory_space<vmem>>, vector<128x1xf32>
    %273 = vector.broadcast %272 : vector<128x1xf32> to vector<128x128xf32>
    %274 = arith.subf %271, %273 : vector<128x128xf32>
    %cst_157 = arith.constant dense<0xFF800000> : vector<128xf32>
    %275 = vector.multi_reduction <maximumf>, %274, %cst_157 [0] : vector<128x128xf32> to vector<128xf32>
    %276 = vector.shape_cast %275 : vector<128xf32> to vector<1x128xf32>
    %277 = tpu.iota {dimensions = array<i32: 0>} : vector<128x128xi32>
    %278 = vector.broadcast %276 : vector<1x128xf32> to vector<128x128xf32>
    %279 = arith.cmpf oge, %274, %278 : vector<128x128xf32>
    %c128_i32_158 = arith.constant 128 : i32
    %280 = vector.broadcast %c128_i32_158 : i32 to vector<128x128xi32>
    %281 = arith.select %279, %277, %280 : vector<128x128xi1>, vector<128x128xi32>
    %cst_159 = arith.constant dense<2147483647> : vector<128xi32>
    %282 = vector.multi_reduction <minsi>, %281, %cst_159 [0] : vector<128x128xi32> to vector<128xi32>
    %283 = vector.shape_cast %282 : vector<128xi32> to vector<1x128xi32>
    %c14 = arith.constant 14 : index
    %c0_160 = arith.constant 0 : index
    %284 = vector.load %arg8[%c14, %c0_160] : memref<16x128xi32, #tpu.memory_space<vmem>>, vector<1x128xi32>
    tpu.vector_store %arg8[%c14, %c0_160], %283 {strides = array<i32>} : memref<16x128xi32, #tpu.memory_space<vmem>>, vector<1x128xi32>,
    %285 = vector.extract_strided_slice %14 {offsets = [480, 0], sizes = [32, 128], strides = [1, 1]} : vector<512x128xf32> to vector<32x128xf32>
    %c0_161 = arith.constant 0 : index
    %c0_162 = arith.constant 0 : index
    %286 = vector.load %arg6[%c0_161, %c0_162] : memref<128x32xf32, #tpu.memory_space<vmem>>, vector<128x32xf32>
    %cst_163 = arith.constant dense<0.000000e+00> : vector<128x128xf32>
    %287 = tpu.matmul %286, %285, %cst_163 {dimension_numbers = #tpu.dot_dimension_numbers<[1], [0], [0], [1], [0, 0, 1, 1], [], []>} : vector<128x32xf32>, vector<32x128xf32>, vector<128x128xf32> -> vector<128x128xf32>
    %cst_164 = arith.constant 2.000000e+00 : f32
    %288 = vector.broadcast %cst_164 : f32 to vector<128x128xf32>
    %289 = arith.mulf %288, %287 : vector<128x128xf32>
    %c0_165 = arith.constant 0 : index
    %c0_166 = arith.constant 0 : index
    %290 = vector.load %arg7[%c0_165, %c0_166] : memref<128x1xf32, #tpu.memory_space<vmem>>, vector<128x1xf32>
    %291 = vector.broadcast %290 : vector<128x1xf32> to vector<128x128xf32>
    %292 = arith.subf %289, %291 : vector<128x128xf32>
    %cst_167 = arith.constant dense<0xFF800000> : vector<128xf32>
    %293 = vector.multi_reduction <maximumf>, %292, %cst_167 [0] : vector<128x128xf32> to vector<128xf32>
    %294 = vector.shape_cast %293 : vector<128xf32> to vector<1x128xf32>
    %295 = tpu.iota {dimensions = array<i32: 0>} : vector<128x128xi32>
    %296 = vector.broadcast %294 : vector<1x128xf32> to vector<128x128xf32>
    %297 = arith.cmpf oge, %292, %296 : vector<128x128xf32>
    %c128_i32_168 = arith.constant 128 : i32
    %298 = vector.broadcast %c128_i32_168 : i32 to vector<128x128xi32>
    %299 = arith.select %297, %295, %298 : vector<128x128xi1>, vector<128x128xi32>
    %cst_169 = arith.constant dense<2147483647> : vector<128xi32>
    %300 = vector.multi_reduction <minsi>, %299, %cst_169 [0] : vector<128x128xi32> to vector<128xi32>
    %301 = vector.shape_cast %300 : vector<128xi32> to vector<1x128xi32>
    %c15 = arith.constant 15 : index
    %c0_170 = arith.constant 0 : index
    %302 = vector.load %arg8[%c15, %c0_170] : memref<16x128xi32, #tpu.memory_space<vmem>>, vector<1x128xi32>
    tpu.vector_store %arg8[%c15, %c0_170], %301 {strides = array<i32>} : memref<16x128xi32, #tpu.memory_space<vmem>>, vector<1x128xi32>,
    %c0_171 = arith.constant 0 : index
    %c0_172 = arith.constant 0 : index
    %303 = vector.load %arg9[%c0_171, %c0_172] : memref<512x128xf32, #tpu.memory_space<vmem>>, vector<512x128xf32>
    tpu.vector_store %arg9[%c0_171, %c0_172], %14 {strides = array<i32>} : memref<512x128xf32, #tpu.memory_space<vmem>>, vector<512x128xf32>,
    return
  }
  func.func @transform_0(%arg0: i32) -> (i32, i32) {
    %c0_i32 = arith.constant 0 : i32
    %c0_i32_0 = arith.constant 0 : i32
    return %c0_i32, %arg0 : i32, i32
  }
  func.func @transform_1(%arg0: i32) -> (i32, i32) {
    %c0_i32 = arith.constant 0 : i32
    %c0_i32_0 = arith.constant 0 : i32
    %c0_i32_1 = arith.constant 0 : i32
    return %c0_i32, %c0_i32_0 : i32, i32
  }
  func.func @transform_2(%arg0: i32) -> (i32, i32) {
    %c0_i32 = arith.constant 0 : i32
    %c0_i32_0 = arith.constant 0 : i32
    %c0_i32_1 = arith.constant 0 : i32
    return %c0_i32, %c0_i32_0 : i32, i32
  }
  func.func @transform_3(%arg0: i32) -> (i32, i32) {
    %c0_i32 = arith.constant 0 : i32
    %c0_i32_0 = arith.constant 0 : i32
    %c0_i32_1 = arith.constant 0 : i32
    return %c0_i32, %c0_i32_0 : i32, i32
  }
  func.func @transform_4(%arg0: i32) -> (i32, i32) {
    %c0_i32 = arith.constant 0 : i32
    %c0_i32_0 = arith.constant 0 : i32
    %c0_i32_1 = arith.constant 0 : i32
    return %c0_i32, %c0_i32_0 : i32, i32
  }
  func.func @transform_5(%arg0: i32) -> (i32, i32) {
    %c0_i32 = arith.constant 0 : i32
    %c0_i32_0 = arith.constant 0 : i32
    %c0_i32_1 = arith.constant 0 : i32
    return %c0_i32, %c0_i32_0 : i32, i32
  }
  func.func @transform_6(%arg0: i32) -> (i32, i32) {
    %c0_i32 = arith.constant 0 : i32
    %c0_i32_0 = arith.constant 0 : i32
    %c0_i32_1 = arith.constant 0 : i32
    return %c0_i32, %c0_i32_0 : i32, i32
  }
  func.func @transform_7(%arg0: i32) -> (i32, i32) {
    %c0_i32 = arith.constant 0 : i32
    %c0_i32_0 = arith.constant 0 : i32
    return %c0_i32, %arg0 : i32, i32
  }
  func.func @transform_8(%arg0: i32) -> (i32, i32) {
    %c0_i32 = arith.constant 0 : i32
    %c0_i32_0 = arith.constant 0 : i32
    return %c0_i32, %arg0 : i32, i32
  }
}

</mosaic_0001>

<llo_original>
// kernel: tpu_custom_call.1
$region0: #{tpu_custom_call.1}
  #allocation0 [shape = 'u32[]', space=smem, size = 0x4, offset = 0x4, fixed_abs, tag = 'smem constant byte address 0x4 - core index']
  #allocation1 [shape = 'u32[144,128]{1,0:T(1,128)}', space=vmem, size = 0x12000, scoped, tag = 'internal scratch']
  %s0 = inlined_call_operand.vmem [shape: f32[256,128], index: 0, kind: input, shape index: {}]
  %s1 = inlined_call_operand.vmem [shape: bf16[1024,256], index: 1, kind: input, shape index: {}]
  %s2 = inlined_call_operand.vmem [shape: f32[1024,1], index: 2, kind: input, shape index: {}]
  %s3 = inlined_call_operand.hbm [shape: bf16[512,1024], index: 3, kind: input, shape index: {}]
  %s4 = inlined_call_operand.vmem [shape: f32[512,1], index: 4, kind: input, shape index: {}]
  %s5 = inlined_call_operand.vmem [shape: f32[128,32], index: 5, kind: input, shape index: {}]
  %s6 = inlined_call_operand.vmem [shape: f32[128,1], index: 6, kind: input, shape index: {}]
  %s7 = inlined_call_operand.hbm [shape: s32[16,128], index: 7, kind: output, shape index: {0}]
  %s8 = inlined_call_operand.hbm [shape: f32[512,128], index: 8, kind: output, shape index: {1}]
  %9 = xla_tuple %s7, %s8
  %s10 = sld [smem:[#allocation0]]
  $region50: #{tpu_custom_call.1} parent=0
    _
  %s12 = ssub.s32 1, %s10
  %s13 = scalar_select 0, %s12, %s10
  $region1: #{tpu_custom_call.1} parent=0
    #allocation2 [shape = 'u8[1048576]{0}', space=vmem, size = 0x100000, scoped, tag = 'input window, operand 3, single buffered']
    #allocation3 [shape = 's32[1]{0}', space=sflag, size = 0x4, scoped, tag = 'scoped memory for tpu_custom_call.1']
    #allocation4 [shape = 's32[1]{0}', space=sflag, size = 0x4, scoped, tag = 'scoped memory for tpu_custom_call.1']
    #allocation5 [shape = 'u8[8192]{0}', space=vmem, size = 0x2000, scoped, tag = 'output window, operand 0, single buffered']
    #allocation6 [shape = 'u8[262144]{0}', space=vmem, size = 0x40000, scoped, tag = 'output window, operand 1, single buffered']
    #allocation7 [shape = 's32[1]{0}', space=sflag, size = 0x4, scoped, tag = 'scoped memory for tpu_custom_call.1']
    %14 = vsyncpa [#allocation3], 0
    %15 = vsyncpa [#allocation4], 0
    %16 = vsyncpa [#allocation7], 0
    // Predicated region
    $region2: #{tpu_custom_call.1} parent=1 // pred_check
      _
    $region3: #{tpu_custom_call.1} parent=1 // pred_check_branch
      %18 = sbr.rel (0) target = $region5
    $region4: #{tpu_custom_call.1} parent=1 // pred_region
      _
    $region5: #{tpu_custom_call.1} parent=1 // pred_fallthru
      _
    // Predicated region
    $region6: #{tpu_custom_call.1} parent=1 // pred_check
      _
    $region7: #{tpu_custom_call.1} parent=1 // pred_check_branch
      %20 = sbr.rel (0) target = $region9
    $region8: #{tpu_custom_call.1} parent=1 // pred_region
      _
    $region9: #{tpu_custom_call.1} parent=1 // pred_fallthru
      _
    // Predicated region
    $region10: #{tpu_custom_call.1} parent=1 // pred_check
      _
    $region11: #{tpu_custom_call.1} parent=1 // pred_check_branch
      %22 = sbr.rel (0) target = $region13
    $region12: #{tpu_custom_call.1} parent=1 // pred_region
      _
    $region13: #{tpu_custom_call.1} parent=1 // pred_fallthru
      _
    // Predicated region
    $region14: #{tpu_custom_call.1} parent=1 // pred_check
      _
    $region15: #{tpu_custom_call.1} parent=1 // pred_check_branch
      %24 = sbr.rel (0) target = $region17
    $region16: #{tpu_custom_call.1} parent=1 // pred_region
      %s26 = ssub.s32 32768, 32768
      %27 = vsyncadd [#allocation3], %s26
      %s28 = sshll.u32 [#allocation2], 4
      %s29 = int_to_ptr.vmem [resolvable:$true] %s28
      %34 = dma.hbm_to_vmem [thread:$0]  %s3, 32768, %s29, [#allocation3], 512, 512, 32
    $region17: #{tpu_custom_call.1} parent=1 // pred_fallthru
      _
    // Predicated region
    $region18: #{tpu_custom_call.1} parent=1 // pred_check
      _
    $region19: #{tpu_custom_call.1} parent=1 // pred_check_branch
      %36 = sbr.rel (0) target = $region21
    $region20: #{tpu_custom_call.1} parent=1 // pred_region
      _
    $region21: #{tpu_custom_call.1} parent=1 // pred_fallthru
      _
    // Predicated region
    $region22: #{tpu_custom_call.1} parent=1 // pred_check
      _
    $region23: #{tpu_custom_call.1} parent=1 // pred_check_branch
      %38 = sbr.rel (0) target = $region25
    $region24: #{tpu_custom_call.1} parent=1 // pred_region
      _
    $region25: #{tpu_custom_call.1} parent=1 // pred_fallthru
      _
    // Predicated region
    $region26: #{tpu_custom_call.1} parent=1 // pred_check
      _
    $region27: #{tpu_custom_call.1} parent=1 // pred_check_branch
      %40 = sbr.rel (0) target = $region29
    $region28: #{tpu_custom_call.1} parent=1 // pred_region
      _
    $region29: #{tpu_custom_call.1} parent=1 // pred_fallthru
      _
    // Predicated region
    $region30: #{tpu_custom_call.1} parent=1 // pred_check
      _
    $region31: #{tpu_custom_call.1} parent=1 // pred_check_branch
      %42 = sbr.rel (0) target = $region33
    $region32: #{tpu_custom_call.1} parent=1 // pred_region
      %43 = dma.done [#allocation3], 32768
    $region33: #{tpu_custom_call.1} parent=1 // pred_fallthru
      _
    %v45 = vld [vmem:[%s0] sm:$0xff]
    %v46 = vld [vmem:[%s0 + $0x8] sm:$0xff]
    %v47 = vld [vmem:[%s0 + $0x10] sm:$0xff]
    %v48 = vld [vmem:[%s0 + $0x18] sm:$0xff]
    %v49 = vld [vmem:[%s0 + $0x20] sm:$0xff]
    %v50 = vld [vmem:[%s0 + $0x28] sm:$0xff]
    %v51 = vld [vmem:[%s0 + $0x30] sm:$0xff]
    %v52 = vld [vmem:[%s0 + $0x38] sm:$0xff]
    %v53 = vld [vmem:[%s0 + $0x40] sm:$0xff]
    %v54 = vld [vmem:[%s0 + $0x48] sm:$0xff]
    %v55 = vld [vmem:[%s0 + $0x50] sm:$0xff]
    %v56 = vld [vmem:[%s0 + $0x58] sm:$0xff]
    %v57 = vld [vmem:[%s0 + $0x60] sm:$0xff]
    %v58 = vld [vmem:[%s0 + $0x68] sm:$0xff]
    %v59 = vld [vmem:[%s0 + $0x70] sm:$0xff]
    %v60 = vld [vmem:[%s0 + $0x78] sm:$0xff]
    %v61 = vld [vmem:[%s0 + $0x80] sm:$0xff]
    %v62 = vld [vmem:[%s0 + $0x88] sm:$0xff]
    %v63 = vld [vmem:[%s0 + $0x90] sm:$0xff]
    %v64 = vld [vmem:[%s0 + $0x98] sm:$0xff]
    %v65 = vld [vmem:[%s0 + $0xa0] sm:$0xff]
    %v66 = vld [vmem:[%s0 + $0xa8] sm:$0xff]
    %v67 = vld [vmem:[%s0 + $0xb0] sm:$0xff]
    %v68 = vld [vmem:[%s0 + $0xb8] sm:$0xff]
    %v69 = vld [vmem:[%s0 + $0xc0] sm:$0xff]
    %v70 = vld [vmem:[%s0 + $0xc8] sm:$0xff]
    %v71 = vld [vmem:[%s0 + $0xd0] sm:$0xff]
    %v72 = vld [vmem:[%s0 + $0xd8] sm:$0xff]
    %v73 = vld [vmem:[%s0 + $0xe0] sm:$0xff]
    %v74 = vld [vmem:[%s0 + $0xe8] sm:$0xff]
    %v75 = vld [vmem:[%s0 + $0xf0] sm:$0xff]
    %v76 = vld [vmem:[%s0 + $0xf8] sm:$0xff]
    %v77 = vld [vmem:[%s1] sm:$0xff]
    %v78 = vld [vmem:[%s1 + $0x8] sm:$0xff]
    %v79 = vld [vmem:[%s1 + $0x10] sm:$0xff]
    %v80 = vld [vmem:[%s1 + $0x18] sm:$0xff]
    %v81 = vld [vmem:[%s1 + $0x20] sm:$0xff]
    %v82 = vld [vmem:[%s1 + $0x28] sm:$0xff]
    %v83 = vld [vmem:[%s1 + $0x30] sm:$0xff]
    %v84 = vld [vmem:[%s1 + $0x38] sm:$0xff]
    %v85 = vld [vmem:[%s1 + $0x40] sm:$0xff]
    %v86 = vld [vmem:[%s1 + $0x48] sm:$0xff]
    %v87 = vld [vmem:[%s1 + $0x50] sm:$0xff]
    %v88 = vld [vmem:[%s1 + $0x58] sm:$0xff]
    %v89 = vld [vmem:[%s1 + $0x60] sm:$0xff]
    %v90 = vld [vmem:[%s1 + $0x68] sm:$0xff]
    %v91 = vld [vmem:[%s1 + $0x70] sm:$0xff]
    %v92 = vld [vmem:[%s1 + $0x78] sm:$0xff]
    %v93 = vld [vmem:[%s1 + $0x80] sm:$0xff]
    %v94 = vld [vmem:[%s1 + $0x88] sm:$0xff]
    %v95 = vld [vmem:[%s1 + $0x90] sm:$0xff]
    %v96 = vld [vmem:[%s1 + $0x98] sm:$0xff]
    %v97 = vld [vmem:[%s1 + $0xa0] sm:$0xff]
    %v98 = vld [vmem:[%s1 + $0xa8] sm:$0xff]
    %v99 = vld [vmem:[%s1 + $0xb0] sm:$0xff]
    %v100 = vld [vmem:[%s1 + $0xb8] sm:$0xff]
    %v101 = vld [vmem:[%s1 + $0xc0] sm:$0xff]
    %v102 = vld [vmem:[%s1 + $0xc8] sm:$0xff]
    %v103 = vld [vmem:[%s1 + $0xd0] sm:$0xff]
    %v104 = vld [vmem:[%s1 + $0xd8] sm:$0xff]
    %v105 = vld [vmem:[%s1 + $0xe0] sm:$0xff]
    %v106 = vld [vmem:[%s1 + $0xe8] sm:$0xff]
    %v107 = vld [vmem:[%s1 + $0xf0] sm:$0xff]
    %v108 = vld [vmem:[%s1 + $0xf8] sm:$0xff]
    %v109 = vld [vmem:[%s1 + $0x100] sm:$0xff]
    %v110 = vld [vmem:[%s1 + $0x108] sm:$0xff]
    %v111 = vld [vmem:[%s1 + $0x110] sm:$0xff]
    %v112 = vld [vmem:[%s1 + $0x118] sm:$0xff]
    %v113 = vld [vmem:[%s1 + $0x120] sm:$0xff]
    %v114 = vld [vmem:[%s1 + $0x128] sm:$0xff]
    %v115 = vld [vmem:[%s1 + $0x130] sm:$0xff]
    %v116 = vld [vmem:[%s1 + $0x138] sm:$0xff]
    %v117 = vld [vmem:[%s1 + $0x140] sm:$0xff]
    %v118 = vld [vmem:[%s1 + $0x148] sm:$0xff]
    %v119 = vld [vmem:[%s1 + $0x150] sm:$0xff]
    %v120 = vld [vmem:[%s1 + $0x158] sm:$0xff]
    %v121 = vld [vmem:[%s1 + $0x160] sm:$0xff]
    %v122 = vld [vmem:[%s1 + $0x168] sm:$0xff]
    %v123 = vld [vmem:[%s1 + $0x170] sm:$0xff]
    %v124 = vld [vmem:[%s1 + $0x178] sm:$0xff]
    %v125 = vld [vmem:[%s1 + $0x180] sm:$0xff]
    %v126 = vld [vmem:[%s1 + $0x188] sm:$0xff]
    %v127 = vld [vmem:[%s1 + $0x190] sm:$0xff]
    %v128 = vld [vmem:[%s1 + $0x198] sm:$0xff]
    %v129 = vld [vmem:[%s1 + $0x1a0] sm:$0xff]
    %v130 = vld [vmem:[%s1 + $0x1a8] sm:$0xff]
    %v131 = vld [vmem:[%s1 + $0x1b0] sm:$0xff]
    %v132 = vld [vmem:[%s1 + $0x1b8] sm:$0xff]
    %v133 = vld [vmem:[%s1 + $0x1c0] sm:$0xff]
    %v134 = vld [vmem:[%s1 + $0x1c8] sm:$0xff]
    %v135 = vld [vmem:[%s1 + $0x1d0] sm:$0xff]
    %v136 = vld [vmem:[%s1 + $0x1d8] sm:$0xff]
    %v137 = vld [vmem:[%s1 + $0x1e0] sm:$0xff]
    %v138 = vld [vmem:[%s1 + $0x1e8] sm:$0xff]
    %v139 = vld [vmem:[%s1 + $0x1f0] sm:$0xff]
    %v140 = vld [vmem:[%s1 + $0x1f8] sm:$0xff]
    %v141 = vld [vmem:[%s1 + $0x200] sm:$0xff]
    %v142 = vld [vmem:[%s1 + $0x208] sm:$0xff]
    %v143 = vld [vmem:[%s1 + $0x210] sm:$0xff]
    %v144 = vld [vmem:[%s1 + $0x218] sm:$0xff]
    %v145 = vld [vmem:[%s1 + $0x220] sm:$0xff]
    %v146 = vld [vmem:[%s1 + $0x228] sm:$0xff]
    %v147 = vld [vmem:[%s1 + $0x230] sm:$0xff]
    %v148 = vld [vmem:[%s1 + $0x238] sm:$0xff]
    %v149 = vld [vmem:[%s1 + $0x240] sm:$0xff]
    %v150 = vld [vmem:[%s1 + $0x248] sm:$0xff]
    %v151 = vld [vmem:[%s1 + $0x250] sm:$0xff]
    %v152 = vld [vmem:[%s1 + $0x258] sm:$0xff]
    %v153 = vld [vmem:[%s1 + $0x260] sm:$0xff]
    %v154 = vld [vmem:[%s1 + $0x268] sm:$0xff]
    %v155 = vld [vmem:[%s1 + $0x270] sm:$0xff]
    %v156 = vld [vmem:[%s1 + $0x278] sm:$0xff]
    %v157 = vld [vmem:[%s1 + $0x280] sm:$0xff]
    %v158 = vld [vmem:[%s1 + $0x288] sm:$0xff]
    %v159 = vld [vmem:[%s1 + $0x290] sm:$0xff]
    %v160 = vld [vmem:[%s1 + $0x298] sm:$0xff]
    %v161 = vld [vmem:[%s1 + $0x2a0] sm:$0xff]
    %v162 = vld [vmem:[%s1 + $0x2a8] sm:$0xff]
    %v163 = vld [vmem:[%s1 + $0x2b0] sm:$0xff]
    %v164 = vld [vmem:[%s1 + $0x2b8] sm:$0xff]
    %v165 = vld [vmem:[%s1 + $0x2c0] sm:$0xff]
    %v166 = vld [vmem:[%s1 + $0x2c8] sm:$0xff]
    %v167 = vld [vmem:[%s1 + $0x2d0] sm:$0xff]
    %v168 = vld [vmem:[%s1 + $0x2d8] sm:$0xff]
    %v169 = vld [vmem:[%s1 + $0x2e0] sm:$0xff]
    %v170 = vld [vmem:[%s1 + $0x2e8] sm:$0xff]
    %v171 = vld [vmem:[%s1 + $0x2f0] sm:$0xff]
    %v172 = vld [vmem:[%s1 + $0x2f8] sm:$0xff]
    %v173 = vld [vmem:[%s1 + $0x300] sm:$0xff]
    %v174 = vld [vmem:[%s1 + $0x308] sm:$0xff]
    %v175 = vld [vmem:[%s1 + $0x310] sm:$0xff]
    %v176 = vld [vmem:[%s1 + $0x318] sm:$0xff]
    %v177 = vld [vmem:[%s1 + $0x320] sm:$0xff]
    %v178 = vld [vmem:[%s1 + $0x328] sm:$0xff]
    %v179 = vld [vmem:[%s1 + $0x330] sm:$0xff]
    %v180 = vld [vmem:[%s1 + $0x338] sm:$0xff]
    %v181 = vld [vmem:[%s1 + $0x340] sm:$0xff]
    %v182 = vld [vmem:[%s1 + $0x348] sm:$0xff]
    %v183 = vld [vmem:[%s1 + $0x350] sm:$0xff]
    %v184 = vld [vmem:[%s1 + $0x358] sm:$0xff]
    %v185 = vld [vmem:[%s1 + $0x360] sm:$0xff]
    %v186 = vld [vmem:[%s1 + $0x368] sm:$0xff]
    %v187 = vld [vmem:[%s1 + $0x370] sm:$0xff]
    %v188 = vld [vmem:[%s1 + $0x378] sm:$0xff]
    %v189 = vld [vmem:[%s1 + $0x380] sm:$0xff]
    %v190 = vld [vmem:[%s1 + $0x388] sm:$0xff]
    %v191 = vld [vmem:[%s1 + $0x390] sm:$0xff]
    %v192 = vld [vmem:[%s1 + $0x398] sm:$0xff]
    %v193 = vld [vmem:[%s1 + $0x3a0] sm:$0xff]
    %v194 = vld [vmem:[%s1 + $0x3a8] sm:$0xff]
    %v195 = vld [vmem:[%s1 + $0x3b0] sm:$0xff]
    %v196 = vld [vmem:[%s1 + $0x3b8] sm:$0xff]
    %v197 = vld [vmem:[%s1 + $0x3c0] sm:$0xff]
    %v198 = vld [vmem:[%s1 + $0x3c8] sm:$0xff]
    %v199 = vld [vmem:[%s1 + $0x3d0] sm:$0xff]
    %v200 = vld [vmem:[%s1 + $0x3d8] sm:$0xff]
    %v201 = vld [vmem:[%s1 + $0x3e0] sm:$0xff]
    %v202 = vld [vmem:[%s1 + $0x3e8] sm:$0xff]
    %v203 = vld [vmem:[%s1 + $0x3f0] sm:$0xff]
    %v204 = vld [vmem:[%s1 + $0x3f8] sm:$0xff]
    %v205 = vpack.c.bf16 %v46, %v45
    %v206 = vpack.c.bf16 %v48, %v47
    %v207 = vpack.c.bf16 %v50, %v49
    %v208 = vpack.c.bf16 %v52, %v51
    %v209 = vpack.c.bf16 %v54, %v53
    %v210 = vpack.c.bf16 %v56, %v55
    %v211 = vpack.c.bf16 %v58, %v57
    %v212 = vpack.c.bf16 %v60, %v59
    %v213 = vpack.c.bf16 %v62, %v61
    %v214 = vpack.c.bf16 %v64, %v63
    %v215 = vpack.c.bf16 %v66, %v65
    %v216 = vpack.c.bf16 %v68, %v67
    %v217 = vpack.c.bf16 %v70, %v69
    %v218 = vpack.c.bf16 %v72, %v71
    %v219 = vpack.c.bf16 %v74, %v73
    %v220 = vpack.c.bf16 %v76, %v75
    %v221 = vld [vmem:[%s2] sm:$0xff]
    %v222 = vld [vmem:[%s2 + $0x8] sm:$0xff]
    %v223 = vld [vmem:[%s2 + $0x10] sm:$0xff]
    %v224 = vld [vmem:[%s2 + $0x18] sm:$0xff]
    %v225 = vld [vmem:[%s2 + $0x20] sm:$0xff]
    %v226 = vld [vmem:[%s2 + $0x28] sm:$0xff]
    %v227 = vld [vmem:[%s2 + $0x30] sm:$0xff]
    %v228 = vld [vmem:[%s2 + $0x38] sm:$0xff]
    %v229 = vld [vmem:[%s2 + $0x40] sm:$0xff]
    %v230 = vld [vmem:[%s2 + $0x48] sm:$0xff]
    %v231 = vld [vmem:[%s2 + $0x50] sm:$0xff]
    %v232 = vld [vmem:[%s2 + $0x58] sm:$0xff]
    %v233 = vld [vmem:[%s2 + $0x60] sm:$0xff]
    %v234 = vld [vmem:[%s2 + $0x68] sm:$0xff]
    %v235 = vld [vmem:[%s2 + $0x70] sm:$0xff]
    %v236 = vld [vmem:[%s2 + $0x78] sm:$0xff]
    %v237 = vld [vmem:[%s2 + $0x80] sm:$0xff]
    %v238 = vld [vmem:[%s2 + $0x88] sm:$0xff]
    %v239 = vld [vmem:[%s2 + $0x90] sm:$0xff]
    %v240 = vld [vmem:[%s2 + $0x98] sm:$0xff]
    %v241 = vld [vmem:[%s2 + $0xa0] sm:$0xff]
    %v242 = vld [vmem:[%s2 + $0xa8] sm:$0xff]
    %v243 = vld [vmem:[%s2 + $0xb0] sm:$0xff]
    %v244 = vld [vmem:[%s2 + $0xb8] sm:$0xff]
    %v245 = vld [vmem:[%s2 + $0xc0] sm:$0xff]
    %v246 = vld [vmem:[%s2 + $0xc8] sm:$0xff]
    %v247 = vld [vmem:[%s2 + $0xd0] sm:$0xff]
    %v248 = vld [vmem:[%s2 + $0xd8] sm:$0xff]
    %v249 = vld [vmem:[%s2 + $0xe0] sm:$0xff]
    %v250 = vld [vmem:[%s2 + $0xe8] sm:$0xff]
    %v251 = vld [vmem:[%s2 + $0xf0] sm:$0xff]
    %v252 = vld [vmem:[%s2 + $0xf8] sm:$0xff]
    %v253 = vld [vmem:[%s2 + $0x100] sm:$0xff]
    %v254 = vld [vmem:[%s2 + $0x108] sm:$0xff]
    %v255 = vld [vmem:[%s2 + $0x110] sm:$0xff]
    %v256 = vld [vmem:[%s2 + $0x118] sm:$0xff]
    %v257 = vld [vmem:[%s2 + $0x120] sm:$0xff]
    %v258 = vld [vmem:[%s2 + $0x128] sm:$0xff]
    %v259 = vld [vmem:[%s2 + $0x130] sm:$0xff]
    %v260 = vld [vmem:[%s2 + $0x138] sm:$0xff]
    %v261 = vld [vmem:[%s2 + $0x140] sm:$0xff]
    %v262 = vld [vmem:[%s2 + $0x148] sm:$0xff]
    %v263 = vld [vmem:[%s2 + $0x150] sm:$0xff]
    %v264 = vld [vmem:[%s2 + $0x158] sm:$0xff]
    %v265 = vld [vmem:[%s2 + $0x160] sm:$0xff]
    %v266 = vld [vmem:[%s2 + $0x168] sm:$0xff]
    %v267 = vld [vmem:[%s2 + $0x170] sm:$0xff]
    %v268 = vld [vmem:[%s2 + $0x178] sm:$0xff]
    %v269 = vld [vmem:[%s2 + $0x180] sm:$0xff]
    %v270 = vld [vmem:[%s2 + $0x188] sm:$0xff]
    %v271 = vld [vmem:[%s2 + $0x190] sm:$0xff]
    %v272 = vld [vmem:[%s2 + $0x198] sm:$0xff]
    %v273 = vld [vmem:[%s2 + $0x1a0] sm:$0xff]
    %v274 = vld [vmem:[%s2 + $0x1a8] sm:$0xff]
    %v275 = vld [vmem:[%s2 + $0x1b0] sm:$0xff]
    %v276 = vld [vmem:[%s2 + $0x1b8] sm:$0xff]
    %v277 = vld [vmem:[%s2 + $0x1c0] sm:$0xff]
    %v278 = vld [vmem:[%s2 + $0x1c8] sm:$0xff]
    %v279 = vld [vmem:[%s2 + $0x1d0] sm:$0xff]
    %v280 = vld [vmem:[%s2 + $0x1d8] sm:$0xff]
    %v281 = vld [vmem:[%s2 + $0x1e0] sm:$0xff]
    %v282 = vld [vmem:[%s2 + $0x1e8] sm:$0xff]
    %v283 = vld [vmem:[%s2 + $0x1f0] sm:$0xff]
    %v284 = vld [vmem:[%s2 + $0x1f8] sm:$0xff]
    %v285 = vld [vmem:[%s2 + $0x200] sm:$0xff]
    %v286 = vld [vmem:[%s2 + $0x208] sm:$0xff]
    %v287 = vld [vmem:[%s2 + $0x210] sm:$0xff]
    %v288 = vld [vmem:[%s2 + $0x218] sm:$0xff]
    %v289 = vld [vmem:[%s2 + $0x220] sm:$0xff]
    %v290 = vld [vmem:[%s2 + $0x228] sm:$0xff]
    %v291 = vld [vmem:[%s2 + $0x230] sm:$0xff]
    %v292 = vld [vmem:[%s2 + $0x238] sm:$0xff]
    %v293 = vld [vmem:[%s2 + $0x240] sm:$0xff]
    %v294 = vld [vmem:[%s2 + $0x248] sm:$0xff]
    %v295 = vld [vmem:[%s2 + $0x250] sm:$0xff]
    %v296 = vld [vmem:[%s2 + $0x258] sm:$0xff]
    %v297 = vld [vmem:[%s2 + $0x260] sm:$0xff]
    %v298 = vld [vmem:[%s2 + $0x268] sm:$0xff]
    %v299 = vld [vmem:[%s2 + $0x270] sm:$0xff]
    %v300 = vld [vmem:[%s2 + $0x278] sm:$0xff]
    %v301 = vld [vmem:[%s2 + $0x280] sm:$0xff]
    %v302 = vld [vmem:[%s2 + $0x288] sm:$0xff]
    %v303 = vld [vmem:[%s2 + $0x290] sm:$0xff]
    %v304 = vld [vmem:[%s2 + $0x298] sm:$0xff]
    %v305 = vld [vmem:[%s2 + $0x2a0] sm:$0xff]
    %v306 = vld [vmem:[%s2 + $0x2a8] sm:$0xff]
    %v307 = vld [vmem:[%s2 + $0x2b0] sm:$0xff]
    %v308 = vld [vmem:[%s2 + $0x2b8] sm:$0xff]
    %v309 = vld [vmem:[%s2 + $0x2c0] sm:$0xff]
    %v310 = vld [vmem:[%s2 + $0x2c8] sm:$0xff]
    %v311 = vld [vmem:[%s2 + $0x2d0] sm:$0xff]
    %v312 = vld [vmem:[%s2 + $0x2d8] sm:$0xff]
    %v313 = vld [vmem:[%s2 + $0x2e0] sm:$0xff]
    %v314 = vld [vmem:[%s2 + $0x2e8] sm:$0xff]
    %v315 = vld [vmem:[%s2 + $0x2f0] sm:$0xff]
    %v316 = vld [vmem:[%s2 + $0x2f8] sm:$0xff]
    %v317 = vld [vmem:[%s2 + $0x300] sm:$0xff]
    %v318 = vld [vmem:[%s2 + $0x308] sm:$0xff]
    %v319 = vld [vmem:[%s2 + $0x310] sm:$0xff]
    %v320 = vld [vmem:[%s2 + $0x318] sm:$0xff]
    %v321 = vld [vmem:[%s2 + $0x320] sm:$0xff]
    %v322 = vld [vmem:[%s2 + $0x328] sm:$0xff]
    %v323 = vld [vmem:[%s2 + $0x330] sm:$0xff]
    %v324 = vld [vmem:[%s2 + $0x338] sm:$0xff]
    %v325 = vld [vmem:[%s2 + $0x340] sm:$0xff]
    %v326 = vld [vmem:[%s2 + $0x348] sm:$0xff]
    %v327 = vld [vmem:[%s2 + $0x350] sm:$0xff]
    %v328 = vld [vmem:[%s2 + $0x358] sm:$0xff]
    %v329 = vld [vmem:[%s2 + $0x360] sm:$0xff]
    %v330 = vld [vmem:[%s2 + $0x368] sm:$0xff]
    %v331 = vld [vmem:[%s2 + $0x370] sm:$0xff]
    %v332 = vld [vmem:[%s2 + $0x378] sm:$0xff]
    %v333 = vld [vmem:[%s2 + $0x380] sm:$0xff]
    %v334 = vld [vmem:[%s2 + $0x388] sm:$0xff]
    %v335 = vld [vmem:[%s2 + $0x390] sm:$0xff]
    %v336 = vld [vmem:[%s2 + $0x398] sm:$0xff]
    %v337 = vld [vmem:[%s2 + $0x3a0] sm:$0xff]
    %v338 = vld [vmem:[%s2 + $0x3a8] sm:$0xff]
    %v339 = vld [vmem:[%s2 + $0x3b0] sm:$0xff]
    %v340 = vld [vmem:[%s2 + $0x3b8] sm:$0xff]
    %v341 = vld [vmem:[%s2 + $0x3c0] sm:$0xff]
    %v342 = vld [vmem:[%s2 + $0x3c8] sm:$0xff]
    %v343 = vld [vmem:[%s2 + $0x3d0] sm:$0xff]
    %v344 = vld [vmem:[%s2 + $0x3d8] sm:$0xff]
    %v345 = vld [vmem:[%s2 + $0x3e0] sm:$0xff]
    %v346 = vld [vmem:[%s2 + $0x3e8] sm:$0xff]
    %v347 = vld [vmem:[%s2 + $0x3f0] sm:$0xff]
    %v348 = vld [vmem:[%s2 + $0x3f8] sm:$0xff]
    %350 = vset.pattern.permute.xlu0 0
    %351 = vperm.xlu0 %350, %v221
    %v352 = vpop.permute.xlu0 %351
    %355 = vset.pattern.permute.xlu0 0
    %356 = vperm.xlu0 %355, %v222
    %v357 = vpop.permute.xlu0 %356
    %360 = vset.pattern.permute.xlu0 0
    %361 = vperm.xlu0 %360, %v223
    %v362 = vpop.permute.xlu0 %361
    %365 = vset.pattern.permute.xlu0 0
    %366 = vperm.xlu0 %365, %v224
    %v367 = vpop.permute.xlu0 %366
    %370 = vset.pattern.permute.xlu0 0
    %371 = vperm.xlu0 %370, %v225
    %v372 = vpop.permute.xlu0 %371
    %375 = vset.pattern.permute.xlu0 0
    %376 = vperm.xlu0 %375, %v226
    %v377 = vpop.permute.xlu0 %376
    %380 = vset.pattern.permute.xlu0 0
    %381 = vperm.xlu0 %380, %v227
    %v382 = vpop.permute.xlu0 %381
    %385 = vset.pattern.permute.xlu0 0
    %386 = vperm.xlu0 %385, %v228
    %v387 = vpop.permute.xlu0 %386
    %390 = vset.pattern.permute.xlu0 0
    %391 = vperm.xlu0 %390, %v229
    %v392 = vpop.permute.xlu0 %391
    %395 = vset.pattern.permute.xlu0 0
    %396 = vperm.xlu0 %395, %v230
    %v397 = vpop.permute.xlu0 %396
    %400 = vset.pattern.permute.xlu0 0
    %401 = vperm.xlu0 %400, %v231
    %v402 = vpop.permute.xlu0 %401
    %405 = vset.pattern.permute.xlu0 0
    %406 = vperm.xlu0 %405, %v232
    %v407 = vpop.permute.xlu0 %406
    %410 = vset.pattern.permute.xlu0 0
    %411 = vperm.xlu0 %410, %v233
    %v412 = vpop.permute.xlu0 %411
    %415 = vset.pattern.permute.xlu0 0
    %416 = vperm.xlu0 %415, %v234
    %v417 = vpop.permute.xlu0 %416
    %420 = vset.pattern.permute.xlu0 0
    %421 = vperm.xlu0 %420, %v235
    %v422 = vpop.permute.xlu0 %421
    %425 = vset.pattern.permute.xlu0 0
    %426 = vperm.xlu0 %425, %v236
    %v427 = vpop.permute.xlu0 %426
    %430 = vset.pattern.permute.xlu0 0
    %431 = vperm.xlu0 %430, %v237
    %v432 = vpop.permute.xlu0 %431
    %435 = vset.pattern.permute.xlu0 0
    %436 = vperm.xlu0 %435, %v238
    %v437 = vpop.permute.xlu0 %436
    %440 = vset.pattern.permute.xlu0 0
    %441 = vperm.xlu0 %440, %v239
    %v442 = vpop.permute.xlu0 %441
    %445 = vset.pattern.permute.xlu0 0
    %446 = vperm.xlu0 %445, %v240
    %v447 = vpop.permute.xlu0 %446
    %450 = vset.pattern.permute.xlu0 0
    %451 = vperm.xlu0 %450, %v241
    %v452 = vpop.permute.xlu0 %451
    %455 = vset.pattern.permute.xlu0 0
    %456 = vperm.xlu0 %455, %v242
    %v457 = vpop.permute.xlu0 %456
    %460 = vset.pattern.permute.xlu0 0
    %461 = vperm.xlu0 %460, %v243
    %v462 = vpop.permute.xlu0 %461
    %465 = vset.pattern.permute.xlu0 0
    %466 = vperm.xlu0 %465, %v244
    %v467 = vpop.permute.xlu0 %466
    %470 = vset.pattern.permute.xlu0 0
    %471 = vperm.xlu0 %470, %v245
    %v472 = vpop.permute.xlu0 %471
    %475 = vset.pattern.permute.xlu0 0
    %476 = vperm.xlu0 %475, %v246
    %v477 = vpop.permute.xlu0 %476
    %480 = vset.pattern.permute.xlu0 0
    %481 = vperm.xlu0 %480, %v247
    %v482 = vpop.permute.xlu0 %481
    %485 = vset.pattern.permute.xlu0 0
    %486 = vperm.xlu0 %485, %v248
    %v487 = vpop.permute.xlu0 %486
    %490 = vset.pattern.permute.xlu0 0
    %491 = vperm.xlu0 %490, %v249
    %v492 = vpop.permute.xlu0 %491
    %495 = vset.pattern.permute.xlu0 0
    %496 = vperm.xlu0 %495, %v250
    %v497 = vpop.permute.xlu0 %496
    %500 = vset.pattern.permute.xlu0 0
    %501 = vperm.xlu0 %500, %v251
    %v502 = vpop.permute.xlu0 %501
    %505 = vset.pattern.permute.xlu0 0
    %506 = vperm.xlu0 %505, %v252
    %v507 = vpop.permute.xlu0 %506
    %510 = vset.pattern.permute.xlu0 0
    %511 = vperm.xlu0 %510, %v253
    %v512 = vpop.permute.xlu0 %511
    %515 = vset.pattern.permute.xlu0 0
    %516 = vperm.xlu0 %515, %v254
    %v517 = vpop.permute.xlu0 %516
    %520 = vset.pattern.permute.xlu0 0
    %521 = vperm.xlu0 %520, %v255
    %v522 = vpop.permute.xlu0 %521
    %525 = vset.pattern.permute.xlu0 0
    %526 = vperm.xlu0 %525, %v256
    %v527 = vpop.permute.xlu0 %526
    %530 = vset.pattern.permute.xlu0 0
    %531 = vperm.xlu0 %530, %v257
    %v532 = vpop.permute.xlu0 %531
    %535 = vset.pattern.permute.xlu0 0
    %536 = vperm.xlu0 %535, %v258
    %v537 = vpop.permute.xlu0 %536
    %540 = vset.pattern.permute.xlu0 0
    %541 = vperm.xlu0 %540, %v259
    %v542 = vpop.permute.xlu0 %541
    %545 = vset.pattern.permute.xlu0 0
    %546 = vperm.xlu0 %545, %v260
    %v547 = vpop.permute.xlu0 %546
    %550 = vset.pattern.permute.xlu0 0
    %551 = vperm.xlu0 %550, %v261
    %v552 = vpop.permute.xlu0 %551
    %555 = vset.pattern.permute.xlu0 0
    %556 = vperm.xlu0 %555, %v262
    %v557 = vpop.permute.xlu0 %556
    %560 = vset.pattern.permute.xlu0 0
    %561 = vperm.xlu0 %560, %v263
    %v562 = vpop.permute.xlu0 %561
    %565 = vset.pattern.permute.xlu0 0
    %566 = vperm.xlu0 %565, %v264
    %v567 = vpop.permute.xlu0 %566
    %570 = vset.pattern.permute.xlu0 0
    %571 = vperm.xlu0 %570, %v265
    %v572 = vpop.permute.xlu0 %571
    %575 = vset.pattern.permute.xlu0 0
    %576 = vperm.xlu0 %575, %v266
    %v577 = vpop.permute.xlu0 %576
    %580 = vset.pattern.permute.xlu0 0
    %581 = vperm.xlu0 %580, %v267
    %v582 = vpop.permute.xlu0 %581
    %585 = vset.pattern.permute.xlu0 0
    %586 = vperm.xlu0 %585, %v268
    %v587 = vpop.permute.xlu0 %586
    %590 = vset.pattern.permute.xlu0 0
    %591 = vperm.xlu0 %590, %v269
    %v592 = vpop.permute.xlu0 %591
    %595 = vset.pattern.permute.xlu0 0
    %596 = vperm.xlu0 %595, %v270
    %v597 = vpop.permute.xlu0 %596
    %600 = vset.pattern.permute.xlu0 0
    %601 = vperm.xlu0 %600, %v271
    %v602 = vpop.permute.xlu0 %601
    %605 = vset.pattern.permute.xlu0 0
    %606 = vperm.xlu0 %605, %v272
    %v607 = vpop.permute.xlu0 %606
    %610 = vset.pattern.permute.xlu0 0
    %611 = vperm.xlu0 %610, %v273
    %v612 = vpop.permute.xlu0 %611
    %615 = vset.pattern.permute.xlu0 0
    %616 = vperm.xlu0 %615, %v274
    %v617 = vpop.permute.xlu0 %616
    %620 = vset.pattern.permute.xlu0 0
    %621 = vperm.xlu0 %620, %v275
    %v622 = vpop.permute.xlu0 %621
    %625 = vset.pattern.permute.xlu0 0
    %626 = vperm.xlu0 %625, %v276
    %v627 = vpop.permute.xlu0 %626
    %630 = vset.pattern.permute.xlu0 0
    %631 = vperm.xlu0 %630, %v277
    %v632 = vpop.permute.xlu0 %631
    %635 = vset.pattern.permute.xlu0 0
    %636 = vperm.xlu0 %635, %v278
    %v637 = vpop.permute.xlu0 %636
    %640 = vset.pattern.permute.xlu0 0
    %641 = vperm.xlu0 %640, %v279
    %v642 = vpop.permute.xlu0 %641
    %645 = vset.pattern.permute.xlu0 0
    %646 = vperm.xlu0 %645, %v280
    %v647 = vpop.permute.xlu0 %646
    %650 = vset.pattern.permute.xlu0 0
    %651 = vperm.xlu0 %650, %v281
    %v652 = vpop.permute.xlu0 %651
    %655 = vset.pattern.permute.xlu0 0
    %656 = vperm.xlu0 %655, %v282
    %v657 = vpop.permute.xlu0 %656
    %660 = vset.pattern.permute.xlu0 0
    %661 = vperm.xlu0 %660, %v283
    %v662 = vpop.permute.xlu0 %661
    %665 = vset.pattern.permute.xlu0 0
    %666 = vperm.xlu0 %665, %v284
    %v667 = vpop.permute.xlu0 %666
    %670 = vset.pattern.permute.xlu0 0
    %671 = vperm.xlu0 %670, %v285
    %v672 = vpop.permute.xlu0 %671
    %675 = vset.pattern.permute.xlu0 0
    %676 = vperm.xlu0 %675, %v286
    %v677 = vpop.permute.xlu0 %676
    %680 = vset.pattern.permute.xlu0 0
    %681 = vperm.xlu0 %680, %v287
    %v682 = vpop.permute.xlu0 %681
    %685 = vset.pattern.permute.xlu0 0
    %686 = vperm.xlu0 %685, %v288
    %v687 = vpop.permute.xlu0 %686
    %690 = vset.pattern.permute.xlu0 0
    %691 = vperm.xlu0 %690, %v289
    %v692 = vpop.permute.xlu0 %691
    %695 = vset.pattern.permute.xlu0 0
    %696 = vperm.xlu0 %695, %v290
    %v697 = vpop.permute.xlu0 %696
    %700 = vset.pattern.permute.xlu0 0
    %701 = vperm.xlu0 %700, %v291
    %v702 = vpop.permute.xlu0 %701
    %705 = vset.pattern.permute.xlu0 0
    %706 = vperm.xlu0 %705, %v292
    %v707 = vpop.permute.xlu0 %706
    %710 = vset.pattern.permute.xlu0 0
    %711 = vperm.xlu0 %710, %v293
    %v712 = vpop.permute.xlu0 %711
    %715 = vset.pattern.permute.xlu0 0
    %716 = vperm.xlu0 %715, %v294
    %v717 = vpop.permute.xlu0 %716
    %720 = vset.pattern.permute.xlu0 0
    %721 = vperm.xlu0 %720, %v295
    %v722 = vpop.permute.xlu0 %721
    %725 = vset.pattern.permute.xlu0 0
    %726 = vperm.xlu0 %725, %v296
    %v727 = vpop.permute.xlu0 %726
    %730 = vset.pattern.permute.xlu0 0
    %731 = vperm.xlu0 %730, %v297
    %v732 = vpop.permute.xlu0 %731
    %735 = vset.pattern.permute.xlu0 0
    %736 = vperm.xlu0 %735, %v298
    %v737 = vpop.permute.xlu0 %736
    %740 = vset.pattern.permute.xlu0 0
    %741 = vperm.xlu0 %740, %v299
    %v742 = vpop.permute.xlu0 %741
    %745 = vset.pattern.permute.xlu0 0
    %746 = vperm.xlu0 %745, %v300
    %v747 = vpop.permute.xlu0 %746
    %750 = vset.pattern.permute.xlu0 0
    %751 = vperm.xlu0 %750, %v301
    %v752 = vpop.permute.xlu0 %751
    %755 = vset.pattern.permute.xlu0 0
    %756 = vperm.xlu0 %755, %v302
    %v757 = vpop.permute.xlu0 %756
    %760 = vset.pattern.permute.xlu0 0
    %761 = vperm.xlu0 %760, %v303
    %v762 = vpop.permute.xlu0 %761
    %765 = vset.pattern.permute.xlu0 0
    %766 = vperm.xlu0 %765, %v304
    %v767 = vpop.permute.xlu0 %766
    %770 = vset.pattern.permute.xlu0 0
    %771 = vperm.xlu0 %770, %v305
    %v772 = vpop.permute.xlu0 %771
    %775 = vset.pattern.permute.xlu0 0
    %776 = vperm.xlu0 %775, %v306
    %v777 = vpop.permute.xlu0 %776
    %780 = vset.pattern.permute.xlu0 0
    %781 = vperm.xlu0 %780, %v307
    %v782 = vpop.permute.xlu0 %781
    %785 = vset.pattern.permute.xlu0 0
    %786 = vperm.xlu0 %785, %v308
    %v787 = vpop.permute.xlu0 %786
    %790 = vset.pattern.permute.xlu0 0
    %791 = vperm.xlu0 %790, %v309
    %v792 = vpop.permute.xlu0 %791
    %795 = vset.pattern.permute.xlu0 0
    %796 = vperm.xlu0 %795, %v310
    %v797 = vpop.permute.xlu0 %796
    %800 = vset.pattern.permute.xlu0 0
    %801 = vperm.xlu0 %800, %v311
    %v802 = vpop.permute.xlu0 %801
    %805 = vset.pattern.permute.xlu0 0
    %806 = vperm.xlu0 %805, %v312
    %v807 = vpop.permute.xlu0 %806
    %810 = vset.pattern.permute.xlu0 0
    %811 = vperm.xlu0 %810, %v313
    %v812 = vpop.permute.xlu0 %811
    %815 = vset.pattern.permute.xlu0 0
    %816 = vperm.xlu0 %815, %v314
    %v817 = vpop.permute.xlu0 %816
    %820 = vset.pattern.permute.xlu0 0
    %821 = vperm.xlu0 %820, %v315
    %v822 = vpop.permute.xlu0 %821
    %825 = vset.pattern.permute.xlu0 0
    %826 = vperm.xlu0 %825, %v316
    %v827 = vpop.permute.xlu0 %826
    %830 = vset.pattern.permute.xlu0 0
    %831 = vperm.xlu0 %830, %v317
    %v832 = vpop.permute.xlu0 %831
    %835 = vset.pattern.permute.xlu0 0
    %836 = vperm.xlu0 %835, %v318
    %v837 = vpop.permute.xlu0 %836
    %840 = vset.pattern.permute.xlu0 0
    %841 = vperm.xlu0 %840, %v319
    %v842 = vpop.permute.xlu0 %841
    %845 = vset.pattern.permute.xlu0 0
    %846 = vperm.xlu0 %845, %v320
    %v847 = vpop.permute.xlu0 %846
    %850 = vset.pattern.permute.xlu0 0
    %851 = vperm.xlu0 %850, %v321
    %v852 = vpop.permute.xlu0 %851
    %855 = vset.pattern.permute.xlu0 0
    %856 = vperm.xlu0 %855, %v322
    %v857 = vpop.permute.xlu0 %856
    %860 = vset.pattern.permute.xlu0 0
    %861 = vperm.xlu0 %860, %v323
    %v862 = vpop.permute.xlu0 %861
    %865 = vset.pattern.permute.xlu0 0
    %866 = vperm.xlu0 %865, %v324
    %v867 = vpop.permute.xlu0 %866
    %870 = vset.pattern.permute.xlu0 0
    %871 = vperm.xlu0 %870, %v325
    %v872 = vpop.permute.xlu0 %871
    %875 = vset.pattern.permute.xlu0 0
    %876 = vperm.xlu0 %875, %v326
    %v877 = vpop.permute.xlu0 %876
    %880 = vset.pattern.permute.xlu0 0
    %881 = vperm.xlu0 %880, %v327
    %v882 = vpop.permute.xlu0 %881
    %885 = vset.pattern.permute.xlu0 0
    %886 = vperm.xlu0 %885, %v328
    %v887 = vpop.permute.xlu0 %886
    %890 = vset.pattern.permute.xlu0 0
    %891 = vperm.xlu0 %890, %v329
    %v892 = vpop.permute.xlu0 %891
    %895 = vset.pattern.permute.xlu0 0
    %896 = vperm.xlu0 %895, %v330
    %v897 = vpop.permute.xlu0 %896
    %900 = vset.pattern.permute.xlu0 0
    %901 = vperm.xlu0 %900, %v331
    %v902 = vpop.permute.xlu0 %901
    %905 = vset.pattern.permute.xlu0 0
    %906 = vperm.xlu0 %905, %v332
    %v907 = vpop.permute.xlu0 %906
    %910 = vset.pattern.permute.xlu0 0
    %911 = vperm.xlu0 %910, %v333
    %v912 = vpop.permute.xlu0 %911
    %915 = vset.pattern.permute.xlu0 0
    %916 = vperm.xlu0 %915, %v334
    %v917 = vpop.permute.xlu0 %916
    %920 = vset.pattern.permute.xlu0 0
    %921 = vperm.xlu0 %920, %v335
    %v922 = vpop.permute.xlu0 %921
    %925 = vset.pattern.permute.xlu0 0
    %926 = vperm.xlu0 %925, %v336
    %v927 = vpop.permute.xlu0 %926
    %930 = vset.pattern.permute.xlu0 0
    %931 = vperm.xlu0 %930, %v337
    %v932 = vpop.permute.xlu0 %931
    %935 = vset.pattern.permute.xlu0 0
    %936 = vperm.xlu0 %935, %v338
    %v937 = vpop.permute.xlu0 %936
    %940 = vset.pattern.permute.xlu0 0
    %941 = vperm.xlu0 %940, %v339
    %v942 = vpop.permute.xlu0 %941
    %945 = vset.pattern.permute.xlu0 0
    %946 = vperm.xlu0 %945, %v340
    %v947 = vpop.permute.xlu0 %946
    %950 = vset.pattern.permute.xlu0 0
    %951 = vperm.xlu0 %950, %v341
    %v952 = vpop.permute.xlu0 %951
    %955 = vset.pattern.permute.xlu0 0
    %956 = vperm.xlu0 %955, %v342
    %v957 = vpop.permute.xlu0 %956
    %960 = vset.pattern.permute.xlu0 0
    %961 = vperm.xlu0 %960, %v343
    %v962 = vpop.permute.xlu0 %961
    %965 = vset.pattern.permute.xlu0 0
    %966 = vperm.xlu0 %965, %v344
    %v967 = vpop.permute.xlu0 %966
    %970 = vset.pattern.permute.xlu0 0
    %971 = vperm.xlu0 %970, %v345
    %v972 = vpop.permute.xlu0 %971
    %975 = vset.pattern.permute.xlu0 0
    %976 = vperm.xlu0 %975, %v346
    %v977 = vpop.permute.xlu0 %976
    %980 = vset.pattern.permute.xlu0 0
    %981 = vperm.xlu0 %980, %v347
    %v982 = vpop.permute.xlu0 %981
    %985 = vset.pattern.permute.xlu0 0
    %986 = vperm.xlu0 %985, %v348
    %v987 = vpop.permute.xlu0 %986
    %v1117 = vunpack.c.l.b16 %v77
    %v1118 = vunpack.c.h.b16 %v77
    %v1119 = vunpack.c.l.b16 %v78
    %v1120 = vunpack.c.h.b16 %v78
    %v1121 = vunpack.c.l.b16 %v79
    %v1122 = vunpack.c.h.b16 %v79
    %v1123 = vunpack.c.l.b16 %v80
    %v1124 = vunpack.c.h.b16 %v80
    %v1125 = vunpack.c.l.b16 %v81
    %v1126 = vunpack.c.h.b16 %v81
    %v1127 = vunpack.c.l.b16 %v82
    %v1128 = vunpack.c.h.b16 %v82
    %v1129 = vunpack.c.l.b16 %v83
    %v1130 = vunpack.c.h.b16 %v83
    %v1131 = vunpack.c.l.b16 %v84
    %v1132 = vunpack.c.h.b16 %v84
    %v1133 = vunpack.c.l.b16 %v85
    %v1134 = vunpack.c.h.b16 %v85
    %v1135 = vunpack.c.l.b16 %v86
    %v1136 = vunpack.c.h.b16 %v86
    %v1137 = vunpack.c.l.b16 %v87
    %v1138 = vunpack.c.h.b16 %v87
    %v1139 = vunpack.c.l.b16 %v88
    %v1140 = vunpack.c.h.b16 %v88
    %v1141 = vunpack.c.l.b16 %v89
    %v1142 = vunpack.c.h.b16 %v89
    %v1143 = vunpack.c.l.b16 %v90
    %v1144 = vunpack.c.h.b16 %v90
    %v1145 = vunpack.c.l.b16 %v91
    %v1146 = vunpack.c.h.b16 %v91
    %v1147 = vunpack.c.l.b16 %v92
    %v1148 = vunpack.c.h.b16 %v92
    %v1149 = vunpack.c.l.b16 %v93
    %v1150 = vunpack.c.h.b16 %v93
    %v1151 = vunpack.c.l.b16 %v94
    %v1152 = vunpack.c.h.b16 %v94
    %v1153 = vunpack.c.l.b16 %v95
    %v1154 = vunpack.c.h.b16 %v95
    %v1155 = vunpack.c.l.b16 %v96
    %v1156 = vunpack.c.h.b16 %v96
    %v1157 = vunpack.c.l.b16 %v97
    %v1158 = vunpack.c.h.b16 %v97
    %v1159 = vunpack.c.l.b16 %v98
    %v1160 = vunpack.c.h.b16 %v98
    %v1161 = vunpack.c.l.b16 %v99
    %v1162 = vunpack.c.h.b16 %v99
    %v1163 = vunpack.c.l.b16 %v100
    %v1164 = vunpack.c.h.b16 %v100
    %v1165 = vunpack.c.l.b16 %v101
    %v1166 = vunpack.c.h.b16 %v101
    %v1167 = vunpack.c.l.b16 %v102
    %v1168 = vunpack.c.h.b16 %v102
    %v1169 = vunpack.c.l.b16 %v103
    %v1170 = vunpack.c.h.b16 %v103
    %v1171 = vunpack.c.l.b16 %v104
    %v1172 = vunpack.c.h.b16 %v104
    %v1173 = vunpack.c.l.b16 %v105
    %v1174 = vunpack.c.h.b16 %v105
    %v1175 = vunpack.c.l.b16 %v106
    %v1176 = vunpack.c.h.b16 %v106
    %v1177 = vunpack.c.l.b16 %v107
    %v1178 = vunpack.c.h.b16 %v107
    %v1179 = vunpack.c.l.b16 %v108
    %v1180 = vunpack.c.h.b16 %v108
    %v1181 = vunpack.c.l.b16 %v109
    %v1182 = vunpack.c.h.b16 %v109
    %v1183 = vunpack.c.l.b16 %v110
    %v1184 = vunpack.c.h.b16 %v110
    %v1185 = vunpack.c.l.b16 %v111
    %v1186 = vunpack.c.h.b16 %v111
    %v1187 = vunpack.c.l.b16 %v112
    %v1188 = vunpack.c.h.b16 %v112
    %v1189 = vunpack.c.l.b16 %v113
    %v1190 = vunpack.c.h.b16 %v113
    %v1191 = vunpack.c.l.b16 %v114
    %v1192 = vunpack.c.h.b16 %v114
    %v1193 = vunpack.c.l.b16 %v115
    %v1194 = vunpack.c.h.b16 %v115
    %v1195 = vunpack.c.l.b16 %v116
    %v1196 = vunpack.c.h.b16 %v116
    %v1197 = vunpack.c.l.b16 %v117
    %v1198 = vunpack.c.h.b16 %v117
    %v1199 = vunpack.c.l.b16 %v118
    %v1200 = vunpack.c.h.b16 %v118
    %v1201 = vunpack.c.l.b16 %v119
    %v1202 = vunpack.c.h.b16 %v119
    %v1203 = vunpack.c.l.b16 %v120
    %v1204 = vunpack.c.h.b16 %v120
    %v1205 = vunpack.c.l.b16 %v121
    %v1206 = vunpack.c.h.b16 %v121
    %v1207 = vunpack.c.l.b16 %v122
    %v1208 = vunpack.c.h.b16 %v122
    %v1209 = vunpack.c.l.b16 %v123
    %v1210 = vunpack.c.h.b16 %v123
    %v1211 = vunpack.c.l.b16 %v124
    %v1212 = vunpack.c.h.b16 %v124
    %v1213 = vunpack.c.l.b16 %v125
    %v1214 = vunpack.c.h.b16 %v125
    %v1215 = vunpack.c.l.b16 %v126
    %v1216 = vunpack.c.h.b16 %v126
    %v1217 = vunpack.c.l.b16 %v127
    %v1218 = vunpack.c.h.b16 %v127
    %v1219 = vunpack.c.l.b16 %v128
    %v1220 = vunpack.c.h.b16 %v128
    %v1221 = vunpack.c.l.b16 %v129
    %v1222 = vunpack.c.h.b16 %v129
    %v1223 = vunpack.c.l.b16 %v130
    %v1224 = vunpack.c.h.b16 %v130
    %v1225 = vunpack.c.l.b16 %v131
    %v1226 = vunpack.c.h.b16 %v131
    %v1227 = vunpack.c.l.b16 %v132
    %v1228 = vunpack.c.h.b16 %v132
    %v1229 = vunpack.c.l.b16 %v133
    %v1230 = vunpack.c.h.b16 %v133
    %v1231 = vunpack.c.l.b16 %v134
    %v1232 = vunpack.c.h.b16 %v134
    %v1233 = vunpack.c.l.b16 %v135
    %v1234 = vunpack.c.h.b16 %v135
    %v1235 = vunpack.c.l.b16 %v136
    %v1236 = vunpack.c.h.b16 %v136
    %v1237 = vunpack.c.l.b16 %v137
    %v1238 = vunpack.c.h.b16 %v137
    %v1239 = vunpack.c.l.b16 %v138
    %v1240 = vunpack.c.h.b16 %v138
    %v1241 = vunpack.c.l.b16 %v139
    %v1242 = vunpack.c.h.b16 %v139
    %v1243 = vunpack.c.l.b16 %v140
    %v1244 = vunpack.c.h.b16 %v140
    %v1245 = vunpack.c.l.b16 %v141
    %v1246 = vunpack.c.h.b16 %v141
    %v1247 = vunpack.c.l.b16 %v142
    %v1248 = vunpack.c.h.b16 %v142
    %v1249 = vunpack.c.l.b16 %v143
    %v1250 = vunpack.c.h.b16 %v143
    %v1251 = vunpack.c.l.b16 %v144
    %v1252 = vunpack.c.h.b16 %v144
    %v1253 = vunpack.c.l.b16 %v145
    %v1254 = vunpack.c.h.b16 %v145
    %v1255 = vunpack.c.l.b16 %v146
    %v1256 = vunpack.c.h.b16 %v146
    %v1257 = vunpack.c.l.b16 %v147
    %v1258 = vunpack.c.h.b16 %v147
    %v1259 = vunpack.c.l.b16 %v148
    %v1260 = vunpack.c.h.b16 %v148
    %v1261 = vunpack.c.l.b16 %v149
    %v1262 = vunpack.c.h.b16 %v149
    %v1263 = vunpack.c.l.b16 %v150
    %v1264 = vunpack.c.h.b16 %v150
    %v1265 = vunpack.c.l.b16 %v151
    %v1266 = vunpack.c.h.b16 %v151
    %v1267 = vunpack.c.l.b16 %v152
    %v1268 = vunpack.c.h.b16 %v152
    %v1269 = vunpack.c.l.b16 %v153
    %v1270 = vunpack.c.h.b16 %v153
    %v1271 = vunpack.c.l.b16 %v154
    %v1272 = vunpack.c.h.b16 %v154
    %v1273 = vunpack.c.l.b16 %v155
    %v1274 = vunpack.c.h.b16 %v155
    %v1275 = vunpack.c.l.b16 %v156
    %v1276 = vunpack.c.h.b16 %v156
    %v1277 = vunpack.c.l.b16 %v157
    %v1278 = vunpack.c.h.b16 %v157
    %v1279 = vunpack.c.l.b16 %v158
    %v1280 = vunpack.c.h.b16 %v158
    %v1281 = vunpack.c.l.b16 %v159
    %v1282 = vunpack.c.h.b16 %v159
    %v1283 = vunpack.c.l.b16 %v160
    %v1284 = vunpack.c.h.b16 %v160
    %v1285 = vunpack.c.l.b16 %v161
    %v1286 = vunpack.c.h.b16 %v161
    %v1287 = vunpack.c.l.b16 %v162
    %v1288 = vunpack.c.h.b16 %v162
    %v1289 = vunpack.c.l.b16 %v163
    %v1290 = vunpack.c.h.b16 %v163
    %v1291 = vunpack.c.l.b16 %v164
    %v1292 = vunpack.c.h.b16 %v164
    %v1293 = vunpack.c.l.b16 %v165
    %v1294 = vunpack.c.h.b16 %v165
    %v1295 = vunpack.c.l.b16 %v166
    %v1296 = vunpack.c.h.b16 %v166
    %v1297 = vunpack.c.l.b16 %v167
    %v1298 = vunpack.c.h.b16 %v167
    %v1299 = vunpack.c.l.b16 %v168
    %v1300 = vunpack.c.h.b16 %v168
    %v1301 = vunpack.c.l.b16 %v169
    %v1302 = vunpack.c.h.b16 %v169
    %v1303 = vunpack.c.l.b16 %v170
    %v1304 = vunpack.c.h.b16 %v170
    %v1305 = vunpack.c.l.b16 %v171
    %v1306 = vunpack.c.h.b16 %v171
    %v1307 = vunpack.c.l.b16 %v172
    %v1308 = vunpack.c.h.b16 %v172
    %v1309 = vunpack.c.l.b16 %v173
    %v1310 = vunpack.c.h.b16 %v173
    %v1311 = vunpack.c.l.b16 %v174
    %v1312 = vunpack.c.h.b16 %v174
    %v1313 = vunpack.c.l.b16 %v175
    %v1314 = vunpack.c.h.b16 %v175
    %v1315 = vunpack.c.l.b16 %v176
    %v1316 = vunpack.c.h.b16 %v176
    %v1317 = vunpack.c.l.b16 %v177
    %v1318 = vunpack.c.h.b16 %v177
    %v1319 = vunpack.c.l.b16 %v178
    %v1320 = vunpack.c.h.b16 %v178
    %v1321 = vunpack.c.l.b16 %v179
    %v1322 = vunpack.c.h.b16 %v179
    %v1323 = vunpack.c.l.b16 %v180
    %v1324 = vunpack.c.h.b16 %v180
    %v1325 = vunpack.c.l.b16 %v181
    %v1326 = vunpack.c.h.b16 %v181
    %v1327 = vunpack.c.l.b16 %v182
    %v1328 = vunpack.c.h.b16 %v182
    %v1329 = vunpack.c.l.b16 %v183
    %v1330 = vunpack.c.h.b16 %v183
    %v1331 = vunpack.c.l.b16 %v184
    %v1332 = vunpack.c.h.b16 %v184
    %v1333 = vunpack.c.l.b16 %v185
    %v1334 = vunpack.c.h.b16 %v185
    %v1335 = vunpack.c.l.b16 %v186
    %v1336 = vunpack.c.h.b16 %v186
    %v1337 = vunpack.c.l.b16 %v187
    %v1338 = vunpack.c.h.b16 %v187
    %v1339 = vunpack.c.l.b16 %v188
    %v1340 = vunpack.c.h.b16 %v188
    %v1341 = vunpack.c.l.b16 %v189
    %v1342 = vunpack.c.h.b16 %v189
    %v1343 = vunpack.c.l.b16 %v190
    %v1344 = vunpack.c.h.b16 %v190
    %v1345 = vunpack.c.l.b16 %v191
    %v1346 = vunpack.c.h.b16 %v191
    %v1347 = vunpack.c.l.b16 %v192
    %v1348 = vunpack.c.h.b16 %v192
    %v1349 = vunpack.c.l.b16 %v193
    %v1350 = vunpack.c.h.b16 %v193
    %v1351 = vunpack.c.l.b16 %v194
    %v1352 = vunpack.c.h.b16 %v194
    %v1353 = vunpack.c.l.b16 %v195
    %v1354 = vunpack.c.h.b16 %v195
    %v1355 = vunpack.c.l.b16 %v196
    %v1356 = vunpack.c.h.b16 %v196
    %v1357 = vunpack.c.l.b16 %v197
    %v1358 = vunpack.c.h.b16 %v197
    %v1359 = vunpack.c.l.b16 %v198
    %v1360 = vunpack.c.h.b16 %v198
    %v1361 = vunpack.c.l.b16 %v199
    %v1362 = vunpack.c.h.b16 %v199
    %v1363 = vunpack.c.l.b16 %v200
    %v1364 = vunpack.c.h.b16 %v200
    %v1365 = vunpack.c.l.b16 %v201
    %v1366 = vunpack.c.h.b16 %v201
    %v1367 = vunpack.c.l.b16 %v202
    %v1368 = vunpack.c.h.b16 %v202
    %v1369 = vunpack.c.l.b16 %v203
    %v1370 = vunpack.c.h.b16 %v203
    %v1371 = vunpack.c.l.b16 %v204
    %v1372 = vunpack.c.h.b16 %v204
    %v1373 = vpack.c.b16 %v1119, %v1117
    %v1374 = vpack.c.b16 %v1120, %v1118
    %v1375 = vpack.c.b16 %v1123, %v1121
    %v1376 = vpack.c.b16 %v1124, %v1122
    %v1377 = vpack.c.b16 %v1127, %v1125
    %v1378 = vpack.c.b16 %v1128, %v1126
    %v1379 = vpack.c.b16 %v1131, %v1129
    %v1380 = vpack.c.b16 %v1132, %v1130
    %v1381 = vpack.c.b16 %v1135, %v1133
    %v1382 = vpack.c.b16 %v1136, %v1134
    %v1383 = vpack.c.b16 %v1139, %v1137
    %v1384 = vpack.c.b16 %v1140, %v1138
    %v1385 = vpack.c.b16 %v1143, %v1141
    %v1386 = vpack.c.b16 %v1144, %v1142
    %v1387 = vpack.c.b16 %v1147, %v1145
    %v1388 = vpack.c.b16 %v1148, %v1146
    %v1389 = vpack.c.b16 %v1151, %v1149
    %v1390 = vpack.c.b16 %v1152, %v1150
    %v1391 = vpack.c.b16 %v1155, %v1153
    %v1392 = vpack.c.b16 %v1156, %v1154
    %v1393 = vpack.c.b16 %v1159, %v1157
    %v1394 = vpack.c.b16 %v1160, %v1158
    %v1395 = vpack.c.b16 %v1163, %v1161
    %v1396 = vpack.c.b16 %v1164, %v1162
    %v1397 = vpack.c.b16 %v1167, %v1165
    %v1398 = vpack.c.b16 %v1168, %v1166
    %v1399 = vpack.c.b16 %v1171, %v1169
    %v1400 = vpack.c.b16 %v1172, %v1170
    %v1401 = vpack.c.b16 %v1175, %v1173
    %v1402 = vpack.c.b16 %v1176, %v1174
    %v1403 = vpack.c.b16 %v1179, %v1177
    %v1404 = vpack.c.b16 %v1180, %v1178
    %v1405 = vpack.c.b16 %v1183, %v1181
    %v1406 = vpack.c.b16 %v1184, %v1182
    %v1407 = vpack.c.b16 %v1187, %v1185
    %v1408 = vpack.c.b16 %v1188, %v1186
    %v1409 = vpack.c.b16 %v1191, %v1189
    %v1410 = vpack.c.b16 %v1192, %v1190
    %v1411 = vpack.c.b16 %v1195, %v1193
    %v1412 = vpack.c.b16 %v1196, %v1194
    %v1413 = vpack.c.b16 %v1199, %v1197
    %v1414 = vpack.c.b16 %v1200, %v1198
    %v1415 = vpack.c.b16 %v1203, %v1201
    %v1416 = vpack.c.b16 %v1204, %v1202
    %v1417 = vpack.c.b16 %v1207, %v1205
    %v1418 = vpack.c.b16 %v1208, %v1206
    %v1419 = vpack.c.b16 %v1211, %v1209
    %v1420 = vpack.c.b16 %v1212, %v1210
    %v1421 = vpack.c.b16 %v1215, %v1213
    %v1422 = vpack.c.b16 %v1216, %v1214
    %v1423 = vpack.c.b16 %v1219, %v1217
    %v1424 = vpack.c.b16 %v1220, %v1218
    %v1425 = vpack.c.b16 %v1223, %v1221
    %v1426 = vpack.c.b16 %v1224, %v1222
    %v1427 = vpack.c.b16 %v1227, %v1225
    %v1428 = vpack.c.b16 %v1228, %v1226
    %v1429 = vpack.c.b16 %v1231, %v1229
    %v1430 = vpack.c.b16 %v1232, %v1230
    %v1431 = vpack.c.b16 %v1235, %v1233
    %v1432 = vpack.c.b16 %v1236, %v1234
    %v1433 = vpack.c.b16 %v1239, %v1237
    %v1434 = vpack.c.b16 %v1240, %v1238
    %v1435 = vpack.c.b16 %v1243, %v1241
    %v1436 = vpack.c.b16 %v1244, %v1242
    %v1437 = vpack.c.b16 %v1247, %v1245
    %v1438 = vpack.c.b16 %v1248, %v1246
    %v1439 = vpack.c.b16 %v1251, %v1249
    %v1440 = vpack.c.b16 %v1252, %v1250
    %v1441 = vpack.c.b16 %v1255, %v1253
    %v1442 = vpack.c.b16 %v1256, %v1254
    %v1443 = vpack.c.b16 %v1259, %v1257
    %v1444 = vpack.c.b16 %v1260, %v1258
    %v1445 = vpack.c.b16 %v1263, %v1261
    %v1446 = vpack.c.b16 %v1264, %v1262
    %v1447 = vpack.c.b16 %v1267, %v1265
    %v1448 = vpack.c.b16 %v1268, %v1266
    %v1449 = vpack.c.b16 %v1271, %v1269
    %v1450 = vpack.c.b16 %v1272, %v1270
    %v1451 = vpack.c.b16 %v1275, %v1273
    %v1452 = vpack.c.b16 %v1276, %v1274
    %v1453 = vpack.c.b16 %v1279, %v1277
    %v1454 = vpack.c.b16 %v1280, %v1278
    %v1455 = vpack.c.b16 %v1283, %v1281
    %v1456 = vpack.c.b16 %v1284, %v1282
    %v1457 = vpack.c.b16 %v1287, %v1285
    %v1458 = vpack.c.b16 %v1288, %v1286
    %v1459 = vpack.c.b16 %v1291, %v1289
    %v1460 = vpack.c.b16 %v1292, %v1290
    %v1461 = vpack.c.b16 %v1295, %v1293
    %v1462 = vpack.c.b16 %v1296, %v1294
    %v1463 = vpack.c.b16 %v1299, %v1297
    %v1464 = vpack.c.b16 %v1300, %v1298
    %v1465 = vpack.c.b16 %v1303, %v1301
    %v1466 = vpack.c.b16 %v1304, %v1302
    %v1467 = vpack.c.b16 %v1307, %v1305
    %v1468 = vpack.c.b16 %v1308, %v1306
    %v1469 = vpack.c.b16 %v1311, %v1309
    %v1470 = vpack.c.b16 %v1312, %v1310
    %v1471 = vpack.c.b16 %v1315, %v1313
    %v1472 = vpack.c.b16 %v1316, %v1314
    %v1473 = vpack.c.b16 %v1319, %v1317
    %v1474 = vpack.c.b16 %v1320, %v1318
    %v1475 = vpack.c.b16 %v1323, %v1321
    %v1476 = vpack.c.b16 %v1324, %v1322
    %v1477 = vpack.c.b16 %v1327, %v1325
    %v1478 = vpack.c.b16 %v1328, %v1326
    %v1479 = vpack.c.b16 %v1331, %v1329
    %v1480 = vpack.c.b16 %v1332, %v1330
    %v1481 = vpack.c.b16 %v1335, %v1333
    %v1482 = vpack.c.b16 %v1336, %v1334
    %v1483 = vpack.c.b16 %v1339, %v1337
    %v1484 = vpack.c.b16 %v1340, %v1338
    %v1485 = vpack.c.b16 %v1343, %v1341
    %v1486 = vpack.c.b16 %v1344, %v1342
    %v1487 = vpack.c.b16 %v1347, %v1345
    %v1488 = vpack.c.b16 %v1348, %v1346
    %v1489 = vpack.c.b16 %v1351, %v1349
    %v1490 = vpack.c.b16 %v1352, %v1350
    %v1491 = vpack.c.b16 %v1355, %v1353
    %v1492 = vpack.c.b16 %v1356, %v1354
    %v1493 = vpack.c.b16 %v1359, %v1357
    %v1494 = vpack.c.b16 %v1360, %v1358
    %v1495 = vpack.c.b16 %v1363, %v1361
    %v1496 = vpack.c.b16 %v1364, %v1362
    %v1497 = vpack.c.b16 %v1367, %v1365
    %v1498 = vpack.c.b16 %v1368, %v1366
    %v1499 = vpack.c.b16 %v1371, %v1369
    %v1500 = vpack.c.b16 %v1372, %v1370
    %1629 = vmatprep.subr.bf16.mxu0 0
    %1630 = vmatpush1.bf16.msra.mxu0 %v205
    %1631 = vmatprep.subr.bf16.mxu0 0
    %1632 = vmatpush1.bf16.msra.mxu0 %v206
    %1633 = vmatprep.subr.bf16.mxu0 0
    %1634 = vmatpush1.bf16.msra.mxu0 %v207
    %1635 = vmatprep.subr.bf16.mxu0 0
    %1636 = vmatpush1.bf16.msra.mxu0 %v208
    %1637 = vmatprep.subr.bf16.mxu0 0
    %1638 = vmatpush1.bf16.msra.mxu0 %v209
    %1639 = vmatprep.subr.bf16.mxu0 0
    %1640 = vmatpush1.bf16.msra.mxu0 %v210
    %1641 = vmatprep.subr.bf16.mxu0 0
    %1642 = vmatpush1.bf16.msra.mxu0 %v211
    %1643 = vmatprep.subr.bf16.mxu0 0
    %1644 = vmatpush1.bf16.msra.mxu0 %v212
    %1645 = vmatprep.subr.bf16.mxu0 0
    %1646 = vmatpush1.bf16.msra.mxu0 %v213
    %1647 = vmatprep.subr.bf16.mxu0 0
    %1648 = vmatpush1.bf16.msra.mxu0 %v214
    %1649 = vmatprep.subr.bf16.mxu0 0
    %1650 = vmatpush1.bf16.msra.mxu0 %v215
    %1651 = vmatprep.subr.bf16.mxu0 0
    %1652 = vmatpush1.bf16.msra.mxu0 %v216
    %1653 = vmatprep.subr.bf16.mxu0 0
    %1654 = vmatpush1.bf16.msra.mxu0 %v217
    %1655 = vmatprep.subr.bf16.mxu0 0
    %1656 = vmatpush1.bf16.msra.mxu0 %v218
    %1657 = vmatprep.subr.bf16.mxu0 0
    %1658 = vmatpush1.bf16.msra.mxu0 %v219
    %1659 = vmatprep.subr.bf16.mxu0 0
    %1660 = vmatpush1.bf16.msra.mxu0 %v220
    %1661 = vmatprep.mubr.bf16.mxu0 %v1374
    %1662 = vmatmul.mubr.bf16.gmra.mrb[0].mxu0 %v1373
    %v1663 = vpop.f32.mrb[0].mxu0
    %v1664 = vadd.f32 %v352, %v1663
    %v1665 = vpop.f32.mrb[0].mxu0
    %v1666 = vpop.f32.mrb[0].mxu0
    %v1667 = vadd.f32 %v357, %v1666
    %v1668 = vpop.f32.mrb[0].mxu0
    %1669 = vmatprep.mubr.bf16.mxu0 %v1376
    %1670 = vmatmul.mubr.bf16.gmra.mrb[0].mxu0 %v1375
    %v1671 = vpop.f32.mrb[0].mxu0
    %v1672 = vadd.f32 %v362, %v1671
    %v1673 = vpop.f32.mrb[0].mxu0
    %v1674 = vpop.f32.mrb[0].mxu0
    %v1675 = vadd.f32 %v367, %v1674
    %v1676 = vpop.f32.mrb[0].mxu0
    %1677 = vmatprep.mubr.bf16.mxu0 %v1378
    %1678 = vmatmul.mubr.bf16.gmra.mrb[0].mxu0 %v1377
    %v1679 = vpop.f32.mrb[0].mxu0
    %v1680 = vadd.f32 %v372, %v1679
    %v1681 = vpop.f32.mrb[0].mxu0
    %v1682 = vpop.f32.mrb[0].mxu0
    %v1683 = vadd.f32 %v377, %v1682
    %v1684 = vpop.f32.mrb[0].mxu0
    %1685 = vmatprep.mubr.bf16.mxu0 %v1380
    %1686 = vmatmul.mubr.bf16.gmra.mrb[0].mxu0 %v1379
    %v1687 = vpop.f32.mrb[0].mxu0
    %v1688 = vadd.f32 %v382, %v1687
    %v1689 = vpop.f32.mrb[0].mxu0
    %v1690 = vpop.f32.mrb[0].mxu0
    %v1691 = vadd.f32 %v387, %v1690
    %v1692 = vpop.f32.mrb[0].mxu0
    %1693 = vmatprep.mubr.bf16.mxu0 %v1382
    %1694 = vmatmul.mubr.bf16.gmra.mrb[0].mxu0 %v1381
    %v1695 = vpop.f32.mrb[0].mxu0
    %v1696 = vadd.f32 %v392, %v1695
    %v1697 = vpop.f32.mrb[0].mxu0
    %v1698 = vpop.f32.mrb[0].mxu0
    %v1699 = vadd.f32 %v397, %v1698
    %v1700 = vpop.f32.mrb[0].mxu0
    %1701 = vmatprep.mubr.bf16.mxu0 %v1384
    %1702 = vmatmul.mubr.bf16.gmra.mrb[0].mxu0 %v1383
    %v1703 = vpop.f32.mrb[0].mxu0
    %v1704 = vadd.f32 %v402, %v1703
    %v1705 = vpop.f32.mrb[0].mxu0
    %v1706 = vpop.f32.mrb[0].mxu0
    %v1707 = vadd.f32 %v407, %v1706
    %v1708 = vpop.f32.mrb[0].mxu0
    %1709 = vmatprep.mubr.bf16.mxu0 %v1386
    %1710 = vmatmul.mubr.bf16.gmra.mrb[0].mxu0 %v1385
    %v1711 = vpop.f32.mrb[0].mxu0
    %v1712 = vadd.f32 %v412, %v1711
    %v1713 = vpop.f32.mrb[0].mxu0
    %v1714 = vpop.f32.mrb[0].mxu0
    %v1715 = vadd.f32 %v417, %v1714
    %v1716 = vpop.f32.mrb[0].mxu0
    %1717 = vmatprep.mubr.bf16.mxu0 %v1388
    %1718 = vmatmul.mubr.bf16.gmra.mrb[0].mxu0 %v1387
    %v1719 = vpop.f32.mrb[0].mxu0
    %v1720 = vadd.f32 %v422, %v1719
    %v1721 = vpop.f32.mrb[0].mxu0
    %v1722 = vpop.f32.mrb[0].mxu0
    %v1723 = vadd.f32 %v427, %v1722
    %v1724 = vpop.f32.mrb[0].mxu0
    %1725 = vmatprep.mubr.bf16.mxu0 %v1390
    %1726 = vmatmul.mubr.bf16.gmra.mrb[0].mxu0 %v1389
    %v1727 = vpop.f32.mrb[0].mxu0
    %v1728 = vadd.f32 %v432, %v1727
    %v1729 = vpop.f32.mrb[0].mxu0
    %v1730 = vpop.f32.mrb[0].mxu0
    %v1731 = vadd.f32 %v437, %v1730
    %v1732 = vpop.f32.mrb[0].mxu0
    %1733 = vmatprep.mubr.bf16.mxu0 %v1392
    %1734 = vmatmul.mubr.bf16.gmra.mrb[0].mxu0 %v1391
    %v1735 = vpop.f32.mrb[0].mxu0
    %v1736 = vadd.f32 %v442, %v1735
    %v1737 = vpop.f32.mrb[0].mxu0
    %v1738 = vpop.f32.mrb[0].mxu0
    %v1739 = vadd.f32 %v447, %v1738
    %v1740 = vpop.f32.mrb[0].mxu0
    %1741 = vmatprep.mubr.bf16.mxu0 %v1394
    %1742 = vmatmul.mubr.bf16.gmra.mrb[0].mxu0 %v1393
    %v1743 = vpop.f32.mrb[0].mxu0
    %v1744 = vadd.f32 %v452, %v1743
    %v1745 = vpop.f32.mrb[0].mxu0
    %v1746 = vpop.f32.mrb[0].mxu0
    %v1747 = vadd.f32 %v457, %v1746
    %v1748 = vpop.f32.mrb[0].mxu0
    %1749 = vmatprep.mubr.bf16.mxu0 %v1396
    %1750 = vmatmul.mubr.bf16.gmra.mrb[0].mxu0 %v1395
    %v1751 = vpop.f32.mrb[0].mxu0
    %v1752 = vadd.f32 %v462, %v1751
    %v1753 = vpop.f32.mrb[0].mxu0
    %v1754 = vpop.f32.mrb[0].mxu0
    %v1755 = vadd.f32 %v467, %v1754
    %v1756 = vpop.f32.mrb[0].mxu0
    %1757 = vmatprep.mubr.bf16.mxu0 %v1398
    %1758 = vmatmul.mubr.bf16.gmra.mrb[0].mxu0 %v1397
    %v1759 = vpop.f32.mrb[0].mxu0
    %v1760 = vadd.f32 %v472, %v1759
    %v1761 = vpop.f32.mrb[0].mxu0
    %v1762 = vpop.f32.mrb[0].mxu0
    %v1763 = vadd.f32 %v477, %v1762
    %v1764 = vpop.f32.mrb[0].mxu0
    %1765 = vmatprep.mubr.bf16.mxu0 %v1400
    %1766 = vmatmul.mubr.bf16.gmra.mrb[0].mxu0 %v1399
    %v1767 = vpop.f32.mrb[0].mxu0
    %v1768 = vadd.f32 %v482, %v1767
    %v1769 = vpop.f32.mrb[0].mxu0
    %v1770 = vpop.f32.mrb[0].mxu0
    %v1771 = vadd.f32 %v487, %v1770
    %v1772 = vpop.f32.mrb[0].mxu0
    %1773 = vmatprep.mubr.bf16.mxu0 %v1402
    %1774 = vmatmul.mubr.bf16.gmra.mrb[0].mxu0 %v1401
    %v1775 = vpop.f32.mrb[0].mxu0
    %v1776 = vadd.f32 %v492, %v1775
    %v1777 = vpop.f32.mrb[0].mxu0
    %v1778 = vpop.f32.mrb[0].mxu0
    %v1779 = vadd.f32 %v497, %v1778
    %v1780 = vpop.f32.mrb[0].mxu0
    %1781 = vmatprep.mubr.bf16.mxu0 %v1404
    %1782 = vmatmul.mubr.bf16.gmra.mrb[0].mxu0 %v1403
    %v1783 = vpop.f32.mrb[0].mxu0
    %v1784 = vadd.f32 %v502, %v1783
    %v1785 = vpop.f32.mrb[0].mxu0
    %v1786 = vpop.f32.mrb[0].mxu0
    %v1787 = vadd.f32 %v507, %v1786
    %v1788 = vpop.f32.mrb[0].mxu0
    %1789 = vmatprep.mubr.bf16.mxu0 %v1406
    %1790 = vmatmul.mubr.bf16.gmra.mrb[0].mxu0 %v1405
    %v1791 = vpop.f32.mrb[0].mxu0
    %v1792 = vadd.f32 %v512, %v1791
    %v1793 = vpop.f32.mrb[0].mxu0
    %v1794 = vpop.f32.mrb[0].mxu0
    %v1795 = vadd.f32 %v517, %v1794
    %v1796 = vpop.f32.mrb[0].mxu0
    %1797 = vmatprep.mubr.bf16.mxu0 %v1408
    %1798 = vmatmul.mubr.bf16.gmra.mrb[0].mxu0 %v1407
    %v1799 = vpop.f32.mrb[0].mxu0
    %v1800 = vadd.f32 %v522, %v1799
    %v1801 = vpop.f32.mrb[0].mxu0
    %v1802 = vpop.f32.mrb[0].mxu0
    %v1803 = vadd.f32 %v527, %v1802
    %v1804 = vpop.f32.mrb[0].mxu0
    %1805 = vmatprep.mubr.bf16.mxu0 %v1410
    %1806 = vmatmul.mubr.bf16.gmra.mrb[0].mxu0 %v1409
    %v1807 = vpop.f32.mrb[0].mxu0
    %v1808 = vadd.f32 %v532, %v1807
    %v1809 = vpop.f32.mrb[0].mxu0
    %v1810 = vpop.f32.mrb[0].mxu0
    %v1811 = vadd.f32 %v537, %v1810
    %v1812 = vpop.f32.mrb[0].mxu0
    %1813 = vmatprep.mubr.bf16.mxu0 %v1412
    %1814 = vmatmul.mubr.bf16.gmra.mrb[0].mxu0 %v1411
    %v1815 = vpop.f32.mrb[0].mxu0
    %v1816 = vadd.f32 %v542, %v1815
    %v1817 = vpop.f32.mrb[0].mxu0
    %v1818 = vpop.f32.mrb[0].mxu0
    %v1819 = vadd.f32 %v547, %v1818
    %v1820 = vpop.f32.mrb[0].mxu0
    %1821 = vmatprep.mubr.bf16.mxu0 %v1414
    %1822 = vmatmul.mubr.bf16.gmra.mrb[0].mxu0 %v1413
    %v1823 = vpop.f32.mrb[0].mxu0
    %v1824 = vadd.f32 %v552, %v1823
    %v1825 = vpop.f32.mrb[0].mxu0
    %v1826 = vpop.f32.mrb[0].mxu0
    %v1827 = vadd.f32 %v557, %v1826
    %v1828 = vpop.f32.mrb[0].mxu0
    %1829 = vmatprep.mubr.bf16.mxu0 %v1416
    %1830 = vmatmul.mubr.bf16.gmra.mrb[0].mxu0 %v1415
    %v1831 = vpop.f32.mrb[0].mxu0
    %v1832 = vadd.f32 %v562, %v1831
    %v1833 = vpop.f32.mrb[0].mxu0
    %v1834 = vpop.f32.mrb[0].mxu0
    %v1835 = vadd.f32 %v567, %v1834
    %v1836 = vpop.f32.mrb[0].mxu0
    %1837 = vmatprep.mubr.bf16.mxu0 %v1418
    %1838 = vmatmul.mubr.bf16.gmra.mrb[0].mxu0 %v1417
    %v1839 = vpop.f32.mrb[0].mxu0
    %v1840 = vadd.f32 %v572, %v1839
    %v1841 = vpop.f32.mrb[0].mxu0
    %v1842 = vpop.f32.mrb[0].mxu0
    %v1843 = vadd.f32 %v577, %v1842
    %v1844 = vpop.f32.mrb[0].mxu0
    %1845 = vmatprep.mubr.bf16.mxu0 %v1420
    %1846 = vmatmul.mubr.bf16.gmra.mrb[0].mxu0 %v1419
    %v1847 = vpop.f32.mrb[0].mxu0
    %v1848 = vadd.f32 %v582, %v1847
    %v1849 = vpop.f32.mrb[0].mxu0
    %v1850 = vpop.f32.mrb[0].mxu0
    %v1851 = vadd.f32 %v587, %v1850
    %v1852 = vpop.f32.mrb[0].mxu0
    %1853 = vmatprep.mubr.bf16.mxu0 %v1422
    %1854 = vmatmul.mubr.bf16.gmra.mrb[0].mxu0 %v1421
    %v1855 = vpop.f32.mrb[0].mxu0
    %v1856 = vadd.f32 %v592, %v1855
    %v1857 = vpop.f32.mrb[0].mxu0
    %v1858 = vpop.f32.mrb[0].mxu0
    %v1859 = vadd.f32 %v597, %v1858
    %v1860 = vpop.f32.mrb[0].mxu0
    %1861 = vmatprep.mubr.bf16.mxu0 %v1424
    %1862 = vmatmul.mubr.bf16.gmra.mrb[0].mxu0 %v1423
    %v1863 = vpop.f32.mrb[0].mxu0
    %v1864 = vadd.f32 %v602, %v1863
    %v1865 = vpop.f32.mrb[0].mxu0
    %v1866 = vpop.f32.mrb[0].mxu0
    %v1867 = vadd.f32 %v607, %v1866
    %v1868 = vpop.f32.mrb[0].mxu0
    %1869 = vmatprep.mubr.bf16.mxu0 %v1426
    %1870 = vmatmul.mubr.bf16.gmra.mrb[0].mxu0 %v1425
    %v1871 = vpop.f32.mrb[0].mxu0
    %v1872 = vadd.f32 %v612, %v1871
    %v1873 = vpop.f32.mrb[0].mxu0
    %v1874 = vpop.f32.mrb[0].mxu0
    %v1875 = vadd.f32 %v617, %v1874
    %v1876 = vpop.f32.mrb[0].mxu0
    %1877 = vmatprep.mubr.bf16.mxu0 %v1428
    %1878 = vmatmul.mubr.bf16.gmra.mrb[0].mxu0 %v1427
    %v1879 = vpop.f32.mrb[0].mxu0
    %v1880 = vadd.f32 %v622, %v1879
    %v1881 = vpop.f32.mrb[0].mxu0
    %v1882 = vpop.f32.mrb[0].mxu0
    %v1883 = vadd.f32 %v627, %v1882
    %v1884 = vpop.f32.mrb[0].mxu0
    %1885 = vmatprep.mubr.bf16.mxu0 %v1430
    %1886 = vmatmul.mubr.bf16.gmra.mrb[0].mxu0 %v1429
    %v1887 = vpop.f32.mrb[0].mxu0
    %v1888 = vadd.f32 %v632, %v1887
    %v1889 = vpop.f32.mrb[0].mxu0
    %v1890 = vpop.f32.mrb[0].mxu0
    %v1891 = vadd.f32 %v637, %v1890
    %v1892 = vpop.f32.mrb[0].mxu0
    %1893 = vmatprep.mubr.bf16.mxu0 %v1432
    %1894 = vmatmul.mubr.bf16.gmra.mrb[0].mxu0 %v1431
    %v1895 = vpop.f32.mrb[0].mxu0
    %v1896 = vadd.f32 %v642, %v1895
    %v1897 = vpop.f32.mrb[0].mxu0
    %v1898 = vpop.f32.mrb[0].mxu0
    %v1899 = vadd.f32 %v647, %v1898
    %v1900 = vpop.f32.mrb[0].mxu0
    %1901 = vmatprep.mubr.bf16.mxu0 %v1434
    %1902 = vmatmul.mubr.bf16.gmra.mrb[0].mxu0 %v1433
    %v1903 = vpop.f32.mrb[0].mxu0
    %v1904 = vadd.f32 %v652, %v1903
    %v1905 = vpop.f32.mrb[0].mxu0
    %v1906 = vpop.f32.mrb[0].mxu0
    %v1907 = vadd.f32 %v657, %v1906
    %v1908 = vpop.f32.mrb[0].mxu0
    %1909 = vmatprep.mubr.bf16.mxu0 %v1436
    %1910 = vmatmul.mubr.bf16.gmra.mrb[0].mxu0 %v1435
    %v1911 = vpop.f32.mrb[0].mxu0
    %v1912 = vadd.f32 %v662, %v1911
    %v1913 = vpop.f32.mrb[0].mxu0
    %v1914 = vpop.f32.mrb[0].mxu0
    %v1915 = vadd.f32 %v667, %v1914
    %v1916 = vpop.f32.mrb[0].mxu0
    %1917 = vmatprep.mubr.bf16.mxu0 %v1438
    %1918 = vmatmul.mubr.bf16.gmra.mrb[0].mxu0 %v1437
    %v1919 = vpop.f32.mrb[0].mxu0
    %v1920 = vadd.f32 %v672, %v1919
    %v1921 = vpop.f32.mrb[0].mxu0
    %v1922 = vpop.f32.mrb[0].mxu0
    %v1923 = vadd.f32 %v677, %v1922
    %v1924 = vpop.f32.mrb[0].mxu0
    %1925 = vmatprep.mubr.bf16.mxu0 %v1440
    %1926 = vmatmul.mubr.bf16.gmra.mrb[0].mxu0 %v1439
    %v1927 = vpop.f32.mrb[0].mxu0
    %v1928 = vadd.f32 %v682, %v1927
    %v1929 = vpop.f32.mrb[0].mxu0
    %v1930 = vpop.f32.mrb[0].mxu0
    %v1931 = vadd.f32 %v687, %v1930
    %v1932 = vpop.f32.mrb[0].mxu0
    %1933 = vmatprep.mubr.bf16.mxu0 %v1442
    %1934 = vmatmul.mubr.bf16.gmra.mrb[0].mxu0 %v1441
    %v1935 = vpop.f32.mrb[0].mxu0
    %v1936 = vadd.f32 %v692, %v1935
    %v1937 = vpop.f32.mrb[0].mxu0
    %v1938 = vpop.f32.mrb[0].mxu0
    %v1939 = vadd.f32 %v697, %v1938
    %v1940 = vpop.f32.mrb[0].mxu0
    %1941 = vmatprep.mubr.bf16.mxu0 %v1444
    %1942 = vmatmul.mubr.bf16.gmra.mrb[0].mxu0 %v1443
    %v1943 = vpop.f32.mrb[0].mxu0
    %v1944 = vadd.f32 %v702, %v1943
    %v1945 = vpop.f32.mrb[0].mxu0
    %v1946 = vpop.f32.mrb[0].mxu0
    %v1947 = vadd.f32 %v707, %v1946
    %v1948 = vpop.f32.mrb[0].mxu0
    %1949 = vmatprep.mubr.bf16.mxu0 %v1446
    %1950 = vmatmul.mubr.bf16.gmra.mrb[0].mxu0 %v1445
    %v1951 = vpop.f32.mrb[0].mxu0
    %v1952 = vadd.f32 %v712, %v1951
    %v1953 = vpop.f32.mrb[0].mxu0
    %v1954 = vpop.f32.mrb[0].mxu0
    %v1955 = vadd.f32 %v717, %v1954
    %v1956 = vpop.f32.mrb[0].mxu0
    %1957 = vmatprep.mubr.bf16.mxu0 %v1448
    %1958 = vmatmul.mubr.bf16.gmra.mrb[0].mxu0 %v1447
    %v1959 = vpop.f32.mrb[0].mxu0
    %v1960 = vadd.f32 %v722, %v1959
    %v1961 = vpop.f32.mrb[0].mxu0
    %v1962 = vpop.f32.mrb[0].mxu0
    %v1963 = vadd.f32 %v727, %v1962
    %v1964 = vpop.f32.mrb[0].mxu0
    %1965 = vmatprep.mubr.bf16.mxu0 %v1450
    %1966 = vmatmul.mubr.bf16.gmra.mrb[0].mxu0 %v1449
    %v1967 = vpop.f32.mrb[0].mxu0
    %v1968 = vadd.f32 %v732, %v1967
    %v1969 = vpop.f32.mrb[0].mxu0
    %v1970 = vpop.f32.mrb[0].mxu0
    %v1971 = vadd.f32 %v737, %v1970
    %v1972 = vpop.f32.mrb[0].mxu0
    %1973 = vmatprep.mubr.bf16.mxu0 %v1452
    %1974 = vmatmul.mubr.bf16.gmra.mrb[0].mxu0 %v1451
    %v1975 = vpop.f32.mrb[0].mxu0
    %v1976 = vadd.f32 %v742, %v1975
    %v1977 = vpop.f32.mrb[0].mxu0
    %v1978 = vpop.f32.mrb[0].mxu0
    %v1979 = vadd.f32 %v747, %v1978
    %v1980 = vpop.f32.mrb[0].mxu0
    %1981 = vmatprep.mubr.bf16.mxu0 %v1454
    %1982 = vmatmul.mubr.bf16.gmra.mrb[0].mxu0 %v1453
    %v1983 = vpop.f32.mrb[0].mxu0
    %v1984 = vadd.f32 %v752, %v1983
    %v1985 = vpop.f32.mrb[0].mxu0
    %v1986 = vpop.f32.mrb[0].mxu0
    %v1987 = vadd.f32 %v757, %v1986
    %v1988 = vpop.f32.mrb[0].mxu0
    %1989 = vmatprep.mubr.bf16.mxu0 %v1456
    %1990 = vmatmul.mubr.bf16.gmra.mrb[0].mxu0 %v1455
    %v1991 = vpop.f32.mrb[0].mxu0
    %v1992 = vadd.f32 %v762, %v1991
    %v1993 = vpop.f32.mrb[0].mxu0
    %v1994 = vpop.f32.mrb[0].mxu0
    %v1995 = vadd.f32 %v767, %v1994
    %v1996 = vpop.f32.mrb[0].mxu0
    %1997 = vmatprep.mubr.bf16.mxu0 %v1458
    %1998 = vmatmul.mubr.bf16.gmra.mrb[0].mxu0 %v1457
    %v1999 = vpop.f32.mrb[0].mxu0
    %v2000 = vadd.f32 %v772, %v1999
    %v2001 = vpop.f32.mrb[0].mxu0
    %v2002 = vpop.f32.mrb[0].mxu0
    %v2003 = vadd.f32 %v777, %v2002
    %v2004 = vpop.f32.mrb[0].mxu0
    %2005 = vmatprep.mubr.bf16.mxu0 %v1460
    %2006 = vmatmul.mubr.bf16.gmra.mrb[0].mxu0 %v1459
    %v2007 = vpop.f32.mrb[0].mxu0
    %v2008 = vadd.f32 %v782, %v2007
    %v2009 = vpop.f32.mrb[0].mxu0
    %v2010 = vpop.f32.mrb[0].mxu0
    %v2011 = vadd.f32 %v787, %v2010
    %v2012 = vpop.f32.mrb[0].mxu0
    %2013 = vmatprep.mubr.bf16.mxu0 %v1462
    %2014 = vmatmul.mubr.bf16.gmra.mrb[0].mxu0 %v1461
    %v2015 = vpop.f32.mrb[0].mxu0
    %v2016 = vadd.f32 %v792, %v2015
    %v2017 = vpop.f32.mrb[0].mxu0
    %v2018 = vpop.f32.mrb[0].mxu0
    %v2019 = vadd.f32 %v797, %v2018
    %v2020 = vpop.f32.mrb[0].mxu0
    %2021 = vmatprep.mubr.bf16.mxu0 %v1464
    %2022 = vmatmul.mubr.bf16.gmra.mrb[0].mxu0 %v1463
    %v2023 = vpop.f32.mrb[0].mxu0
    %v2024 = vadd.f32 %v802, %v2023
    %v2025 = vpop.f32.mrb[0].mxu0
    %v2026 = vpop.f32.mrb[0].mxu0
    %v2027 = vadd.f32 %v807, %v2026
    %v2028 = vpop.f32.mrb[0].mxu0
    %2029 = vmatprep.mubr.bf16.mxu0 %v1466
    %2030 = vmatmul.mubr.bf16.gmra.mrb[0].mxu0 %v1465
    %v2031 = vpop.f32.mrb[0].mxu0
    %v2032 = vadd.f32 %v812, %v2031
    %v2033 = vpop.f32.mrb[0].mxu0
    %v2034 = vpop.f32.mrb[0].mxu0
    %v2035 = vadd.f32 %v817, %v2034
    %v2036 = vpop.f32.mrb[0].mxu0
    %2037 = vmatprep.mubr.bf16.mxu0 %v1468
    %2038 = vmatmul.mubr.bf16.gmra.mrb[0].mxu0 %v1467
    %v2039 = vpop.f32.mrb[0].mxu0
    %v2040 = vadd.f32 %v822, %v2039
    %v2041 = vpop.f32.mrb[0].mxu0
    %v2042 = vpop.f32.mrb[0].mxu0
    %v2043 = vadd.f32 %v827, %v2042
    %v2044 = vpop.f32.mrb[0].mxu0
    %2045 = vmatprep.mubr.bf16.mxu0 %v1470
    %2046 = vmatmul.mubr.bf16.gmra.mrb[0].mxu0 %v1469
    %v2047 = vpop.f32.mrb[0].mxu0
    %v2048 = vadd.f32 %v832, %v2047
    %v2049 = vpop.f32.mrb[0].mxu0
    %v2050 = vpop.f32.mrb[0].mxu0
    %v2051 = vadd.f32 %v837, %v2050
    %v2052 = vpop.f32.mrb[0].mxu0
    %2053 = vmatprep.mubr.bf16.mxu0 %v1472
    %2054 = vmatmul.mubr.bf16.gmra.mrb[0].mxu0 %v1471
    %v2055 = vpop.f32.mrb[0].mxu0
    %v2056 = vadd.f32 %v842, %v2055
    %v2057 = vpop.f32.mrb[0].mxu0
    %v2058 = vpop.f32.mrb[0].mxu0
    %v2059 = vadd.f32 %v847, %v2058
    %v2060 = vpop.f32.mrb[0].mxu0
    %2061 = vmatprep.mubr.bf16.mxu0 %v1474
    %2062 = vmatmul.mubr.bf16.gmra.mrb[0].mxu0 %v1473
    %v2063 = vpop.f32.mrb[0].mxu0
    %v2064 = vadd.f32 %v852, %v2063
    %v2065 = vpop.f32.mrb[0].mxu0
    %v2066 = vpop.f32.mrb[0].mxu0
    %v2067 = vadd.f32 %v857, %v2066
    %v2068 = vpop.f32.mrb[0].mxu0
    %2069 = vmatprep.mubr.bf16.mxu0 %v1476
    %2070 = vmatmul.mubr.bf16.gmra.mrb[0].mxu0 %v1475
    %v2071 = vpop.f32.mrb[0].mxu0
    %v2072 = vadd.f32 %v862, %v2071
    %v2073 = vpop.f32.mrb[0].mxu0
    %v2074 = vpop.f32.mrb[0].mxu0
    %v2075 = vadd.f32 %v867, %v2074
    %v2076 = vpop.f32.mrb[0].mxu0
    %2077 = vmatprep.mubr.bf16.mxu0 %v1478
    %2078 = vmatmul.mubr.bf16.gmra.mrb[0].mxu0 %v1477
    %v2079 = vpop.f32.mrb[0].mxu0
    %v2080 = vadd.f32 %v872, %v2079
    %v2081 = vpop.f32.mrb[0].mxu0
    %v2082 = vpop.f32.mrb[0].mxu0
    %v2083 = vadd.f32 %v877, %v2082
    %v2084 = vpop.f32.mrb[0].mxu0
    %2085 = vmatprep.mubr.bf16.mxu0 %v1480
    %2086 = vmatmul.mubr.bf16.gmra.mrb[0].mxu0 %v1479
    %v2087 = vpop.f32.mrb[0].mxu0
    %v2088 = vadd.f32 %v882, %v2087
    %v2089 = vpop.f32.mrb[0].mxu0
    %v2090 = vpop.f32.mrb[0].mxu0
    %v2091 = vadd.f32 %v887, %v2090
    %v2092 = vpop.f32.mrb[0].mxu0
    %2093 = vmatprep.mubr.bf16.mxu0 %v1482
    %2094 = vmatmul.mubr.bf16.gmra.mrb[0].mxu0 %v1481
    %v2095 = vpop.f32.mrb[0].mxu0
    %v2096 = vadd.f32 %v892, %v2095
    %v2097 = vpop.f32.mrb[0].mxu0
    %v2098 = vpop.f32.mrb[0].mxu0
    %v2099 = vadd.f32 %v897, %v2098
    %v2100 = vpop.f32.mrb[0].mxu0
    %2101 = vmatprep.mubr.bf16.mxu0 %v1484
    %2102 = vmatmul.mubr.bf16.gmra.mrb[0].mxu0 %v1483
    %v2103 = vpop.f32.mrb[0].mxu0
    %v2104 = vadd.f32 %v902, %v2103
    %v2105 = vpop.f32.mrb[0].mxu0
    %v2106 = vpop.f32.mrb[0].mxu0
    %v2107 = vadd.f32 %v907, %v2106
    %v2108 = vpop.f32.mrb[0].mxu0
    %2109 = vmatprep.mubr.bf16.mxu0 %v1486
    %2110 = vmatmul.mubr.bf16.gmra.mrb[0].mxu0 %v1485
    %v2111 = vpop.f32.mrb[0].mxu0
    %v2112 = vadd.f32 %v912, %v2111
    %v2113 = vpop.f32.mrb[0].mxu0
    %v2114 = vpop.f32.mrb[0].mxu0
    %v2115 = vadd.f32 %v917, %v2114
    %v2116 = vpop.f32.mrb[0].mxu0
    %2117 = vmatprep.mubr.bf16.mxu0 %v1488
    %2118 = vmatmul.mubr.bf16.gmra.mrb[0].mxu0 %v1487
    %v2119 = vpop.f32.mrb[0].mxu0
    %v2120 = vadd.f32 %v922, %v2119
    %v2121 = vpop.f32.mrb[0].mxu0
    %v2122 = vpop.f32.mrb[0].mxu0
    %v2123 = vadd.f32 %v927, %v2122
    %v2124 = vpop.f32.mrb[0].mxu0
    %2125 = vmatprep.mubr.bf16.mxu0 %v1490
    %2126 = vmatmul.mubr.bf16.gmra.mrb[0].mxu0 %v1489
    %v2127 = vpop.f32.mrb[0].mxu0
    %v2128 = vadd.f32 %v932, %v2127
    %v2129 = vpop.f32.mrb[0].mxu0
    %v2130 = vpop.f32.mrb[0].mxu0
    %v2131 = vadd.f32 %v937, %v2130
    %v2132 = vpop.f32.mrb[0].mxu0
    %2133 = vmatprep.mubr.bf16.mxu0 %v1492
    %2134 = vmatmul.mubr.bf16.gmra.mrb[0].mxu0 %v1491
    %v2135 = vpop.f32.mrb[0].mxu0
    %v2136 = vadd.f32 %v942, %v2135
    %v2137 = vpop.f32.mrb[0].mxu0
    %v2138 = vpop.f32.mrb[0].mxu0
    %v2139 = vadd.f32 %v947, %v2138
    %v2140 = vpop.f32.mrb[0].mxu0
    %2141 = vmatprep.mubr.bf16.mxu0 %v1494
    %2142 = vmatmul.mubr.bf16.gmra.mrb[0].mxu0 %v1493
    %v2143 = vpop.f32.mrb[0].mxu0
    %v2144 = vadd.f32 %v952, %v2143
    %v2145 = vpop.f32.mrb[0].mxu0
    %v2146 = vpop.f32.mrb[0].mxu0
    %v2147 = vadd.f32 %v957, %v2146
    %v2148 = vpop.f32.mrb[0].mxu0
    %2149 = vmatprep.mubr.bf16.mxu0 %v1496
    %2150 = vmatmul.mubr.bf16.gmra.mrb[0].mxu0 %v1495
    %v2151 = vpop.f32.mrb[0].mxu0
    %v2152 = vadd.f32 %v962, %v2151
    %v2153 = vpop.f32.mrb[0].mxu0
    %v2154 = vpop.f32.mrb[0].mxu0
    %v2155 = vadd.f32 %v967, %v2154
    %v2156 = vpop.f32.mrb[0].mxu0
    %2157 = vmatprep.mubr.bf16.mxu0 %v1498
    %2158 = vmatmul.mubr.bf16.gmra.mrb[0].mxu0 %v1497
    %v2159 = vpop.f32.mrb[0].mxu0
    %v2160 = vadd.f32 %v972, %v2159
    %v2161 = vpop.f32.mrb[0].mxu0
    %v2162 = vpop.f32.mrb[0].mxu0
    %v2163 = vadd.f32 %v977, %v2162
    %v2164 = vpop.f32.mrb[0].mxu0
    %2165 = vmatprep.mubr.bf16.mxu0 %v1500
    %2166 = vmatmul.mubr.bf16.gmra.mrb[0].mxu0 %v1499
    %v2167 = vpop.f32.mrb[0].mxu0
    %v2168 = vadd.f32 %v982, %v2167
    %v2169 = vpop.f32.mrb[0].mxu0
    %v2170 = vpop.f32.mrb[0].mxu0
    %v2171 = vadd.f32 %v987, %v2170
    %v2172 = vpop.f32.mrb[0].mxu0
    %2173 = vdwg.mxu0
    %v2174 = vmax.f32 %v1664, 0.0
    %v2175 = vmax.f32 %v1667, 0.0
    %v2176 = vmax.f32 %v1672, 0.0
    %v2177 = vmax.f32 %v1675, 0.0
    %v2178 = vmax.f32 %v1680, 0.0
    %v2179 = vmax.f32 %v1683, 0.0
    %v2180 = vmax.f32 %v1688, 0.0
    %v2181 = vmax.f32 %v1691, 0.0
    %v2182 = vmax.f32 %v1696, 0.0
    %v2183 = vmax.f32 %v1699, 0.0
    %v2184 = vmax.f32 %v1704, 0.0
    %v2185 = vmax.f32 %v1707, 0.0
    %v2186 = vmax.f32 %v1712, 0.0
    %v2187 = vmax.f32 %v1715, 0.0
    %v2188 = vmax.f32 %v1720, 0.0
    %v2189 = vmax.f32 %v1723, 0.0
    %v2190 = vmax.f32 %v1728, 0.0
    %v2191 = vmax.f32 %v1731, 0.0
    %v2192 = vmax.f32 %v1736, 0.0
    %v2193 = vmax.f32 %v1739, 0.0
    %v2194 = vmax.f32 %v1744, 0.0
    %v2195 = vmax.f32 %v1747, 0.0
    %v2196 = vmax.f32 %v1752, 0.0
    %v2197 = vmax.f32 %v1755, 0.0
    %v2198 = vmax.f32 %v1760, 0.0
    %v2199 = vmax.f32 %v1763, 0.0
    %v2200 = vmax.f32 %v1768, 0.0
    %v2201 = vmax.f32 %v1771, 0.0
    %v2202 = vmax.f32 %v1776, 0.0
    %v2203 = vmax.f32 %v1779, 0.0
    %v2204 = vmax.f32 %v1784, 0.0
    %v2205 = vmax.f32 %v1787, 0.0
    %v2206 = vmax.f32 %v1792, 0.0
    %v2207 = vmax.f32 %v1795, 0.0
    %v2208 = vmax.f32 %v1800, 0.0
    %v2209 = vmax.f32 %v1803, 0.0
    %v2210 = vmax.f32 %v1808, 0.0
    %v2211 = vmax.f32 %v1811, 0.0
    %v2212 = vmax.f32 %v1816, 0.0
    %v2213 = vmax.f32 %v1819, 0.0
    %v2214 = vmax.f32 %v1824, 0.0
    %v2215 = vmax.f32 %v1827, 0.0
    %v2216 = vmax.f32 %v1832, 0.0
    %v2217 = vmax.f32 %v1835, 0.0
    %v2218 = vmax.f32 %v1840, 0.0
    %v2219 = vmax.f32 %v1843, 0.0
    %v2220 = vmax.f32 %v1848, 0.0
    %v2221 = vmax.f32 %v1851, 0.0
    %v2222 = vmax.f32 %v1856, 0.0
    %v2223 = vmax.f32 %v1859, 0.0
    %v2224 = vmax.f32 %v1864, 0.0
    %v2225 = vmax.f32 %v1867, 0.0
    %v2226 = vmax.f32 %v1872, 0.0
    %v2227 = vmax.f32 %v1875, 0.0
    %v2228 = vmax.f32 %v1880, 0.0
    %v2229 = vmax.f32 %v1883, 0.0
    %v2230 = vmax.f32 %v1888, 0.0
    %v2231 = vmax.f32 %v1891, 0.0
    %v2232 = vmax.f32 %v1896, 0.0
    %v2233 = vmax.f32 %v1899, 0.0
    %v2234 = vmax.f32 %v1904, 0.0
    %v2235 = vmax.f32 %v1907, 0.0
    %v2236 = vmax.f32 %v1912, 0.0
    %v2237 = vmax.f32 %v1915, 0.0
    %v2238 = vmax.f32 %v1920, 0.0
    %v2239 = vmax.f32 %v1923, 0.0
    %v2240 = vmax.f32 %v1928, 0.0
    %v2241 = vmax.f32 %v1931, 0.0
    %v2242 = vmax.f32 %v1936, 0.0
    %v2243 = vmax.f32 %v1939, 0.0
    %v2244 = vmax.f32 %v1944, 0.0
    %v2245 = vmax.f32 %v1947, 0.0
    %v2246 = vmax.f32 %v1952, 0.0
    %v2247 = vmax.f32 %v1955, 0.0
    %v2248 = vmax.f32 %v1960, 0.0
    %v2249 = vmax.f32 %v1963, 0.0
    %v2250 = vmax.f32 %v1968, 0.0
    %v2251 = vmax.f32 %v1971, 0.0
    %v2252 = vmax.f32 %v1976, 0.0
    %v2253 = vmax.f32 %v1979, 0.0
    %v2254 = vmax.f32 %v1984, 0.0
    %v2255 = vmax.f32 %v1987, 0.0
    %v2256 = vmax.f32 %v1992, 0.0
    %v2257 = vmax.f32 %v1995, 0.0
    %v2258 = vmax.f32 %v2000, 0.0
    %v2259 = vmax.f32 %v2003, 0.0
    %v2260 = vmax.f32 %v2008, 0.0
    %v2261 = vmax.f32 %v2011, 0.0
    %v2262 = vmax.f32 %v2016, 0.0
    %v2263 = vmax.f32 %v2019, 0.0
    %v2264 = vmax.f32 %v2024, 0.0
    %v2265 = vmax.f32 %v2027, 0.0
    %v2266 = vmax.f32 %v2032, 0.0
    %v2267 = vmax.f32 %v2035, 0.0
    %v2268 = vmax.f32 %v2040, 0.0
    %v2269 = vmax.f32 %v2043, 0.0
    %v2270 = vmax.f32 %v2048, 0.0
    %v2271 = vmax.f32 %v2051, 0.0
    %v2272 = vmax.f32 %v2056, 0.0
    %v2273 = vmax.f32 %v2059, 0.0
    %v2274 = vmax.f32 %v2064, 0.0
    %v2275 = vmax.f32 %v2067, 0.0
    %v2276 = vmax.f32 %v2072, 0.0
    %v2277 = vmax.f32 %v2075, 0.0
    %v2278 = vmax.f32 %v2080, 0.0
    %v2279 = vmax.f32 %v2083, 0.0
    %v2280 = vmax.f32 %v2088, 0.0
    %v2281 = vmax.f32 %v2091, 0.0
    %v2282 = vmax.f32 %v2096, 0.0
    %v2283 = vmax.f32 %v2099, 0.0
    %v2284 = vmax.f32 %v2104, 0.0
    %v2285 = vmax.f32 %v2107, 0.0
    %v2286 = vmax.f32 %v2112, 0.0
    %v2287 = vmax.f32 %v2115, 0.0
    %v2288 = vmax.f32 %v2120, 0.0
    %v2289 = vmax.f32 %v2123, 0.0
    %v2290 = vmax.f32 %v2128, 0.0
    %v2291 = vmax.f32 %v2131, 0.0
    %v2292 = vmax.f32 %v2136, 0.0
    %v2293 = vmax.f32 %v2139, 0.0
    %v2294 = vmax.f32 %v2144, 0.0
    %v2295 = vmax.f32 %v2147, 0.0
    %v2296 = vmax.f32 %v2152, 0.0
    %v2297 = vmax.f32 %v2155, 0.0
    %v2298 = vmax.f32 %v2160, 0.0
    %v2299 = vmax.f32 %v2163, 0.0
    %v2300 = vmax.f32 %v2168, 0.0
    %v2301 = vmax.f32 %v2171, 0.0
    %v2302 = vld [vmem:[#allocation2] sm:$0xff]
    %v2303 = vld [vmem:[#allocation2 + $0x8] sm:$0xff]
    %v2304 = vld [vmem:[#allocation2 + $0x10] sm:$0xff]
    %v2305 = vld [vmem:[#allocation2 + $0x18] sm:$0xff]
    %v2306 = vld [vmem:[#allocation2 + $0x20] sm:$0xff]
    %v2307 = vld [vmem:[#allocation2 + $0x28] sm:$0xff]
    %v2308 = vld [vmem:[#allocation2 + $0x30] sm:$0xff]
    %v2309 = vld [vmem:[#allocation2 + $0x38] sm:$0xff]
    %v2310 = vld [vmem:[#allocation2 + $0x40] sm:$0xff]
    %v2311 = vld [vmem:[#allocation2 + $0x48] sm:$0xff]
    %v2312 = vld [vmem:[#allocation2 + $0x50] sm:$0xff]
    %v2313 = vld [vmem:[#allocation2 + $0x58] sm:$0xff]
    %v2314 = vld [vmem:[#allocation2 + $0x60] sm:$0xff]
    %v2315 = vld [vmem:[#allocation2 + $0x68] sm:$0xff]
    %v2316 = vld [vmem:[#allocation2 + $0x70] sm:$0xff]
    %v2317 = vld [vmem:[#allocation2 + $0x78] sm:$0xff]
    %v2318 = vld [vmem:[#allocation2 + $0x80] sm:$0xff]
    %v2319 = vld [vmem:[#allocation2 + $0x88] sm:$0xff]
    %v2320 = vld [vmem:[#allocation2 + $0x90] sm:$0xff]
    %v2321 = vld [vmem:[#allocation2 + $0x98] sm:$0xff]
    %v2322 = vld [vmem:[#allocation2 + $0xa0] sm:$0xff]
    %v2323 = vld [vmem:[#allocation2 + $0xa8] sm:$0xff]
    %v2324 = vld [vmem:[#allocation2 + $0xb0] sm:$0xff]
    %v2325 = vld [vmem:[#allocation2 + $0xb8] sm:$0xff]
    %v2326 = vld [vmem:[#allocation2 + $0xc0] sm:$0xff]
    %v2327 = vld [vmem:[#allocation2 + $0xc8] sm:$0xff]
    %v2328 = vld [vmem:[#allocation2 + $0xd0] sm:$0xff]
    %v2329 = vld [vmem:[#allocation2 + $0xd8] sm:$0xff]
    %v2330 = vld [vmem:[#allocation2 + $0xe0] sm:$0xff]
    %v2331 = vld [vmem:[#allocation2 + $0xe8] sm:$0xff]
    %v2332 = vld [vmem:[#allocation2 + $0xf0] sm:$0xff]
    %v2333 = vld [vmem:[#allocation2 + $0xf8] sm:$0xff]
    %v2334 = vld [vmem:[#allocation2 + $0x100] sm:$0xff]
    %v2335 = vld [vmem:[#allocation2 + $0x108] sm:$0xff]
    %v2336 = vld [vmem:[#allocation2 + $0x110] sm:$0xff]
    %v2337 = vld [vmem:[#allocation2 + $0x118] sm:$0xff]
    %v2338 = vld [vmem:[#allocation2 + $0x120] sm:$0xff]
    %v2339 = vld [vmem:[#allocation2 + $0x128] sm:$0xff]
    %v2340 = vld [vmem:[#allocation2 + $0x130] sm:$0xff]
    %v2341 = vld [vmem:[#allocation2 + $0x138] sm:$0xff]
    %v2342 = vld [vmem:[#allocation2 + $0x140] sm:$0xff]
    %v2343 = vld [vmem:[#allocation2 + $0x148] sm:$0xff]
    %v2344 = vld [vmem:[#allocation2 + $0x150] sm:$0xff]
    %v2345 = vld [vmem:[#allocation2 + $0x158] sm:$0xff]
    %v2346 = vld [vmem:[#allocation2 + $0x160] sm:$0xff]
    %v2347 = vld [vmem:[#allocation2 + $0x168] sm:$0xff]
    %v2348 = vld [vmem:[#allocation2 + $0x170] sm:$0xff]
    %v2349 = vld [vmem:[#allocation2 + $0x178] sm:$0xff]
    %v2350 = vld [vmem:[#allocation2 + $0x180] sm:$0xff]
    %v2351 = vld [vmem:[#allocation2 + $0x188] sm:$0xff]
    %v2352 = vld [vmem:[#allocation2 + $0x190] sm:$0xff]
    %v2353 = vld [vmem:[#allocation2 + $0x198] sm:$0xff]
    %v2354 = vld [vmem:[#allocation2 + $0x1a0] sm:$0xff]
    %v2355 = vld [vmem:[#allocation2 + $0x1a8] sm:$0xff]
    %v2356 = vld [vmem:[#allocation2 + $0x1b0] sm:$0xff]
    %v2357 = vld [vmem:[#allocation2 + $0x1b8] sm:$0xff]
    %v2358 = vld [vmem:[#allocation2 + $0x1c0] sm:$0xff]
    %v2359 = vld [vmem:[#allocation2 + $0x1c8] sm:$0xff]
    %v2360 = vld [vmem:[#allocation2 + $0x1d0] sm:$0xff]
    %v2361 = vld [vmem:[#allocation2 + $0x1d8] sm:$0xff]
    %v2362 = vld [vmem:[#allocation2 + $0x1e0] sm:$0xff]
    %v2363 = vld [vmem:[#allocation2 + $0x1e8] sm:$0xff]
    %v2364 = vld [vmem:[#allocation2 + $0x1f0] sm:$0xff]
    %v2365 = vld [vmem:[#allocation2 + $0x1f8] sm:$0xff]
    %v2366 = vld [vmem:[#allocation2 + $0x200] sm:$0xff]
    %v2367 = vld [vmem:[#allocation2 + $0x208] sm:$0xff]
    %v2368 = vld [vmem:[#allocation2 + $0x210] sm:$0xff]
    %v2369 = vld [vmem:[#allocation2 + $0x218] sm:$0xff]
    %v2370 = vld [vmem:[#allocation2 + $0x220] sm:$0xff]
    %v2371 = vld [vmem:[#allocation2 + $0x228] sm:$0xff]
    %v2372 = vld [vmem:[#allocation2 + $0x230] sm:$0xff]
    %v2373 = vld [vmem:[#allocation2 + $0x238] sm:$0xff]
    %v2374 = vld [vmem:[#allocation2 + $0x240] sm:$0xff]
    %v2375 = vld [vmem:[#allocation2 + $0x248] sm:$0xff]
    %v2376 = vld [vmem:[#allocation2 + $0x250] sm:$0xff]
    %v2377 = vld [vmem:[#allocation2 + $0x258] sm:$0xff]
    %v2378 = vld [vmem:[#allocation2 + $0x260] sm:$0xff]
    %v2379 = vld [vmem:[#allocation2 + $0x268] sm:$0xff]
    %v2380 = vld [vmem:[#allocation2 + $0x270] sm:$0xff]
    %v2381 = vld [vmem:[#allocation2 + $0x278] sm:$0xff]
    %v2382 = vld [vmem:[#allocation2 + $0x280] sm:$0xff]
    %v2383 = vld [vmem:[#allocation2 + $0x288] sm:$0xff]
    %v2384 = vld [vmem:[#allocation2 + $0x290] sm:$0xff]
    %v2385 = vld [vmem:[#allocation2 + $0x298] sm:$0xff]
    %v2386 = vld [vmem:[#allocation2 + $0x2a0] sm:$0xff]
    %v2387 = vld [vmem:[#allocation2 + $0x2a8] sm:$0xff]
    %v2388 = vld [vmem:[#allocation2 + $0x2b0] sm:$0xff]
    %v2389 = vld [vmem:[#allocation2 + $0x2b8] sm:$0xff]
    %v2390 = vld [vmem:[#allocation2 + $0x2c0] sm:$0xff]
    %v2391 = vld [vmem:[#allocation2 + $0x2c8] sm:$0xff]
    %v2392 = vld [vmem:[#allocation2 + $0x2d0] sm:$0xff]
    %v2393 = vld [vmem:[#allocation2 + $0x2d8] sm:$0xff]
    %v2394 = vld [vmem:[#allocation2 + $0x2e0] sm:$0xff]
    %v2395 = vld [vmem:[#allocation2 + $0x2e8] sm:$0xff]
    %v2396 = vld [vmem:[#allocation2 + $0x2f0] sm:$0xff]
    %v2397 = vld [vmem:[#allocation2 + $0x2f8] sm:$0xff]
    %v2398 = vld [vmem:[#allocation2 + $0x300] sm:$0xff]
    %v2399 = vld [vmem:[#allocation2 + $0x308] sm:$0xff]
    %v2400 = vld [vmem:[#allocation2 + $0x310] sm:$0xff]
    %v2401 = vld [vmem:[#allocation2 + $0x318] sm:$0xff]
    %v2402 = vld [vmem:[#allocation2 + $0x320] sm:$0xff]
    %v2403 = vld [vmem:[#allocation2 + $0x328] sm:$0xff]
    %v2404 = vld [vmem:[#allocation2 + $0x330] sm:$0xff]
    %v2405 = vld [vmem:[#allocation2 + $0x338] sm:$0xff]
    %v2406 = vld [vmem:[#allocation2 + $0x340] sm:$0xff]
    %v2407 = vld [vmem:[#allocation2 + $0x348] sm:$0xff]
    %v2408 = vld [vmem:[#allocation2 + $0x350] sm:$0xff]
    %v2409 = vld [vmem:[#allocation2 + $0x358] sm:$0xff]
    %v2410 = vld [vmem:[#allocation2 + $0x360] sm:$0xff]
    %v2411 = vld [vmem:[#allocation2 + $0x368] sm:$0xff]
    %v2412 = vld [vmem:[#allocation2 + $0x370] sm:$0xff]
    %v2413 = vld [vmem:[#allocation2 + $0x378] sm:$0xff]
    %v2414 = vld [vmem:[#allocation2 + $0x380] sm:$0xff]
    %v2415 = vld [vmem:[#allocation2 + $0x388] sm:$0xff]
    %v2416 = vld [vmem:[#allocation2 + $0x390] sm:$0xff]
    %v2417 = vld [vmem:[#allocation2 + $0x398] sm:$0xff]
    %v2418 = vld [vmem:[#allocation2 + $0x3a0] sm:$0xff]
    %v2419 = vld [vmem:[#allocation2 + $0x3a8] sm:$0xff]
    %v2420 = vld [vmem:[#allocation2 + $0x3b0] sm:$0xff]
    %v2421 = vld [vmem:[#allocation2 + $0x3b8] sm:$0xff]
    %v2422 = vld [vmem:[#allocation2 + $0x3c0] sm:$0xff]
    %v2423 = vld [vmem:[#allocation2 + $0x3c8] sm:$0xff]
    %v2424 = vld [vmem:[#allocation2 + $0x3d0] sm:$0xff]
    %v2425 = vld [vmem:[#allocation2 + $0x3d8] sm:$0xff]
    %v2426 = vld [vmem:[#allocation2 + $0x3e0] sm:$0xff]
    %v2427 = vld [vmem:[#allocation2 + $0x3e8] sm:$0xff]
    %v2428 = vld [vmem:[#allocation2 + $0x3f0] sm:$0xff]
    %v2429 = vld [vmem:[#allocation2 + $0x3f8] sm:$0xff]
    %v2430 = vld [vmem:[#allocation2 + $0x400] sm:$0xff]
    %v2431 = vld [vmem:[#allocation2 + $0x408] sm:$0xff]
    %v2432 = vld [vmem:[#allocation2 + $0x410] sm:$0xff]
    %v2433 = vld [vmem:[#allocation2 + $0x418] sm:$0xff]
    %v2434 = vld [vmem:[#allocation2 + $0x420] sm:$0xff]
    %v2435 = vld [vmem:[#allocation2 + $0x428] sm:$0xff]
    %v2436 = vld [vmem:[#allocation2 + $0x430] sm:$0xff]
    %v2437 = vld [vmem:[#allocation2 + $0x438] sm:$0xff]
    %v2438 = vld [vmem:[#allocation2 + $0x440] sm:$0xff]
    %v2439 = vld [vmem:[#allocation2 + $0x448] sm:$0xff]
    %v2440 = vld [vmem:[#allocation2 + $0x450] sm:$0xff]
    %v2441 = vld [vmem:[#allocation2 + $0x458] sm:$0xff]
    %v2442 = vld [vmem:[#allocation2 + $0x460] sm:$0xff]
    %v2443 = vld [vmem:[#allocation2 + $0x468] sm:$0xff]
    %v2444 = vld [vmem:[#allocation2 + $0x470] sm:$0xff]
    %v2445 = vld [vmem:[#allocation2 + $0x478] sm:$0xff]
    %v2446 = vld [vmem:[#allocation2 + $0x480] sm:$0xff]
    %v2447 = vld [vmem:[#allocation2 + $0x488] sm:$0xff]
    %v2448 = vld [vmem:[#allocation2 + $0x490] sm:$0xff]
    %v2449 = vld [vmem:[#allocation2 + $0x498] sm:$0xff]
    %v2450 = vld [vmem:[#allocation2 + $0x4a0] sm:$0xff]
    %v2451 = vld [vmem:[#allocation2 + $0x4a8] sm:$0xff]
    %v2452 = vld [vmem:[#allocation2 + $0x4b0] sm:$0xff]
    %v2453 = vld [vmem:[#allocation2 + $0x4b8] sm:$0xff]
    %v2454 = vld [vmem:[#allocation2 + $0x4c0] sm:$0xff]
    %v2455 = vld [vmem:[#allocation2 + $0x4c8] sm:$0xff]
    %v2456 = vld [vmem:[#allocation2 + $0x4d0] sm:$0xff]
    %v2457 = vld [vmem:[#allocation2 + $0x4d8] sm:$0xff]
    %v2458 = vld [vmem:[#allocation2 + $0x4e0] sm:$0xff]
    %v2459 = vld [vmem:[#allocation2 + $0x4e8] sm:$0xff]
    %v2460 = vld [vmem:[#allocation2 + $0x4f0] sm:$0xff]
    %v2461 = vld [vmem:[#allocation2 + $0x4f8] sm:$0xff]
    %v2462 = vld [vmem:[#allocation2 + $0x500] sm:$0xff]
    %v2463 = vld [vmem:[#allocation2 + $0x508] sm:$0xff]
    %v2464 = vld [vmem:[#allocation2 + $0x510] sm:$0xff]
    %v2465 = vld [vmem:[#allocation2 + $0x518] sm:$0xff]
    %v2466 = vld [vmem:[#allocation2 + $0x520] sm:$0xff]
    %v2467 = vld [vmem:[#allocation2 + $0x528] sm:$0xff]
    %v2468 = vld [vmem:[#allocation2 + $0x530] sm:$0xff]
    %v2469 = vld [vmem:[#allocation2 + $0x538] sm:$0xff]
    %v2470 = vld [vmem:[#allocation2 + $0x540] sm:$0xff]
    %v2471 = vld [vmem:[#allocation2 + $0x548] sm:$0xff]
    %v2472 = vld [vmem:[#allocation2 + $0x550] sm:$0xff]
    %v2473 = vld [vmem:[#allocation2 + $0x558] sm:$0xff]
    %v2474 = vld [vmem:[#allocation2 + $0x560] sm:$0xff]
    %v2475 = vld [vmem:[#allocation2 + $0x568] sm:$0xff]
    %v2476 = vld [vmem:[#allocation2 + $0x570] sm:$0xff]
    %v2477 = vld [vmem:[#allocation2 + $0x578] sm:$0xff]
    %v2478 = vld [vmem:[#allocation2 + $0x580] sm:$0xff]
    %v2479 = vld [vmem:[#allocation2 + $0x588] sm:$0xff]
    %v2480 = vld [vmem:[#allocation2 + $0x590] sm:$0xff]
    %v2481 = vld [vmem:[#allocation2 + $0x598] sm:$0xff]
    %v2482 = vld [vmem:[#allocation2 + $0x5a0] sm:$0xff]
    %v2483 = vld [vmem:[#allocation2 + $0x5a8] sm:$0xff]
    %v2484 = vld [vmem:[#allocation2 + $0x5b0] sm:$0xff]
    %v2485 = vld [vmem:[#allocation2 + $0x5b8] sm:$0xff]
    %v2486 = vld [vmem:[#allocation2 + $0x5c0] sm:$0xff]
    %v2487 = vld [vmem:[#allocation2 + $0x5c8] sm:$0xff]
    %v2488 = vld [vmem:[#allocation2 + $0x5d0] sm:$0xff]
    %v2489 = vld [vmem:[#allocation2 + $0x5d8] sm:$0xff]
    %v2490 = vld [vmem:[#allocation2 + $0x5e0] sm:$0xff]
    %v2491 = vld [vmem:[#allocation2 + $0x5e8] sm:$0xff]
    %v2492 = vld [vmem:[#allocation2 + $0x5f0] sm:$0xff]
    %v2493 = vld [vmem:[#allocation2 + $0x5f8] sm:$0xff]
    %v2494 = vld [vmem:[#allocation2 + $0x600] sm:$0xff]
    %v2495 = vld [vmem:[#allocation2 + $0x608] sm:$0xff]
    %v2496 = vld [vmem:[#allocation2 + $0x610] sm:$0xff]
    %v2497 = vld [vmem:[#allocation2 + $0x618] sm:$0xff]
    %v2498 = vld [vmem:[#allocation2 + $0x620] sm:$0xff]
    %v2499 = vld [vmem:[#allocation2 + $0x628] sm:$0xff]
    %v2500 = vld [vmem:[#allocation2 + $0x630] sm:$0xff]
    %v2501 = vld [vmem:[#allocation2 + $0x638] sm:$0xff]
    %v2502 = vld [vmem:[#allocation2 + $0x640] sm:$0xff]
    %v2503 = vld [vmem:[#allocation2 + $0x648] sm:$0xff]
    %v2504 = vld [vmem:[#allocation2 + $0x650] sm:$0xff]
    %v2505 = vld [vmem:[#allocation2 + $0x658] sm:$0xff]
    %v2506 = vld [vmem:[#allocation2 + $0x660] sm:$0xff]
    %v2507 = vld [vmem:[#allocation2 + $0x668] sm:$0xff]
    %v2508 = vld [vmem:[#allocation2 + $0x670] sm:$0xff]
    %v2509 = vld [vmem:[#allocation2 + $0x678] sm:$0xff]
    %v2510 = vld [vmem:[#allocation2 + $0x680] sm:$0xff]
    %v2511 = vld [vmem:[#allocation2 + $0x688] sm:$0xff]
    %v2512 = vld [vmem:[#allocation2 + $0x690] sm:$0xff]
    %v2513 = vld [vmem:[#allocation2 + $0x698] sm:$0xff]
    %v2514 = vld [vmem:[#allocation2 + $0x6a0] sm:$0xff]
    %v2515 = vld [vmem:[#allocation2 + $0x6a8] sm:$0xff]
    %v2516 = vld [vmem:[#allocation2 + $0x6b0] sm:$0xff]
    %v2517 = vld [vmem:[#allocation2 + $0x6b8] sm:$0xff]
    %v2518 = vld [vmem:[#allocation2 + $0x6c0] sm:$0xff]
    %v2519 = vld [vmem:[#allocation2 + $0x6c8] sm:$0xff]
    %v2520 = vld [vmem:[#allocation2 + $0x6d0] sm:$0xff]
    %v2521 = vld [vmem:[#allocation2 + $0x6d8] sm:$0xff]
    %v2522 = vld [vmem:[#allocation2 + $0x6e0] sm:$0xff]
    %v2523 = vld [vmem:[#allocation2 + $0x6e8] sm:$0xff]
    %v2524 = vld [vmem:[#allocation2 + $0x6f0] sm:$0xff]
    %v2525 = vld [vmem:[#allocation2 + $0x6f8] sm:$0xff]
    %v2526 = vld [vmem:[#allocation2 + $0x700] sm:$0xff]
    %v2527 = vld [vmem:[#allocation2 + $0x708] sm:$0xff]
    %v2528 = vld [vmem:[#allocation2 + $0x710] sm:$0xff]
    %v2529 = vld [vmem:[#allocation2 + $0x718] sm:$0xff]
    %v2530 = vld [vmem:[#allocation2 + $0x720] sm:$0xff]
    %v2531 = vld [vmem:[#allocation2 + $0x728] sm:$0xff]
    %v2532 = vld [vmem:[#allocation2 + $0x730] sm:$0xff]
    %v2533 = vld [vmem:[#allocation2 + $0x738] sm:$0xff]
    %v2534 = vld [vmem:[#allocation2 + $0x740] sm:$0xff]
    %v2535 = vld [vmem:[#allocation2 + $0x748] sm:$0xff]
    %v2536 = vld [vmem:[#allocation2 + $0x750] sm:$0xff]
    %v2537 = vld [vmem:[#allocation2 + $0x758] sm:$0xff]
    %v2538 = vld [vmem:[#allocation2 + $0x760] sm:$0xff]
    %v2539 = vld [vmem:[#allocation2 + $0x768] sm:$0xff]
    %v2540 = vld [vmem:[#allocation2 + $0x770] sm:$0xff]
    %v2541 = vld [vmem:[#allocation2 + $0x778] sm:$0xff]
    %v2542 = vld [vmem:[#allocation2 + $0x780] sm:$0xff]
    %v2543 = vld [vmem:[#allocation2 + $0x788] sm:$0xff]
    %v2544 = vld [vmem:[#allocation2 + $0x790] sm:$0xff]
    %v2545 = vld [vmem:[#allocation2 + $0x798] sm:$0xff]
    %v2546 = vld [vmem:[#allocation2 + $0x7a0] sm:$0xff]
    %v2547 = vld [vmem:[#allocation2 + $0x7a8] sm:$0xff]
    %v2548 = vld [vmem:[#allocation2 + $0x7b0] sm:$0xff]
    %v2549 = vld [vmem:[#allocation2 + $0x7b8] sm:$0xff]
    %v2550 = vld [vmem:[#allocation2 + $0x7c0] sm:$0xff]
    %v2551 = vld [vmem:[#allocation2 + $0x7c8] sm:$0xff]
    %v2552 = vld [vmem:[#allocation2 + $0x7d0] sm:$0xff]
    %v2553 = vld [vmem:[#allocation2 + $0x7d8] sm:$0xff]
    %v2554 = vld [vmem:[#allocation2 + $0x7e0] sm:$0xff]
    %v2555 = vld [vmem:[#allocation2 + $0x7e8] sm:$0xff]
    %v2556 = vld [vmem:[#allocation2 + $0x7f0] sm:$0xff]
    %v2557 = vld [vmem:[#allocation2 + $0x7f8] sm:$0xff]
    %v2558 = vpack.c.bf16 %v2175, %v2174
    %v2559 = vpack.c.bf16 %v2177, %v2176
    %v2560 = vpack.c.bf16 %v2179, %v2178
    %v2561 = vpack.c.bf16 %v2181, %v2180
    %v2562 = vpack.c.bf16 %v2183, %v2182
    %v2563 = vpack.c.bf16 %v2185, %v2184
    %v2564 = vpack.c.bf16 %v2187, %v2186
    %v2565 = vpack.c.bf16 %v2189, %v2188
    %v2566 = vpack.c.bf16 %v2191, %v2190
    %v2567 = vpack.c.bf16 %v2193, %v2192
    %v2568 = vpack.c.bf16 %v2195, %v2194
    %v2569 = vpack.c.bf16 %v2197, %v2196
    %v2570 = vpack.c.bf16 %v2199, %v2198
    %v2571 = vpack.c.bf16 %v2201, %v2200
    %v2572 = vpack.c.bf16 %v2203, %v2202
    %v2573 = vpack.c.bf16 %v2205, %v2204
    %v2574 = vpack.c.bf16 %v2207, %v2206
    %v2575 = vpack.c.bf16 %v2209, %v2208
    %v2576 = vpack.c.bf16 %v2211, %v2210
    %v2577 = vpack.c.bf16 %v2213, %v2212
    %v2578 = vpack.c.bf16 %v2215, %v2214
    %v2579 = vpack.c.bf16 %v2217, %v2216
    %v2580 = vpack.c.bf16 %v2219, %v2218
    %v2581 = vpack.c.bf16 %v2221, %v2220
    %v2582 = vpack.c.bf16 %v2223, %v2222
    %v2583 = vpack.c.bf16 %v2225, %v2224
    %v2584 = vpack.c.bf16 %v2227, %v2226
    %v2585 = vpack.c.bf16 %v2229, %v2228
    %v2586 = vpack.c.bf16 %v2231, %v2230
    %v2587 = vpack.c.bf16 %v2233, %v2232
    %v2588 = vpack.c.bf16 %v2235, %v2234
    %v2589 = vpack.c.bf16 %v2237, %v2236
    %v2590 = vpack.c.bf16 %v2239, %v2238
    %v2591 = vpack.c.bf16 %v2241, %v2240
    %v2592 = vpack.c.bf16 %v2243, %v2242
    %v2593 = vpack.c.bf16 %v2245, %v2244
    %v2594 = vpack.c.bf16 %v2247, %v2246
    %v2595 = vpack.c.bf16 %v2249, %v2248
    %v2596 = vpack.c.bf16 %v2251, %v2250
    %v2597 = vpack.c.bf16 %v2253, %v2252
    %v2598 = vpack.c.bf16 %v2255, %v2254
    %v2599 = vpack.c.bf16 %v2257, %v2256
    %v2600 = vpack.c.bf16 %v2259, %v2258
    %v2601 = vpack.c.bf16 %v2261, %v2260
    %v2602 = vpack.c.bf16 %v2263, %v2262
    %v2603 = vpack.c.bf16 %v2265, %v2264
    %v2604 = vpack.c.bf16 %v2267, %v2266
    %v2605 = vpack.c.bf16 %v2269, %v2268
    %v2606 = vpack.c.bf16 %v2271, %v2270
    %v2607 = vpack.c.bf16 %v2273, %v2272
    %v2608 = vpack.c.bf16 %v2275, %v2274
    %v2609 = vpack.c.bf16 %v2277, %v2276
    %v2610 = vpack.c.bf16 %v2279, %v2278
    %v2611 = vpack.c.bf16 %v2281, %v2280
    %v2612 = vpack.c.bf16 %v2283, %v2282
    %v2613 = vpack.c.bf16 %v2285, %v2284
    %v2614 = vpack.c.bf16 %v2287, %v2286
    %v2615 = vpack.c.bf16 %v2289, %v2288
    %v2616 = vpack.c.bf16 %v2291, %v2290
    %v2617 = vpack.c.bf16 %v2293, %v2292
    %v2618 = vpack.c.bf16 %v2295, %v2294
    %v2619 = vpack.c.bf16 %v2297, %v2296
    %v2620 = vpack.c.bf16 %v2299, %v2298
    %v2621 = vpack.c.bf16 %v2301, %v2300
    %v2622 = vld [vmem:[%s4] sm:$0xff]
    %v2623 = vld [vmem:[%s4 + $0x8] sm:$0xff]
    %v2624 = vld [vmem:[%s4 + $0x10] sm:$0xff]
    %v2625 = vld [vmem:[%s4 + $0x18] sm:$0xff]
    %v2626 = vld [vmem:[%s4 + $0x20] sm:$0xff]
    %v2627 = vld [vmem:[%s4 + $0x28] sm:$0xff]
    %v2628 = vld [vmem:[%s4 + $0x30] sm:$0xff]
    %v2629 = vld [vmem:[%s4 + $0x38] sm:$0xff]
    %v2630 = vld [vmem:[%s4 + $0x40] sm:$0xff]
    %v2631 = vld [vmem:[%s4 + $0x48] sm:$0xff]
    %v2632 = vld [vmem:[%s4 + $0x50] sm:$0xff]
    %v2633 = vld [vmem:[%s4 + $0x58] sm:$0xff]
    %v2634 = vld [vmem:[%s4 + $0x60] sm:$0xff]
    %v2635 = vld [vmem:[%s4 + $0x68] sm:$0xff]
    %v2636 = vld [vmem:[%s4 + $0x70] sm:$0xff]
    %v2637 = vld [vmem:[%s4 + $0x78] sm:$0xff]
    %v2638 = vld [vmem:[%s4 + $0x80] sm:$0xff]
    %v2639 = vld [vmem:[%s4 + $0x88] sm:$0xff]
    %v2640 = vld [vmem:[%s4 + $0x90] sm:$0xff]
    %v2641 = vld [vmem:[%s4 + $0x98] sm:$0xff]
    %v2642 = vld [vmem:[%s4 + $0xa0] sm:$0xff]
    %v2643 = vld [vmem:[%s4 + $0xa8] sm:$0xff]
    %v2644 = vld [vmem:[%s4 + $0xb0] sm:$0xff]
    %v2645 = vld [vmem:[%s4 + $0xb8] sm:$0xff]
    %v2646 = vld [vmem:[%s4 + $0xc0] sm:$0xff]
    %v2647 = vld [vmem:[%s4 + $0xc8] sm:$0xff]
    %v2648 = vld [vmem:[%s4 + $0xd0] sm:$0xff]
    %v2649 = vld [vmem:[%s4 + $0xd8] sm:$0xff]
    %v2650 = vld [vmem:[%s4 + $0xe0] sm:$0xff]
    %v2651 = vld [vmem:[%s4 + $0xe8] sm:$0xff]
    %v2652 = vld [vmem:[%s4 + $0xf0] sm:$0xff]
    %v2653 = vld [vmem:[%s4 + $0xf8] sm:$0xff]
    %v2654 = vld [vmem:[%s4 + $0x100] sm:$0xff]
    %v2655 = vld [vmem:[%s4 + $0x108] sm:$0xff]
    %v2656 = vld [vmem:[%s4 + $0x110] sm:$0xff]
    %v2657 = vld [vmem:[%s4 + $0x118] sm:$0xff]
    %v2658 = vld [vmem:[%s4 + $0x120] sm:$0xff]
    %v2659 = vld [vmem:[%s4 + $0x128] sm:$0xff]
    %v2660 = vld [vmem:[%s4 + $0x130] sm:$0xff]
    %v2661 = vld [vmem:[%s4 + $0x138] sm:$0xff]
    %v2662 = vld [vmem:[%s4 + $0x140] sm:$0xff]
    %v2663 = vld [vmem:[%s4 + $0x148] sm:$0xff]
    %v2664 = vld [vmem:[%s4 + $0x150] sm:$0xff]
    %v2665 = vld [vmem:[%s4 + $0x158] sm:$0xff]
    %v2666 = vld [vmem:[%s4 + $0x160] sm:$0xff]
    %v2667 = vld [vmem:[%s4 + $0x168] sm:$0xff]
    %v2668 = vld [vmem:[%s4 + $0x170] sm:$0xff]
    %v2669 = vld [vmem:[%s4 + $0x178] sm:$0xff]
    %v2670 = vld [vmem:[%s4 + $0x180] sm:$0xff]
    %v2671 = vld [vmem:[%s4 + $0x188] sm:$0xff]
    %v2672 = vld [vmem:[%s4 + $0x190] sm:$0xff]
    %v2673 = vld [vmem:[%s4 + $0x198] sm:$0xff]
    %v2674 = vld [vmem:[%s4 + $0x1a0] sm:$0xff]
    %v2675 = vld [vmem:[%s4 + $0x1a8] sm:$0xff]
    %v2676 = vld [vmem:[%s4 + $0x1b0] sm:$0xff]
    %v2677 = vld [vmem:[%s4 + $0x1b8] sm:$0xff]
    %v2678 = vld [vmem:[%s4 + $0x1c0] sm:$0xff]
    %v2679 = vld [vmem:[%s4 + $0x1c8] sm:$0xff]
    %v2680 = vld [vmem:[%s4 + $0x1d0] sm:$0xff]
    %v2681 = vld [vmem:[%s4 + $0x1d8] sm:$0xff]
    %v2682 = vld [vmem:[%s4 + $0x1e0] sm:$0xff]
    %v2683 = vld [vmem:[%s4 + $0x1e8] sm:$0xff]
    %v2684 = vld [vmem:[%s4 + $0x1f0] sm:$0xff]
    %v2685 = vld [vmem:[%s4 + $0x1f8] sm:$0xff]
    %2687 = vset.pattern.permute.xlu0 0
    %2688 = vperm.xlu0 %2687, %v2622
    %v2689 = vpop.permute.xlu0 %2688
    %2692 = vset.pattern.permute.xlu0 0
    %2693 = vperm.xlu0 %2692, %v2623
    %v2694 = vpop.permute.xlu0 %2693
    %2697 = vset.pattern.permute.xlu0 0
    %2698 = vperm.xlu0 %2697, %v2624
    %v2699 = vpop.permute.xlu0 %2698
    %2702 = vset.pattern.permute.xlu0 0
    %2703 = vperm.xlu0 %2702, %v2625
    %v2704 = vpop.permute.xlu0 %2703
    %2707 = vset.pattern.permute.xlu0 0
    %2708 = vperm.xlu0 %2707, %v2626
    %v2709 = vpop.permute.xlu0 %2708
    %2712 = vset.pattern.permute.xlu0 0
    %2713 = vperm.xlu0 %2712, %v2627
    %v2714 = vpop.permute.xlu0 %2713
    %2717 = vset.pattern.permute.xlu0 0
    %2718 = vperm.xlu0 %2717, %v2628
    %v2719 = vpop.permute.xlu0 %2718
    %2722 = vset.pattern.permute.xlu0 0
    %2723 = vperm.xlu0 %2722, %v2629
    %v2724 = vpop.permute.xlu0 %2723
    %2727 = vset.pattern.permute.xlu0 0
    %2728 = vperm.xlu0 %2727, %v2630
    %v2729 = vpop.permute.xlu0 %2728
    %2732 = vset.pattern.permute.xlu0 0
    %2733 = vperm.xlu0 %2732, %v2631
    %v2734 = vpop.permute.xlu0 %2733
    %2737 = vset.pattern.permute.xlu0 0
    %2738 = vperm.xlu0 %2737, %v2632
    %v2739 = vpop.permute.xlu0 %2738
    %2742 = vset.pattern.permute.xlu0 0
    %2743 = vperm.xlu0 %2742, %v2633
    %v2744 = vpop.permute.xlu0 %2743
    %2747 = vset.pattern.permute.xlu0 0
    %2748 = vperm.xlu0 %2747, %v2634
    %v2749 = vpop.permute.xlu0 %2748
    %2752 = vset.pattern.permute.xlu0 0
    %2753 = vperm.xlu0 %2752, %v2635
    %v2754 = vpop.permute.xlu0 %2753
    %2757 = vset.pattern.permute.xlu0 0
    %2758 = vperm.xlu0 %2757, %v2636
    %v2759 = vpop.permute.xlu0 %2758
    %2762 = vset.pattern.permute.xlu0 0
    %2763 = vperm.xlu0 %2762, %v2637
    %v2764 = vpop.permute.xlu0 %2763
    %2767 = vset.pattern.permute.xlu0 0
    %2768 = vperm.xlu0 %2767, %v2638
    %v2769 = vpop.permute.xlu0 %2768
    %2772 = vset.pattern.permute.xlu0 0
    %2773 = vperm.xlu0 %2772, %v2639
    %v2774 = vpop.permute.xlu0 %2773
    %2777 = vset.pattern.permute.xlu0 0
    %2778 = vperm.xlu0 %2777, %v2640
    %v2779 = vpop.permute.xlu0 %2778
    %2782 = vset.pattern.permute.xlu0 0
    %2783 = vperm.xlu0 %2782, %v2641
    %v2784 = vpop.permute.xlu0 %2783
    %2787 = vset.pattern.permute.xlu0 0
    %2788 = vperm.xlu0 %2787, %v2642
    %v2789 = vpop.permute.xlu0 %2788
    %2792 = vset.pattern.permute.xlu0 0
    %2793 = vperm.xlu0 %2792, %v2643
    %v2794 = vpop.permute.xlu0 %2793
    %2797 = vset.pattern.permute.xlu0 0
    %2798 = vperm.xlu0 %2797, %v2644
    %v2799 = vpop.permute.xlu0 %2798
    %2802 = vset.pattern.permute.xlu0 0
    %2803 = vperm.xlu0 %2802, %v2645
    %v2804 = vpop.permute.xlu0 %2803
    %2807 = vset.pattern.permute.xlu0 0
    %2808 = vperm.xlu0 %2807, %v2646
    %v2809 = vpop.permute.xlu0 %2808
    %2812 = vset.pattern.permute.xlu0 0
    %2813 = vperm.xlu0 %2812, %v2647
    %v2814 = vpop.permute.xlu0 %2813
    %2817 = vset.pattern.permute.xlu0 0
    %2818 = vperm.xlu0 %2817, %v2648
    %v2819 = vpop.permute.xlu0 %2818
    %2822 = vset.pattern.permute.xlu0 0
    %2823 = vperm.xlu0 %2822, %v2649
    %v2824 = vpop.permute.xlu0 %2823
    %2827 = vset.pattern.permute.xlu0 0
    %2828 = vperm.xlu0 %2827, %v2650
    %v2829 = vpop.permute.xlu0 %2828
    %2832 = vset.pattern.permute.xlu0 0
    %2833 = vperm.xlu0 %2832, %v2651
    %v2834 = vpop.permute.xlu0 %2833
    %2837 = vset.pattern.permute.xlu0 0
    %2838 = vperm.xlu0 %2837, %v2652
    %v2839 = vpop.permute.xlu0 %2838
    %2842 = vset.pattern.permute.xlu0 0
    %2843 = vperm.xlu0 %2842, %v2653
    %v2844 = vpop.permute.xlu0 %2843
    %2847 = vset.pattern.permute.xlu0 0
    %2848 = vperm.xlu0 %2847, %v2654
    %v2849 = vpop.permute.xlu0 %2848
    %2852 = vset.pattern.permute.xlu0 0
    %2853 = vperm.xlu0 %2852, %v2655
    %v2854 = vpop.permute.xlu0 %2853
    %2857 = vset.pattern.permute.xlu0 0
    %2858 = vperm.xlu0 %2857, %v2656
    %v2859 = vpop.permute.xlu0 %2858
    %2862 = vset.pattern.permute.xlu0 0
    %2863 = vperm.xlu0 %2862, %v2657
    %v2864 = vpop.permute.xlu0 %2863
    %2867 = vset.pattern.permute.xlu0 0
    %2868 = vperm.xlu0 %2867, %v2658
    %v2869 = vpop.permute.xlu0 %2868
    %2872 = vset.pattern.permute.xlu0 0
    %2873 = vperm.xlu0 %2872, %v2659
    %v2874 = vpop.permute.xlu0 %2873
    %2877 = vset.pattern.permute.xlu0 0
    %2878 = vperm.xlu0 %2877, %v2660
    %v2879 = vpop.permute.xlu0 %2878
    %2882 = vset.pattern.permute.xlu0 0
    %2883 = vperm.xlu0 %2882, %v2661
    %v2884 = vpop.permute.xlu0 %2883
    %2887 = vset.pattern.permute.xlu0 0
    %2888 = vperm.xlu0 %2887, %v2662
    %v2889 = vpop.permute.xlu0 %2888
    %2892 = vset.pattern.permute.xlu0 0
    %2893 = vperm.xlu0 %2892, %v2663
    %v2894 = vpop.permute.xlu0 %2893
    %2897 = vset.pattern.permute.xlu0 0
    %2898 = vperm.xlu0 %2897, %v2664
    %v2899 = vpop.permute.xlu0 %2898
    %2902 = vset.pattern.permute.xlu0 0
    %2903 = vperm.xlu0 %2902, %v2665
    %v2904 = vpop.permute.xlu0 %2903
    %2907 = vset.pattern.permute.xlu0 0
    %2908 = vperm.xlu0 %2907, %v2666
    %v2909 = vpop.permute.xlu0 %2908
    %2912 = vset.pattern.permute.xlu0 0
    %2913 = vperm.xlu0 %2912, %v2667
    %v2914 = vpop.permute.xlu0 %2913
    %2917 = vset.pattern.permute.xlu0 0
    %2918 = vperm.xlu0 %2917, %v2668
    %v2919 = vpop.permute.xlu0 %2918
    %2922 = vset.pattern.permute.xlu0 0
    %2923 = vperm.xlu0 %2922, %v2669
    %v2924 = vpop.permute.xlu0 %2923
    %2927 = vset.pattern.permute.xlu0 0
    %2928 = vperm.xlu0 %2927, %v2670
    %v2929 = vpop.permute.xlu0 %2928
    %2932 = vset.pattern.permute.xlu0 0
    %2933 = vperm.xlu0 %2932, %v2671
    %v2934 = vpop.permute.xlu0 %2933
    %2937 = vset.pattern.permute.xlu0 0
    %2938 = vperm.xlu0 %2937, %v2672
    %v2939 = vpop.permute.xlu0 %2938
    %2942 = vset.pattern.permute.xlu0 0
    %2943 = vperm.xlu0 %2942, %v2673
    %v2944 = vpop.permute.xlu0 %2943
    %2947 = vset.pattern.permute.xlu0 0
    %2948 = vperm.xlu0 %2947, %v2674
    %v2949 = vpop.permute.xlu0 %2948
    %2952 = vset.pattern.permute.xlu0 0
    %2953 = vperm.xlu0 %2952, %v2675
    %v2954 = vpop.permute.xlu0 %2953
    %2957 = vset.pattern.permute.xlu0 0
    %2958 = vperm.xlu0 %2957, %v2676
    %v2959 = vpop.permute.xlu0 %2958
    %2962 = vset.pattern.permute.xlu0 0
    %2963 = vperm.xlu0 %2962, %v2677
    %v2964 = vpop.permute.xlu0 %2963
    %2967 = vset.pattern.permute.xlu0 0
    %2968 = vperm.xlu0 %2967, %v2678
    %v2969 = vpop.permute.xlu0 %2968
    %2972 = vset.pattern.permute.xlu0 0
    %2973 = vperm.xlu0 %2972, %v2679
    %v2974 = vpop.permute.xlu0 %2973
    %2977 = vset.pattern.permute.xlu0 0
    %2978 = vperm.xlu0 %2977, %v2680
    %v2979 = vpop.permute.xlu0 %2978
    %2982 = vset.pattern.permute.xlu0 0
    %2983 = vperm.xlu0 %2982, %v2681
    %v2984 = vpop.permute.xlu0 %2983
    %2987 = vset.pattern.permute.xlu0 0
    %2988 = vperm.xlu0 %2987, %v2682
    %v2989 = vpop.permute.xlu0 %2988
    %2992 = vset.pattern.permute.xlu0 0
    %2993 = vperm.xlu0 %2992, %v2683
    %v2994 = vpop.permute.xlu0 %2993
    %2997 = vset.pattern.permute.xlu0 0
    %2998 = vperm.xlu0 %2997, %v2684
    %v2999 = vpop.permute.xlu0 %2998
    %3002 = vset.pattern.permute.xlu0 0
    %3003 = vperm.xlu0 %3002, %v2685
    %v3004 = vpop.permute.xlu0 %3003
    %v3262 = vunpack.c.l.b16 %v2302
    %v3263 = vunpack.c.h.b16 %v2302
    %v3264 = vunpack.c.l.b16 %v2303
    %v3265 = vunpack.c.h.b16 %v2303
    %v3266 = vunpack.c.l.b16 %v2304
    %v3267 = vunpack.c.h.b16 %v2304
    %v3268 = vunpack.c.l.b16 %v2305
    %v3269 = vunpack.c.h.b16 %v2305
    %v3270 = vunpack.c.l.b16 %v2306
    %v3271 = vunpack.c.h.b16 %v2306
    %v3272 = vunpack.c.l.b16 %v2307
    %v3273 = vunpack.c.h.b16 %v2307
    %v3274 = vunpack.c.l.b16 %v2308
    %v3275 = vunpack.c.h.b16 %v2308
    %v3276 = vunpack.c.l.b16 %v2309
    %v3277 = vunpack.c.h.b16 %v2309
    %v3278 = vunpack.c.l.b16 %v2310
    %v3279 = vunpack.c.h.b16 %v2310
    %v3280 = vunpack.c.l.b16 %v2311
    %v3281 = vunpack.c.h.b16 %v2311
    %v3282 = vunpack.c.l.b16 %v2312
    %v3283 = vunpack.c.h.b16 %v2312
    %v3284 = vunpack.c.l.b16 %v2313
    %v3285 = vunpack.c.h.b16 %v2313
    %v3286 = vunpack.c.l.b16 %v2314
    %v3287 = vunpack.c.h.b16 %v2314
    %v3288 = vunpack.c.l.b16 %v2315
    %v3289 = vunpack.c.h.b16 %v2315
    %v3290 = vunpack.c.l.b16 %v2316
    %v3291 = vunpack.c.h.b16 %v2316
    %v3292 = vunpack.c.l.b16 %v2317
    %v3293 = vunpack.c.h.b16 %v2317
    %v3294 = vunpack.c.l.b16 %v2318
    %v3295 = vunpack.c.h.b16 %v2318
    %v3296 = vunpack.c.l.b16 %v2319
    %v3297 = vunpack.c.h.b16 %v2319
    %v3298 = vunpack.c.l.b16 %v2320
    %v3299 = vunpack.c.h.b16 %v2320
    %v3300 = vunpack.c.l.b16 %v2321
    %v3301 = vunpack.c.h.b16 %v2321
    %v3302 = vunpack.c.l.b16 %v2322
    %v3303 = vunpack.c.h.b16 %v2322
    %v3304 = vunpack.c.l.b16 %v2323
    %v3305 = vunpack.c.h.b16 %v2323
    %v3306 = vunpack.c.l.b16 %v2324
    %v3307 = vunpack.c.h.b16 %v2324
    %v3308 = vunpack.c.l.b16 %v2325
    %v3309 = vunpack.c.h.b16 %v2325
    %v3310 = vunpack.c.l.b16 %v2326
    %v3311 = vunpack.c.h.b16 %v2326
    %v3312 = vunpack.c.l.b16 %v2327
    %v3313 = vunpack.c.h.b16 %v2327
    %v3314 = vunpack.c.l.b16 %v2328
    %v3315 = vunpack.c.h.b16 %v2328
    %v3316 = vunpack.c.l.b16 %v2329
    %v3317 = vunpack.c.h.b16 %v2329
    %v3318 = vunpack.c.l.b16 %v2330
    %v3319 = vunpack.c.h.b16 %v2330
    %v3320 = vunpack.c.l.b16 %v2331
    %v3321 = vunpack.c.h.b16 %v2331
    %v3322 = vunpack.c.l.b16 %v2332
    %v3323 = vunpack.c.h.b16 %v2332
    %v3324 = vunpack.c.l.b16 %v2333
    %v3325 = vunpack.c.h.b16 %v2333
    %v3326 = vunpack.c.l.b16 %v2334
    %v3327 = vunpack.c.h.b16 %v2334
    %v3328 = vunpack.c.l.b16 %v2335
    %v3329 = vunpack.c.h.b16 %v2335
    %v3330 = vunpack.c.l.b16 %v2336
    %v3331 = vunpack.c.h.b16 %v2336
    %v3332 = vunpack.c.l.b16 %v2337
    %v3333 = vunpack.c.h.b16 %v2337
    %v3334 = vunpack.c.l.b16 %v2338
    %v3335 = vunpack.c.h.b16 %v2338
    %v3336 = vunpack.c.l.b16 %v2339
    %v3337 = vunpack.c.h.b16 %v2339
    %v3338 = vunpack.c.l.b16 %v2340
    %v3339 = vunpack.c.h.b16 %v2340
    %v3340 = vunpack.c.l.b16 %v2341
    %v3341 = vunpack.c.h.b16 %v2341
    %v3342 = vunpack.c.l.b16 %v2342
    %v3343 = vunpack.c.h.b16 %v2342
    %v3344 = vunpack.c.l.b16 %v2343
    %v3345 = vunpack.c.h.b16 %v2343
    %v3346 = vunpack.c.l.b16 %v2344
    %v3347 = vunpack.c.h.b16 %v2344
    %v3348 = vunpack.c.l.b16 %v2345
    %v3349 = vunpack.c.h.b16 %v2345
    %v3350 = vunpack.c.l.b16 %v2346
    %v3351 = vunpack.c.h.b16 %v2346
    %v3352 = vunpack.c.l.b16 %v2347
    %v3353 = vunpack.c.h.b16 %v2347
    %v3354 = vunpack.c.l.b16 %v2348
    %v3355 = vunpack.c.h.b16 %v2348
    %v3356 = vunpack.c.l.b16 %v2349
    %v3357 = vunpack.c.h.b16 %v2349
    %v3358 = vunpack.c.l.b16 %v2350
    %v3359 = vunpack.c.h.b16 %v2350
    %v3360 = vunpack.c.l.b16 %v2351
    %v3361 = vunpack.c.h.b16 %v2351
    %v3362 = vunpack.c.l.b16 %v2352
    %v3363 = vunpack.c.h.b16 %v2352
    %v3364 = vunpack.c.l.b16 %v2353
    %v3365 = vunpack.c.h.b16 %v2353
    %v3366 = vunpack.c.l.b16 %v2354
    %v3367 = vunpack.c.h.b16 %v2354
    %v3368 = vunpack.c.l.b16 %v2355
    %v3369 = vunpack.c.h.b16 %v2355
    %v3370 = vunpack.c.l.b16 %v2356
    %v3371 = vunpack.c.h.b16 %v2356
    %v3372 = vunpack.c.l.b16 %v2357
    %v3373 = vunpack.c.h.b16 %v2357
    %v3374 = vunpack.c.l.b16 %v2358
    %v3375 = vunpack.c.h.b16 %v2358
    %v3376 = vunpack.c.l.b16 %v2359
    %v3377 = vunpack.c.h.b16 %v2359
    %v3378 = vunpack.c.l.b16 %v2360
    %v3379 = vunpack.c.h.b16 %v2360
    %v3380 = vunpack.c.l.b16 %v2361
    %v3381 = vunpack.c.h.b16 %v2361
    %v3382 = vunpack.c.l.b16 %v2362
    %v3383 = vunpack.c.h.b16 %v2362
    %v3384 = vunpack.c.l.b16 %v2363
    %v3385 = vunpack.c.h.b16 %v2363
    %v3386 = vunpack.c.l.b16 %v2364
    %v3387 = vunpack.c.h.b16 %v2364
    %v3388 = vunpack.c.l.b16 %v2365
    %v3389 = vunpack.c.h.b16 %v2365
    %v3390 = vunpack.c.l.b16 %v2366
    %v3391 = vunpack.c.h.b16 %v2366
    %v3392 = vunpack.c.l.b16 %v2367
    %v3393 = vunpack.c.h.b16 %v2367
    %v3394 = vunpack.c.l.b16 %v2368
    %v3395 = vunpack.c.h.b16 %v2368
    %v3396 = vunpack.c.l.b16 %v2369
    %v3397 = vunpack.c.h.b16 %v2369
    %v3398 = vunpack.c.l.b16 %v2370
    %v3399 = vunpack.c.h.b16 %v2370
    %v3400 = vunpack.c.l.b16 %v2371
    %v3401 = vunpack.c.h.b16 %v2371
    %v3402 = vunpack.c.l.b16 %v2372
    %v3403 = vunpack.c.h.b16 %v2372
    %v3404 = vunpack.c.l.b16 %v2373
    %v3405 = vunpack.c.h.b16 %v2373
    %v3406 = vunpack.c.l.b16 %v2374
    %v3407 = vunpack.c.h.b16 %v2374
    %v3408 = vunpack.c.l.b16 %v2375
    %v3409 = vunpack.c.h.b16 %v2375
    %v3410 = vunpack.c.l.b16 %v2376
    %v3411 = vunpack.c.h.b16 %v2376
    %v3412 = vunpack.c.l.b16 %v2377
    %v3413 = vunpack.c.h.b16 %v2377
    %v3414 = vunpack.c.l.b16 %v2378
    %v3415 = vunpack.c.h.b16 %v2378
    %v3416 = vunpack.c.l.b16 %v2379
    %v3417 = vunpack.c.h.b16 %v2379
    %v3418 = vunpack.c.l.b16 %v2380
    %v3419 = vunpack.c.h.b16 %v2380
    %v3420 = vunpack.c.l.b16 %v2381
    %v3421 = vunpack.c.h.b16 %v2381
    %v3422 = vunpack.c.l.b16 %v2382
    %v3423 = vunpack.c.h.b16 %v2382
    %v3424 = vunpack.c.l.b16 %v2383
    %v3425 = vunpack.c.h.b16 %v2383
    %v3426 = vunpack.c.l.b16 %v2384
    %v3427 = vunpack.c.h.b16 %v2384
    %v3428 = vunpack.c.l.b16 %v2385
    %v3429 = vunpack.c.h.b16 %v2385
    %v3430 = vunpack.c.l.b16 %v2386
    %v3431 = vunpack.c.h.b16 %v2386
    %v3432 = vunpack.c.l.b16 %v2387
    %v3433 = vunpack.c.h.b16 %v2387
    %v3434 = vunpack.c.l.b16 %v2388
    %v3435 = vunpack.c.h.b16 %v2388
    %v3436 = vunpack.c.l.b16 %v2389
    %v3437 = vunpack.c.h.b16 %v2389
    %v3438 = vunpack.c.l.b16 %v2390
    %v3439 = vunpack.c.h.b16 %v2390
    %v3440 = vunpack.c.l.b16 %v2391
    %v3441 = vunpack.c.h.b16 %v2391
    %v3442 = vunpack.c.l.b16 %v2392
    %v3443 = vunpack.c.h.b16 %v2392
    %v3444 = vunpack.c.l.b16 %v2393
    %v3445 = vunpack.c.h.b16 %v2393
    %v3446 = vunpack.c.l.b16 %v2394
    %v3447 = vunpack.c.h.b16 %v2394
    %v3448 = vunpack.c.l.b16 %v2395
    %v3449 = vunpack.c.h.b16 %v2395
    %v3450 = vunpack.c.l.b16 %v2396
    %v3451 = vunpack.c.h.b16 %v2396
    %v3452 = vunpack.c.l.b16 %v2397
    %v3453 = vunpack.c.h.b16 %v2397
    %v3454 = vunpack.c.l.b16 %v2398
    %v3455 = vunpack.c.h.b16 %v2398
    %v3456 = vunpack.c.l.b16 %v2399
    %v3457 = vunpack.c.h.b16 %v2399
    %v3458 = vunpack.c.l.b16 %v2400
    %v3459 = vunpack.c.h.b16 %v2400
    %v3460 = vunpack.c.l.b16 %v2401
    %v3461 = vunpack.c.h.b16 %v2401
    %v3462 = vunpack.c.l.b16 %v2402
    %v3463 = vunpack.c.h.b16 %v2402
    %v3464 = vunpack.c.l.b16 %v2403
    %v3465 = vunpack.c.h.b16 %v2403
    %v3466 = vunpack.c.l.b16 %v2404
    %v3467 = vunpack.c.h.b16 %v2404
    %v3468 = vunpack.c.l.b16 %v2405
    %v3469 = vunpack.c.h.b16 %v2405
    %v3470 = vunpack.c.l.b16 %v2406
    %v3471 = vunpack.c.h.b16 %v2406
    %v3472 = vunpack.c.l.b16 %v2407
    %v3473 = vunpack.c.h.b16 %v2407
    %v3474 = vunpack.c.l.b16 %v2408
    %v3475 = vunpack.c.h.b16 %v2408
    %v3476 = vunpack.c.l.b16 %v2409
    %v3477 = vunpack.c.h.b16 %v2409
    %v3478 = vunpack.c.l.b16 %v2410
    %v3479 = vunpack.c.h.b16 %v2410
    %v3480 = vunpack.c.l.b16 %v2411
    %v3481 = vunpack.c.h.b16 %v2411
    %v3482 = vunpack.c.l.b16 %v2412
    %v3483 = vunpack.c.h.b16 %v2412
    %v3484 = vunpack.c.l.b16 %v2413
    %v3485 = vunpack.c.h.b16 %v2413
    %v3486 = vunpack.c.l.b16 %v2414
    %v3487 = vunpack.c.h.b16 %v2414
    %v3488 = vunpack.c.l.b16 %v2415
    %v3489 = vunpack.c.h.b16 %v2415
    %v3490 = vunpack.c.l.b16 %v2416
    %v3491 = vunpack.c.h.b16 %v2416
    %v3492 = vunpack.c.l.b16 %v2417
    %v3493 = vunpack.c.h.b16 %v2417
    %v3494 = vunpack.c.l.b16 %v2418
    %v3495 = vunpack.c.h.b16 %v2418
    %v3496 = vunpack.c.l.b16 %v2419
    %v3497 = vunpack.c.h.b16 %v2419
    %v3498 = vunpack.c.l.b16 %v2420
    %v3499 = vunpack.c.h.b16 %v2420
    %v3500 = vunpack.c.l.b16 %v2421
    %v3501 = vunpack.c.h.b16 %v2421
    %v3502 = vunpack.c.l.b16 %v2422
    %v3503 = vunpack.c.h.b16 %v2422
    %v3504 = vunpack.c.l.b16 %v2423
    %v3505 = vunpack.c.h.b16 %v2423
    %v3506 = vunpack.c.l.b16 %v2424
    %v3507 = vunpack.c.h.b16 %v2424
    %v3508 = vunpack.c.l.b16 %v2425
    %v3509 = vunpack.c.h.b16 %v2425
    %v3510 = vunpack.c.l.b16 %v2426
    %v3511 = vunpack.c.h.b16 %v2426
    %v3512 = vunpack.c.l.b16 %v2427
    %v3513 = vunpack.c.h.b16 %v2427
    %v3514 = vunpack.c.l.b16 %v2428
    %v3515 = vunpack.c.h.b16 %v2428
    %v3516 = vunpack.c.l.b16 %v2429
    %v3517 = vunpack.c.h.b16 %v2429
    %v3518 = vunpack.c.l.b16 %v2430
    %v3519 = vunpack.c.h.b16 %v2430
    %v3520 = vunpack.c.l.b16 %v2431
    %v3521 = vunpack.c.h.b16 %v2431
    %v3522 = vunpack.c.l.b16 %v2432
    %v3523 = vunpack.c.h.b16 %v2432
    %v3524 = vunpack.c.l.b16 %v2433
    %v3525 = vunpack.c.h.b16 %v2433
    %v3526 = vunpack.c.l.b16 %v2434
    %v3527 = vunpack.c.h.b16 %v2434
    %v3528 = vunpack.c.l.b16 %v2435
    %v3529 = vunpack.c.h.b16 %v2435
    %v3530 = vunpack.c.l.b16 %v2436
    %v3531 = vunpack.c.h.b16 %v2436
    %v3532 = vunpack.c.l.b16 %v2437
    %v3533 = vunpack.c.h.b16 %v2437
    %v3534 = vunpack.c.l.b16 %v2438
    %v3535 = vunpack.c.h.b16 %v2438
    %v3536 = vunpack.c.l.b16 %v2439
    %v3537 = vunpack.c.h.b16 %v2439
    %v3538 = vunpack.c.l.b16 %v2440
    %v3539 = vunpack.c.h.b16 %v2440
    %v3540 = vunpack.c.l.b16 %v2441
    %v3541 = vunpack.c.h.b16 %v2441
    %v3542 = vunpack.c.l.b16 %v2442
    %v3543 = vunpack.c.h.b16 %v2442
    %v3544 = vunpack.c.l.b16 %v2443
    %v3545 = vunpack.c.h.b16 %v2443
    %v3546 = vunpack.c.l.b16 %v2444
    %v3547 = vunpack.c.h.b16 %v2444
    %v3548 = vunpack.c.l.b16 %v2445
    %v3549 = vunpack.c.h.b16 %v2445
    %v3550 = vunpack.c.l.b16 %v2446
    %v3551 = vunpack.c.h.b16 %v2446
    %v3552 = vunpack.c.l.b16 %v2447
    %v3553 = vunpack.c.h.b16 %v2447
    %v3554 = vunpack.c.l.b16 %v2448
    %v3555 = vunpack.c.h.b16 %v2448
    %v3556 = vunpack.c.l.b16 %v2449
    %v3557 = vunpack.c.h.b16 %v2449
    %v3558 = vunpack.c.l.b16 %v2450
    %v3559 = vunpack.c.h.b16 %v2450
    %v3560 = vunpack.c.l.b16 %v2451
    %v3561 = vunpack.c.h.b16 %v2451
    %v3562 = vunpack.c.l.b16 %v2452
    %v3563 = vunpack.c.h.b16 %v2452
    %v3564 = vunpack.c.l.b16 %v2453
    %v3565 = vunpack.c.h.b16 %v2453
    %v3566 = vunpack.c.l.b16 %v2454
    %v3567 = vunpack.c.h.b16 %v2454
    %v3568 = vunpack.c.l.b16 %v2455
    %v3569 = vunpack.c.h.b16 %v2455
    %v3570 = vunpack.c.l.b16 %v2456
    %v3571 = vunpack.c.h.b16 %v2456
    %v3572 = vunpack.c.l.b16 %v2457
    %v3573 = vunpack.c.h.b16 %v2457
    %v3574 = vunpack.c.l.b16 %v2458
    %v3575 = vunpack.c.h.b16 %v2458
    %v3576 = vunpack.c.l.b16 %v2459
    %v3577 = vunpack.c.h.b16 %v2459
    %v3578 = vunpack.c.l.b16 %v2460
    %v3579 = vunpack.c.h.b16 %v2460
    %v3580 = vunpack.c.l.b16 %v2461
    %v3581 = vunpack.c.h.b16 %v2461
    %v3582 = vunpack.c.l.b16 %v2462
    %v3583 = vunpack.c.h.b16 %v2462
    %v3584 = vunpack.c.l.b16 %v2463
    %v3585 = vunpack.c.h.b16 %v2463
    %v3586 = vunpack.c.l.b16 %v2464
    %v3587 = vunpack.c.h.b16 %v2464
    %v3588 = vunpack.c.l.b16 %v2465
    %v3589 = vunpack.c.h.b16 %v2465
    %v3590 = vunpack.c.l.b16 %v2466
    %v3591 = vunpack.c.h.b16 %v2466
    %v3592 = vunpack.c.l.b16 %v2467
    %v3593 = vunpack.c.h.b16 %v2467
    %v3594 = vunpack.c.l.b16 %v2468
    %v3595 = vunpack.c.h.b16 %v2468
    %v3596 = vunpack.c.l.b16 %v2469
    %v3597 = vunpack.c.h.b16 %v2469
    %v3598 = vunpack.c.l.b16 %v2470
    %v3599 = vunpack.c.h.b16 %v2470
    %v3600 = vunpack.c.l.b16 %v2471
    %v3601 = vunpack.c.h.b16 %v2471
    %v3602 = vunpack.c.l.b16 %v2472
    %v3603 = vunpack.c.h.b16 %v2472
    %v3604 = vunpack.c.l.b16 %v2473
    %v3605 = vunpack.c.h.b16 %v2473
    %v3606 = vunpack.c.l.b16 %v2474
    %v3607 = vunpack.c.h.b16 %v2474
    %v3608 = vunpack.c.l.b16 %v2475
    %v3609 = vunpack.c.h.b16 %v2475
    %v3610 = vunpack.c.l.b16 %v2476
    %v3611 = vunpack.c.h.b16 %v2476
    %v3612 = vunpack.c.l.b16 %v2477
    %v3613 = vunpack.c.h.b16 %v2477
    %v3614 = vunpack.c.l.b16 %v2478
    %v3615 = vunpack.c.h.b16 %v2478
    %v3616 = vunpack.c.l.b16 %v2479
    %v3617 = vunpack.c.h.b16 %v2479
    %v3618 = vunpack.c.l.b16 %v2480
    %v3619 = vunpack.c.h.b16 %v2480
    %v3620 = vunpack.c.l.b16 %v2481
    %v3621 = vunpack.c.h.b16 %v2481
    %v3622 = vunpack.c.l.b16 %v2482
    %v3623 = vunpack.c.h.b16 %v2482
    %v3624 = vunpack.c.l.b16 %v2483
    %v3625 = vunpack.c.h.b16 %v2483
    %v3626 = vunpack.c.l.b16 %v2484
    %v3627 = vunpack.c.h.b16 %v2484
    %v3628 = vunpack.c.l.b16 %v2485
    %v3629 = vunpack.c.h.b16 %v2485
    %v3630 = vunpack.c.l.b16 %v2486
    %v3631 = vunpack.c.h.b16 %v2486
    %v3632 = vunpack.c.l.b16 %v2487
    %v3633 = vunpack.c.h.b16 %v2487
    %v3634 = vunpack.c.l.b16 %v2488
    %v3635 = vunpack.c.h.b16 %v2488
    %v3636 = vunpack.c.l.b16 %v2489
    %v3637 = vunpack.c.h.b16 %v2489
    %v3638 = vunpack.c.l.b16 %v2490
    %v3639 = vunpack.c.h.b16 %v2490
    %v3640 = vunpack.c.l.b16 %v2491
    %v3641 = vunpack.c.h.b16 %v2491
    %v3642 = vunpack.c.l.b16 %v2492
    %v3643 = vunpack.c.h.b16 %v2492
    %v3644 = vunpack.c.l.b16 %v2493
    %v3645 = vunpack.c.h.b16 %v2493
    %v3646 = vunpack.c.l.b16 %v2494
    %v3647 = vunpack.c.h.b16 %v2494
    %v3648 = vunpack.c.l.b16 %v2495
    %v3649 = vunpack.c.h.b16 %v2495
    %v3650 = vunpack.c.l.b16 %v2496
    %v3651 = vunpack.c.h.b16 %v2496
    %v3652 = vunpack.c.l.b16 %v2497
    %v3653 = vunpack.c.h.b16 %v2497
    %v3654 = vunpack.c.l.b16 %v2498
    %v3655 = vunpack.c.h.b16 %v2498
    %v3656 = vunpack.c.l.b16 %v2499
    %v3657 = vunpack.c.h.b16 %v2499
    %v3658 = vunpack.c.l.b16 %v2500
    %v3659 = vunpack.c.h.b16 %v2500
    %v3660 = vunpack.c.l.b16 %v2501
    %v3661 = vunpack.c.h.b16 %v2501
    %v3662 = vunpack.c.l.b16 %v2502
    %v3663 = vunpack.c.h.b16 %v2502
    %v3664 = vunpack.c.l.b16 %v2503
    %v3665 = vunpack.c.h.b16 %v2503
    %v3666 = vunpack.c.l.b16 %v2504
    %v3667 = vunpack.c.h.b16 %v2504
    %v3668 = vunpack.c.l.b16 %v2505
    %v3669 = vunpack.c.h.b16 %v2505
    %v3670 = vunpack.c.l.b16 %v2506
    %v3671 = vunpack.c.h.b16 %v2506
    %v3672 = vunpack.c.l.b16 %v2507
    %v3673 = vunpack.c.h.b16 %v2507
    %v3674 = vunpack.c.l.b16 %v2508
    %v3675 = vunpack.c.h.b16 %v2508
    %v3676 = vunpack.c.l.b16 %v2509
    %v3677 = vunpack.c.h.b16 %v2509
    %v3678 = vunpack.c.l.b16 %v2510
    %v3679 = vunpack.c.h.b16 %v2510
    %v3680 = vunpack.c.l.b16 %v2511
    %v3681 = vunpack.c.h.b16 %v2511
    %v3682 = vunpack.c.l.b16 %v2512
    %v3683 = vunpack.c.h.b16 %v2512
    %v3684 = vunpack.c.l.b16 %v2513
    %v3685 = vunpack.c.h.b16 %v2513
    %v3686 = vunpack.c.l.b16 %v2514
    %v3687 = vunpack.c.h.b16 %v2514
    %v3688 = vunpack.c.l.b16 %v2515
    %v3689 = vunpack.c.h.b16 %v2515
    %v3690 = vunpack.c.l.b16 %v2516
    %v3691 = vunpack.c.h.b16 %v2516
    %v3692 = vunpack.c.l.b16 %v2517
    %v3693 = vunpack.c.h.b16 %v2517
    %v3694 = vunpack.c.l.b16 %v2518
    %v3695 = vunpack.c.h.b16 %v2518
    %v3696 = vunpack.c.l.b16 %v2519
    %v3697 = vunpack.c.h.b16 %v2519
    %v3698 = vunpack.c.l.b16 %v2520
    %v3699 = vunpack.c.h.b16 %v2520
    %v3700 = vunpack.c.l.b16 %v2521
    %v3701 = vunpack.c.h.b16 %v2521
    %v3702 = vunpack.c.l.b16 %v2522
    %v3703 = vunpack.c.h.b16 %v2522
    %v3704 = vunpack.c.l.b16 %v2523
    %v3705 = vunpack.c.h.b16 %v2523
    %v3706 = vunpack.c.l.b16 %v2524
    %v3707 = vunpack.c.h.b16 %v2524
    %v3708 = vunpack.c.l.b16 %v2525
    %v3709 = vunpack.c.h.b16 %v2525
    %v3710 = vunpack.c.l.b16 %v2526
    %v3711 = vunpack.c.h.b16 %v2526
    %v3712 = vunpack.c.l.b16 %v2527
    %v3713 = vunpack.c.h.b16 %v2527
    %v3714 = vunpack.c.l.b16 %v2528
    %v3715 = vunpack.c.h.b16 %v2528
    %v3716 = vunpack.c.l.b16 %v2529
    %v3717 = vunpack.c.h.b16 %v2529
    %v3718 = vunpack.c.l.b16 %v2530
    %v3719 = vunpack.c.h.b16 %v2530
    %v3720 = vunpack.c.l.b16 %v2531
    %v3721 = vunpack.c.h.b16 %v2531
    %v3722 = vunpack.c.l.b16 %v2532
    %v3723 = vunpack.c.h.b16 %v2532
    %v3724 = vunpack.c.l.b16 %v2533
    %v3725 = vunpack.c.h.b16 %v2533
    %v3726 = vunpack.c.l.b16 %v2534
    %v3727 = vunpack.c.h.b16 %v2534
    %v3728 = vunpack.c.l.b16 %v2535
    %v3729 = vunpack.c.h.b16 %v2535
    %v3730 = vunpack.c.l.b16 %v2536
    %v3731 = vunpack.c.h.b16 %v2536
    %v3732 = vunpack.c.l.b16 %v2537
    %v3733 = vunpack.c.h.b16 %v2537
    %v3734 = vunpack.c.l.b16 %v2538
    %v3735 = vunpack.c.h.b16 %v2538
    %v3736 = vunpack.c.l.b16 %v2539
    %v3737 = vunpack.c.h.b16 %v2539
    %v3738 = vunpack.c.l.b16 %v2540
    %v3739 = vunpack.c.h.b16 %v2540
    %v3740 = vunpack.c.l.b16 %v2541
    %v3741 = vunpack.c.h.b16 %v2541
    %v3742 = vunpack.c.l.b16 %v2542
    %v3743 = vunpack.c.h.b16 %v2542
    %v3744 = vunpack.c.l.b16 %v2543
    %v3745 = vunpack.c.h.b16 %v2543
    %v3746 = vunpack.c.l.b16 %v2544
    %v3747 = vunpack.c.h.b16 %v2544
    %v3748 = vunpack.c.l.b16 %v2545
    %v3749 = vunpack.c.h.b16 %v2545
    %v3750 = vunpack.c.l.b16 %v2546
    %v3751 = vunpack.c.h.b16 %v2546
    %v3752 = vunpack.c.l.b16 %v2547
    %v3753 = vunpack.c.h.b16 %v2547
    %v3754 = vunpack.c.l.b16 %v2548
    %v3755 = vunpack.c.h.b16 %v2548
    %v3756 = vunpack.c.l.b16 %v2549
    %v3757 = vunpack.c.h.b16 %v2549
    %v3758 = vunpack.c.l.b16 %v2550
    %v3759 = vunpack.c.h.b16 %v2550
    %v3760 = vunpack.c.l.b16 %v2551
    %v3761 = vunpack.c.h.b16 %v2551
    %v3762 = vunpack.c.l.b16 %v2552
    %v3763 = vunpack.c.h.b16 %v2552
    %v3764 = vunpack.c.l.b16 %v2553
    %v3765 = vunpack.c.h.b16 %v2553
    %v3766 = vunpack.c.l.b16 %v2554
    %v3767 = vunpack.c.h.b16 %v2554
    %v3768 = vunpack.c.l.b16 %v2555
    %v3769 = vunpack.c.h.b16 %v2555
    %v3770 = vunpack.c.l.b16 %v2556
    %v3771 = vunpack.c.h.b16 %v2556
    %v3772 = vunpack.c.l.b16 %v2557
    %v3773 = vunpack.c.h.b16 %v2557
    %v3774 = vpack.c.b16 %v3270, %v3262
    %v3775 = vpack.c.b16 %v3271, %v3263
    %v3776 = vpack.c.b16 %v3272, %v3264
    %v3777 = vpack.c.b16 %v3273, %v3265
    %v3778 = vpack.c.b16 %v3274, %v3266
    %v3779 = vpack.c.b16 %v3275, %v3267
    %v3780 = vpack.c.b16 %v3276, %v3268
    %v3781 = vpack.c.b16 %v3277, %v3269
    %v3782 = vpack.c.b16 %v3286, %v3278
    %v3783 = vpack.c.b16 %v3287, %v3279
    %v3784 = vpack.c.b16 %v3288, %v3280
    %v3785 = vpack.c.b16 %v3289, %v3281
    %v3786 = vpack.c.b16 %v3290, %v3282
    %v3787 = vpack.c.b16 %v3291, %v3283
    %v3788 = vpack.c.b16 %v3292, %v3284
    %v3789 = vpack.c.b16 %v3293, %v3285
    %v3790 = vpack.c.b16 %v3302, %v3294
    %v3791 = vpack.c.b16 %v3303, %v3295
    %v3792 = vpack.c.b16 %v3304, %v3296
    %v3793 = vpack.c.b16 %v3305, %v3297
    %v3794 = vpack.c.b16 %v3306, %v3298
    %v3795 = vpack.c.b16 %v3307, %v3299
    %v3796 = vpack.c.b16 %v3308, %v3300
    %v3797 = vpack.c.b16 %v3309, %v3301
    %v3798 = vpack.c.b16 %v3318, %v3310
    %v3799 = vpack.c.b16 %v3319, %v3311
    %v3800 = vpack.c.b16 %v3320, %v3312
    %v3801 = vpack.c.b16 %v3321, %v3313
    %v3802 = vpack.c.b16 %v3322, %v3314
    %v3803 = vpack.c.b16 %v3323, %v3315
    %v3804 = vpack.c.b16 %v3324, %v3316
    %v3805 = vpack.c.b16 %v3325, %v3317
    %v3806 = vpack.c.b16 %v3334, %v3326
    %v3807 = vpack.c.b16 %v3335, %v3327
    %v3808 = vpack.c.b16 %v3336, %v3328
    %v3809 = vpack.c.b16 %v3337, %v3329
    %v3810 = vpack.c.b16 %v3338, %v3330
    %v3811 = vpack.c.b16 %v3339, %v3331
    %v3812 = vpack.c.b16 %v3340, %v3332
    %v3813 = vpack.c.b16 %v3341, %v3333
    %v3814 = vpack.c.b16 %v3350, %v3342
    %v3815 = vpack.c.b16 %v3351, %v3343
    %v3816 = vpack.c.b16 %v3352, %v3344
    %v3817 = vpack.c.b16 %v3353, %v3345
    %v3818 = vpack.c.b16 %v3354, %v3346
    %v3819 = vpack.c.b16 %v3355, %v3347
    %v3820 = vpack.c.b16 %v3356, %v3348
    %v3821 = vpack.c.b16 %v3357, %v3349
    %v3822 = vpack.c.b16 %v3366, %v3358
    %v3823 = vpack.c.b16 %v3367, %v3359
    %v3824 = vpack.c.b16 %v3368, %v3360
    %v3825 = vpack.c.b16 %v3369, %v3361
    %v3826 = vpack.c.b16 %v3370, %v3362
    %v3827 = vpack.c.b16 %v3371, %v3363
    %v3828 = vpack.c.b16 %v3372, %v3364
    %v3829 = vpack.c.b16 %v3373, %v3365
    %v3830 = vpack.c.b16 %v3382, %v3374
    %v3831 = vpack.c.b16 %v3383, %v3375
    %v3832 = vpack.c.b16 %v3384, %v3376
    %v3833 = vpack.c.b16 %v3385, %v3377
    %v3834 = vpack.c.b16 %v3386, %v3378
    %v3835 = vpack.c.b16 %v3387, %v3379
    %v3836 = vpack.c.b16 %v3388, %v3380
    %v3837 = vpack.c.b16 %v3389, %v3381
    %v3838 = vpack.c.b16 %v3398, %v3390
    %v3839 = vpack.c.b16 %v3399, %v3391
    %v3840 = vpack.c.b16 %v3400, %v3392
    %v3841 = vpack.c.b16 %v3401, %v3393
    %v3842 = vpack.c.b16 %v3402, %v3394
    %v3843 = vpack.c.b16 %v3403, %v3395
    %v3844 = vpack.c.b16 %v3404, %v3396
    %v3845 = vpack.c.b16 %v3405, %v3397
    %v3846 = vpack.c.b16 %v3414, %v3406
    %v3847 = vpack.c.b16 %v3415, %v3407
    %v3848 = vpack.c.b16 %v3416, %v3408
    %v3849 = vpack.c.b16 %v3417, %v3409
    %v3850 = vpack.c.b16 %v3418, %v3410
    %v3851 = vpack.c.b16 %v3419, %v3411
    %v3852 = vpack.c.b16 %v3420, %v3412
    %v3853 = vpack.c.b16 %v3421, %v3413
    %v3854 = vpack.c.b16 %v3430, %v3422
    %v3855 = vpack.c.b16 %v3431, %v3423
    %v3856 = vpack.c.b16 %v3432, %v3424
    %v3857 = vpack.c.b16 %v3433, %v3425
    %v3858 = vpack.c.b16 %v3434, %v3426
    %v3859 = vpack.c.b16 %v3435, %v3427
    %v3860 = vpack.c.b16 %v3436, %v3428
    %v3861 = vpack.c.b16 %v3437, %v3429
    %v3862 = vpack.c.b16 %v3446, %v3438
    %v3863 = vpack.c.b16 %v3447, %v3439
    %v3864 = vpack.c.b16 %v3448, %v3440
    %v3865 = vpack.c.b16 %v3449, %v3441
    %v3866 = vpack.c.b16 %v3450, %v3442
    %v3867 = vpack.c.b16 %v3451, %v3443
    %v3868 = vpack.c.b16 %v3452, %v3444
    %v3869 = vpack.c.b16 %v3453, %v3445
    %v3870 = vpack.c.b16 %v3462, %v3454
    %v3871 = vpack.c.b16 %v3463, %v3455
    %v3872 = vpack.c.b16 %v3464, %v3456
    %v3873 = vpack.c.b16 %v3465, %v3457
    %v3874 = vpack.c.b16 %v3466, %v3458
    %v3875 = vpack.c.b16 %v3467, %v3459
    %v3876 = vpack.c.b16 %v3468, %v3460
    %v3877 = vpack.c.b16 %v3469, %v3461
    %v3878 = vpack.c.b16 %v3478, %v3470
    %v3879 = vpack.c.b16 %v3479, %v3471
    %v3880 = vpack.c.b16 %v3480, %v3472
    %v3881 = vpack.c.b16 %v3481, %v3473
    %v3882 = vpack.c.b16 %v3482, %v3474
    %v3883 = vpack.c.b16 %v3483, %v3475
    %v3884 = vpack.c.b16 %v3484, %v3476
    %v3885 = vpack.c.b16 %v3485, %v3477
    %v3886 = vpack.c.b16 %v3494, %v3486
    %v3887 = vpack.c.b16 %v3495, %v3487
    %v3888 = vpack.c.b16 %v3496, %v3488
    %v3889 = vpack.c.b16 %v3497, %v3489
    %v3890 = vpack.c.b16 %v3498, %v3490
    %v3891 = vpack.c.b16 %v3499, %v3491
    %v3892 = vpack.c.b16 %v3500, %v3492
    %v3893 = vpack.c.b16 %v3501, %v3493
    %v3894 = vpack.c.b16 %v3510, %v3502
    %v3895 = vpack.c.b16 %v3511, %v3503
    %v3896 = vpack.c.b16 %v3512, %v3504
    %v3897 = vpack.c.b16 %v3513, %v3505
    %v3898 = vpack.c.b16 %v3514, %v3506
    %v3899 = vpack.c.b16 %v3515, %v3507
    %v3900 = vpack.c.b16 %v3516, %v3508
    %v3901 = vpack.c.b16 %v3517, %v3509
    %v3902 = vpack.c.b16 %v3526, %v3518
    %v3903 = vpack.c.b16 %v3527, %v3519
    %v3904 = vpack.c.b16 %v3528, %v3520
    %v3905 = vpack.c.b16 %v3529, %v3521
    %v3906 = vpack.c.b16 %v3530, %v3522
    %v3907 = vpack.c.b16 %v3531, %v3523
    %v3908 = vpack.c.b16 %v3532, %v3524
    %v3909 = vpack.c.b16 %v3533, %v3525
    %v3910 = vpack.c.b16 %v3542, %v3534
    %v3911 = vpack.c.b16 %v3543, %v3535
    %v3912 = vpack.c.b16 %v3544, %v3536
    %v3913 = vpack.c.b16 %v3545, %v3537
    %v3914 = vpack.c.b16 %v3546, %v3538
    %v3915 = vpack.c.b16 %v3547, %v3539
    %v3916 = vpack.c.b16 %v3548, %v3540
    %v3917 = vpack.c.b16 %v3549, %v3541
    %v3918 = vpack.c.b16 %v3558, %v3550
    %v3919 = vpack.c.b16 %v3559, %v3551
    %v3920 = vpack.c.b16 %v3560, %v3552
    %v3921 = vpack.c.b16 %v3561, %v3553
    %v3922 = vpack.c.b16 %v3562, %v3554
    %v3923 = vpack.c.b16 %v3563, %v3555
    %v3924 = vpack.c.b16 %v3564, %v3556
    %v3925 = vpack.c.b16 %v3565, %v3557
    %v3926 = vpack.c.b16 %v3574, %v3566
    %v3927 = vpack.c.b16 %v3575, %v3567
    %v3928 = vpack.c.b16 %v3576, %v3568
    %v3929 = vpack.c.b16 %v3577, %v3569
    %v3930 = vpack.c.b16 %v3578, %v3570
    %v3931 = vpack.c.b16 %v3579, %v3571
    %v3932 = vpack.c.b16 %v3580, %v3572
    %v3933 = vpack.c.b16 %v3581, %v3573
    %v3934 = vpack.c.b16 %v3590, %v3582
    %v3935 = vpack.c.b16 %v3591, %v3583
    %v3936 = vpack.c.b16 %v3592, %v3584
    %v3937 = vpack.c.b16 %v3593, %v3585
    %v3938 = vpack.c.b16 %v3594, %v3586
    %v3939 = vpack.c.b16 %v3595, %v3587
    %v3940 = vpack.c.b16 %v3596, %v3588
    %v3941 = vpack.c.b16 %v3597, %v3589
    %v3942 = vpack.c.b16 %v3606, %v3598
    %v3943 = vpack.c.b16 %v3607, %v3599
    %v3944 = vpack.c.b16 %v3608, %v3600
    %v3945 = vpack.c.b16 %v3609, %v3601
    %v3946 = vpack.c.b16 %v3610, %v3602
    %v3947 = vpack.c.b16 %v3611, %v3603
    %v3948 = vpack.c.b16 %v3612, %v3604
    %v3949 = vpack.c.b16 %v3613, %v3605
    %v3950 = vpack.c.b16 %v3622, %v3614
    %v3951 = vpack.c.b16 %v3623, %v3615
    %v3952 = vpack.c.b16 %v3624, %v3616
    %v3953 = vpack.c.b16 %v3625, %v3617
    %v3954 = vpack.c.b16 %v3626, %v3618
    %v3955 = vpack.c.b16 %v3627, %v3619
    %v3956 = vpack.c.b16 %v3628, %v3620
    %v3957 = vpack.c.b16 %v3629, %v3621
    %v3958 = vpack.c.b16 %v3638, %v3630
    %v3959 = vpack.c.b16 %v3639, %v3631
    %v3960 = vpack.c.b16 %v3640, %v3632
    %v3961 = vpack.c.b16 %v3641, %v3633
    %v3962 = vpack.c.b16 %v3642, %v3634
    %v3963 = vpack.c.b16 %v3643, %v3635
    %v3964 = vpack.c.b16 %v3644, %v3636
    %v3965 = vpack.c.b16 %v3645, %v3637
    %v3966 = vpack.c.b16 %v3654, %v3646
    %v3967 = vpack.c.b16 %v3655, %v3647
    %v3968 = vpack.c.b16 %v3656, %v3648
    %v3969 = vpack.c.b16 %v3657, %v3649
    %v3970 = vpack.c.b16 %v3658, %v3650
    %v3971 = vpack.c.b16 %v3659, %v3651
    %v3972 = vpack.c.b16 %v3660, %v3652
    %v3973 = vpack.c.b16 %v3661, %v3653
    %v3974 = vpack.c.b16 %v3670, %v3662
    %v3975 = vpack.c.b16 %v3671, %v3663
    %v3976 = vpack.c.b16 %v3672, %v3664
    %v3977 = vpack.c.b16 %v3673, %v3665
    %v3978 = vpack.c.b16 %v3674, %v3666
    %v3979 = vpack.c.b16 %v3675, %v3667
    %v3980 = vpack.c.b16 %v3676, %v3668
    %v3981 = vpack.c.b16 %v3677, %v3669
    %v3982 = vpack.c.b16 %v3686, %v3678
    %v3983 = vpack.c.b16 %v3687, %v3679
    %v3984 = vpack.c.b16 %v3688, %v3680
    %v3985 = vpack.c.b16 %v3689, %v3681
    %v3986 = vpack.c.b16 %v3690, %v3682
    %v3987 = vpack.c.b16 %v3691, %v3683
    %v3988 = vpack.c.b16 %v3692, %v3684
    %v3989 = vpack.c.b16 %v3693, %v3685
    %v3990 = vpack.c.b16 %v3702, %v3694
    %v3991 = vpack.c.b16 %v3703, %v3695
    %v3992 = vpack.c.b16 %v3704, %v3696
    %v3993 = vpack.c.b16 %v3705, %v3697
    %v3994 = vpack.c.b16 %v3706, %v3698
    %v3995 = vpack.c.b16 %v3707, %v3699
    %v3996 = vpack.c.b16 %v3708, %v3700
    %v3997 = vpack.c.b16 %v3709, %v3701
    %v3998 = vpack.c.b16 %v3718, %v3710
    %v3999 = vpack.c.b16 %v3719, %v3711
    %v4000 = vpack.c.b16 %v3720, %v3712
    %v4001 = vpack.c.b16 %v3721, %v3713
    %v4002 = vpack.c.b16 %v3722, %v3714
    %v4003 = vpack.c.b16 %v3723, %v3715
    %v4004 = vpack.c.b16 %v3724, %v3716
    %v4005 = vpack.c.b16 %v3725, %v3717
    %v4006 = vpack.c.b16 %v3734, %v3726
    %v4007 = vpack.c.b16 %v3735, %v3727
    %v4008 = vpack.c.b16 %v3736, %v3728
    %v4009 = vpack.c.b16 %v3737, %v3729
    %v4010 = vpack.c.b16 %v3738, %v3730
    %v4011 = vpack.c.b16 %v3739, %v3731
    %v4012 = vpack.c.b16 %v3740, %v3732
    %v4013 = vpack.c.b16 %v3741, %v3733
    %v4014 = vpack.c.b16 %v3750, %v3742
    %v4015 = vpack.c.b16 %v3751, %v3743
    %v4016 = vpack.c.b16 %v3752, %v3744
    %v4017 = vpack.c.b16 %v3753, %v3745
    %v4018 = vpack.c.b16 %v3754, %v3746
    %v4019 = vpack.c.b16 %v3755, %v3747
    %v4020 = vpack.c.b16 %v3756, %v3748
    %v4021 = vpack.c.b16 %v3757, %v3749
    %v4022 = vpack.c.b16 %v3766, %v3758
    %v4023 = vpack.c.b16 %v3767, %v3759
    %v4024 = vpack.c.b16 %v3768, %v3760
    %v4025 = vpack.c.b16 %v3769, %v3761
    %v4026 = vpack.c.b16 %v3770, %v3762
    %v4027 = vpack.c.b16 %v3771, %v3763
    %v4028 = vpack.c.b16 %v3772, %v3764
    %v4029 = vpack.c.b16 %v3773, %v3765
    %4286 = vmatprep.subr.bf16.mxu0 0
    %4287 = vmatpush1.bf16.msra.mxu0 %v2558
    %4288 = vmatprep.subr.bf16.mxu0 0
    %4289 = vmatpush1.bf16.msra.mxu0 %v2559
    %4290 = vmatprep.subr.bf16.mxu0 0
    %4291 = vmatpush1.bf16.msra.mxu0 %v2560
    %4292 = vmatprep.subr.bf16.mxu0 0
    %4293 = vmatpush1.bf16.msra.mxu0 %v2561
    %4294 = vmatprep.subr.bf16.mxu0 0
    %4295 = vmatpush1.bf16.msra.mxu0 %v2562
    %4296 = vmatprep.subr.bf16.mxu0 0
    %4297 = vmatpush1.bf16.msra.mxu0 %v2563
    %4298 = vmatprep.subr.bf16.mxu0 0
    %4299 = vmatpush1.bf16.msra.mxu0 %v2564
    %4300 = vmatprep.subr.bf16.mxu0 0
    %4301 = vmatpush1.bf16.msra.mxu0 %v2565
    %4302 = vmatprep.subr.bf16.mxu0 0
    %4303 = vmatpush1.bf16.msra.mxu0 %v2566
    %4304 = vmatprep.subr.bf16.mxu0 0
    %4305 = vmatpush1.bf16.msra.mxu0 %v2567
    %4306 = vmatprep.subr.bf16.mxu0 0
    %4307 = vmatpush1.bf16.msra.mxu0 %v2568
    %4308 = vmatprep.subr.bf16.mxu0 0
    %4309 = vmatpush1.bf16.msra.mxu0 %v2569
    %4310 = vmatprep.subr.bf16.mxu0 0
    %4311 = vmatpush1.bf16.msra.mxu0 %v2570
    %4312 = vmatprep.subr.bf16.mxu0 0
    %4313 = vmatpush1.bf16.msra.mxu0 %v2571
    %4314 = vmatprep.subr.bf16.mxu0 0
    %4315 = vmatpush1.bf16.msra.mxu0 %v2572
    %4316 = vmatprep.subr.bf16.mxu0 0
    %4317 = vmatpush1.bf16.msra.mxu0 %v2573
    %4318 = vmatprep.mubr.bf16.mxu0 %v3775
    %4319 = vmatmul.mubr.bf16.gmra.mrb[0].mxu0 %v3774
    %v4320 = vpop.f32.mrb[0].mxu0
    %v4321 = vadd.f32 %v2689, %v4320
    %v4322 = vpop.f32.mrb[0].mxu0
    %v4323 = vpop.f32.mrb[0].mxu0
    %v4324 = vadd.f32 %v2694, %v4323
    %v4325 = vpop.f32.mrb[0].mxu0
    %4326 = vmatprep.mubr.bf16.mxu0 %v3783
    %4327 = vmatmul.mubr.bf16.gmra.mrb[0].mxu0 %v3782
    %v4328 = vpop.f32.mrb[0].mxu0
    %v4329 = vadd.f32 %v2699, %v4328
    %v4330 = vpop.f32.mrb[0].mxu0
    %v4331 = vpop.f32.mrb[0].mxu0
    %v4332 = vadd.f32 %v2704, %v4331
    %v4333 = vpop.f32.mrb[0].mxu0
    %4334 = vmatprep.mubr.bf16.mxu0 %v3791
    %4335 = vmatmul.mubr.bf16.gmra.mrb[0].mxu0 %v3790
    %v4336 = vpop.f32.mrb[0].mxu0
    %v4337 = vadd.f32 %v2709, %v4336
    %v4338 = vpop.f32.mrb[0].mxu0
    %v4339 = vpop.f32.mrb[0].mxu0
    %v4340 = vadd.f32 %v2714, %v4339
    %v4341 = vpop.f32.mrb[0].mxu0
    %4342 = vmatprep.mubr.bf16.mxu0 %v3799
    %4343 = vmatmul.mubr.bf16.gmra.mrb[0].mxu0 %v3798
    %v4344 = vpop.f32.mrb[0].mxu0
    %v4345 = vadd.f32 %v2719, %v4344
    %v4346 = vpop.f32.mrb[0].mxu0
    %v4347 = vpop.f32.mrb[0].mxu0
    %v4348 = vadd.f32 %v2724, %v4347
    %v4349 = vpop.f32.mrb[0].mxu0
    %4350 = vmatprep.mubr.bf16.mxu0 %v3807
    %4351 = vmatmul.mubr.bf16.gmra.mrb[0].mxu0 %v3806
    %v4352 = vpop.f32.mrb[0].mxu0
    %v4353 = vadd.f32 %v2729, %v4352
    %v4354 = vpop.f32.mrb[0].mxu0
    %v4355 = vpop.f32.mrb[0].mxu0
    %v4356 = vadd.f32 %v2734, %v4355
    %v4357 = vpop.f32.mrb[0].mxu0
    %4358 = vmatprep.mubr.bf16.mxu0 %v3815
    %4359 = vmatmul.mubr.bf16.gmra.mrb[0].mxu0 %v3814
    %v4360 = vpop.f32.mrb[0].mxu0
    %v4361 = vadd.f32 %v2739, %v4360
    %v4362 = vpop.f32.mrb[0].mxu0
    %v4363 = vpop.f32.mrb[0].mxu0
    %v4364 = vadd.f32 %v2744, %v4363
    %v4365 = vpop.f32.mrb[0].mxu0
    %4366 = vmatprep.mubr.bf16.mxu0 %v3823
    %4367 = vmatmul.mubr.bf16.gmra.mrb[0].mxu0 %v3822
    %v4368 = vpop.f32.mrb[0].mxu0
    %v4369 = vadd.f32 %v2749, %v4368
    %v4370 = vpop.f32.mrb[0].mxu0
    %v4371 = vpop.f32.mrb[0].mxu0
    %v4372 = vadd.f32 %v2754, %v4371
    %v4373 = vpop.f32.mrb[0].mxu0
    %4374 = vmatprep.mubr.bf16.mxu0 %v3831
    %4375 = vmatmul.mubr.bf16.gmra.mrb[0].mxu0 %v3830
    %v4376 = vpop.f32.mrb[0].mxu0
    %v4377 = vadd.f32 %v2759, %v4376
    %v4378 = vpop.f32.mrb[0].mxu0
    %v4379 = vpop.f32.mrb[0].mxu0
    %v4380 = vadd.f32 %v2764, %v4379
    %v4381 = vpop.f32.mrb[0].mxu0
    %4382 = vmatprep.mubr.bf16.mxu0 %v3839
    %4383 = vmatmul.mubr.bf16.gmra.mrb[0].mxu0 %v3838
    %v4384 = vpop.f32.mrb[0].mxu0
    %v4385 = vadd.f32 %v2769, %v4384
    %v4386 = vpop.f32.mrb[0].mxu0
    %v4387 = vpop.f32.mrb[0].mxu0
    %v4388 = vadd.f32 %v2774, %v4387
    %v4389 = vpop.f32.mrb[0].mxu0
    %4390 = vmatprep.mubr.bf16.mxu0 %v3847
    %4391 = vmatmul.mubr.bf16.gmra.mrb[0].mxu0 %v3846
    %v4392 = vpop.f32.mrb[0].mxu0
    %v4393 = vadd.f32 %v2779, %v4392
    %v4394 = vpop.f32.mrb[0].mxu0
    %v4395 = vpop.f32.mrb[0].mxu0
    %v4396 = vadd.f32 %v2784, %v4395
    %v4397 = vpop.f32.mrb[0].mxu0
    %4398 = vmatprep.mubr.bf16.mxu0 %v3855
    %4399 = vmatmul.mubr.bf16.gmra.mrb[0].mxu0 %v3854
    %v4400 = vpop.f32.mrb[0].mxu0
    %v4401 = vadd.f32 %v2789, %v4400
    %v4402 = vpop.f32.mrb[0].mxu0
    %v4403 = vpop.f32.mrb[0].mxu0
    %v4404 = vadd.f32 %v2794, %v4403
    %v4405 = vpop.f32.mrb[0].mxu0
    %4406 = vmatprep.mubr.bf16.mxu0 %v3863
    %4407 = vmatmul.mubr.bf16.gmra.mrb[0].mxu0 %v3862
    %v4408 = vpop.f32.mrb[0].mxu0
    %v4409 = vadd.f32 %v2799, %v4408
    %v4410 = vpop.f32.mrb[0].mxu0
    %v4411 = vpop.f32.mrb[0].mxu0
    %v4412 = vadd.f32 %v2804, %v4411
    %v4413 = vpop.f32.mrb[0].mxu0
    %4414 = vmatprep.mubr.bf16.mxu0 %v3871
    %4415 = vmatmul.mubr.bf16.gmra.mrb[0].mxu0 %v3870
    %v4416 = vpop.f32.mrb[0].mxu0
    %v4417 = vadd.f32 %v2809, %v4416
    %v4418 = vpop.f32.mrb[0].mxu0
    %v4419 = vpop.f32.mrb[0].mxu0
    %v4420 = vadd.f32 %v2814, %v4419
    %v4421 = vpop.f32.mrb[0].mxu0
    %4422 = vmatprep.mubr.bf16.mxu0 %v3879
    %4423 = vmatmul.mubr.bf16.gmra.mrb[0].mxu0 %v3878
    %v4424 = vpop.f32.mrb[0].mxu0
    %v4425 = vadd.f32 %v2819, %v4424
    %v4426 = vpop.f32.mrb[0].mxu0
    %v4427 = vpop.f32.mrb[0].mxu0
    %v4428 = vadd.f32 %v2824, %v4427
    %v4429 = vpop.f32.mrb[0].mxu0
    %4430 = vmatprep.mubr.bf16.mxu0 %v3887
    %4431 = vmatmul.mubr.bf16.gmra.mrb[0].mxu0 %v3886
    %v4432 = vpop.f32.mrb[0].mxu0
    %v4433 = vadd.f32 %v2829, %v4432
    %v4434 = vpop.f32.mrb[0].mxu0
    %v4435 = vpop.f32.mrb[0].mxu0
    %v4436 = vadd.f32 %v2834, %v4435
    %v4437 = vpop.f32.mrb[0].mxu0
    %4438 = vmatprep.mubr.bf16.mxu0 %v3895
    %4439 = vmatmul.mubr.bf16.gmra.mrb[0].mxu0 %v3894
    %v4440 = vpop.f32.mrb[0].mxu0
    %v4441 = vadd.f32 %v2839, %v4440
    %v4442 = vpop.f32.mrb[0].mxu0
    %v4443 = vpop.f32.mrb[0].mxu0
    %v4444 = vadd.f32 %v2844, %v4443
    %v4445 = vpop.f32.mrb[0].mxu0
    %4446 = vmatprep.mubr.bf16.mxu0 %v3903
    %4447 = vmatmul.mubr.bf16.gmra.mrb[0].mxu0 %v3902
    %v4448 = vpop.f32.mrb[0].mxu0
    %v4449 = vadd.f32 %v2849, %v4448
    %v4450 = vpop.f32.mrb[0].mxu0
    %v4451 = vpop.f32.mrb[0].mxu0
    %v4452 = vadd.f32 %v2854, %v4451
    %v4453 = vpop.f32.mrb[0].mxu0
    %4454 = vmatprep.mubr.bf16.mxu0 %v3911
    %4455 = vmatmul.mubr.bf16.gmra.mrb[0].mxu0 %v3910
    %v4456 = vpop.f32.mrb[0].mxu0
    %v4457 = vadd.f32 %v2859, %v4456
    %v4458 = vpop.f32.mrb[0].mxu0
    %v4459 = vpop.f32.mrb[0].mxu0
    %v4460 = vadd.f32 %v2864, %v4459
    %v4461 = vpop.f32.mrb[0].mxu0
    %4462 = vmatprep.mubr.bf16.mxu0 %v3919
    %4463 = vmatmul.mubr.bf16.gmra.mrb[0].mxu0 %v3918
    %v4464 = vpop.f32.mrb[0].mxu0
    %v4465 = vadd.f32 %v2869, %v4464
    %v4466 = vpop.f32.mrb[0].mxu0
    %v4467 = vpop.f32.mrb[0].mxu0
    %v4468 = vadd.f32 %v2874, %v4467
    %v4469 = vpop.f32.mrb[0].mxu0
    %4470 = vmatprep.mubr.bf16.mxu0 %v3927
    %4471 = vmatmul.mubr.bf16.gmra.mrb[0].mxu0 %v3926
    %v4472 = vpop.f32.mrb[0].mxu0
    %v4473 = vadd.f32 %v2879, %v4472
    %v4474 = vpop.f32.mrb[0].mxu0
    %v4475 = vpop.f32.mrb[0].mxu0
    %v4476 = vadd.f32 %v2884, %v4475
    %v4477 = vpop.f32.mrb[0].mxu0
    %4478 = vmatprep.mubr.bf16.mxu0 %v3935
    %4479 = vmatmul.mubr.bf16.gmra.mrb[0].mxu0 %v3934
    %v4480 = vpop.f32.mrb[0].mxu0
    %v4481 = vadd.f32 %v2889, %v4480
    %v4482 = vpop.f32.mrb[0].mxu0
    %v4483 = vpop.f32.mrb[0].mxu0
    %v4484 = vadd.f32 %v2894, %v4483
    %v4485 = vpop.f32.mrb[0].mxu0
    %4486 = vmatprep.mubr.bf16.mxu0 %v3943
    %4487 = vmatmul.mubr.bf16.gmra.mrb[0].mxu0 %v3942
    %v4488 = vpop.f32.mrb[0].mxu0
    %v4489 = vadd.f32 %v2899, %v4488
    %v4490 = vpop.f32.mrb[0].mxu0
    %v4491 = vpop.f32.mrb[0].mxu0
    %v4492 = vadd.f32 %v2904, %v4491
    %v4493 = vpop.f32.mrb[0].mxu0
    %4494 = vmatprep.mubr.bf16.mxu0 %v3951
    %4495 = vmatmul.mubr.bf16.gmra.mrb[0].mxu0 %v3950
    %v4496 = vpop.f32.mrb[0].mxu0
    %v4497 = vadd.f32 %v2909, %v4496
    %v4498 = vpop.f32.mrb[0].mxu0
    %v4499 = vpop.f32.mrb[0].mxu0
    %v4500 = vadd.f32 %v2914, %v4499
    %v4501 = vpop.f32.mrb[0].mxu0
    %4502 = vmatprep.mubr.bf16.mxu0 %v3959
    %4503 = vmatmul.mubr.bf16.gmra.mrb[0].mxu0 %v3958
    %v4504 = vpop.f32.mrb[0].mxu0
    %v4505 = vadd.f32 %v2919, %v4504
    %v4506 = vpop.f32.mrb[0].mxu0
    %v4507 = vpop.f32.mrb[0].mxu0
    %v4508 = vadd.f32 %v2924, %v4507
    %v4509 = vpop.f32.mrb[0].mxu0
    %4510 = vmatprep.mubr.bf16.mxu0 %v3967
    %4511 = vmatmul.mubr.bf16.gmra.mrb[0].mxu0 %v3966
    %v4512 = vpop.f32.mrb[0].mxu0
    %v4513 = vadd.f32 %v2929, %v4512
    %v4514 = vpop.f32.mrb[0].mxu0
    %v4515 = vpop.f32.mrb[0].mxu0
    %v4516 = vadd.f32 %v2934, %v4515
    %v4517 = vpop.f32.mrb[0].mxu0
    %4518 = vmatprep.mubr.bf16.mxu0 %v3975
    %4519 = vmatmul.mubr.bf16.gmra.mrb[0].mxu0 %v3974
    %v4520 = vpop.f32.mrb[0].mxu0
    %v4521 = vadd.f32 %v2939, %v4520
    %v4522 = vpop.f32.mrb[0].mxu0
    %v4523 = vpop.f32.mrb[0].mxu0
    %v4524 = vadd.f32 %v2944, %v4523
    %v4525 = vpop.f32.mrb[0].mxu0
    %4526 = vmatprep.mubr.bf16.mxu0 %v3983
    %4527 = vmatmul.mubr.bf16.gmra.mrb[0].mxu0 %v3982
    %v4528 = vpop.f32.mrb[0].mxu0
    %v4529 = vadd.f32 %v2949, %v4528
    %v4530 = vpop.f32.mrb[0].mxu0
    %v4531 = vpop.f32.mrb[0].mxu0
    %v4532 = vadd.f32 %v2954, %v4531
    %v4533 = vpop.f32.mrb[0].mxu0
    %4534 = vmatprep.mubr.bf16.mxu0 %v3991
    %4535 = vmatmul.mubr.bf16.gmra.mrb[0].mxu0 %v3990
    %v4536 = vpop.f32.mrb[0].mxu0
    %v4537 = vadd.f32 %v2959, %v4536
    %v4538 = vpop.f32.mrb[0].mxu0
    %v4539 = vpop.f32.mrb[0].mxu0
    %v4540 = vadd.f32 %v2964, %v4539
    %v4541 = vpop.f32.mrb[0].mxu0
    %4542 = vmatprep.mubr.bf16.mxu0 %v3999
    %4543 = vmatmul.mubr.bf16.gmra.mrb[0].mxu0 %v3998
    %v4544 = vpop.f32.mrb[0].mxu0
    %v4545 = vadd.f32 %v2969, %v4544
    %v4546 = vpop.f32.mrb[0].mxu0
    %v4547 = vpop.f32.mrb[0].mxu0
    %v4548 = vadd.f32 %v2974, %v4547
    %v4549 = vpop.f32.mrb[0].mxu0
    %4550 = vmatprep.mubr.bf16.mxu0 %v4007
    %4551 = vmatmul.mubr.bf16.gmra.mrb[0].mxu0 %v4006
    %v4552 = vpop.f32.mrb[0].mxu0
    %v4553 = vadd.f32 %v2979, %v4552
    %v4554 = vpop.f32.mrb[0].mxu0
    %v4555 = vpop.f32.mrb[0].mxu0
    %v4556 = vadd.f32 %v2984, %v4555
    %v4557 = vpop.f32.mrb[0].mxu0
    %4558 = vmatprep.mubr.bf16.mxu0 %v4015
    %4559 = vmatmul.mubr.bf16.gmra.mrb[0].mxu0 %v4014
    %v4560 = vpop.f32.mrb[0].mxu0
    %v4561 = vadd.f32 %v2989, %v4560
    %v4562 = vpop.f32.mrb[0].mxu0
    %v4563 = vpop.f32.mrb[0].mxu0
    %v4564 = vadd.f32 %v2994, %v4563
    %v4565 = vpop.f32.mrb[0].mxu0
    %4566 = vmatprep.mubr.bf16.mxu0 %v4023
    %4567 = vmatmul.mubr.bf16.gmra.mrb[0].mxu0 %v4022
    %v4568 = vpop.f32.mrb[0].mxu0
    %v4569 = vadd.f32 %v2999, %v4568
    %v4570 = vpop.f32.mrb[0].mxu0
    %v4571 = vpop.f32.mrb[0].mxu0
    %v4572 = vadd.f32 %v3004, %v4571
    %v4573 = vpop.f32.mrb[0].mxu0
    %4574 = vdwg.mxu0
    %4575 = vmatprep.subr.bf16.mxu0 0
    %4576 = vmatpush1.bf16.msra.mxu0 %v2574
    %4577 = vmatprep.subr.bf16.mxu0 0
    %4578 = vmatpush1.bf16.msra.mxu0 %v2575
    %4579 = vmatprep.subr.bf16.mxu0 0
    %4580 = vmatpush1.bf16.msra.mxu0 %v2576
    %4581 = vmatprep.subr.bf16.mxu0 0
    %4582 = vmatpush1.bf16.msra.mxu0 %v2577
    %4583 = vmatprep.subr.bf16.mxu0 0
    %4584 = vmatpush1.bf16.msra.mxu0 %v2578
    %4585 = vmatprep.subr.bf16.mxu0 0
    %4586 = vmatpush1.bf16.msra.mxu0 %v2579
    %4587 = vmatprep.subr.bf16.mxu0 0
    %4588 = vmatpush1.bf16.msra.mxu0 %v2580
    %4589 = vmatprep.subr.bf16.mxu0 0
    %4590 = vmatpush1.bf16.msra.mxu0 %v2581
    %4591 = vmatprep.subr.bf16.mxu0 0
    %4592 = vmatpush1.bf16.msra.mxu0 %v2582
    %4593 = vmatprep.subr.bf16.mxu0 0
    %4594 = vmatpush1.bf16.msra.mxu0 %v2583
    %4595 = vmatprep.subr.bf16.mxu0 0
    %4596 = vmatpush1.bf16.msra.mxu0 %v2584
    %4597 = vmatprep.subr.bf16.mxu0 0
    %4598 = vmatpush1.bf16.msra.mxu0 %v2585
    %4599 = vmatprep.subr.bf16.mxu0 0
    %4600 = vmatpush1.bf16.msra.mxu0 %v2586
    %4601 = vmatprep.subr.bf16.mxu0 0
    %4602 = vmatpush1.bf16.msra.mxu0 %v2587
    %4603 = vmatprep.subr.bf16.mxu0 0
    %4604 = vmatpush1.bf16.msra.mxu0 %v2588
    %4605 = vmatprep.subr.bf16.mxu0 0
    %4606 = vmatpush1.bf16.msra.mxu0 %v2589
    %4607 = vmatprep.mubr.bf16.mxu0 %v3777
    %4608 = vmatmul.mubr.bf16.gmra.mrb[0].mxu0 %v3776
    %v4609 = vpop.f32.mrb[0].mxu0
    %v4610 = vadd.f32 %v4321, %v4609
    %v4611 = vpop.f32.mrb[0].mxu0
    %v4612 = vpop.f32.mrb[0].mxu0
    %v4613 = vadd.f32 %v4324, %v4612
    %v4614 = vpop.f32.mrb[0].mxu0
    %4615 = vmatprep.mubr.bf16.mxu0 %v3785
    %4616 = vmatmul.mubr.bf16.gmra.mrb[0].mxu0 %v3784
    %v4617 = vpop.f32.mrb[0].mxu0
    %v4618 = vadd.f32 %v4329, %v4617
    %v4619 = vpop.f32.mrb[0].mxu0
    %v4620 = vpop.f32.mrb[0].mxu0
    %v4621 = vadd.f32 %v4332, %v4620
    %v4622 = vpop.f32.mrb[0].mxu0
    %4623 = vmatprep.mubr.bf16.mxu0 %v3793
    %4624 = vmatmul.mubr.bf16.gmra.mrb[0].mxu0 %v3792
    %v4625 = vpop.f32.mrb[0].mxu0
    %v4626 = vadd.f32 %v4337, %v4625
    %v4627 = vpop.f32.mrb[0].mxu0
    %v4628 = vpop.f32.mrb[0].mxu0
    %v4629 = vadd.f32 %v4340, %v4628
    %v4630 = vpop.f32.mrb[0].mxu0
    %4631 = vmatprep.mubr.bf16.mxu0 %v3801
    %4632 = vmatmul.mubr.bf16.gmra.mrb[0].mxu0 %v3800
    %v4633 = vpop.f32.mrb[0].mxu0
    %v4634 = vadd.f32 %v4345, %v4633
    %v4635 = vpop.f32.mrb[0].mxu0
    %v4636 = vpop.f32.mrb[0].mxu0
    %v4637 = vadd.f32 %v4348, %v4636
    %v4638 = vpop.f32.mrb[0].mxu0
    %4639 = vmatprep.mubr.bf16.mxu0 %v3809
    %4640 = vmatmul.mubr.bf16.gmra.mrb[0].mxu0 %v3808
    %v4641 = vpop.f32.mrb[0].mxu0
    %v4642 = vadd.f32 %v4353, %v4641
    %v4643 = vpop.f32.mrb[0].mxu0
    %v4644 = vpop.f32.mrb[0].mxu0
    %v4645 = vadd.f32 %v4356, %v4644
    %v4646 = vpop.f32.mrb[0].mxu0
    %4647 = vmatprep.mubr.bf16.mxu0 %v3817
    %4648 = vmatmul.mubr.bf16.gmra.mrb[0].mxu0 %v3816
    %v4649 = vpop.f32.mrb[0].mxu0
    %v4650 = vadd.f32 %v4361, %v4649
    %v4651 = vpop.f32.mrb[0].mxu0
    %v4652 = vpop.f32.mrb[0].mxu0
    %v4653 = vadd.f32 %v4364, %v4652
    %v4654 = vpop.f32.mrb[0].mxu0
    %4655 = vmatprep.mubr.bf16.mxu0 %v3825
    %4656 = vmatmul.mubr.bf16.gmra.mrb[0].mxu0 %v3824
    %v4657 = vpop.f32.mrb[0].mxu0
    %v4658 = vadd.f32 %v4369, %v4657
    %v4659 = vpop.f32.mrb[0].mxu0
    %v4660 = vpop.f32.mrb[0].mxu0
    %v4661 = vadd.f32 %v4372, %v4660
    %v4662 = vpop.f32.mrb[0].mxu0
    %4663 = vmatprep.mubr.bf16.mxu0 %v3833
    %4664 = vmatmul.mubr.bf16.gmra.mrb[0].mxu0 %v3832
    %v4665 = vpop.f32.mrb[0].mxu0
    %v4666 = vadd.f32 %v4377, %v4665
    %v4667 = vpop.f32.mrb[0].mxu0
    %v4668 = vpop.f32.mrb[0].mxu0
    %v4669 = vadd.f32 %v4380, %v4668
    %v4670 = vpop.f32.mrb[0].mxu0
    %4671 = vmatprep.mubr.bf16.mxu0 %v3841
    %4672 = vmatmul.mubr.bf16.gmra.mrb[0].mxu0 %v3840
    %v4673 = vpop.f32.mrb[0].mxu0
    %v4674 = vadd.f32 %v4385, %v4673
    %v4675 = vpop.f32.mrb[0].mxu0
    %v4676 = vpop.f32.mrb[0].mxu0
    %v4677 = vadd.f32 %v4388, %v4676
    %v4678 = vpop.f32.mrb[0].mxu0
    %4679 = vmatprep.mubr.bf16.mxu0 %v3849
    %4680 = vmatmul.mubr.bf16.gmra.mrb[0].mxu0 %v3848
    %v4681 = vpop.f32.mrb[0].mxu0
    %v4682 = vadd.f32 %v4393, %v4681
    %v4683 = vpop.f32.mrb[0].mxu0
    %v4684 = vpop.f32.mrb[0].mxu0
    %v4685 = vadd.f32 %v4396, %v4684
    %v4686 = vpop.f32.mrb[0].mxu0
    %4687 = vmatprep.mubr.bf16.mxu0 %v3857
    %4688 = vmatmul.mubr.bf16.gmra.mrb[0].mxu0 %v3856
    %v4689 = vpop.f32.mrb[0].mxu0
    %v4690 = vadd.f32 %v4401, %v4689
    %v4691 = vpop.f32.mrb[0].mxu0
    %v4692 = vpop.f32.mrb[0].mxu0
    %v4693 = vadd.f32 %v4404, %v4692
    %v4694 = vpop.f32.mrb[0].mxu0
    %4695 = vmatprep.mubr.bf16.mxu0 %v3865
    %4696 = vmatmul.mubr.bf16.gmra.mrb[0].mxu0 %v3864
    %v4697 = vpop.f32.mrb[0].mxu0
    %v4698 = vadd.f32 %v4409, %v4697
    %v4699 = vpop.f32.mrb[0].mxu0
    %v4700 = vpop.f32.mrb[0].mxu0
    %v4701 = vadd.f32 %v4412, %v4700
    %v4702 = vpop.f32.mrb[0].mxu0
    %4703 = vmatprep.mubr.bf16.mxu0 %v3873
    %4704 = vmatmul.mubr.bf16.gmra.mrb[0].mxu0 %v3872
    %v4705 = vpop.f32.mrb[0].mxu0
    %v4706 = vadd.f32 %v4417, %v4705
    %v4707 = vpop.f32.mrb[0].mxu0
    %v4708 = vpop.f32.mrb[0].mxu0
    %v4709 = vadd.f32 %v4420, %v4708
    %v4710 = vpop.f32.mrb[0].mxu0
    %4711 = vmatprep.mubr.bf16.mxu0 %v3881
    %4712 = vmatmul.mubr.bf16.gmra.mrb[0].mxu0 %v3880
    %v4713 = vpop.f32.mrb[0].mxu0
    %v4714 = vadd.f32 %v4425, %v4713
    %v4715 = vpop.f32.mrb[0].mxu0
    %v4716 = vpop.f32.mrb[0].mxu0
    %v4717 = vadd.f32 %v4428, %v4716
    %v4718 = vpop.f32.mrb[0].mxu0
    %4719 = vmatprep.mubr.bf16.mxu0 %v3889
    %4720 = vmatmul.mubr.bf16.gmra.mrb[0].mxu0 %v3888
    %v4721 = vpop.f32.mrb[0].mxu0
    %v4722 = vadd.f32 %v4433, %v4721
    %v4723 = vpop.f32.mrb[0].mxu0
    %v4724 = vpop.f32.mrb[0].mxu0
    %v4725 = vadd.f32 %v4436, %v4724
    %v4726 = vpop.f32.mrb[0].mxu0
    %4727 = vmatprep.mubr.bf16.mxu0 %v3897
    %4728 = vmatmul.mubr.bf16.gmra.mrb[0].mxu0 %v3896
    %v4729 = vpop.f32.mrb[0].mxu0
    %v4730 = vadd.f32 %v4441, %v4729
    %v4731 = vpop.f32.mrb[0].mxu0
    %v4732 = vpop.f32.mrb[0].mxu0
    %v4733 = vadd.f32 %v4444, %v4732
    %v4734 = vpop.f32.mrb[0].mxu0
    %4735 = vmatprep.mubr.bf16.mxu0 %v3905
    %4736 = vmatmul.mubr.bf16.gmra.mrb[0].mxu0 %v3904
    %v4737 = vpop.f32.mrb[0].mxu0
    %v4738 = vadd.f32 %v4449, %v4737
    %v4739 = vpop.f32.mrb[0].mxu0
    %v4740 = vpop.f32.mrb[0].mxu0
    %v4741 = vadd.f32 %v4452, %v4740
    %v4742 = vpop.f32.mrb[0].mxu0
    %4743 = vmatprep.mubr.bf16.mxu0 %v3913
    %4744 = vmatmul.mubr.bf16.gmra.mrb[0].mxu0 %v3912
    %v4745 = vpop.f32.mrb[0].mxu0
    %v4746 = vadd.f32 %v4457, %v4745
    %v4747 = vpop.f32.mrb[0].mxu0
    %v4748 = vpop.f32.mrb[0].mxu0
    %v4749 = vadd.f32 %v4460, %v4748
    %v4750 = vpop.f32.mrb[0].mxu0
    %4751 = vmatprep.mubr.bf16.mxu0 %v3921
    %4752 = vmatmul.mubr.bf16.gmra.mrb[0].mxu0 %v3920
    %v4753 = vpop.f32.mrb[0].mxu0
    %v4754 = vadd.f32 %v4465, %v4753
    %v4755 = vpop.f32.mrb[0].mxu0
    %v4756 = vpop.f32.mrb[0].mxu0
    %v4757 = vadd.f32 %v4468, %v4756
    %v4758 = vpop.f32.mrb[0].mxu0
    %4759 = vmatprep.mubr.bf16.mxu0 %v3929
    %4760 = vmatmul.mubr.bf16.gmra.mrb[0].mxu0 %v3928
    %v4761 = vpop.f32.mrb[0].mxu0
    %v4762 = vadd.f32 %v4473, %v4761
    %v4763 = vpop.f32.mrb[0].mxu0
    %v4764 = vpop.f32.mrb[0].mxu0
    %v4765 = vadd.f32 %v4476, %v4764
    %v4766 = vpop.f32.mrb[0].mxu0
    %4767 = vmatprep.mubr.bf16.mxu0 %v3937
    %4768 = vmatmul.mubr.bf16.gmra.mrb[0].mxu0 %v3936
    %v4769 = vpop.f32.mrb[0].mxu0
    %v4770 = vadd.f32 %v4481, %v4769
    %v4771 = vpop.f32.mrb[0].mxu0
    %v4772 = vpop.f32.mrb[0].mxu0
    %v4773 = vadd.f32 %v4484, %v4772
    %v4774 = vpop.f32.mrb[0].mxu0
    %4775 = vmatprep.mubr.bf16.mxu0 %v3945
    %4776 = vmatmul.mubr.bf16.gmra.mrb[0].mxu0 %v3944
    %v4777 = vpop.f32.mrb[0].mxu0
    %v4778 = vadd.f32 %v4489, %v4777
    %v4779 = vpop.f32.mrb[0].mxu0
    %v4780 = vpop.f32.mrb[0].mxu0
    %v4781 = vadd.f32 %v4492, %v4780
    %v4782 = vpop.f32.mrb[0].mxu0
    %4783 = vmatprep.mubr.bf16.mxu0 %v3953
    %4784 = vmatmul.mubr.bf16.gmra.mrb[0].mxu0 %v3952
    %v4785 = vpop.f32.mrb[0].mxu0
    %v4786 = vadd.f32 %v4497, %v4785
    %v4787 = vpop.f32.mrb[0].mxu0
    %v4788 = vpop.f32.mrb[0].mxu0
    %v4789 = vadd.f32 %v4500, %v4788
    %v4790 = vpop.f32.mrb[0].mxu0
    %4791 = vmatprep.mubr.bf16.mxu0 %v3961
    %4792 = vmatmul.mubr.bf16.gmra.mrb[0].mxu0 %v3960
    %v4793 = vpop.f32.mrb[0].mxu0
    %v4794 = vadd.f32 %v4505, %v4793
    %v4795 = vpop.f32.mrb[0].mxu0
    %v4796 = vpop.f32.mrb[0].mxu0
    %v4797 = vadd.f32 %v4508, %v4796
    %v4798 = vpop.f32.mrb[0].mxu0
    %4799 = vmatprep.mubr.bf16.mxu0 %v3969
    %4800 = vmatmul.mubr.bf16.gmra.mrb[0].mxu0 %v3968
    %v4801 = vpop.f32.mrb[0].mxu0
    %v4802 = vadd.f32 %v4513, %v4801
    %v4803 = vpop.f32.mrb[0].mxu0
    %v4804 = vpop.f32.mrb[0].mxu0
    %v4805 = vadd.f32 %v4516, %v4804
    %v4806 = vpop.f32.mrb[0].mxu0
    %4807 = vmatprep.mubr.bf16.mxu0 %v3977
    %4808 = vmatmul.mubr.bf16.gmra.mrb[0].mxu0 %v3976
    %v4809 = vpop.f32.mrb[0].mxu0
    %v4810 = vadd.f32 %v4521, %v4809
    %v4811 = vpop.f32.mrb[0].mxu0
    %v4812 = vpop.f32.mrb[0].mxu0
    %v4813 = vadd.f32 %v4524, %v4812
    %v4814 = vpop.f32.mrb[0].mxu0
    %4815 = vmatprep.mubr.bf16.mxu0 %v3985
    %4816 = vmatmul.mubr.bf16.gmra.mrb[0].mxu0 %v3984
    %v4817 = vpop.f32.mrb[0].mxu0
    %v4818 = vadd.f32 %v4529, %v4817
    %v4819 = vpop.f32.mrb[0].mxu0
    %v4820 = vpop.f32.mrb[0].mxu0
    %v4821 = vadd.f32 %v4532, %v4820
    %v4822 = vpop.f32.mrb[0].mxu0
    %4823 = vmatprep.mubr.bf16.mxu0 %v3993
    %4824 = vmatmul.mubr.bf16.gmra.mrb[0].mxu0 %v3992
    %v4825 = vpop.f32.mrb[0].mxu0
    %v4826 = vadd.f32 %v4537, %v4825
    %v4827 = vpop.f32.mrb[0].mxu0
    %v4828 = vpop.f32.mrb[0].mxu0
    %v4829 = vadd.f32 %v4540, %v4828
    %v4830 = vpop.f32.mrb[0].mxu0
    %4831 = vmatprep.mubr.bf16.mxu0 %v4001
    %4832 = vmatmul.mubr.bf16.gmra.mrb[0].mxu0 %v4000
    %v4833 = vpop.f32.mrb[0].mxu0
    %v4834 = vadd.f32 %v4545, %v4833
    %v4835 = vpop.f32.mrb[0].mxu0
    %v4836 = vpop.f32.mrb[0].mxu0
    %v4837 = vadd.f32 %v4548, %v4836
    %v4838 = vpop.f32.mrb[0].mxu0
    %4839 = vmatprep.mubr.bf16.mxu0 %v4009
    %4840 = vmatmul.mubr.bf16.gmra.mrb[0].mxu0 %v4008
    %v4841 = vpop.f32.mrb[0].mxu0
    %v4842 = vadd.f32 %v4553, %v4841
    %v4843 = vpop.f32.mrb[0].mxu0
    %v4844 = vpop.f32.mrb[0].mxu0
    %v4845 = vadd.f32 %v4556, %v4844
    %v4846 = vpop.f32.mrb[0].mxu0
    %4847 = vmatprep.mubr.bf16.mxu0 %v4017
    %4848 = vmatmul.mubr.bf16.gmra.mrb[0].mxu0 %v4016
    %v4849 = vpop.f32.mrb[0].mxu0
    %v4850 = vadd.f32 %v4561, %v4849
    %v4851 = vpop.f32.mrb[0].mxu0
    %v4852 = vpop.f32.mrb[0].mxu0
    %v4853 = vadd.f32 %v4564, %v4852
    %v4854 = vpop.f32.mrb[0].mxu0
    %4855 = vmatprep.mubr.bf16.mxu0 %v4025
    %4856 = vmatmul.mubr.bf16.gmra.mrb[0].mxu0 %v4024
    %v4857 = vpop.f32.mrb[0].mxu0
    %v4858 = vadd.f32 %v4569, %v4857
    %v4859 = vpop.f32.mrb[0].mxu0
    %v4860 = vpop.f32.mrb[0].mxu0
    %v4861 = vadd.f32 %v4572, %v4860
    %v4862 = vpop.f32.mrb[0].mxu0
    %4863 = vdwg.mxu0
    %4864 = vmatprep.subr.bf16.mxu0 0
    %4865 = vmatpush1.bf16.msra.mxu0 %v2590
    %4866 = vmatprep.subr.bf16.mxu0 0
    %4867 = vmatpush1.bf16.msra.mxu0 %v2591
    %4868 = vmatprep.subr.bf16.mxu0 0
    %4869 = vmatpush1.bf16.msra.mxu0 %v2592
    %4870 = vmatprep.subr.bf16.mxu0 0
    %4871 = vmatpush1.bf16.msra.mxu0 %v2593
    %4872 = vmatprep.subr.bf16.mxu0 0
    %4873 = vmatpush1.bf16.msra.mxu0 %v2594
    %4874 = vmatprep.subr.bf16.mxu0 0
    %4875 = vmatpush1.bf16.msra.mxu0 %v2595
    %4876 = vmatprep.subr.bf16.mxu0 0
    %4877 = vmatpush1.bf16.msra.mxu0 %v2596
    %4878 = vmatprep.subr.bf16.mxu0 0
    %4879 = vmatpush1.bf16.msra.mxu0 %v2597
    %4880 = vmatprep.subr.bf16.mxu0 0
    %4881 = vmatpush1.bf16.msra.mxu0 %v2598
    %4882 = vmatprep.subr.bf16.mxu0 0
    %4883 = vmatpush1.bf16.msra.mxu0 %v2599
    %4884 = vmatprep.subr.bf16.mxu0 0
    %4885 = vmatpush1.bf16.msra.mxu0 %v2600
    %4886 = vmatprep.subr.bf16.mxu0 0
    %4887 = vmatpush1.bf16.msra.mxu0 %v2601
    %4888 = vmatprep.subr.bf16.mxu0 0
    %4889 = vmatpush1.bf16.msra.mxu0 %v2602
    %4890 = vmatprep.subr.bf16.mxu0 0
    %4891 = vmatpush1.bf16.msra.mxu0 %v2603
    %4892 = vmatprep.subr.bf16.mxu0 0
    %4893 = vmatpush1.bf16.msra.mxu0 %v2604
    %4894 = vmatprep.subr.bf16.mxu0 0
    %4895 = vmatpush1.bf16.msra.mxu0 %v2605
    %4896 = vmatprep.mubr.bf16.mxu0 %v3779
    %4897 = vmatmul.mubr.bf16.gmra.mrb[0].mxu0 %v3778
    %v4898 = vpop.f32.mrb[0].mxu0
    %v4899 = vadd.f32 %v4610, %v4898
    %v4900 = vpop.f32.mrb[0].mxu0
    %v4901 = vpop.f32.mrb[0].mxu0
    %v4902 = vadd.f32 %v4613, %v4901
    %v4903 = vpop.f32.mrb[0].mxu0
    %4904 = vmatprep.mubr.bf16.mxu0 %v3787
    %4905 = vmatmul.mubr.bf16.gmra.mrb[0].mxu0 %v3786
    %v4906 = vpop.f32.mrb[0].mxu0
    %v4907 = vadd.f32 %v4618, %v4906
    %v4908 = vpop.f32.mrb[0].mxu0
    %v4909 = vpop.f32.mrb[0].mxu0
    %v4910 = vadd.f32 %v4621, %v4909
    %v4911 = vpop.f32.mrb[0].mxu0
    %4912 = vmatprep.mubr.bf16.mxu0 %v3795
    %4913 = vmatmul.mubr.bf16.gmra.mrb[0].mxu0 %v3794
    %v4914 = vpop.f32.mrb[0].mxu0
    %v4915 = vadd.f32 %v4626, %v4914
    %v4916 = vpop.f32.mrb[0].mxu0
    %v4917 = vpop.f32.mrb[0].mxu0
    %v4918 = vadd.f32 %v4629, %v4917
    %v4919 = vpop.f32.mrb[0].mxu0
    %4920 = vmatprep.mubr.bf16.mxu0 %v3803
    %4921 = vmatmul.mubr.bf16.gmra.mrb[0].mxu0 %v3802
    %v4922 = vpop.f32.mrb[0].mxu0
    %v4923 = vadd.f32 %v4634, %v4922
    %v4924 = vpop.f32.mrb[0].mxu0
    %v4925 = vpop.f32.mrb[0].mxu0
    %v4926 = vadd.f32 %v4637, %v4925
    %v4927 = vpop.f32.mrb[0].mxu0
    %4928 = vmatprep.mubr.bf16.mxu0 %v3811
    %4929 = vmatmul.mubr.bf16.gmra.mrb[0].mxu0 %v3810
    %v4930 = vpop.f32.mrb[0].mxu0
    %v4931 = vadd.f32 %v4642, %v4930
    %v4932 = vpop.f32.mrb[0].mxu0
    %v4933 = vpop.f32.mrb[0].mxu0
    %v4934 = vadd.f32 %v4645, %v4933
    %v4935 = vpop.f32.mrb[0].mxu0
    %4936 = vmatprep.mubr.bf16.mxu0 %v3819
    %4937 = vmatmul.mubr.bf16.gmra.mrb[0].mxu0 %v3818
    %v4938 = vpop.f32.mrb[0].mxu0
    %v4939 = vadd.f32 %v4650, %v4938
    %v4940 = vpop.f32.mrb[0].mxu0
    %v4941 = vpop.f32.mrb[0].mxu0
    %v4942 = vadd.f32 %v4653, %v4941
    %v4943 = vpop.f32.mrb[0].mxu0
    %4944 = vmatprep.mubr.bf16.mxu0 %v3827
    %4945 = vmatmul.mubr.bf16.gmra.mrb[0].mxu0 %v3826
    %v4946 = vpop.f32.mrb[0].mxu0
    %v4947 = vadd.f32 %v4658, %v4946
    %v4948 = vpop.f32.mrb[0].mxu0
    %v4949 = vpop.f32.mrb[0].mxu0
    %v4950 = vadd.f32 %v4661, %v4949
    %v4951 = vpop.f32.mrb[0].mxu0
    %4952 = vmatprep.mubr.bf16.mxu0 %v3835
    %4953 = vmatmul.mubr.bf16.gmra.mrb[0].mxu0 %v3834
    %v4954 = vpop.f32.mrb[0].mxu0
    %v4955 = vadd.f32 %v4666, %v4954
    %v4956 = vpop.f32.mrb[0].mxu0
    %v4957 = vpop.f32.mrb[0].mxu0
    %v4958 = vadd.f32 %v4669, %v4957
    %v4959 = vpop.f32.mrb[0].mxu0
    %4960 = vmatprep.mubr.bf16.mxu0 %v3843
    %4961 = vmatmul.mubr.bf16.gmra.mrb[0].mxu0 %v3842
    %v4962 = vpop.f32.mrb[0].mxu0
    %v4963 = vadd.f32 %v4674, %v4962
    %v4964 = vpop.f32.mrb[0].mxu0
    %v4965 = vpop.f32.mrb[0].mxu0
    %v4966 = vadd.f32 %v4677, %v4965
    %v4967 = vpop.f32.mrb[0].mxu0
    %4968 = vmatprep.mubr.bf16.mxu0 %v3851
    %4969 = vmatmul.mubr.bf16.gmra.mrb[0].mxu0 %v3850
    %v4970 = vpop.f32.mrb[0].mxu0
    %v4971 = vadd.f32 %v4682, %v4970
    %v4972 = vpop.f32.mrb[0].mxu0
    %v4973 = vpop.f32.mrb[0].mxu0
    %v4974 = vadd.f32 %v4685, %v4973
    %v4975 = vpop.f32.mrb[0].mxu0
    %4976 = vmatprep.mubr.bf16.mxu0 %v3859
    %4977 = vmatmul.mubr.bf16.gmra.mrb[0].mxu0 %v3858
    %v4978 = vpop.f32.mrb[0].mxu0
    %v4979 = vadd.f32 %v4690, %v4978
    %v4980 = vpop.f32.mrb[0].mxu0
    %v4981 = vpop.f32.mrb[0].mxu0
    %v4982 = vadd.f32 %v4693, %v4981
    %v4983 = vpop.f32.mrb[0].mxu0
    %4984 = vmatprep.mubr.bf16.mxu0 %v3867
    %4985 = vmatmul.mubr.bf16.gmra.mrb[0].mxu0 %v3866
    %v4986 = vpop.f32.mrb[0].mxu0
    %v4987 = vadd.f32 %v4698, %v4986
    %v4988 = vpop.f32.mrb[0].mxu0
    %v4989 = vpop.f32.mrb[0].mxu0
    %v4990 = vadd.f32 %v4701, %v4989
    %v4991 = vpop.f32.mrb[0].mxu0
    %4992 = vmatprep.mubr.bf16.mxu0 %v3875
    %4993 = vmatmul.mubr.bf16.gmra.mrb[0].mxu0 %v3874
    %v4994 = vpop.f32.mrb[0].mxu0
    %v4995 = vadd.f32 %v4706, %v4994
    %v4996 = vpop.f32.mrb[0].mxu0
    %v4997 = vpop.f32.mrb[0].mxu0
    %v4998 = vadd.f32 %v4709, %v4997
    %v4999 = vpop.f32.mrb[0].mxu0
    %5000 = vmatprep.mubr.bf16.mxu0 %v3883
    %5001 = vmatmul.mubr.bf16.gmra.mrb[0].mxu0 %v3882
    %v5002 = vpop.f32.mrb[0].mxu0
    %v5003 = vadd.f32 %v4714, %v5002
    %v5004 = vpop.f32.mrb[0].mxu0
    %v5005 = vpop.f32.mrb[0].mxu0
    %v5006 = vadd.f32 %v4717, %v5005
    %v5007 = vpop.f32.mrb[0].mxu0
    %5008 = vmatprep.mubr.bf16.mxu0 %v3891
    %5009 = vmatmul.mubr.bf16.gmra.mrb[0].mxu0 %v3890
    %v5010 = vpop.f32.mrb[0].mxu0
    %v5011 = vadd.f32 %v4722, %v5010
    %v5012 = vpop.f32.mrb[0].mxu0
    %v5013 = vpop.f32.mrb[0].mxu0
    %v5014 = vadd.f32 %v4725, %v5013
    %v5015 = vpop.f32.mrb[0].mxu0
    %5016 = vmatprep.mubr.bf16.mxu0 %v3899
    %5017 = vmatmul.mubr.bf16.gmra.mrb[0].mxu0 %v3898
    %v5018 = vpop.f32.mrb[0].mxu0
    %v5019 = vadd.f32 %v4730, %v5018
    %v5020 = vpop.f32.mrb[0].mxu0
    %v5021 = vpop.f32.mrb[0].mxu0
    %v5022 = vadd.f32 %v4733, %v5021
    %v5023 = vpop.f32.mrb[0].mxu0
    %5024 = vmatprep.mubr.bf16.mxu0 %v3907
    %5025 = vmatmul.mubr.bf16.gmra.mrb[0].mxu0 %v3906
    %v5026 = vpop.f32.mrb[0].mxu0
    %v5027 = vadd.f32 %v4738, %v5026
    %v5028 = vpop.f32.mrb[0].mxu0
    %v5029 = vpop.f32.mrb[0].mxu0
    %v5030 = vadd.f32 %v4741, %v5029
    %v5031 = vpop.f32.mrb[0].mxu0
    %5032 = vmatprep.mubr.bf16.mxu0 %v3915
    %5033 = vmatmul.mubr.bf16.gmra.mrb[0].mxu0 %v3914
    %v5034 = vpop.f32.mrb[0].mxu0
    %v5035 = vadd.f32 %v4746, %v5034
    %v5036 = vpop.f32.mrb[0].mxu0
    %v5037 = vpop.f32.mrb[0].mxu0
    %v5038 = vadd.f32 %v4749, %v5037
    %v5039 = vpop.f32.mrb[0].mxu0
    %5040 = vmatprep.mubr.bf16.mxu0 %v3923
    %5041 = vmatmul.mubr.bf16.gmra.mrb[0].mxu0 %v3922
    %v5042 = vpop.f32.mrb[0].mxu0
    %v5043 = vadd.f32 %v4754, %v5042
    %v5044 = vpop.f32.mrb[0].mxu0
    %v5045 = vpop.f32.mrb[0].mxu0
    %v5046 = vadd.f32 %v4757, %v5045
    %v5047 = vpop.f32.mrb[0].mxu0
    %5048 = vmatprep.mubr.bf16.mxu0 %v3931
    %5049 = vmatmul.mubr.bf16.gmra.mrb[0].mxu0 %v3930
    %v5050 = vpop.f32.mrb[0].mxu0
    %v5051 = vadd.f32 %v4762, %v5050
    %v5052 = vpop.f32.mrb[0].mxu0
    %v5053 = vpop.f32.mrb[0].mxu0
    %v5054 = vadd.f32 %v4765, %v5053
    %v5055 = vpop.f32.mrb[0].mxu0
    %5056 = vmatprep.mubr.bf16.mxu0 %v3939
    %5057 = vmatmul.mubr.bf16.gmra.mrb[0].mxu0 %v3938
    %v5058 = vpop.f32.mrb[0].mxu0
    %v5059 = vadd.f32 %v4770, %v5058
    %v5060 = vpop.f32.mrb[0].mxu0
    %v5061 = vpop.f32.mrb[0].mxu0
    %v5062 = vadd.f32 %v4773, %v5061
    %v5063 = vpop.f32.mrb[0].mxu0
    %5064 = vmatprep.mubr.bf16.mxu0 %v3947
    %5065 = vmatmul.mubr.bf16.gmra.mrb[0].mxu0 %v3946
    %v5066 = vpop.f32.mrb[0].mxu0
    %v5067 = vadd.f32 %v4778, %v5066
    %v5068 = vpop.f32.mrb[0].mxu0
    %v5069 = vpop.f32.mrb[0].mxu0
    %v5070 = vadd.f32 %v4781, %v5069
    %v5071 = vpop.f32.mrb[0].mxu0
    %5072 = vmatprep.mubr.bf16.mxu0 %v3955
    %5073 = vmatmul.mubr.bf16.gmra.mrb[0].mxu0 %v3954
    %v5074 = vpop.f32.mrb[0].mxu0
    %v5075 = vadd.f32 %v4786, %v5074
    %v5076 = vpop.f32.mrb[0].mxu0
    %v5077 = vpop.f32.mrb[0].mxu0
    %v5078 = vadd.f32 %v4789, %v5077
    %v5079 = vpop.f32.mrb[0].mxu0
    %5080 = vmatprep.mubr.bf16.mxu0 %v3963
    %5081 = vmatmul.mubr.bf16.gmra.mrb[0].mxu0 %v3962
    %v5082 = vpop.f32.mrb[0].mxu0
    %v5083 = vadd.f32 %v4794, %v5082
    %v5084 = vpop.f32.mrb[0].mxu0
    %v5085 = vpop.f32.mrb[0].mxu0
    %v5086 = vadd.f32 %v4797, %v5085
    %v5087 = vpop.f32.mrb[0].mxu0
    %5088 = vmatprep.mubr.bf16.mxu0 %v3971
    %5089 = vmatmul.mubr.bf16.gmra.mrb[0].mxu0 %v3970
    %v5090 = vpop.f32.mrb[0].mxu0
    %v5091 = vadd.f32 %v4802, %v5090
    %v5092 = vpop.f32.mrb[0].mxu0
    %v5093 = vpop.f32.mrb[0].mxu0
    %v5094 = vadd.f32 %v4805, %v5093
    %v5095 = vpop.f32.mrb[0].mxu0
    %5096 = vmatprep.mubr.bf16.mxu0 %v3979
    %5097 = vmatmul.mubr.bf16.gmra.mrb[0].mxu0 %v3978
    %v5098 = vpop.f32.mrb[0].mxu0
    %v5099 = vadd.f32 %v4810, %v5098
    %v5100 = vpop.f32.mrb[0].mxu0
    %v5101 = vpop.f32.mrb[0].mxu0
    %v5102 = vadd.f32 %v4813, %v5101
    %v5103 = vpop.f32.mrb[0].mxu0
    %5104 = vmatprep.mubr.bf16.mxu0 %v3987
    %5105 = vmatmul.mubr.bf16.gmra.mrb[0].mxu0 %v3986
    %v5106 = vpop.f32.mrb[0].mxu0
    %v5107 = vadd.f32 %v4818, %v5106
    %v5108 = vpop.f32.mrb[0].mxu0
    %v5109 = vpop.f32.mrb[0].mxu0
    %v5110 = vadd.f32 %v4821, %v5109
    %v5111 = vpop.f32.mrb[0].mxu0
    %5112 = vmatprep.mubr.bf16.mxu0 %v3995
    %5113 = vmatmul.mubr.bf16.gmra.mrb[0].mxu0 %v3994
    %v5114 = vpop.f32.mrb[0].mxu0
    %v5115 = vadd.f32 %v4826, %v5114
    %v5116 = vpop.f32.mrb[0].mxu0
    %v5117 = vpop.f32.mrb[0].mxu0
    %v5118 = vadd.f32 %v4829, %v5117
    %v5119 = vpop.f32.mrb[0].mxu0
    %5120 = vmatprep.mubr.bf16.mxu0 %v4003
    %5121 = vmatmul.mubr.bf16.gmra.mrb[0].mxu0 %v4002
    %v5122 = vpop.f32.mrb[0].mxu0
    %v5123 = vadd.f32 %v4834, %v5122
    %v5124 = vpop.f32.mrb[0].mxu0
    %v5125 = vpop.f32.mrb[0].mxu0
    %v5126 = vadd.f32 %v4837, %v5125
    %v5127 = vpop.f32.mrb[0].mxu0
    %5128 = vmatprep.mubr.bf16.mxu0 %v4011
    %5129 = vmatmul.mubr.bf16.gmra.mrb[0].mxu0 %v4010
    %v5130 = vpop.f32.mrb[0].mxu0
    %v5131 = vadd.f32 %v4842, %v5130
    %v5132 = vpop.f32.mrb[0].mxu0
    %v5133 = vpop.f32.mrb[0].mxu0
    %v5134 = vadd.f32 %v4845, %v5133
    %v5135 = vpop.f32.mrb[0].mxu0
    %5136 = vmatprep.mubr.bf16.mxu0 %v4019
    %5137 = vmatmul.mubr.bf16.gmra.mrb[0].mxu0 %v4018
    %v5138 = vpop.f32.mrb[0].mxu0
    %v5139 = vadd.f32 %v4850, %v5138
    %v5140 = vpop.f32.mrb[0].mxu0
    %v5141 = vpop.f32.mrb[0].mxu0
    %v5142 = vadd.f32 %v4853, %v5141
    %v5143 = vpop.f32.mrb[0].mxu0
    %5144 = vmatprep.mubr.bf16.mxu0 %v4027
    %5145 = vmatmul.mubr.bf16.gmra.mrb[0].mxu0 %v4026
    %v5146 = vpop.f32.mrb[0].mxu0
    %v5147 = vadd.f32 %v4858, %v5146
    %v5148 = vpop.f32.mrb[0].mxu0
    %v5149 = vpop.f32.mrb[0].mxu0
    %v5150 = vadd.f32 %v4861, %v5149
    %v5151 = vpop.f32.mrb[0].mxu0
    %5152 = vdwg.mxu0
    %5153 = vmatprep.subr.bf16.mxu0 0
    %5154 = vmatpush1.bf16.msra.mxu0 %v2606
    %5155 = vmatprep.subr.bf16.mxu0 0
    %5156 = vmatpush1.bf16.msra.mxu0 %v2607
    %5157 = vmatprep.subr.bf16.mxu0 0
    %5158 = vmatpush1.bf16.msra.mxu0 %v2608
    %5159 = vmatprep.subr.bf16.mxu0 0
    %5160 = vmatpush1.bf16.msra.mxu0 %v2609
    %5161 = vmatprep.subr.bf16.mxu0 0
    %5162 = vmatpush1.bf16.msra.mxu0 %v2610
    %5163 = vmatprep.subr.bf16.mxu0 0
    %5164 = vmatpush1.bf16.msra.mxu0 %v2611
    %5165 = vmatprep.subr.bf16.mxu0 0
    %5166 = vmatpush1.bf16.msra.mxu0 %v2612
    %5167 = vmatprep.subr.bf16.mxu0 0
    %5168 = vmatpush1.bf16.msra.mxu0 %v2613
    %5169 = vmatprep.subr.bf16.mxu0 0
    %5170 = vmatpush1.bf16.msra.mxu0 %v2614
    %5171 = vmatprep.subr.bf16.mxu0 0
    %5172 = vmatpush1.bf16.msra.mxu0 %v2615
    %5173 = vmatprep.subr.bf16.mxu0 0
    %5174 = vmatpush1.bf16.msra.mxu0 %v2616
    %5175 = vmatprep.subr.bf16.mxu0 0
    %5176 = vmatpush1.bf16.msra.mxu0 %v2617
    %5177 = vmatprep.subr.bf16.mxu0 0
    %5178 = vmatpush1.bf16.msra.mxu0 %v2618
    %5179 = vmatprep.subr.bf16.mxu0 0
    %5180 = vmatpush1.bf16.msra.mxu0 %v2619
    %5181 = vmatprep.subr.bf16.mxu0 0
    %5182 = vmatpush1.bf16.msra.mxu0 %v2620
    %5183 = vmatprep.subr.bf16.mxu0 0
    %5184 = vmatpush1.bf16.msra.mxu0 %v2621
    %5185 = vmatprep.mubr.bf16.mxu0 %v3781
    %5186 = vmatmul.mubr.bf16.gmra.mrb[0].mxu0 %v3780
    %v5187 = vpop.f32.mrb[0].mxu0
    %v5188 = vadd.f32 %v4899, %v5187
    %v5189 = vpop.f32.mrb[0].mxu0
    %v5190 = vpop.f32.mrb[0].mxu0
    %v5191 = vadd.f32 %v4902, %v5190
    %v5192 = vpop.f32.mrb[0].mxu0
    %5193 = vmatprep.mubr.bf16.mxu0 %v3789
    %5194 = vmatmul.mubr.bf16.gmra.mrb[0].mxu0 %v3788
    %v5195 = vpop.f32.mrb[0].mxu0
    %v5196 = vadd.f32 %v4907, %v5195
    %v5197 = vpop.f32.mrb[0].mxu0
    %v5198 = vpop.f32.mrb[0].mxu0
    %v5199 = vadd.f32 %v4910, %v5198
    %v5200 = vpop.f32.mrb[0].mxu0
    %5201 = vmatprep.mubr.bf16.mxu0 %v3797
    %5202 = vmatmul.mubr.bf16.gmra.mrb[0].mxu0 %v3796
    %v5203 = vpop.f32.mrb[0].mxu0
    %v5204 = vadd.f32 %v4915, %v5203
    %v5205 = vpop.f32.mrb[0].mxu0
    %v5206 = vpop.f32.mrb[0].mxu0
    %v5207 = vadd.f32 %v4918, %v5206
    %v5208 = vpop.f32.mrb[0].mxu0
    %5209 = vmatprep.mubr.bf16.mxu0 %v3805
    %5210 = vmatmul.mubr.bf16.gmra.mrb[0].mxu0 %v3804
    %v5211 = vpop.f32.mrb[0].mxu0
    %v5212 = vadd.f32 %v4923, %v5211
    %v5213 = vpop.f32.mrb[0].mxu0
    %v5214 = vpop.f32.mrb[0].mxu0
    %v5215 = vadd.f32 %v4926, %v5214
    %v5216 = vpop.f32.mrb[0].mxu0
    %5217 = vmatprep.mubr.bf16.mxu0 %v3813
    %5218 = vmatmul.mubr.bf16.gmra.mrb[0].mxu0 %v3812
    %v5219 = vpop.f32.mrb[0].mxu0
    %v5220 = vadd.f32 %v4931, %v5219
    %v5221 = vpop.f32.mrb[0].mxu0
    %v5222 = vpop.f32.mrb[0].mxu0
    %v5223 = vadd.f32 %v4934, %v5222
    %v5224 = vpop.f32.mrb[0].mxu0
    %5225 = vmatprep.mubr.bf16.mxu0 %v3821
    %5226 = vmatmul.mubr.bf16.gmra.mrb[0].mxu0 %v3820
    %v5227 = vpop.f32.mrb[0].mxu0
    %v5228 = vadd.f32 %v4939, %v5227
    %v5229 = vpop.f32.mrb[0].mxu0
    %v5230 = vpop.f32.mrb[0].mxu0
    %v5231 = vadd.f32 %v4942, %v5230
    %v5232 = vpop.f32.mrb[0].mxu0
    %5233 = vmatprep.mubr.bf16.mxu0 %v3829
    %5234 = vmatmul.mubr.bf16.gmra.mrb[0].mxu0 %v3828
    %v5235 = vpop.f32.mrb[0].mxu0
    %v5236 = vadd.f32 %v4947, %v5235
    %v5237 = vpop.f32.mrb[0].mxu0
    %v5238 = vpop.f32.mrb[0].mxu0
    %v5239 = vadd.f32 %v4950, %v5238
    %v5240 = vpop.f32.mrb[0].mxu0
    %5241 = vmatprep.mubr.bf16.mxu0 %v3837
    %5242 = vmatmul.mubr.bf16.gmra.mrb[0].mxu0 %v3836
    %v5243 = vpop.f32.mrb[0].mxu0
    %v5244 = vadd.f32 %v4955, %v5243
    %v5245 = vpop.f32.mrb[0].mxu0
    %v5246 = vpop.f32.mrb[0].mxu0
    %v5247 = vadd.f32 %v4958, %v5246
    %v5248 = vpop.f32.mrb[0].mxu0
    %5249 = vmatprep.mubr.bf16.mxu0 %v3845
    %5250 = vmatmul.mubr.bf16.gmra.mrb[0].mxu0 %v3844
    %v5251 = vpop.f32.mrb[0].mxu0
    %v5252 = vadd.f32 %v4963, %v5251
    %v5253 = vpop.f32.mrb[0].mxu0
    %v5254 = vpop.f32.mrb[0].mxu0
    %v5255 = vadd.f32 %v4966, %v5254
    %v5256 = vpop.f32.mrb[0].mxu0
    %5257 = vmatprep.mubr.bf16.mxu0 %v3853
    %5258 = vmatmul.mubr.bf16.gmra.mrb[0].mxu0 %v3852
    %v5259 = vpop.f32.mrb[0].mxu0
    %v5260 = vadd.f32 %v4971, %v5259
    %v5261 = vpop.f32.mrb[0].mxu0
    %v5262 = vpop.f32.mrb[0].mxu0
    %v5263 = vadd.f32 %v4974, %v5262
    %v5264 = vpop.f32.mrb[0].mxu0
    %5265 = vmatprep.mubr.bf16.mxu0 %v3861
    %5266 = vmatmul.mubr.bf16.gmra.mrb[0].mxu0 %v3860
    %v5267 = vpop.f32.mrb[0].mxu0
    %v5268 = vadd.f32 %v4979, %v5267
    %v5269 = vpop.f32.mrb[0].mxu0
    %v5270 = vpop.f32.mrb[0].mxu0
    %v5271 = vadd.f32 %v4982, %v5270
    %v5272 = vpop.f32.mrb[0].mxu0
    %5273 = vmatprep.mubr.bf16.mxu0 %v3869
    %5274 = vmatmul.mubr.bf16.gmra.mrb[0].mxu0 %v3868
    %v5275 = vpop.f32.mrb[0].mxu0
    %v5276 = vadd.f32 %v4987, %v5275
    %v5277 = vpop.f32.mrb[0].mxu0
    %v5278 = vpop.f32.mrb[0].mxu0
    %v5279 = vadd.f32 %v4990, %v5278
    %v5280 = vpop.f32.mrb[0].mxu0
    %5281 = vmatprep.mubr.bf16.mxu0 %v3877
    %5282 = vmatmul.mubr.bf16.gmra.mrb[0].mxu0 %v3876
    %v5283 = vpop.f32.mrb[0].mxu0
    %v5284 = vadd.f32 %v4995, %v5283
    %v5285 = vpop.f32.mrb[0].mxu0
    %v5286 = vpop.f32.mrb[0].mxu0
    %v5287 = vadd.f32 %v4998, %v5286
    %v5288 = vpop.f32.mrb[0].mxu0
    %5289 = vmatprep.mubr.bf16.mxu0 %v3885
    %5290 = vmatmul.mubr.bf16.gmra.mrb[0].mxu0 %v3884
    %v5291 = vpop.f32.mrb[0].mxu0
    %v5292 = vadd.f32 %v5003, %v5291
    %v5293 = vpop.f32.mrb[0].mxu0
    %v5294 = vpop.f32.mrb[0].mxu0
    %v5295 = vadd.f32 %v5006, %v5294
    %v5296 = vpop.f32.mrb[0].mxu0
    %5297 = vmatprep.mubr.bf16.mxu0 %v3893
    %5298 = vmatmul.mubr.bf16.gmra.mrb[0].mxu0 %v3892
    %v5299 = vpop.f32.mrb[0].mxu0
    %v5300 = vadd.f32 %v5011, %v5299
    %v5301 = vpop.f32.mrb[0].mxu0
    %v5302 = vpop.f32.mrb[0].mxu0
    %v5303 = vadd.f32 %v5014, %v5302
    %v5304 = vpop.f32.mrb[0].mxu0
    %5305 = vmatprep.mubr.bf16.mxu0 %v3901
    %5306 = vmatmul.mubr.bf16.gmra.mrb[0].mxu0 %v3900
    %v5307 = vpop.f32.mrb[0].mxu0
    %v5308 = vadd.f32 %v5019, %v5307
    %v5309 = vpop.f32.mrb[0].mxu0
    %v5310 = vpop.f32.mrb[0].mxu0
    %v5311 = vadd.f32 %v5022, %v5310
    %v5312 = vpop.f32.mrb[0].mxu0
    %5313 = vmatprep.mubr.bf16.mxu0 %v3909
    %5314 = vmatmul.mubr.bf16.gmra.mrb[0].mxu0 %v3908
    %v5315 = vpop.f32.mrb[0].mxu0
    %v5316 = vadd.f32 %v5027, %v5315
    %v5317 = vpop.f32.mrb[0].mxu0
    %v5318 = vpop.f32.mrb[0].mxu0
    %v5319 = vadd.f32 %v5030, %v5318
    %v5320 = vpop.f32.mrb[0].mxu0
    %5321 = vmatprep.mubr.bf16.mxu0 %v3917
    %5322 = vmatmul.mubr.bf16.gmra.mrb[0].mxu0 %v3916
    %v5323 = vpop.f32.mrb[0].mxu0
    %v5324 = vadd.f32 %v5035, %v5323
    %v5325 = vpop.f32.mrb[0].mxu0
    %v5326 = vpop.f32.mrb[0].mxu0
    %v5327 = vadd.f32 %v5038, %v5326
    %v5328 = vpop.f32.mrb[0].mxu0
    %5329 = vmatprep.mubr.bf16.mxu0 %v3925
    %5330 = vmatmul.mubr.bf16.gmra.mrb[0].mxu0 %v3924
    %v5331 = vpop.f32.mrb[0].mxu0
    %v5332 = vadd.f32 %v5043, %v5331
    %v5333 = vpop.f32.mrb[0].mxu0
    %v5334 = vpop.f32.mrb[0].mxu0
    %v5335 = vadd.f32 %v5046, %v5334
    %v5336 = vpop.f32.mrb[0].mxu0
    %5337 = vmatprep.mubr.bf16.mxu0 %v3933
    %5338 = vmatmul.mubr.bf16.gmra.mrb[0].mxu0 %v3932
    %v5339 = vpop.f32.mrb[0].mxu0
    %v5340 = vadd.f32 %v5051, %v5339
    %v5341 = vpop.f32.mrb[0].mxu0
    %v5342 = vpop.f32.mrb[0].mxu0
    %v5343 = vadd.f32 %v5054, %v5342
    %v5344 = vpop.f32.mrb[0].mxu0
    %5345 = vmatprep.mubr.bf16.mxu0 %v3941
    %5346 = vmatmul.mubr.bf16.gmra.mrb[0].mxu0 %v3940
    %v5347 = vpop.f32.mrb[0].mxu0
    %v5348 = vadd.f32 %v5059, %v5347
    %v5349 = vpop.f32.mrb[0].mxu0
    %v5350 = vpop.f32.mrb[0].mxu0
    %v5351 = vadd.f32 %v5062, %v5350
    %v5352 = vpop.f32.mrb[0].mxu0
    %5353 = vmatprep.mubr.bf16.mxu0 %v3949
    %5354 = vmatmul.mubr.bf16.gmra.mrb[0].mxu0 %v3948
    %v5355 = vpop.f32.mrb[0].mxu0
    %v5356 = vadd.f32 %v5067, %v5355
    %v5357 = vpop.f32.mrb[0].mxu0
    %v5358 = vpop.f32.mrb[0].mxu0
    %v5359 = vadd.f32 %v5070, %v5358
    %v5360 = vpop.f32.mrb[0].mxu0
    %5361 = vmatprep.mubr.bf16.mxu0 %v3957
    %5362 = vmatmul.mubr.bf16.gmra.mrb[0].mxu0 %v3956
    %v5363 = vpop.f32.mrb[0].mxu0
    %v5364 = vadd.f32 %v5075, %v5363
    %v5365 = vpop.f32.mrb[0].mxu0
    %v5366 = vpop.f32.mrb[0].mxu0
    %v5367 = vadd.f32 %v5078, %v5366
    %v5368 = vpop.f32.mrb[0].mxu0
    %5369 = vmatprep.mubr.bf16.mxu0 %v3965
    %5370 = vmatmul.mubr.bf16.gmra.mrb[0].mxu0 %v3964
    %v5371 = vpop.f32.mrb[0].mxu0
    %v5372 = vadd.f32 %v5083, %v5371
    %v5373 = vpop.f32.mrb[0].mxu0
    %v5374 = vpop.f32.mrb[0].mxu0
    %v5375 = vadd.f32 %v5086, %v5374
    %v5376 = vpop.f32.mrb[0].mxu0
    %5377 = vmatprep.mubr.bf16.mxu0 %v3973
    %5378 = vmatmul.mubr.bf16.gmra.mrb[0].mxu0 %v3972
    %v5379 = vpop.f32.mrb[0].mxu0
    %v5380 = vadd.f32 %v5091, %v5379
    %v5381 = vpop.f32.mrb[0].mxu0
    %v5382 = vpop.f32.mrb[0].mxu0
    %v5383 = vadd.f32 %v5094, %v5382
    %v5384 = vpop.f32.mrb[0].mxu0
    %5385 = vmatprep.mubr.bf16.mxu0 %v3981
    %5386 = vmatmul.mubr.bf16.gmra.mrb[0].mxu0 %v3980
    %v5387 = vpop.f32.mrb[0].mxu0
    %v5388 = vadd.f32 %v5099, %v5387
    %v5389 = vpop.f32.mrb[0].mxu0
    %v5390 = vpop.f32.mrb[0].mxu0
    %v5391 = vadd.f32 %v5102, %v5390
    %v5392 = vpop.f32.mrb[0].mxu0
    %5393 = vmatprep.mubr.bf16.mxu0 %v3989
    %5394 = vmatmul.mubr.bf16.gmra.mrb[0].mxu0 %v3988
    %v5395 = vpop.f32.mrb[0].mxu0
    %v5396 = vadd.f32 %v5107, %v5395
    %v5397 = vpop.f32.mrb[0].mxu0
    %v5398 = vpop.f32.mrb[0].mxu0
    %v5399 = vadd.f32 %v5110, %v5398
    %v5400 = vpop.f32.mrb[0].mxu0
    %5401 = vmatprep.mubr.bf16.mxu0 %v3997
    %5402 = vmatmul.mubr.bf16.gmra.mrb[0].mxu0 %v3996
    %v5403 = vpop.f32.mrb[0].mxu0
    %v5404 = vadd.f32 %v5115, %v5403
    %v5405 = vpop.f32.mrb[0].mxu0
    %v5406 = vpop.f32.mrb[0].mxu0
    %v5407 = vadd.f32 %v5118, %v5406
    %v5408 = vpop.f32.mrb[0].mxu0
    %5409 = vmatprep.mubr.bf16.mxu0 %v4005
    %5410 = vmatmul.mubr.bf16.gmra.mrb[0].mxu0 %v4004
    %v5411 = vpop.f32.mrb[0].mxu0
    %v5412 = vadd.f32 %v5123, %v5411
    %v5413 = vpop.f32.mrb[0].mxu0
    %v5414 = vpop.f32.mrb[0].mxu0
    %v5415 = vadd.f32 %v5126, %v5414
    %v5416 = vpop.f32.mrb[0].mxu0
    %5417 = vmatprep.mubr.bf16.mxu0 %v4013
    %5418 = vmatmul.mubr.bf16.gmra.mrb[0].mxu0 %v4012
    %v5419 = vpop.f32.mrb[0].mxu0
    %v5420 = vadd.f32 %v5131, %v5419
    %v5421 = vpop.f32.mrb[0].mxu0
    %v5422 = vpop.f32.mrb[0].mxu0
    %v5423 = vadd.f32 %v5134, %v5422
    %v5424 = vpop.f32.mrb[0].mxu0
    %5425 = vmatprep.mubr.bf16.mxu0 %v4021
    %5426 = vmatmul.mubr.bf16.gmra.mrb[0].mxu0 %v4020
    %v5427 = vpop.f32.mrb[0].mxu0
    %v5428 = vadd.f32 %v5139, %v5427
    %v5429 = vpop.f32.mrb[0].mxu0
    %v5430 = vpop.f32.mrb[0].mxu0
    %v5431 = vadd.f32 %v5142, %v5430
    %v5432 = vpop.f32.mrb[0].mxu0
    %5433 = vmatprep.mubr.bf16.mxu0 %v4029
    %5434 = vmatmul.mubr.bf16.gmra.mrb[0].mxu0 %v4028
    %v5435 = vpop.f32.mrb[0].mxu0
    %v5436 = vadd.f32 %v5147, %v5435
    %v5437 = vpop.f32.mrb[0].mxu0
    %v5438 = vpop.f32.mrb[0].mxu0
    %v5439 = vadd.f32 %v5150, %v5438
    %v5440 = vpop.f32.mrb[0].mxu0
    %5441 = vdwg.mxu0
    %v5442 = vld [vmem:[%s5] sm:$0xff]
    %v5443 = vld [vmem:[%s5 + $0x8] sm:$0xff]
    %v5444 = vld [vmem:[%s5 + $0x10] sm:$0xff]
    %v5445 = vld [vmem:[%s5 + $0x18] sm:$0xff]
    %v5446 = vld [vmem:[%s5 + $0x20] sm:$0xff]
    %v5447 = vld [vmem:[%s5 + $0x28] sm:$0xff]
    %v5448 = vld [vmem:[%s5 + $0x30] sm:$0xff]
    %v5449 = vld [vmem:[%s5 + $0x38] sm:$0xff]
    %v5450 = vld [vmem:[%s5 + $0x40] sm:$0xff]
    %v5451 = vld [vmem:[%s5 + $0x48] sm:$0xff]
    %v5452 = vld [vmem:[%s5 + $0x50] sm:$0xff]
    %v5453 = vld [vmem:[%s5 + $0x58] sm:$0xff]
    %v5454 = vld [vmem:[%s5 + $0x60] sm:$0xff]
    %v5455 = vld [vmem:[%s5 + $0x68] sm:$0xff]
    %v5456 = vld [vmem:[%s5 + $0x70] sm:$0xff]
    %v5457 = vld [vmem:[%s5 + $0x78] sm:$0xff]
    %vm5458 = vcmask 261120
    %v5460 = vsel %vm5458, %v5442, 0
    %v5463 = vsel %vm5458, %v5443, 0
    %v5466 = vsel %vm5458, %v5444, 0
    %v5469 = vsel %vm5458, %v5445, 0
    %v5472 = vsel %vm5458, %v5446, 0
    %v5475 = vsel %vm5458, %v5447, 0
    %v5478 = vsel %vm5458, %v5448, 0
    %v5481 = vsel %vm5458, %v5449, 0
    %v5484 = vsel %vm5458, %v5450, 0
    %v5487 = vsel %vm5458, %v5451, 0
    %v5490 = vsel %vm5458, %v5452, 0
    %v5493 = vsel %vm5458, %v5453, 0
    %v5496 = vsel %vm5458, %v5454, 0
    %v5499 = vsel %vm5458, %v5455, 0
    %v5502 = vsel %vm5458, %v5456, 0
    %v5505 = vsel %vm5458, %v5457, 0
    %5507 = vmatprep.subr.mxu0 0.0
    %5508 = vmatpush1.msra.mxu0 %v5188
    %5509 = vmatprep.subr.mxu0 0.0
    %5510 = vmatpush1.msra.mxu0 %v5191
    %5511 = vmatprep.subr.mxu0 0.0
    %5512 = vmatpush1.msra.mxu0 %v5196
    %5513 = vmatprep.subr.mxu0 0.0
    %5514 = vmatpush1.msra.mxu0 %v5199
    %5515 = vmatprep.subr.mxu0 0.0
    %5516 = vmatpush1.msra.mxu0 0.0
    %5517 = vmatprep.subr.mxu0 0.0
    %5518 = vmatpush1.msra.mxu0 0.0
    %5519 = vmatprep.subr.mxu0 0.0
    %5520 = vmatpush1.msra.mxu0 0.0
    %5521 = vmatprep.subr.mxu0 0.0
    %5522 = vmatpush1.msra.mxu0 0.0
    %5523 = vmatprep.subr.mxu0 0.0
    %5524 = vmatpush1.msra.mxu0 0.0
    %5525 = vmatprep.subr.mxu0 0.0
    %5526 = vmatpush1.msra.mxu0 0.0
    %5527 = vmatprep.subr.mxu0 0.0
    %5528 = vmatpush1.msra.mxu0 0.0
    %5529 = vmatprep.subr.mxu0 0.0
    %5530 = vmatpush1.msra.mxu0 0.0
    %5531 = vmatprep.subr.mxu0 0.0
    %5532 = vmatpush1.msra.mxu0 0.0
    %5533 = vmatprep.subr.mxu0 0.0
    %5534 = vmatpush1.msra.mxu0 0.0
    %5535 = vmatprep.subr.mxu0 0.0
    %5536 = vmatpush1.msra.mxu0 0.0
    %5537 = vmatprep.subr.mxu0 0.0
    %5538 = vmatpush1.msra.mxu0 0.0
    %5539 = vmatprep.subr.mxu0 0.0
    %5540 = vmatpush1.msra.mxu0 0.0
    %5541 = vmatprep.subr.mxu0 0.0
    %5542 = vmatpush1.msra.mxu0 0.0
    %5543 = vmatprep.subr.mxu0 0.0
    %5544 = vmatpush1.msra.mxu0 0.0
    %5545 = vmatprep.subr.mxu0 0.0
    %5546 = vmatpush1.msra.mxu0 0.0
    %5547 = vmatprep.subr.mxu0 0.0
    %5548 = vmatpush1.msra.mxu0 0.0
    %5549 = vmatprep.subr.mxu0 0.0
    %5550 = vmatpush1.msra.mxu0 0.0
    %5551 = vmatprep.subr.mxu0 0.0
    %5552 = vmatpush1.msra.mxu0 0.0
    %5553 = vmatprep.subr.mxu0 0.0
    %5554 = vmatpush1.msra.mxu0 0.0
    %5555 = vmatprep.subr.mxu0 0.0
    %5556 = vmatpush1.msra.mxu0 0.0
    %5557 = vmatprep.subr.mxu0 0.0
    %5558 = vmatpush1.msra.mxu0 0.0
    %5559 = vmatprep.subr.mxu0 0.0
    %5560 = vmatpush1.msra.mxu0 0.0
    %5561 = vmatprep.subr.mxu0 0.0
    %5562 = vmatpush1.msra.mxu0 0.0
    %5563 = vmatprep.subr.mxu0 0.0
    %5564 = vmatpush1.msra.mxu0 0.0
    %5565 = vmatprep.subr.mxu0 0.0
    %5566 = vmatpush1.msra.mxu0 0.0
    %5567 = vmatprep.subr.mxu0 0.0
    %5568 = vmatpush1.msra.mxu0 0.0
    %5569 = vmatprep.subr.mxu0 0.0
    %5570 = vmatpush1.msra.mxu0 0.0
    %5571 = vmatprep.mubr.f32.mxu0 0.0
    %5572 = vmatmul.mubr.f32.gmra.mrb[0].mxu0 %v5460
    %v5573 = vpop.f32.mrb[0].mxu0
    %v5574 = vadd.f32 0.0, %v5573
    %v5575 = vpop.f32.mrb[0].mxu0
    %5576 = vmatprep.mubr.f32.mxu0 0.0
    %5577 = vmatmul.mubr.f32.gmra.mrb[0].mxu0 %v5463
    %v5578 = vpop.f32.mrb[0].mxu0
    %v5579 = vadd.f32 0.0, %v5578
    %v5580 = vpop.f32.mrb[0].mxu0
    %5581 = vmatprep.mubr.f32.mxu0 0.0
    %5582 = vmatmul.mubr.f32.gmra.mrb[0].mxu0 %v5466
    %v5583 = vpop.f32.mrb[0].mxu0
    %v5584 = vadd.f32 0.0, %v5583
    %v5585 = vpop.f32.mrb[0].mxu0
    %5586 = vmatprep.mubr.f32.mxu0 0.0
    %5587 = vmatmul.mubr.f32.gmra.mrb[0].mxu0 %v5469
    %v5588 = vpop.f32.mrb[0].mxu0
    %v5589 = vadd.f32 0.0, %v5588
    %v5590 = vpop.f32.mrb[0].mxu0
    %5591 = vmatprep.mubr.f32.mxu0 0.0
    %5592 = vmatmul.mubr.f32.gmra.mrb[0].mxu0 %v5472
    %v5593 = vpop.f32.mrb[0].mxu0
    %v5594 = vadd.f32 0.0, %v5593
    %v5595 = vpop.f32.mrb[0].mxu0
    %5596 = vmatprep.mubr.f32.mxu0 0.0
    %5597 = vmatmul.mubr.f32.gmra.mrb[0].mxu0 %v5475
    %v5598 = vpop.f32.mrb[0].mxu0
    %v5599 = vadd.f32 0.0, %v5598
    %v5600 = vpop.f32.mrb[0].mxu0
    %5601 = vmatprep.mubr.f32.mxu0 0.0
    %5602 = vmatmul.mubr.f32.gmra.mrb[0].mxu0 %v5478
    %v5603 = vpop.f32.mrb[0].mxu0
    %v5604 = vadd.f32 0.0, %v5603
    %v5605 = vpop.f32.mrb[0].mxu0
    %5606 = vmatprep.mubr.f32.mxu0 0.0
    %5607 = vmatmul.mubr.f32.gmra.mrb[0].mxu0 %v5481
    %v5608 = vpop.f32.mrb[0].mxu0
    %v5609 = vadd.f32 0.0, %v5608
    %v5610 = vpop.f32.mrb[0].mxu0
    %5611 = vmatprep.mubr.f32.mxu0 0.0
    %5612 = vmatmul.mubr.f32.gmra.mrb[0].mxu0 %v5484
    %v5613 = vpop.f32.mrb[0].mxu0
    %v5614 = vadd.f32 0.0, %v5613
    %v5615 = vpop.f32.mrb[0].mxu0
    %5616 = vmatprep.mubr.f32.mxu0 0.0
    %5617 = vmatmul.mubr.f32.gmra.mrb[0].mxu0 %v5487
    %v5618 = vpop.f32.mrb[0].mxu0
    %v5619 = vadd.f32 0.0, %v5618
    %v5620 = vpop.f32.mrb[0].mxu0
    %5621 = vmatprep.mubr.f32.mxu0 0.0
    %5622 = vmatmul.mubr.f32.gmra.mrb[0].mxu0 %v5490
    %v5623 = vpop.f32.mrb[0].mxu0
    %v5624 = vadd.f32 0.0, %v5623
    %v5625 = vpop.f32.mrb[0].mxu0
    %5626 = vmatprep.mubr.f32.mxu0 0.0
    %5627 = vmatmul.mubr.f32.gmra.mrb[0].mxu0 %v5493
    %v5628 = vpop.f32.mrb[0].mxu0
    %v5629 = vadd.f32 0.0, %v5628
    %v5630 = vpop.f32.mrb[0].mxu0
    %5631 = vmatprep.mubr.f32.mxu0 0.0
    %5632 = vmatmul.mubr.f32.gmra.mrb[0].mxu0 %v5496
    %v5633 = vpop.f32.mrb[0].mxu0
    %v5634 = vadd.f32 0.0, %v5633
    %v5635 = vpop.f32.mrb[0].mxu0
    %5636 = vmatprep.mubr.f32.mxu0 0.0
    %5637 = vmatmul.mubr.f32.gmra.mrb[0].mxu0 %v5499
    %v5638 = vpop.f32.mrb[0].mxu0
    %v5639 = vadd.f32 0.0, %v5638
    %v5640 = vpop.f32.mrb[0].mxu0
    %5641 = vmatprep.mubr.f32.mxu0 0.0
    %5642 = vmatmul.mubr.f32.gmra.mrb[0].mxu0 %v5502
    %v5643 = vpop.f32.mrb[0].mxu0
    %v5644 = vadd.f32 0.0, %v5643
    %v5645 = vpop.f32.mrb[0].mxu0
    %5646 = vmatprep.mubr.f32.mxu0 0.0
    %5647 = vmatmul.mubr.f32.gmra.mrb[0].mxu0 %v5505
    %v5648 = vpop.f32.mrb[0].mxu0
    %v5649 = vadd.f32 0.0, %v5648
    %v5650 = vpop.f32.mrb[0].mxu0
    %5651 = vdwg.mxu0
    %v5652 = vmul.f32 %v5574, 2.0
    %v5653 = vmul.f32 %v5579, 2.0
    %v5654 = vmul.f32 %v5584, 2.0
    %v5655 = vmul.f32 %v5589, 2.0
    %v5656 = vmul.f32 %v5594, 2.0
    %v5657 = vmul.f32 %v5599, 2.0
    %v5658 = vmul.f32 %v5604, 2.0
    %v5659 = vmul.f32 %v5609, 2.0
    %v5660 = vmul.f32 %v5614, 2.0
    %v5661 = vmul.f32 %v5619, 2.0
    %v5662 = vmul.f32 %v5624, 2.0
    %v5663 = vmul.f32 %v5629, 2.0
    %v5664 = vmul.f32 %v5634, 2.0
    %v5665 = vmul.f32 %v5639, 2.0
    %v5666 = vmul.f32 %v5644, 2.0
    %v5667 = vmul.f32 %v5649, 2.0
    %v5668 = vld [vmem:[%s6] sm:$0xff]
    %v5669 = vld [vmem:[%s6 + $0x8] sm:$0xff]
    %v5670 = vld [vmem:[%s6 + $0x10] sm:$0xff]
    %v5671 = vld [vmem:[%s6 + $0x18] sm:$0xff]
    %v5672 = vld [vmem:[%s6 + $0x20] sm:$0xff]
    %v5673 = vld [vmem:[%s6 + $0x28] sm:$0xff]
    %v5674 = vld [vmem:[%s6 + $0x30] sm:$0xff]
    %v5675 = vld [vmem:[%s6 + $0x38] sm:$0xff]
    %v5676 = vld [vmem:[%s6 + $0x40] sm:$0xff]
    %v5677 = vld [vmem:[%s6 + $0x48] sm:$0xff]
    %v5678 = vld [vmem:[%s6 + $0x50] sm:$0xff]
    %v5679 = vld [vmem:[%s6 + $0x58] sm:$0xff]
    %v5680 = vld [vmem:[%s6 + $0x60] sm:$0xff]
    %v5681 = vld [vmem:[%s6 + $0x68] sm:$0xff]
    %v5682 = vld [vmem:[%s6 + $0x70] sm:$0xff]
    %v5683 = vld [vmem:[%s6 + $0x78] sm:$0xff]
    %5685 = vset.pattern.permute.xlu0 0
    %5686 = vperm.xlu0 %5685, %v5668
    %v5687 = vpop.permute.xlu0 %5686
    %5690 = vset.pattern.permute.xlu0 0
    %5691 = vperm.xlu0 %5690, %v5669
    %v5692 = vpop.permute.xlu0 %5691
    %5695 = vset.pattern.permute.xlu0 0
    %5696 = vperm.xlu0 %5695, %v5670
    %v5697 = vpop.permute.xlu0 %5696
    %5700 = vset.pattern.permute.xlu0 0
    %5701 = vperm.xlu0 %5700, %v5671
    %v5702 = vpop.permute.xlu0 %5701
    %5705 = vset.pattern.permute.xlu0 0
    %5706 = vperm.xlu0 %5705, %v5672
    %v5707 = vpop.permute.xlu0 %5706
    %5710 = vset.pattern.permute.xlu0 0
    %5711 = vperm.xlu0 %5710, %v5673
    %v5712 = vpop.permute.xlu0 %5711
    %5715 = vset.pattern.permute.xlu0 0
    %5716 = vperm.xlu0 %5715, %v5674
    %v5717 = vpop.permute.xlu0 %5716
    %5720 = vset.pattern.permute.xlu0 0
    %5721 = vperm.xlu0 %5720, %v5675
    %v5722 = vpop.permute.xlu0 %5721
    %5725 = vset.pattern.permute.xlu0 0
    %5726 = vperm.xlu0 %5725, %v5676
    %v5727 = vpop.permute.xlu0 %5726
    %5730 = vset.pattern.permute.xlu0 0
    %5731 = vperm.xlu0 %5730, %v5677
    %v5732 = vpop.permute.xlu0 %5731
    %5735 = vset.pattern.permute.xlu0 0
    %5736 = vperm.xlu0 %5735, %v5678
    %v5737 = vpop.permute.xlu0 %5736
    %5740 = vset.pattern.permute.xlu0 0
    %5741 = vperm.xlu0 %5740, %v5679
    %v5742 = vpop.permute.xlu0 %5741
    %5745 = vset.pattern.permute.xlu0 0
    %5746 = vperm.xlu0 %5745, %v5680
    %v5747 = vpop.permute.xlu0 %5746
    %5750 = vset.pattern.permute.xlu0 0
    %5751 = vperm.xlu0 %5750, %v5681
    %v5752 = vpop.permute.xlu0 %5751
    %5755 = vset.pattern.permute.xlu0 0
    %5756 = vperm.xlu0 %5755, %v5682
    %v5757 = vpop.permute.xlu0 %5756
    %5760 = vset.pattern.permute.xlu0 0
    %5761 = vperm.xlu0 %5760, %v5683
    %v5762 = vpop.permute.xlu0 %5761
    %v5764 = vsub.f32 %v5652, %v5687
    %v5765 = vsub.f32 %v5653, %v5692
    %v5766 = vsub.f32 %v5654, %v5697
    %v5767 = vsub.f32 %v5655, %v5702
    %v5768 = vsub.f32 %v5656, %v5707
    %v5769 = vsub.f32 %v5657, %v5712
    %v5770 = vsub.f32 %v5658, %v5717
    %v5771 = vsub.f32 %v5659, %v5722
    %v5772 = vsub.f32 %v5660, %v5727
    %v5773 = vsub.f32 %v5661, %v5732
    %v5774 = vsub.f32 %v5662, %v5737
    %v5775 = vsub.f32 %v5663, %v5742
    %v5776 = vsub.f32 %v5664, %v5747
    %v5777 = vsub.f32 %v5665, %v5752
    %v5778 = vsub.f32 %v5666, %v5757
    %v5779 = vsub.f32 %v5667, %v5762
    %v5780 = vmax.f32 %v5764, %v5768
    %v5781 = vmax.f32 %v5765, %v5769
    %v5782 = vmax.f32 %v5766, %v5770
    %v5783 = vmax.f32 %v5767, %v5771
    %v5784 = vmax.f32 %v5780, %v5772
    %v5785 = vmax.f32 %v5781, %v5773
    %v5786 = vmax.f32 %v5782, %v5774
    %v5787 = vmax.f32 %v5783, %v5775
    %v5788 = vmax.f32 %v5784, %v5776
    %v5789 = vmax.f32 %v5785, %v5777
    %v5790 = vmax.f32 %v5786, %v5778
    %v5791 = vmax.f32 %v5787, %v5779
    %v5792 = vmax.f32 %v5788, %v5789
    %v5793 = vmax.f32 %v5790, %v5791
    %v5794 = vmax.f32 %v5792, %v5793
    %v5795 = vrot.slane %v5794, 4
    %v5796 = vmax.f32 %v5794, %v5795
    %v5797 = vrot.slane %v5796, 2
    %v5798 = vmax.f32 %v5796, %v5797
    %v5799 = vrot.slane %v5798, 1
    %v5800 = vmax.f32 %v5798, %v5799
    %v5801 = vlaneseq
    %v5802 = vshrl.u32 %v5801, 7
    %v5803 = vadd.s32 %v5802, 8
    %v5804 = vadd.s32 %v5802, 16
    %v5805 = vadd.s32 %v5802, 24
    %v5806 = vadd.s32 %v5802, 32
    %v5807 = vadd.s32 %v5802, 40
    %v5808 = vadd.s32 %v5802, 48
    %v5809 = vadd.s32 %v5802, 56
    %v5810 = vadd.s32 %v5802, 64
    %v5811 = vadd.s32 %v5802, 72
    %v5812 = vadd.s32 %v5802, 80
    %v5813 = vadd.s32 %v5802, 88
    %v5814 = vadd.s32 %v5802, 96
    %v5815 = vadd.s32 %v5802, 104
    %v5816 = vadd.s32 %v5802, 112
    %v5817 = vadd.s32 %v5802, 120
    %vm5818 = vcmp.ge.f32.partialorder %v5764, %v5800
    %vm5819 = vcmp.ge.f32.partialorder %v5765, %v5800
    %vm5820 = vcmp.ge.f32.partialorder %v5766, %v5800
    %vm5821 = vcmp.ge.f32.partialorder %v5767, %v5800
    %vm5822 = vcmp.ge.f32.partialorder %v5768, %v5800
    %vm5823 = vcmp.ge.f32.partialorder %v5769, %v5800
    %vm5824 = vcmp.ge.f32.partialorder %v5770, %v5800
    %vm5825 = vcmp.ge.f32.partialorder %v5771, %v5800
    %vm5826 = vcmp.ge.f32.partialorder %v5772, %v5800
    %vm5827 = vcmp.ge.f32.partialorder %v5773, %v5800
    %vm5828 = vcmp.ge.f32.partialorder %v5774, %v5800
    %vm5829 = vcmp.ge.f32.partialorder %v5775, %v5800
    %vm5830 = vcmp.ge.f32.partialorder %v5776, %v5800
    %vm5831 = vcmp.ge.f32.partialorder %v5777, %v5800
    %vm5832 = vcmp.ge.f32.partialorder %v5778, %v5800
    %vm5833 = vcmp.ge.f32.partialorder %v5779, %v5800
    %v5834 = vsel %vm5818, %v5802, 128
    %v5835 = vsel %vm5819, %v5803, 128
    %v5836 = vsel %vm5820, %v5804, 128
    %v5837 = vsel %vm5821, %v5805, 128
    %v5838 = vsel %vm5822, %v5806, 128
    %v5839 = vsel %vm5823, %v5807, 128
    %v5840 = vsel %vm5824, %v5808, 128
    %v5841 = vsel %vm5825, %v5809, 128
    %v5842 = vsel %vm5826, %v5810, 128
    %v5843 = vsel %vm5827, %v5811, 128
    %v5844 = vsel %vm5828, %v5812, 128
    %v5845 = vsel %vm5829, %v5813, 128
    %v5846 = vsel %vm5830, %v5814, 128
    %v5847 = vsel %vm5831, %v5815, 128
    %v5848 = vsel %vm5832, %v5816, 128
    %v5849 = vsel %vm5833, %v5817, 128
    %vm5850 = vcmp.lt.s32.totalorder %v5834, %v5838
    %v5851 = vsel %vm5850, %v5834, %v5838
    %vm5852 = vcmp.lt.s32.totalorder %v5835, %v5839
    %v5853 = vsel %vm5852, %v5835, %v5839
    %vm5854 = vcmp.lt.s32.totalorder %v5836, %v5840
    %v5855 = vsel %vm5854, %v5836, %v5840
    %vm5856 = vcmp.lt.s32.totalorder %v5837, %v5841
    %v5857 = vsel %vm5856, %v5837, %v5841
    %vm5858 = vcmp.lt.s32.totalorder %v5851, %v5842
    %v5859 = vsel %vm5858, %v5851, %v5842
    %vm5860 = vcmp.lt.s32.totalorder %v5853, %v5843
    %v5861 = vsel %vm5860, %v5853, %v5843
    %vm5862 = vcmp.lt.s32.totalorder %v5855, %v5844
    %v5863 = vsel %vm5862, %v5855, %v5844
    %vm5864 = vcmp.lt.s32.totalorder %v5857, %v5845
    %v5865 = vsel %vm5864, %v5857, %v5845
    %vm5866 = vcmp.lt.s32.totalorder %v5859, %v5846
    %v5867 = vsel %vm5866, %v5859, %v5846
    %vm5868 = vcmp.lt.s32.totalorder %v5861, %v5847
    %v5869 = vsel %vm5868, %v5861, %v5847
    %vm5870 = vcmp.lt.s32.totalorder %v5863, %v5848
    %v5871 = vsel %vm5870, %v5863, %v5848
    %vm5872 = vcmp.lt.s32.totalorder %v5865, %v5849
    %v5873 = vsel %vm5872, %v5865, %v5849
    %vm5874 = vcmp.lt.s32.totalorder %v5867, %v5869
    %v5875 = vsel %vm5874, %v5867, %v5869
    %vm5876 = vcmp.lt.s32.totalorder %v5871, %v5873
    %v5877 = vsel %vm5876, %v5871, %v5873
    %vm5878 = vcmp.lt.s32.totalorder %v5875, %v5877
    %v5879 = vsel %vm5878, %v5875, %v5877
    %v5880 = vrot.slane %v5879, 4
    %vm5881 = vcmp.lt.s32.totalorder %v5879, %v5880
    %v5882 = vsel %vm5881, %v5879, %v5880
    %v5883 = vrot.slane %v5882, 2
    %vm5884 = vcmp.lt.s32.totalorder %v5882, %v5883
    %v5885 = vsel %vm5884, %v5882, %v5883
    %v5886 = vrot.slane %v5885, 1
    %vm5887 = vcmp.lt.s32.totalorder %v5885, %v5886
    %v5888 = vsel %vm5887, %v5885, %v5886
    %5889 = vst [vmem:[#allocation5] sm:$0x1] %v5888
    %v5890 = vld [vmem:[%s5] sm:$0xff]
    %v5891 = vld [vmem:[%s5 + $0x8] sm:$0xff]
    %v5892 = vld [vmem:[%s5 + $0x10] sm:$0xff]
    %v5893 = vld [vmem:[%s5 + $0x18] sm:$0xff]
    %v5894 = vld [vmem:[%s5 + $0x20] sm:$0xff]
    %v5895 = vld [vmem:[%s5 + $0x28] sm:$0xff]
    %v5896 = vld [vmem:[%s5 + $0x30] sm:$0xff]
    %v5897 = vld [vmem:[%s5 + $0x38] sm:$0xff]
    %v5898 = vld [vmem:[%s5 + $0x40] sm:$0xff]
    %v5899 = vld [vmem:[%s5 + $0x48] sm:$0xff]
    %v5900 = vld [vmem:[%s5 + $0x50] sm:$0xff]
    %v5901 = vld [vmem:[%s5 + $0x58] sm:$0xff]
    %v5902 = vld [vmem:[%s5 + $0x60] sm:$0xff]
    %v5903 = vld [vmem:[%s5 + $0x68] sm:$0xff]
    %v5904 = vld [vmem:[%s5 + $0x70] sm:$0xff]
    %v5905 = vld [vmem:[%s5 + $0x78] sm:$0xff]
    %v5907 = vsel %vm5458, %v5890, 0
    %v5910 = vsel %vm5458, %v5891, 0
    %v5913 = vsel %vm5458, %v5892, 0
    %v5916 = vsel %vm5458, %v5893, 0
    %v5919 = vsel %vm5458, %v5894, 0
    %v5922 = vsel %vm5458, %v5895, 0
    %v5925 = vsel %vm5458, %v5896, 0
    %v5928 = vsel %vm5458, %v5897, 0
    %v5931 = vsel %vm5458, %v5898, 0
    %v5934 = vsel %vm5458, %v5899, 0
    %v5937 = vsel %vm5458, %v5900, 0
    %v5940 = vsel %vm5458, %v5901, 0
    %v5943 = vsel %vm5458, %v5902, 0
    %v5946 = vsel %vm5458, %v5903, 0
    %v5949 = vsel %vm5458, %v5904, 0
    %v5952 = vsel %vm5458, %v5905, 0
    %5954 = vmatprep.subr.mxu0 0.0
    %5955 = vmatpush1.msra.mxu0 %v5204
    %5956 = vmatprep.subr.mxu0 0.0
    %5957 = vmatpush1.msra.mxu0 %v5207
    %5958 = vmatprep.subr.mxu0 0.0
    %5959 = vmatpush1.msra.mxu0 %v5212
    %5960 = vmatprep.subr.mxu0 0.0
    %5961 = vmatpush1.msra.mxu0 %v5215
    %5962 = vmatprep.subr.mxu0 0.0
    %5963 = vmatpush1.msra.mxu0 0.0
    %5964 = vmatprep.subr.mxu0 0.0
    %5965 = vmatpush1.msra.mxu0 0.0
    %5966 = vmatprep.subr.mxu0 0.0
    %5967 = vmatpush1.msra.mxu0 0.0
    %5968 = vmatprep.subr.mxu0 0.0
    %5969 = vmatpush1.msra.mxu0 0.0
    %5970 = vmatprep.subr.mxu0 0.0
    %5971 = vmatpush1.msra.mxu0 0.0
    %5972 = vmatprep.subr.mxu0 0.0
    %5973 = vmatpush1.msra.mxu0 0.0
    %5974 = vmatprep.subr.mxu0 0.0
    %5975 = vmatpush1.msra.mxu0 0.0
    %5976 = vmatprep.subr.mxu0 0.0
    %5977 = vmatpush1.msra.mxu0 0.0
    %5978 = vmatprep.subr.mxu0 0.0
    %5979 = vmatpush1.msra.mxu0 0.0
    %5980 = vmatprep.subr.mxu0 0.0
    %5981 = vmatpush1.msra.mxu0 0.0
    %5982 = vmatprep.subr.mxu0 0.0
    %5983 = vmatpush1.msra.mxu0 0.0
    %5984 = vmatprep.subr.mxu0 0.0
    %5985 = vmatpush1.msra.mxu0 0.0
    %5986 = vmatprep.subr.mxu0 0.0
    %5987 = vmatpush1.msra.mxu0 0.0
    %5988 = vmatprep.subr.mxu0 0.0
    %5989 = vmatpush1.msra.mxu0 0.0
    %5990 = vmatprep.subr.mxu0 0.0
    %5991 = vmatpush1.msra.mxu0 0.0
    %5992 = vmatprep.subr.mxu0 0.0
    %5993 = vmatpush1.msra.mxu0 0.0
    %5994 = vmatprep.subr.mxu0 0.0
    %5995 = vmatpush1.msra.mxu0 0.0
    %5996 = vmatprep.subr.mxu0 0.0
    %5997 = vmatpush1.msra.mxu0 0.0
    %5998 = vmatprep.subr.mxu0 0.0
    %5999 = vmatpush1.msra.mxu0 0.0
    %6000 = vmatprep.subr.mxu0 0.0
    %6001 = vmatpush1.msra.mxu0 0.0
    %6002 = vmatprep.subr.mxu0 0.0
    %6003 = vmatpush1.msra.mxu0 0.0
    %6004 = vmatprep.subr.mxu0 0.0
    %6005 = vmatpush1.msra.mxu0 0.0
    %6006 = vmatprep.subr.mxu0 0.0
    %6007 = vmatpush1.msra.mxu0 0.0
    %6008 = vmatprep.subr.mxu0 0.0
    %6009 = vmatpush1.msra.mxu0 0.0
    %6010 = vmatprep.subr.mxu0 0.0
    %6011 = vmatpush1.msra.mxu0 0.0
    %6012 = vmatprep.subr.mxu0 0.0
    %6013 = vmatpush1.msra.mxu0 0.0
    %6014 = vmatprep.subr.mxu0 0.0
    %6015 = vmatpush1.msra.mxu0 0.0
    %6016 = vmatprep.subr.mxu0 0.0
    %6017 = vmatpush1.msra.mxu0 0.0
    %6018 = vmatprep.mubr.f32.mxu0 0.0
    %6019 = vmatmul.mubr.f32.gmra.mrb[0].mxu0 %v5907
    %v6020 = vpop.f32.mrb[0].mxu0
    %v6021 = vadd.f32 0.0, %v6020
    %v6022 = vpop.f32.mrb[0].mxu0
    %6023 = vmatprep.mubr.f32.mxu0 0.0
    %6024 = vmatmul.mubr.f32.gmra.mrb[0].mxu0 %v5910
    %v6025 = vpop.f32.mrb[0].mxu0
    %v6026 = vadd.f32 0.0, %v6025
    %v6027 = vpop.f32.mrb[0].mxu0
    %6028 = vmatprep.mubr.f32.mxu0 0.0
    %6029 = vmatmul.mubr.f32.gmra.mrb[0].mxu0 %v5913
    %v6030 = vpop.f32.mrb[0].mxu0
    %v6031 = vadd.f32 0.0, %v6030
    %v6032 = vpop.f32.mrb[0].mxu0
    %6033 = vmatprep.mubr.f32.mxu0 0.0
    %6034 = vmatmul.mubr.f32.gmra.mrb[0].mxu0 %v5916
    %v6035 = vpop.f32.mrb[0].mxu0
    %v6036 = vadd.f32 0.0, %v6035
    %v6037 = vpop.f32.mrb[0].mxu0
    %6038 = vmatprep.mubr.f32.mxu0 0.0
    %6039 = vmatmul.mubr.f32.gmra.mrb[0].mxu0 %v5919
    %v6040 = vpop.f32.mrb[0].mxu0
    %v6041 = vadd.f32 0.0, %v6040
    %v6042 = vpop.f32.mrb[0].mxu0
    %6043 = vmatprep.mubr.f32.mxu0 0.0
    %6044 = vmatmul.mubr.f32.gmra.mrb[0].mxu0 %v5922
    %v6045 = vpop.f32.mrb[0].mxu0
    %v6046 = vadd.f32 0.0, %v6045
    %v6047 = vpop.f32.mrb[0].mxu0
    %6048 = vmatprep.mubr.f32.mxu0 0.0
    %6049 = vmatmul.mubr.f32.gmra.mrb[0].mxu0 %v5925
    %v6050 = vpop.f32.mrb[0].mxu0
    %v6051 = vadd.f32 0.0, %v6050
    %v6052 = vpop.f32.mrb[0].mxu0
    %6053 = vmatprep.mubr.f32.mxu0 0.0
    %6054 = vmatmul.mubr.f32.gmra.mrb[0].mxu0 %v5928
    %v6055 = vpop.f32.mrb[0].mxu0
    %v6056 = vadd.f32 0.0, %v6055
    %v6057 = vpop.f32.mrb[0].mxu0
    %6058 = vmatprep.mubr.f32.mxu0 0.0
    %6059 = vmatmul.mubr.f32.gmra.mrb[0].mxu0 %v5931
    %v6060 = vpop.f32.mrb[0].mxu0
    %v6061 = vadd.f32 0.0, %v6060
    %v6062 = vpop.f32.mrb[0].mxu0
    %6063 = vmatprep.mubr.f32.mxu0 0.0
    %6064 = vmatmul.mubr.f32.gmra.mrb[0].mxu0 %v5934
    %v6065 = vpop.f32.mrb[0].mxu0
    %v6066 = vadd.f32 0.0, %v6065
    %v6067 = vpop.f32.mrb[0].mxu0
    %6068 = vmatprep.mubr.f32.mxu0 0.0
    %6069 = vmatmul.mubr.f32.gmra.mrb[0].mxu0 %v5937
    %v6070 = vpop.f32.mrb[0].mxu0
    %v6071 = vadd.f32 0.0, %v6070
    %v6072 = vpop.f32.mrb[0].mxu0
    %6073 = vmatprep.mubr.f32.mxu0 0.0
    %6074 = vmatmul.mubr.f32.gmra.mrb[0].mxu0 %v5940
    %v6075 = vpop.f32.mrb[0].mxu0
    %v6076 = vadd.f32 0.0, %v6075
    %v6077 = vpop.f32.mrb[0].mxu0
    %6078 = vmatprep.mubr.f32.mxu0 0.0
    %6079 = vmatmul.mubr.f32.gmra.mrb[0].mxu0 %v5943
    %v6080 = vpop.f32.mrb[0].mxu0
    %v6081 = vadd.f32 0.0, %v6080
    %v6082 = vpop.f32.mrb[0].mxu0
    %6083 = vmatprep.mubr.f32.mxu0 0.0
    %6084 = vmatmul.mubr.f32.gmra.mrb[0].mxu0 %v5946
    %v6085 = vpop.f32.mrb[0].mxu0
    %v6086 = vadd.f32 0.0, %v6085
    %v6087 = vpop.f32.mrb[0].mxu0
    %6088 = vmatprep.mubr.f32.mxu0 0.0
    %6089 = vmatmul.mubr.f32.gmra.mrb[0].mxu0 %v5949
    %v6090 = vpop.f32.mrb[0].mxu0
    %v6091 = vadd.f32 0.0, %v6090
    %v6092 = vpop.f32.mrb[0].mxu0
    %6093 = vmatprep.mubr.f32.mxu0 0.0
    %6094 = vmatmul.mubr.f32.gmra.mrb[0].mxu0 %v5952
    %v6095 = vpop.f32.mrb[0].mxu0
    %v6096 = vadd.f32 0.0, %v6095
    %v6097 = vpop.f32.mrb[0].mxu0
    %6098 = vdwg.mxu0
    %v6099 = vmul.f32 %v6021, 2.0
    %v6100 = vmul.f32 %v6026, 2.0
    %v6101 = vmul.f32 %v6031, 2.0
    %v6102 = vmul.f32 %v6036, 2.0
    %v6103 = vmul.f32 %v6041, 2.0
    %v6104 = vmul.f32 %v6046, 2.0
    %v6105 = vmul.f32 %v6051, 2.0
    %v6106 = vmul.f32 %v6056, 2.0
    %v6107 = vmul.f32 %v6061, 2.0
    %v6108 = vmul.f32 %v6066, 2.0
    %v6109 = vmul.f32 %v6071, 2.0
    %v6110 = vmul.f32 %v6076, 2.0
    %v6111 = vmul.f32 %v6081, 2.0
    %v6112 = vmul.f32 %v6086, 2.0
    %v6113 = vmul.f32 %v6091, 2.0
    %v6114 = vmul.f32 %v6096, 2.0
    %v6115 = vld [vmem:[%s6] sm:$0xff]
    %v6116 = vld [vmem:[%s6 + $0x8] sm:$0xff]
    %v6117 = vld [vmem:[%s6 + $0x10] sm:$0xff]
    %v6118 = vld [vmem:[%s6 + $0x18] sm:$0xff]
    %v6119 = vld [vmem:[%s6 + $0x20] sm:$0xff]
    %v6120 = vld [vmem:[%s6 + $0x28] sm:$0xff]
    %v6121 = vld [vmem:[%s6 + $0x30] sm:$0xff]
    %v6122 = vld [vmem:[%s6 + $0x38] sm:$0xff]
    %v6123 = vld [vmem:[%s6 + $0x40] sm:$0xff]
    %v6124 = vld [vmem:[%s6 + $0x48] sm:$0xff]
    %v6125 = vld [vmem:[%s6 + $0x50] sm:$0xff]
    %v6126 = vld [vmem:[%s6 + $0x58] sm:$0xff]
    %v6127 = vld [vmem:[%s6 + $0x60] sm:$0xff]
    %v6128 = vld [vmem:[%s6 + $0x68] sm:$0xff]
    %v6129 = vld [vmem:[%s6 + $0x70] sm:$0xff]
    %v6130 = vld [vmem:[%s6 + $0x78] sm:$0xff]
    %6132 = vset.pattern.permute.xlu0 0
    %6133 = vperm.xlu0 %6132, %v6115
    %v6134 = vpop.permute.xlu0 %6133
    %6137 = vset.pattern.permute.xlu0 0
    %6138 = vperm.xlu0 %6137, %v6116
    %v6139 = vpop.permute.xlu0 %6138
    %6142 = vset.pattern.permute.xlu0 0
    %6143 = vperm.xlu0 %6142, %v6117
    %v6144 = vpop.permute.xlu0 %6143
    %6147 = vset.pattern.permute.xlu0 0
    %6148 = vperm.xlu0 %6147, %v6118
    %v6149 = vpop.permute.xlu0 %6148
    %6152 = vset.pattern.permute.xlu0 0
    %6153 = vperm.xlu0 %6152, %v6119
    %v6154 = vpop.permute.xlu0 %6153
    %6157 = vset.pattern.permute.xlu0 0
    %6158 = vperm.xlu0 %6157, %v6120
    %v6159 = vpop.permute.xlu0 %6158
    %6162 = vset.pattern.permute.xlu0 0
    %6163 = vperm.xlu0 %6162, %v6121
    %v6164 = vpop.permute.xlu0 %6163
    %6167 = vset.pattern.permute.xlu0 0
    %6168 = vperm.xlu0 %6167, %v6122
    %v6169 = vpop.permute.xlu0 %6168
    %6172 = vset.pattern.permute.xlu0 0
    %6173 = vperm.xlu0 %6172, %v6123
    %v6174 = vpop.permute.xlu0 %6173
    %6177 = vset.pattern.permute.xlu0 0
    %6178 = vperm.xlu0 %6177, %v6124
    %v6179 = vpop.permute.xlu0 %6178
    %6182 = vset.pattern.permute.xlu0 0
    %6183 = vperm.xlu0 %6182, %v6125
    %v6184 = vpop.permute.xlu0 %6183
    %6187 = vset.pattern.permute.xlu0 0
    %6188 = vperm.xlu0 %6187, %v6126
    %v6189 = vpop.permute.xlu0 %6188
    %6192 = vset.pattern.permute.xlu0 0
    %6193 = vperm.xlu0 %6192, %v6127
    %v6194 = vpop.permute.xlu0 %6193
    %6197 = vset.pattern.permute.xlu0 0
    %6198 = vperm.xlu0 %6197, %v6128
    %v6199 = vpop.permute.xlu0 %6198
    %6202 = vset.pattern.permute.xlu0 0
    %6203 = vperm.xlu0 %6202, %v6129
    %v6204 = vpop.permute.xlu0 %6203
    %6207 = vset.pattern.permute.xlu0 0
    %6208 = vperm.xlu0 %6207, %v6130
    %v6209 = vpop.permute.xlu0 %6208
    %v6211 = vsub.f32 %v6099, %v6134
    %v6212 = vsub.f32 %v6100, %v6139
    %v6213 = vsub.f32 %v6101, %v6144
    %v6214 = vsub.f32 %v6102, %v6149
    %v6215 = vsub.f32 %v6103, %v6154
    %v6216 = vsub.f32 %v6104, %v6159
    %v6217 = vsub.f32 %v6105, %v6164
    %v6218 = vsub.f32 %v6106, %v6169
    %v6219 = vsub.f32 %v6107, %v6174
    %v6220 = vsub.f32 %v6108, %v6179
    %v6221 = vsub.f32 %v6109, %v6184
    %v6222 = vsub.f32 %v6110, %v6189
    %v6223 = vsub.f32 %v6111, %v6194
    %v6224 = vsub.f32 %v6112, %v6199
    %v6225 = vsub.f32 %v6113, %v6204
    %v6226 = vsub.f32 %v6114, %v6209
    %v6227 = vmax.f32 %v6211, %v6215
    %v6228 = vmax.f32 %v6212, %v6216
    %v6229 = vmax.f32 %v6213, %v6217
    %v6230 = vmax.f32 %v6214, %v6218
    %v6231 = vmax.f32 %v6227, %v6219
    %v6232 = vmax.f32 %v6228, %v6220
    %v6233 = vmax.f32 %v6229, %v6221
    %v6234 = vmax.f32 %v6230, %v6222
    %v6235 = vmax.f32 %v6231, %v6223
    %v6236 = vmax.f32 %v6232, %v6224
    %v6237 = vmax.f32 %v6233, %v6225
    %v6238 = vmax.f32 %v6234, %v6226
    %v6239 = vmax.f32 %v6235, %v6236
    %v6240 = vmax.f32 %v6237, %v6238
    %v6241 = vmax.f32 %v6239, %v6240
    %v6242 = vrot.slane %v6241, 4
    %v6243 = vmax.f32 %v6241, %v6242
    %v6244 = vrot.slane %v6243, 2
    %v6245 = vmax.f32 %v6243, %v6244
    %v6246 = vrot.slane %v6245, 1
    %v6247 = vmax.f32 %v6245, %v6246
    %vm6248 = vcmp.ge.f32.partialorder %v6211, %v6247
    %vm6249 = vcmp.ge.f32.partialorder %v6212, %v6247
    %vm6250 = vcmp.ge.f32.partialorder %v6213, %v6247
    %vm6251 = vcmp.ge.f32.partialorder %v6214, %v6247
    %vm6252 = vcmp.ge.f32.partialorder %v6215, %v6247
    %vm6253 = vcmp.ge.f32.partialorder %v6216, %v6247
    %vm6254 = vcmp.ge.f32.partialorder %v6217, %v6247
    %vm6255 = vcmp.ge.f32.partialorder %v6218, %v6247
    %vm6256 = vcmp.ge.f32.partialorder %v6219, %v6247
    %vm6257 = vcmp.ge.f32.partialorder %v6220, %v6247
    %vm6258 = vcmp.ge.f32.partialorder %v6221, %v6247
    %vm6259 = vcmp.ge.f32.partialorder %v6222, %v6247
    %vm6260 = vcmp.ge.f32.partialorder %v6223, %v6247
    %vm6261 = vcmp.ge.f32.partialorder %v6224, %v6247
    %vm6262 = vcmp.ge.f32.partialorder %v6225, %v6247
    %vm6263 = vcmp.ge.f32.partialorder %v6226, %v6247
    %v6264 = vsel %vm6248, %v5802, 128
    %v6265 = vsel %vm6249, %v5803, 128
    %v6266 = vsel %vm6250, %v5804, 128
    %v6267 = vsel %vm6251, %v5805, 128
    %v6268 = vsel %vm6252, %v5806, 128
    %v6269 = vsel %vm6253, %v5807, 128
    %v6270 = vsel %vm6254, %v5808, 128
    %v6271 = vsel %vm6255, %v5809, 128
    %v6272 = vsel %vm6256, %v5810, 128
    %v6273 = vsel %vm6257, %v5811, 128
    %v6274 = vsel %vm6258, %v5812, 128
    %v6275 = vsel %vm6259, %v5813, 128
    %v6276 = vsel %vm6260, %v5814, 128
    %v6277 = vsel %vm6261, %v5815, 128
    %v6278 = vsel %vm6262, %v5816, 128
    %v6279 = vsel %vm6263, %v5817, 128
    %vm6280 = vcmp.lt.s32.totalorder %v6264, %v6268
    %v6281 = vsel %vm6280, %v6264, %v6268
    %vm6282 = vcmp.lt.s32.totalorder %v6265, %v6269
    %v6283 = vsel %vm6282, %v6265, %v6269
    %vm6284 = vcmp.lt.s32.totalorder %v6266, %v6270
    %v6285 = vsel %vm6284, %v6266, %v6270
    %vm6286 = vcmp.lt.s32.totalorder %v6267, %v6271
    %v6287 = vsel %vm6286, %v6267, %v6271
    %vm6288 = vcmp.lt.s32.totalorder %v6281, %v6272
    %v6289 = vsel %vm6288, %v6281, %v6272
    %vm6290 = vcmp.lt.s32.totalorder %v6283, %v6273
    %v6291 = vsel %vm6290, %v6283, %v6273
    %vm6292 = vcmp.lt.s32.totalorder %v6285, %v6274
    %v6293 = vsel %vm6292, %v6285, %v6274
    %vm6294 = vcmp.lt.s32.totalorder %v6287, %v6275
    %v6295 = vsel %vm6294, %v6287, %v6275
    %vm6296 = vcmp.lt.s32.totalorder %v6289, %v6276
    %v6297 = vsel %vm6296, %v6289, %v6276
    %vm6298 = vcmp.lt.s32.totalorder %v6291, %v6277
    %v6299 = vsel %vm6298, %v6291, %v6277
    %vm6300 = vcmp.lt.s32.totalorder %v6293, %v6278
    %v6301 = vsel %vm6300, %v6293, %v6278
    %vm6302 = vcmp.lt.s32.totalorder %v6295, %v6279
    %v6303 = vsel %vm6302, %v6295, %v6279
    %vm6304 = vcmp.lt.s32.totalorder %v6297, %v6299
    %v6305 = vsel %vm6304, %v6297, %v6299
    %vm6306 = vcmp.lt.s32.totalorder %v6301, %v6303
    %v6307 = vsel %vm6306, %v6301, %v6303
    %vm6308 = vcmp.lt.s32.totalorder %v6305, %v6307
    %v6309 = vsel %vm6308, %v6305, %v6307
    %v6310 = vrot.slane %v6309, 4
    %vm6311 = vcmp.lt.s32.totalorder %v6309, %v6310
    %v6312 = vsel %vm6311, %v6309, %v6310
    %v6313 = vrot.slane %v6312, 2
    %vm6314 = vcmp.lt.s32.totalorder %v6312, %v6313
    %v6315 = vsel %vm6314, %v6312, %v6313
    %v6316 = vrot.slane %v6315, 1
    %vm6317 = vcmp.lt.s32.totalorder %v6315, %v6316
    %v6318 = vsel %vm6317, %v6315, %v6316
    %6319 = vst [vmem:[#allocation5 + $0x1] sm:$0x1] %v6318
    %v6320 = vld [vmem:[%s5] sm:$0xff]
    %v6321 = vld [vmem:[%s5 + $0x8] sm:$0xff]
    %v6322 = vld [vmem:[%s5 + $0x10] sm:$0xff]
    %v6323 = vld [vmem:[%s5 + $0x18] sm:$0xff]
    %v6324 = vld [vmem:[%s5 + $0x20] sm:$0xff]
    %v6325 = vld [vmem:[%s5 + $0x28] sm:$0xff]
    %v6326 = vld [vmem:[%s5 + $0x30] sm:$0xff]
    %v6327 = vld [vmem:[%s5 + $0x38] sm:$0xff]
    %v6328 = vld [vmem:[%s5 + $0x40] sm:$0xff]
    %v6329 = vld [vmem:[%s5 + $0x48] sm:$0xff]
    %v6330 = vld [vmem:[%s5 + $0x50] sm:$0xff]
    %v6331 = vld [vmem:[%s5 + $0x58] sm:$0xff]
    %v6332 = vld [vmem:[%s5 + $0x60] sm:$0xff]
    %v6333 = vld [vmem:[%s5 + $0x68] sm:$0xff]
    %v6334 = vld [vmem:[%s5 + $0x70] sm:$0xff]
    %v6335 = vld [vmem:[%s5 + $0x78] sm:$0xff]
    %v6337 = vsel %vm5458, %v6320, 0
    %v6340 = vsel %vm5458, %v6321, 0
    %v6343 = vsel %vm5458, %v6322, 0
    %v6346 = vsel %vm5458, %v6323, 0
    %v6349 = vsel %vm5458, %v6324, 0
    %v6352 = vsel %vm5458, %v6325, 0
    %v6355 = vsel %vm5458, %v6326, 0
    %v6358 = vsel %vm5458, %v6327, 0
    %v6361 = vsel %vm5458, %v6328, 0
    %v6364 = vsel %vm5458, %v6329, 0
    %v6367 = vsel %vm5458, %v6330, 0
    %v6370 = vsel %vm5458, %v6331, 0
    %v6373 = vsel %vm5458, %v6332, 0
    %v6376 = vsel %vm5458, %v6333, 0
    %v6379 = vsel %vm5458, %v6334, 0
    %v6382 = vsel %vm5458, %v6335, 0
    %6384 = vmatprep.subr.mxu0 0.0
    %6385 = vmatpush1.msra.mxu0 %v5220
    %6386 = vmatprep.subr.mxu0 0.0
    %6387 = vmatpush1.msra.mxu0 %v5223
    %6388 = vmatprep.subr.mxu0 0.0
    %6389 = vmatpush1.msra.mxu0 %v5228
    %6390 = vmatprep.subr.mxu0 0.0
    %6391 = vmatpush1.msra.mxu0 %v5231
    %6392 = vmatprep.subr.mxu0 0.0
    %6393 = vmatpush1.msra.mxu0 0.0
    %6394 = vmatprep.subr.mxu0 0.0
    %6395 = vmatpush1.msra.mxu0 0.0
    %6396 = vmatprep.subr.mxu0 0.0
    %6397 = vmatpush1.msra.mxu0 0.0
    %6398 = vmatprep.subr.mxu0 0.0
    %6399 = vmatpush1.msra.mxu0 0.0
    %6400 = vmatprep.subr.mxu0 0.0
    %6401 = vmatpush1.msra.mxu0 0.0
    %6402 = vmatprep.subr.mxu0 0.0
    %6403 = vmatpush1.msra.mxu0 0.0
    %6404 = vmatprep.subr.mxu0 0.0
    %6405 = vmatpush1.msra.mxu0 0.0
    %6406 = vmatprep.subr.mxu0 0.0
    %6407 = vmatpush1.msra.mxu0 0.0
    %6408 = vmatprep.subr.mxu0 0.0
    %6409 = vmatpush1.msra.mxu0 0.0
    %6410 = vmatprep.subr.mxu0 0.0
    %6411 = vmatpush1.msra.mxu0 0.0
    %6412 = vmatprep.subr.mxu0 0.0
    %6413 = vmatpush1.msra.mxu0 0.0
    %6414 = vmatprep.subr.mxu0 0.0
    %6415 = vmatpush1.msra.mxu0 0.0
    %6416 = vmatprep.subr.mxu0 0.0
    %6417 = vmatpush1.msra.mxu0 0.0
    %6418 = vmatprep.subr.mxu0 0.0
    %6419 = vmatpush1.msra.mxu0 0.0
    %6420 = vmatprep.subr.mxu0 0.0
    %6421 = vmatpush1.msra.mxu0 0.0
    %6422 = vmatprep.subr.mxu0 0.0
    %6423 = vmatpush1.msra.mxu0 0.0
    %6424 = vmatprep.subr.mxu0 0.0
    %6425 = vmatpush1.msra.mxu0 0.0
    %6426 = vmatprep.subr.mxu0 0.0
    %6427 = vmatpush1.msra.mxu0 0.0
    %6428 = vmatprep.subr.mxu0 0.0
    %6429 = vmatpush1.msra.mxu0 0.0
    %6430 = vmatprep.subr.mxu0 0.0
    %6431 = vmatpush1.msra.mxu0 0.0
    %6432 = vmatprep.subr.mxu0 0.0
    %6433 = vmatpush1.msra.mxu0 0.0
    %6434 = vmatprep.subr.mxu0 0.0
    %6435 = vmatpush1.msra.mxu0 0.0
    %6436 = vmatprep.subr.mxu0 0.0
    %6437 = vmatpush1.msra.mxu0 0.0
    %6438 = vmatprep.subr.mxu0 0.0
    %6439 = vmatpush1.msra.mxu0 0.0
    %6440 = vmatprep.subr.mxu0 0.0
    %6441 = vmatpush1.msra.mxu0 0.0
    %6442 = vmatprep.subr.mxu0 0.0
    %6443 = vmatpush1.msra.mxu0 0.0
    %6444 = vmatprep.subr.mxu0 0.0
    %6445 = vmatpush1.msra.mxu0 0.0
    %6446 = vmatprep.subr.mxu0 0.0
    %6447 = vmatpush1.msra.mxu0 0.0
    %6448 = vmatprep.mubr.f32.mxu0 0.0
    %6449 = vmatmul.mubr.f32.gmra.mrb[0].mxu0 %v6337
    %v6450 = vpop.f32.mrb[0].mxu0
    %v6451 = vadd.f32 0.0, %v6450
    %v6452 = vpop.f32.mrb[0].mxu0
    %6453 = vmatprep.mubr.f32.mxu0 0.0
    %6454 = vmatmul.mubr.f32.gmra.mrb[0].mxu0 %v6340
    %v6455 = vpop.f32.mrb[0].mxu0
    %v6456 = vadd.f32 0.0, %v6455
    %v6457 = vpop.f32.mrb[0].mxu0
    %6458 = vmatprep.mubr.f32.mxu0 0.0
    %6459 = vmatmul.mubr.f32.gmra.mrb[0].mxu0 %v6343
    %v6460 = vpop.f32.mrb[0].mxu0
    %v6461 = vadd.f32 0.0, %v6460
    %v6462 = vpop.f32.mrb[0].mxu0
    %6463 = vmatprep.mubr.f32.mxu0 0.0
    %6464 = vmatmul.mubr.f32.gmra.mrb[0].mxu0 %v6346
    %v6465 = vpop.f32.mrb[0].mxu0
    %v6466 = vadd.f32 0.0, %v6465
    %v6467 = vpop.f32.mrb[0].mxu0
    %6468 = vmatprep.mubr.f32.mxu0 0.0
    %6469 = vmatmul.mubr.f32.gmra.mrb[0].mxu0 %v6349
    %v6470 = vpop.f32.mrb[0].mxu0
    %v6471 = vadd.f32 0.0, %v6470
    %v6472 = vpop.f32.mrb[0].mxu0
    %6473 = vmatprep.mubr.f32.mxu0 0.0
    %6474 = vmatmul.mubr.f32.gmra.mrb[0].mxu0 %v6352
    %v6475 = vpop.f32.mrb[0].mxu0
    %v6476 = vadd.f32 0.0, %v6475
    %v6477 = vpop.f32.mrb[0].mxu0
    %6478 = vmatprep.mubr.f32.mxu0 0.0
    %6479 = vmatmul.mubr.f32.gmra.mrb[0].mxu0 %v6355
    %v6480 = vpop.f32.mrb[0].mxu0
    %v6481 = vadd.f32 0.0, %v6480
    %v6482 = vpop.f32.mrb[0].mxu0
    %6483 = vmatprep.mubr.f32.mxu0 0.0
    %6484 = vmatmul.mubr.f32.gmra.mrb[0].mxu0 %v6358
    %v6485 = vpop.f32.mrb[0].mxu0
    %v6486 = vadd.f32 0.0, %v6485
    %v6487 = vpop.f32.mrb[0].mxu0
    %6488 = vmatprep.mubr.f32.mxu0 0.0
    %6489 = vmatmul.mubr.f32.gmra.mrb[0].mxu0 %v6361
    %v6490 = vpop.f32.mrb[0].mxu0
    %v6491 = vadd.f32 0.0, %v6490
    %v6492 = vpop.f32.mrb[0].mxu0
    %6493 = vmatprep.mubr.f32.mxu0 0.0
    %6494 = vmatmul.mubr.f32.gmra.mrb[0].mxu0 %v6364
    %v6495 = vpop.f32.mrb[0].mxu0
    %v6496 = vadd.f32 0.0, %v6495
    %v6497 = vpop.f32.mrb[0].mxu0
    %6498 = vmatprep.mubr.f32.mxu0 0.0
    %6499 = vmatmul.mubr.f32.gmra.mrb[0].mxu0 %v6367
    %v6500 = vpop.f32.mrb[0].mxu0
    %v6501 = vadd.f32 0.0, %v6500
    %v6502 = vpop.f32.mrb[0].mxu0
    %6503 = vmatprep.mubr.f32.mxu0 0.0
    %6504 = vmatmul.mubr.f32.gmra.mrb[0].mxu0 %v6370
    %v6505 = vpop.f32.mrb[0].mxu0
    %v6506 = vadd.f32 0.0, %v6505
    %v6507 = vpop.f32.mrb[0].mxu0
    %6508 = vmatprep.mubr.f32.mxu0 0.0
    %6509 = vmatmul.mubr.f32.gmra.mrb[0].mxu0 %v6373
    %v6510 = vpop.f32.mrb[0].mxu0
    %v6511 = vadd.f32 0.0, %v6510
    %v6512 = vpop.f32.mrb[0].mxu0
    %6513 = vmatprep.mubr.f32.mxu0 0.0
    %6514 = vmatmul.mubr.f32.gmra.mrb[0].mxu0 %v6376
    %v6515 = vpop.f32.mrb[0].mxu0
    %v6516 = vadd.f32 0.0, %v6515
    %v6517 = vpop.f32.mrb[0].mxu0
    %6518 = vmatprep.mubr.f32.mxu0 0.0
    %6519 = vmatmul.mubr.f32.gmra.mrb[0].mxu0 %v6379
    %v6520 = vpop.f32.mrb[0].mxu0
    %v6521 = vadd.f32 0.0, %v6520
    %v6522 = vpop.f32.mrb[0].mxu0
    %6523 = vmatprep.mubr.f32.mxu0 0.0
    %6524 = vmatmul.mubr.f32.gmra.mrb[0].mxu0 %v6382
    %v6525 = vpop.f32.mrb[0].mxu0
    %v6526 = vadd.f32 0.0, %v6525
    %v6527 = vpop.f32.mrb[0].mxu0
    %6528 = vdwg.mxu0
    %v6529 = vmul.f32 %v6451, 2.0
    %v6530 = vmul.f32 %v6456, 2.0
    %v6531 = vmul.f32 %v6461, 2.0
    %v6532 = vmul.f32 %v6466, 2.0
    %v6533 = vmul.f32 %v6471, 2.0
    %v6534 = vmul.f32 %v6476, 2.0
    %v6535 = vmul.f32 %v6481, 2.0
    %v6536 = vmul.f32 %v6486, 2.0
    %v6537 = vmul.f32 %v6491, 2.0
    %v6538 = vmul.f32 %v6496, 2.0
    %v6539 = vmul.f32 %v6501, 2.0
    %v6540 = vmul.f32 %v6506, 2.0
    %v6541 = vmul.f32 %v6511, 2.0
    %v6542 = vmul.f32 %v6516, 2.0
    %v6543 = vmul.f32 %v6521, 2.0
    %v6544 = vmul.f32 %v6526, 2.0
    %v6545 = vld [vmem:[%s6] sm:$0xff]
    %v6546 = vld [vmem:[%s6 + $0x8] sm:$0xff]
    %v6547 = vld [vmem:[%s6 + $0x10] sm:$0xff]
    %v6548 = vld [vmem:[%s6 + $0x18] sm:$0xff]
    %v6549 = vld [vmem:[%s6 + $0x20] sm:$0xff]
    %v6550 = vld [vmem:[%s6 + $0x28] sm:$0xff]
    %v6551 = vld [vmem:[%s6 + $0x30] sm:$0xff]
    %v6552 = vld [vmem:[%s6 + $0x38] sm:$0xff]
    %v6553 = vld [vmem:[%s6 + $0x40] sm:$0xff]
    %v6554 = vld [vmem:[%s6 + $0x48] sm:$0xff]
    %v6555 = vld [vmem:[%s6 + $0x50] sm:$0xff]
    %v6556 = vld [vmem:[%s6 + $0x58] sm:$0xff]
    %v6557 = vld [vmem:[%s6 + $0x60] sm:$0xff]
    %v6558 = vld [vmem:[%s6 + $0x68] sm:$0xff]
    %v6559 = vld [vmem:[%s6 + $0x70] sm:$0xff]
    %v6560 = vld [vmem:[%s6 + $0x78] sm:$0xff]
    %6562 = vset.pattern.permute.xlu0 0
    %6563 = vperm.xlu0 %6562, %v6545
    %v6564 = vpop.permute.xlu0 %6563
    %6567 = vset.pattern.permute.xlu0 0
    %6568 = vperm.xlu0 %6567, %v6546
    %v6569 = vpop.permute.xlu0 %6568
    %6572 = vset.pattern.permute.xlu0 0
    %6573 = vperm.xlu0 %6572, %v6547
    %v6574 = vpop.permute.xlu0 %6573
    %6577 = vset.pattern.permute.xlu0 0
    %6578 = vperm.xlu0 %6577, %v6548
    %v6579 = vpop.permute.xlu0 %6578
    %6582 = vset.pattern.permute.xlu0 0
    %6583 = vperm.xlu0 %6582, %v6549
    %v6584 = vpop.permute.xlu0 %6583
    %6587 = vset.pattern.permute.xlu0 0
    %6588 = vperm.xlu0 %6587, %v6550
    %v6589 = vpop.permute.xlu0 %6588
    %6592 = vset.pattern.permute.xlu0 0
    %6593 = vperm.xlu0 %6592, %v6551
    %v6594 = vpop.permute.xlu0 %6593
    %6597 = vset.pattern.permute.xlu0 0
    %6598 = vperm.xlu0 %6597, %v6552
    %v6599 = vpop.permute.xlu0 %6598
    %6602 = vset.pattern.permute.xlu0 0
    %6603 = vperm.xlu0 %6602, %v6553
    %v6604 = vpop.permute.xlu0 %6603
    %6607 = vset.pattern.permute.xlu0 0
    %6608 = vperm.xlu0 %6607, %v6554
    %v6609 = vpop.permute.xlu0 %6608
    %6612 = vset.pattern.permute.xlu0 0
    %6613 = vperm.xlu0 %6612, %v6555
    %v6614 = vpop.permute.xlu0 %6613
    %6617 = vset.pattern.permute.xlu0 0
    %6618 = vperm.xlu0 %6617, %v6556
    %v6619 = vpop.permute.xlu0 %6618
    %6622 = vset.pattern.permute.xlu0 0
    %6623 = vperm.xlu0 %6622, %v6557
    %v6624 = vpop.permute.xlu0 %6623
    %6627 = vset.pattern.permute.xlu0 0
    %6628 = vperm.xlu0 %6627, %v6558
    %v6629 = vpop.permute.xlu0 %6628
    %6632 = vset.pattern.permute.xlu0 0
    %6633 = vperm.xlu0 %6632, %v6559
    %v6634 = vpop.permute.xlu0 %6633
    %6637 = vset.pattern.permute.xlu0 0
    %6638 = vperm.xlu0 %6637, %v6560
    %v6639 = vpop.permute.xlu0 %6638
    %v6641 = vsub.f32 %v6529, %v6564
    %v6642 = vsub.f32 %v6530, %v6569
    %v6643 = vsub.f32 %v6531, %v6574
    %v6644 = vsub.f32 %v6532, %v6579
    %v6645 = vsub.f32 %v6533, %v6584
    %v6646 = vsub.f32 %v6534, %v6589
    %v6647 = vsub.f32 %v6535, %v6594
    %v6648 = vsub.f32 %v6536, %v6599
    %v6649 = vsub.f32 %v6537, %v6604
    %v6650 = vsub.f32 %v6538, %v6609
    %v6651 = vsub.f32 %v6539, %v6614
    %v6652 = vsub.f32 %v6540, %v6619
    %v6653 = vsub.f32 %v6541, %v6624
    %v6654 = vsub.f32 %v6542, %v6629
    %v6655 = vsub.f32 %v6543, %v6634
    %v6656 = vsub.f32 %v6544, %v6639
    %v6657 = vmax.f32 %v6641, %v6645
    %v6658 = vmax.f32 %v6642, %v6646
    %v6659 = vmax.f32 %v6643, %v6647
    %v6660 = vmax.f32 %v6644, %v6648
    %v6661 = vmax.f32 %v6657, %v6649
    %v6662 = vmax.f32 %v6658, %v6650
    %v6663 = vmax.f32 %v6659, %v6651
    %v6664 = vmax.f32 %v6660, %v6652
    %v6665 = vmax.f32 %v6661, %v6653
    %v6666 = vmax.f32 %v6662, %v6654
    %v6667 = vmax.f32 %v6663, %v6655
    %v6668 = vmax.f32 %v6664, %v6656
    %v6669 = vmax.f32 %v6665, %v6666
    %v6670 = vmax.f32 %v6667, %v6668
    %v6671 = vmax.f32 %v6669, %v6670
    %v6672 = vrot.slane %v6671, 4
    %v6673 = vmax.f32 %v6671, %v6672
    %v6674 = vrot.slane %v6673, 2
    %v6675 = vmax.f32 %v6673, %v6674
    %v6676 = vrot.slane %v6675, 1
    %v6677 = vmax.f32 %v6675, %v6676
    %vm6678 = vcmp.ge.f32.partialorder %v6641, %v6677
    %vm6679 = vcmp.ge.f32.partialorder %v6642, %v6677
    %vm6680 = vcmp.ge.f32.partialorder %v6643, %v6677
    %vm6681 = vcmp.ge.f32.partialorder %v6644, %v6677
    %vm6682 = vcmp.ge.f32.partialorder %v6645, %v6677
    %vm6683 = vcmp.ge.f32.partialorder %v6646, %v6677
    %vm6684 = vcmp.ge.f32.partialorder %v6647, %v6677
    %vm6685 = vcmp.ge.f32.partialorder %v6648, %v6677
    %vm6686 = vcmp.ge.f32.partialorder %v6649, %v6677
    %vm6687 = vcmp.ge.f32.partialorder %v6650, %v6677
    %vm6688 = vcmp.ge.f32.partialorder %v6651, %v6677
    %vm6689 = vcmp.ge.f32.partialorder %v6652, %v6677
    %vm6690 = vcmp.ge.f32.partialorder %v6653, %v6677
    %vm6691 = vcmp.ge.f32.partialorder %v6654, %v6677
    %vm6692 = vcmp.ge.f32.partialorder %v6655, %v6677
    %vm6693 = vcmp.ge.f32.partialorder %v6656, %v6677
    %v6694 = vsel %vm6678, %v5802, 128
    %v6695 = vsel %vm6679, %v5803, 128
    %v6696 = vsel %vm6680, %v5804, 128
    %v6697 = vsel %vm6681, %v5805, 128
    %v6698 = vsel %vm6682, %v5806, 128
    %v6699 = vsel %vm6683, %v5807, 128
    %v6700 = vsel %vm6684, %v5808, 128
    %v6701 = vsel %vm6685, %v5809, 128
    %v6702 = vsel %vm6686, %v5810, 128
    %v6703 = vsel %vm6687, %v5811, 128
    %v6704 = vsel %vm6688, %v5812, 128
    %v6705 = vsel %vm6689, %v5813, 128
    %v6706 = vsel %vm6690, %v5814, 128
    %v6707 = vsel %vm6691, %v5815, 128
    %v6708 = vsel %vm6692, %v5816, 128
    %v6709 = vsel %vm6693, %v5817, 128
    %vm6710 = vcmp.lt.s32.totalorder %v6694, %v6698
    %v6711 = vsel %vm6710, %v6694, %v6698
    %vm6712 = vcmp.lt.s32.totalorder %v6695, %v6699
    %v6713 = vsel %vm6712, %v6695, %v6699
    %vm6714 = vcmp.lt.s32.totalorder %v6696, %v6700
    %v6715 = vsel %vm6714, %v6696, %v6700
    %vm6716 = vcmp.lt.s32.totalorder %v6697, %v6701
    %v6717 = vsel %vm6716, %v6697, %v6701
    %vm6718 = vcmp.lt.s32.totalorder %v6711, %v6702
    %v6719 = vsel %vm6718, %v6711, %v6702
    %vm6720 = vcmp.lt.s32.totalorder %v6713, %v6703
    %v6721 = vsel %vm6720, %v6713, %v6703
    %vm6722 = vcmp.lt.s32.totalorder %v6715, %v6704
    %v6723 = vsel %vm6722, %v6715, %v6704
    %vm6724 = vcmp.lt.s32.totalorder %v6717, %v6705
    %v6725 = vsel %vm6724, %v6717, %v6705
    %vm6726 = vcmp.lt.s32.totalorder %v6719, %v6706
    %v6727 = vsel %vm6726, %v6719, %v6706
    %vm6728 = vcmp.lt.s32.totalorder %v6721, %v6707
    %v6729 = vsel %vm6728, %v6721, %v6707
    %vm6730 = vcmp.lt.s32.totalorder %v6723, %v6708
    %v6731 = vsel %vm6730, %v6723, %v6708
    %vm6732 = vcmp.lt.s32.totalorder %v6725, %v6709
    %v6733 = vsel %vm6732, %v6725, %v6709
    %vm6734 = vcmp.lt.s32.totalorder %v6727, %v6729
    %v6735 = vsel %vm6734, %v6727, %v6729
    %vm6736 = vcmp.lt.s32.totalorder %v6731, %v6733
    %v6737 = vsel %vm6736, %v6731, %v6733
    %vm6738 = vcmp.lt.s32.totalorder %v6735, %v6737
    %v6739 = vsel %vm6738, %v6735, %v6737
    %v6740 = vrot.slane %v6739, 4
    %vm6741 = vcmp.lt.s32.totalorder %v6739, %v6740
    %v6742 = vsel %vm6741, %v6739, %v6740
    %v6743 = vrot.slane %v6742, 2
    %vm6744 = vcmp.lt.s32.totalorder %v6742, %v6743
    %v6745 = vsel %vm6744, %v6742, %v6743
    %v6746 = vrot.slane %v6745, 1
    %vm6747 = vcmp.lt.s32.totalorder %v6745, %v6746
    %v6748 = vsel %vm6747, %v6745, %v6746
    %6749 = vst [vmem:[#allocation5 + $0x2] sm:$0x1] %v6748
    %v6750 = vld [vmem:[%s5] sm:$0xff]
    %v6751 = vld [vmem:[%s5 + $0x8] sm:$0xff]
    %v6752 = vld [vmem:[%s5 + $0x10] sm:$0xff]
    %v6753 = vld [vmem:[%s5 + $0x18] sm:$0xff]
    %v6754 = vld [vmem:[%s5 + $0x20] sm:$0xff]
    %v6755 = vld [vmem:[%s5 + $0x28] sm:$0xff]
    %v6756 = vld [vmem:[%s5 + $0x30] sm:$0xff]
    %v6757 = vld [vmem:[%s5 + $0x38] sm:$0xff]
    %v6758 = vld [vmem:[%s5 + $0x40] sm:$0xff]
    %v6759 = vld [vmem:[%s5 + $0x48] sm:$0xff]
    %v6760 = vld [vmem:[%s5 + $0x50] sm:$0xff]
    %v6761 = vld [vmem:[%s5 + $0x58] sm:$0xff]
    %v6762 = vld [vmem:[%s5 + $0x60] sm:$0xff]
    %v6763 = vld [vmem:[%s5 + $0x68] sm:$0xff]
    %v6764 = vld [vmem:[%s5 + $0x70] sm:$0xff]
    %v6765 = vld [vmem:[%s5 + $0x78] sm:$0xff]
    %v6767 = vsel %vm5458, %v6750, 0
    %v6770 = vsel %vm5458, %v6751, 0
    %v6773 = vsel %vm5458, %v6752, 0
    %v6776 = vsel %vm5458, %v6753, 0
    %v6779 = vsel %vm5458, %v6754, 0
    %v6782 = vsel %vm5458, %v6755, 0
    %v6785 = vsel %vm5458, %v6756, 0
    %v6788 = vsel %vm5458, %v6757, 0
    %v6791 = vsel %vm5458, %v6758, 0
    %v6794 = vsel %vm5458, %v6759, 0
    %v6797 = vsel %vm5458, %v6760, 0
    %v6800 = vsel %vm5458, %v6761, 0
    %v6803 = vsel %vm5458, %v6762, 0
    %v6806 = vsel %vm5458, %v6763, 0
    %v6809 = vsel %vm5458, %v6764, 0
    %v6812 = vsel %vm5458, %v6765, 0
    %6814 = vmatprep.subr.mxu0 0.0
    %6815 = vmatpush1.msra.mxu0 %v5236
    %6816 = vmatprep.subr.mxu0 0.0
    %6817 = vmatpush1.msra.mxu0 %v5239
    %6818 = vmatprep.subr.mxu0 0.0
    %6819 = vmatpush1.msra.mxu0 %v5244
    %6820 = vmatprep.subr.mxu0 0.0
    %6821 = vmatpush1.msra.mxu0 %v5247
    %6822 = vmatprep.subr.mxu0 0.0
    %6823 = vmatpush1.msra.mxu0 0.0
    %6824 = vmatprep.subr.mxu0 0.0
    %6825 = vmatpush1.msra.mxu0 0.0
    %6826 = vmatprep.subr.mxu0 0.0
    %6827 = vmatpush1.msra.mxu0 0.0
    %6828 = vmatprep.subr.mxu0 0.0
    %6829 = vmatpush1.msra.mxu0 0.0
    %6830 = vmatprep.subr.mxu0 0.0
    %6831 = vmatpush1.msra.mxu0 0.0
    %6832 = vmatprep.subr.mxu0 0.0
    %6833 = vmatpush1.msra.mxu0 0.0
    %6834 = vmatprep.subr.mxu0 0.0
    %6835 = vmatpush1.msra.mxu0 0.0
    %6836 = vmatprep.subr.mxu0 0.0
    %6837 = vmatpush1.msra.mxu0 0.0
    %6838 = vmatprep.subr.mxu0 0.0
    %6839 = vmatpush1.msra.mxu0 0.0
    %6840 = vmatprep.subr.mxu0 0.0
    %6841 = vmatpush1.msra.mxu0 0.0
    %6842 = vmatprep.subr.mxu0 0.0
    %6843 = vmatpush1.msra.mxu0 0.0
    %6844 = vmatprep.subr.mxu0 0.0
    %6845 = vmatpush1.msra.mxu0 0.0
    %6846 = vmatprep.subr.mxu0 0.0
    %6847 = vmatpush1.msra.mxu0 0.0
    %6848 = vmatprep.subr.mxu0 0.0
    %6849 = vmatpush1.msra.mxu0 0.0
    %6850 = vmatprep.subr.mxu0 0.0
    %6851 = vmatpush1.msra.mxu0 0.0
    %6852 = vmatprep.subr.mxu0 0.0
    %6853 = vmatpush1.msra.mxu0 0.0
    %6854 = vmatprep.subr.mxu0 0.0
    %6855 = vmatpush1.msra.mxu0 0.0
    %6856 = vmatprep.subr.mxu0 0.0
    %6857 = vmatpush1.msra.mxu0 0.0
    %6858 = vmatprep.subr.mxu0 0.0
    %6859 = vmatpush1.msra.mxu0 0.0
    %6860 = vmatprep.subr.mxu0 0.0
    %6861 = vmatpush1.msra.mxu0 0.0
    %6862 = vmatprep.subr.mxu0 0.0
    %6863 = vmatpush1.msra.mxu0 0.0
    %6864 = vmatprep.subr.mxu0 0.0
    %6865 = vmatpush1.msra.mxu0 0.0
    %6866 = vmatprep.subr.mxu0 0.0
    %6867 = vmatpush1.msra.mxu0 0.0
    %6868 = vmatprep.subr.mxu0 0.0
    %6869 = vmatpush1.msra.mxu0 0.0
    %6870 = vmatprep.subr.mxu0 0.0
    %6871 = vmatpush1.msra.mxu0 0.0
    %6872 = vmatprep.subr.mxu0 0.0
    %6873 = vmatpush1.msra.mxu0 0.0
    %6874 = vmatprep.subr.mxu0 0.0
    %6875 = vmatpush1.msra.mxu0 0.0
    %6876 = vmatprep.subr.mxu0 0.0
    %6877 = vmatpush1.msra.mxu0 0.0
    %6878 = vmatprep.mubr.f32.mxu0 0.0
    %6879 = vmatmul.mubr.f32.gmra.mrb[0].mxu0 %v6767
    %v6880 = vpop.f32.mrb[0].mxu0
    %v6881 = vadd.f32 0.0, %v6880
    %v6882 = vpop.f32.mrb[0].mxu0
    %6883 = vmatprep.mubr.f32.mxu0 0.0
    %6884 = vmatmul.mubr.f32.gmra.mrb[0].mxu0 %v6770
    %v6885 = vpop.f32.mrb[0].mxu0
    %v6886 = vadd.f32 0.0, %v6885
    %v6887 = vpop.f32.mrb[0].mxu0
    %6888 = vmatprep.mubr.f32.mxu0 0.0
    %6889 = vmatmul.mubr.f32.gmra.mrb[0].mxu0 %v6773
    %v6890 = vpop.f32.mrb[0].mxu0
    %v6891 = vadd.f32 0.0, %v6890
    %v6892 = vpop.f32.mrb[0].mxu0
    %6893 = vmatprep.mubr.f32.mxu0 0.0
    %6894 = vmatmul.mubr.f32.gmra.mrb[0].mxu0 %v6776
    %v6895 = vpop.f32.mrb[0].mxu0
    %v6896 = vadd.f32 0.0, %v6895
    %v6897 = vpop.f32.mrb[0].mxu0
    %6898 = vmatprep.mubr.f32.mxu0 0.0
    %6899 = vmatmul.mubr.f32.gmra.mrb[0].mxu0 %v6779
    %v6900 = vpop.f32.mrb[0].mxu0
    %v6901 = vadd.f32 0.0, %v6900
    %v6902 = vpop.f32.mrb[0].mxu0
    %6903 = vmatprep.mubr.f32.mxu0 0.0
    %6904 = vmatmul.mubr.f32.gmra.mrb[0].mxu0 %v6782
    %v6905 = vpop.f32.mrb[0].mxu0
    %v6906 = vadd.f32 0.0, %v6905
    %v6907 = vpop.f32.mrb[0].mxu0
    %6908 = vmatprep.mubr.f32.mxu0 0.0
    %6909 = vmatmul.mubr.f32.gmra.mrb[0].mxu0 %v6785
    %v6910 = vpop.f32.mrb[0].mxu0
    %v6911 = vadd.f32 0.0, %v6910
    %v6912 = vpop.f32.mrb[0].mxu0
    %6913 = vmatprep.mubr.f32.mxu0 0.0
    %6914 = vmatmul.mubr.f32.gmra.mrb[0].mxu0 %v6788
    %v6915 = vpop.f32.mrb[0].mxu0
    %v6916 = vadd.f32 0.0, %v6915
    %v6917 = vpop.f32.mrb[0].mxu0
    %6918 = vmatprep.mubr.f32.mxu0 0.0
    %6919 = vmatmul.mubr.f32.gmra.mrb[0].mxu0 %v6791
    %v6920 = vpop.f32.mrb[0].mxu0
    %v6921 = vadd.f32 0.0, %v6920
    %v6922 = vpop.f32.mrb[0].mxu0
    %6923 = vmatprep.mubr.f32.mxu0 0.0
    %6924 = vmatmul.mubr.f32.gmra.mrb[0].mxu0 %v6794
    %v6925 = vpop.f32.mrb[0].mxu0
    %v6926 = vadd.f32 0.0, %v6925
    %v6927 = vpop.f32.mrb[0].mxu0
    %6928 = vmatprep.mubr.f32.mxu0 0.0
    %6929 = vmatmul.mubr.f32.gmra.mrb[0].mxu0 %v6797
    %v6930 = vpop.f32.mrb[0].mxu0
    %v6931 = vadd.f32 0.0, %v6930
    %v6932 = vpop.f32.mrb[0].mxu0
    %6933 = vmatprep.mubr.f32.mxu0 0.0
    %6934 = vmatmul.mubr.f32.gmra.mrb[0].mxu0 %v6800
    %v6935 = vpop.f32.mrb[0].mxu0
    %v6936 = vadd.f32 0.0, %v6935
    %v6937 = vpop.f32.mrb[0].mxu0
    %6938 = vmatprep.mubr.f32.mxu0 0.0
    %6939 = vmatmul.mubr.f32.gmra.mrb[0].mxu0 %v6803
    %v6940 = vpop.f32.mrb[0].mxu0
    %v6941 = vadd.f32 0.0, %v6940
    %v6942 = vpop.f32.mrb[0].mxu0
    %6943 = vmatprep.mubr.f32.mxu0 0.0
    %6944 = vmatmul.mubr.f32.gmra.mrb[0].mxu0 %v6806
    %v6945 = vpop.f32.mrb[0].mxu0
    %v6946 = vadd.f32 0.0, %v6945
    %v6947 = vpop.f32.mrb[0].mxu0
    %6948 = vmatprep.mubr.f32.mxu0 0.0
    %6949 = vmatmul.mubr.f32.gmra.mrb[0].mxu0 %v6809
    %v6950 = vpop.f32.mrb[0].mxu0
    %v6951 = vadd.f32 0.0, %v6950
    %v6952 = vpop.f32.mrb[0].mxu0
    %6953 = vmatprep.mubr.f32.mxu0 0.0
    %6954 = vmatmul.mubr.f32.gmra.mrb[0].mxu0 %v6812
    %v6955 = vpop.f32.mrb[0].mxu0
    %v6956 = vadd.f32 0.0, %v6955
    %v6957 = vpop.f32.mrb[0].mxu0
    %6958 = vdwg.mxu0
    %v6959 = vmul.f32 %v6881, 2.0
    %v6960 = vmul.f32 %v6886, 2.0
    %v6961 = vmul.f32 %v6891, 2.0
    %v6962 = vmul.f32 %v6896, 2.0
    %v6963 = vmul.f32 %v6901, 2.0
    %v6964 = vmul.f32 %v6906, 2.0
    %v6965 = vmul.f32 %v6911, 2.0
    %v6966 = vmul.f32 %v6916, 2.0
    %v6967 = vmul.f32 %v6921, 2.0
    %v6968 = vmul.f32 %v6926, 2.0
    %v6969 = vmul.f32 %v6931, 2.0
    %v6970 = vmul.f32 %v6936, 2.0
    %v6971 = vmul.f32 %v6941, 2.0
    %v6972 = vmul.f32 %v6946, 2.0
    %v6973 = vmul.f32 %v6951, 2.0
    %v6974 = vmul.f32 %v6956, 2.0
    %v6975 = vld [vmem:[%s6] sm:$0xff]
    %v6976 = vld [vmem:[%s6 + $0x8] sm:$0xff]
    %v6977 = vld [vmem:[%s6 + $0x10] sm:$0xff]
    %v6978 = vld [vmem:[%s6 + $0x18] sm:$0xff]
    %v6979 = vld [vmem:[%s6 + $0x20] sm:$0xff]
    %v6980 = vld [vmem:[%s6 + $0x28] sm:$0xff]
    %v6981 = vld [vmem:[%s6 + $0x30] sm:$0xff]
    %v6982 = vld [vmem:[%s6 + $0x38] sm:$0xff]
    %v6983 = vld [vmem:[%s6 + $0x40] sm:$0xff]
    %v6984 = vld [vmem:[%s6 + $0x48] sm:$0xff]
    %v6985 = vld [vmem:[%s6 + $0x50] sm:$0xff]
    %v6986 = vld [vmem:[%s6 + $0x58] sm:$0xff]
    %v6987 = vld [vmem:[%s6 + $0x60] sm:$0xff]
    %v6988 = vld [vmem:[%s6 + $0x68] sm:$0xff]
    %v6989 = vld [vmem:[%s6 + $0x70] sm:$0xff]
    %v6990 = vld [vmem:[%s6 + $0x78] sm:$0xff]
    %6992 = vset.pattern.permute.xlu0 0
    %6993 = vperm.xlu0 %6992, %v6975
    %v6994 = vpop.permute.xlu0 %6993
    %6997 = vset.pattern.permute.xlu0 0
    %6998 = vperm.xlu0 %6997, %v6976
    %v6999 = vpop.permute.xlu0 %6998
    %7002 = vset.pattern.permute.xlu0 0
    %7003 = vperm.xlu0 %7002, %v6977
    %v7004 = vpop.permute.xlu0 %7003
    %7007 = vset.pattern.permute.xlu0 0
    %7008 = vperm.xlu0 %7007, %v6978
    %v7009 = vpop.permute.xlu0 %7008
    %7012 = vset.pattern.permute.xlu0 0
    %7013 = vperm.xlu0 %7012, %v6979
    %v7014 = vpop.permute.xlu0 %7013
    %7017 = vset.pattern.permute.xlu0 0
    %7018 = vperm.xlu0 %7017, %v6980
    %v7019 = vpop.permute.xlu0 %7018
    %7022 = vset.pattern.permute.xlu0 0
    %7023 = vperm.xlu0 %7022, %v6981
    %v7024 = vpop.permute.xlu0 %7023
    %7027 = vset.pattern.permute.xlu0 0
    %7028 = vperm.xlu0 %7027, %v6982
    %v7029 = vpop.permute.xlu0 %7028
    %7032 = vset.pattern.permute.xlu0 0
    %7033 = vperm.xlu0 %7032, %v6983
    %v7034 = vpop.permute.xlu0 %7033
    %7037 = vset.pattern.permute.xlu0 0
    %7038 = vperm.xlu0 %7037, %v6984
    %v7039 = vpop.permute.xlu0 %7038
    %7042 = vset.pattern.permute.xlu0 0
    %7043 = vperm.xlu0 %7042, %v6985
    %v7044 = vpop.permute.xlu0 %7043
    %7047 = vset.pattern.permute.xlu0 0
    %7048 = vperm.xlu0 %7047, %v6986
    %v7049 = vpop.permute.xlu0 %7048
    %7052 = vset.pattern.permute.xlu0 0
    %7053 = vperm.xlu0 %7052, %v6987
    %v7054 = vpop.permute.xlu0 %7053
    %7057 = vset.pattern.permute.xlu0 0
    %7058 = vperm.xlu0 %7057, %v6988
    %v7059 = vpop.permute.xlu0 %7058
    %7062 = vset.pattern.permute.xlu0 0
    %7063 = vperm.xlu0 %7062, %v6989
    %v7064 = vpop.permute.xlu0 %7063
    %7067 = vset.pattern.permute.xlu0 0
    %7068 = vperm.xlu0 %7067, %v6990
    %v7069 = vpop.permute.xlu0 %7068
    %v7071 = vsub.f32 %v6959, %v6994
    %v7072 = vsub.f32 %v6960, %v6999
    %v7073 = vsub.f32 %v6961, %v7004
    %v7074 = vsub.f32 %v6962, %v7009
    %v7075 = vsub.f32 %v6963, %v7014
    %v7076 = vsub.f32 %v6964, %v7019
    %v7077 = vsub.f32 %v6965, %v7024
    %v7078 = vsub.f32 %v6966, %v7029
    %v7079 = vsub.f32 %v6967, %v7034
    %v7080 = vsub.f32 %v6968, %v7039
    %v7081 = vsub.f32 %v6969, %v7044
    %v7082 = vsub.f32 %v6970, %v7049
    %v7083 = vsub.f32 %v6971, %v7054
    %v7084 = vsub.f32 %v6972, %v7059
    %v7085 = vsub.f32 %v6973, %v7064
    %v7086 = vsub.f32 %v6974, %v7069
    %v7087 = vmax.f32 %v7071, %v7075
    %v7088 = vmax.f32 %v7072, %v7076
    %v7089 = vmax.f32 %v7073, %v7077
    %v7090 = vmax.f32 %v7074, %v7078
    %v7091 = vmax.f32 %v7087, %v7079
    %v7092 = vmax.f32 %v7088, %v7080
    %v7093 = vmax.f32 %v7089, %v7081
    %v7094 = vmax.f32 %v7090, %v7082
    %v7095 = vmax.f32 %v7091, %v7083
    %v7096 = vmax.f32 %v7092, %v7084
    %v7097 = vmax.f32 %v7093, %v7085
    %v7098 = vmax.f32 %v7094, %v7086
    %v7099 = vmax.f32 %v7095, %v7096
    %v7100 = vmax.f32 %v7097, %v7098
    %v7101 = vmax.f32 %v7099, %v7100
    %v7102 = vrot.slane %v7101, 4
    %v7103 = vmax.f32 %v7101, %v7102
    %v7104 = vrot.slane %v7103, 2
    %v7105 = vmax.f32 %v7103, %v7104
    %v7106 = vrot.slane %v7105, 1
    %v7107 = vmax.f32 %v7105, %v7106
    %vm7108 = vcmp.ge.f32.partialorder %v7071, %v7107
    %vm7109 = vcmp.ge.f32.partialorder %v7072, %v7107
    %vm7110 = vcmp.ge.f32.partialorder %v7073, %v7107
    %vm7111 = vcmp.ge.f32.partialorder %v7074, %v7107
    %vm7112 = vcmp.ge.f32.partialorder %v7075, %v7107
    %vm7113 = vcmp.ge.f32.partialorder %v7076, %v7107
    %vm7114 = vcmp.ge.f32.partialorder %v7077, %v7107
    %vm7115 = vcmp.ge.f32.partialorder %v7078, %v7107
    %vm7116 = vcmp.ge.f32.partialorder %v7079, %v7107
    %vm7117 = vcmp.ge.f32.partialorder %v7080, %v7107
    %vm7118 = vcmp.ge.f32.partialorder %v7081, %v7107
    %vm7119 = vcmp.ge.f32.partialorder %v7082, %v7107
    %vm7120 = vcmp.ge.f32.partialorder %v7083, %v7107
    %vm7121 = vcmp.ge.f32.partialorder %v7084, %v7107
    %vm7122 = vcmp.ge.f32.partialorder %v7085, %v7107
    %vm7123 = vcmp.ge.f32.partialorder %v7086, %v7107
    %v7124 = vsel %vm7108, %v5802, 128
    %v7125 = vsel %vm7109, %v5803, 128
    %v7126 = vsel %vm7110, %v5804, 128
    %v7127 = vsel %vm7111, %v5805, 128
    %v7128 = vsel %vm7112, %v5806, 128
    %v7129 = vsel %vm7113, %v5807, 128
    %v7130 = vsel %vm7114, %v5808, 128
    %v7131 = vsel %vm7115, %v5809, 128
    %v7132 = vsel %vm7116, %v5810, 128
    %v7133 = vsel %vm7117, %v5811, 128
    %v7134 = vsel %vm7118, %v5812, 128
    %v7135 = vsel %vm7119, %v5813, 128
    %v7136 = vsel %vm7120, %v5814, 128
    %v7137 = vsel %vm7121, %v5815, 128
    %v7138 = vsel %vm7122, %v5816, 128
    %v7139 = vsel %vm7123, %v5817, 128
    %vm7140 = vcmp.lt.s32.totalorder %v7124, %v7128
    %v7141 = vsel %vm7140, %v7124, %v7128
    %vm7142 = vcmp.lt.s32.totalorder %v7125, %v7129
    %v7143 = vsel %vm7142, %v7125, %v7129
    %vm7144 = vcmp.lt.s32.totalorder %v7126, %v7130
    %v7145 = vsel %vm7144, %v7126, %v7130
    %vm7146 = vcmp.lt.s32.totalorder %v7127, %v7131
    %v7147 = vsel %vm7146, %v7127, %v7131
    %vm7148 = vcmp.lt.s32.totalorder %v7141, %v7132
    %v7149 = vsel %vm7148, %v7141, %v7132
    %vm7150 = vcmp.lt.s32.totalorder %v7143, %v7133
    %v7151 = vsel %vm7150, %v7143, %v7133
    %vm7152 = vcmp.lt.s32.totalorder %v7145, %v7134
    %v7153 = vsel %vm7152, %v7145, %v7134
    %vm7154 = vcmp.lt.s32.totalorder %v7147, %v7135
    %v7155 = vsel %vm7154, %v7147, %v7135
    %vm7156 = vcmp.lt.s32.totalorder %v7149, %v7136
    %v7157 = vsel %vm7156, %v7149, %v7136
    %vm7158 = vcmp.lt.s32.totalorder %v7151, %v7137
    %v7159 = vsel %vm7158, %v7151, %v7137
    %vm7160 = vcmp.lt.s32.totalorder %v7153, %v7138
    %v7161 = vsel %vm7160, %v7153, %v7138
    %vm7162 = vcmp.lt.s32.totalorder %v7155, %v7139
    %v7163 = vsel %vm7162, %v7155, %v7139
    %vm7164 = vcmp.lt.s32.totalorder %v7157, %v7159
    %v7165 = vsel %vm7164, %v7157, %v7159
    %vm7166 = vcmp.lt.s32.totalorder %v7161, %v7163
    %v7167 = vsel %vm7166, %v7161, %v7163
    %vm7168 = vcmp.lt.s32.totalorder %v7165, %v7167
    %v7169 = vsel %vm7168, %v7165, %v7167
    %v7170 = vrot.slane %v7169, 4
    %vm7171 = vcmp.lt.s32.totalorder %v7169, %v7170
    %v7172 = vsel %vm7171, %v7169, %v7170
    %v7173 = vrot.slane %v7172, 2
    %vm7174 = vcmp.lt.s32.totalorder %v7172, %v7173
    %v7175 = vsel %vm7174, %v7172, %v7173
    %v7176 = vrot.slane %v7175, 1
    %vm7177 = vcmp.lt.s32.totalorder %v7175, %v7176
    %v7178 = vsel %vm7177, %v7175, %v7176
    %7179 = vst [vmem:[#allocation5 + $0x3] sm:$0x1] %v7178
    %v7180 = vld [vmem:[%s5] sm:$0xff]
    %v7181 = vld [vmem:[%s5 + $0x8] sm:$0xff]
    %v7182 = vld [vmem:[%s5 + $0x10] sm:$0xff]
    %v7183 = vld [vmem:[%s5 + $0x18] sm:$0xff]
    %v7184 = vld [vmem:[%s5 + $0x20] sm:$0xff]
    %v7185 = vld [vmem:[%s5 + $0x28] sm:$0xff]
    %v7186 = vld [vmem:[%s5 + $0x30] sm:$0xff]
    %v7187 = vld [vmem:[%s5 + $0x38] sm:$0xff]
    %v7188 = vld [vmem:[%s5 + $0x40] sm:$0xff]
    %v7189 = vld [vmem:[%s5 + $0x48] sm:$0xff]
    %v7190 = vld [vmem:[%s5 + $0x50] sm:$0xff]
    %v7191 = vld [vmem:[%s5 + $0x58] sm:$0xff]
    %v7192 = vld [vmem:[%s5 + $0x60] sm:$0xff]
    %v7193 = vld [vmem:[%s5 + $0x68] sm:$0xff]
    %v7194 = vld [vmem:[%s5 + $0x70] sm:$0xff]
    %v7195 = vld [vmem:[%s5 + $0x78] sm:$0xff]
    %v7197 = vsel %vm5458, %v7180, 0
    %v7200 = vsel %vm5458, %v7181, 0
    %v7203 = vsel %vm5458, %v7182, 0
    %v7206 = vsel %vm5458, %v7183, 0
    %v7209 = vsel %vm5458, %v7184, 0
    %v7212 = vsel %vm5458, %v7185, 0
    %v7215 = vsel %vm5458, %v7186, 0
    %v7218 = vsel %vm5458, %v7187, 0
    %v7221 = vsel %vm5458, %v7188, 0
    %v7224 = vsel %vm5458, %v7189, 0
    %v7227 = vsel %vm5458, %v7190, 0
    %v7230 = vsel %vm5458, %v7191, 0
    %v7233 = vsel %vm5458, %v7192, 0
    %v7236 = vsel %vm5458, %v7193, 0
    %v7239 = vsel %vm5458, %v7194, 0
    %v7242 = vsel %vm5458, %v7195, 0
    %7244 = vmatprep.subr.mxu0 0.0
    %7245 = vmatpush1.msra.mxu0 %v5252
    %7246 = vmatprep.subr.mxu0 0.0
    %7247 = vmatpush1.msra.mxu0 %v5255
    %7248 = vmatprep.subr.mxu0 0.0
    %7249 = vmatpush1.msra.mxu0 %v5260
    %7250 = vmatprep.subr.mxu0 0.0
    %7251 = vmatpush1.msra.mxu0 %v5263
    %7252 = vmatprep.subr.mxu0 0.0
    %7253 = vmatpush1.msra.mxu0 0.0
    %7254 = vmatprep.subr.mxu0 0.0
    %7255 = vmatpush1.msra.mxu0 0.0
    %7256 = vmatprep.subr.mxu0 0.0
    %7257 = vmatpush1.msra.mxu0 0.0
    %7258 = vmatprep.subr.mxu0 0.0
    %7259 = vmatpush1.msra.mxu0 0.0
    %7260 = vmatprep.subr.mxu0 0.0
    %7261 = vmatpush1.msra.mxu0 0.0
    %7262 = vmatprep.subr.mxu0 0.0
    %7263 = vmatpush1.msra.mxu0 0.0
    %7264 = vmatprep.subr.mxu0 0.0
    %7265 = vmatpush1.msra.mxu0 0.0
    %7266 = vmatprep.subr.mxu0 0.0
    %7267 = vmatpush1.msra.mxu0 0.0
    %7268 = vmatprep.subr.mxu0 0.0
    %7269 = vmatpush1.msra.mxu0 0.0
    %7270 = vmatprep.subr.mxu0 0.0
    %7271 = vmatpush1.msra.mxu0 0.0
    %7272 = vmatprep.subr.mxu0 0.0
    %7273 = vmatpush1.msra.mxu0 0.0
    %7274 = vmatprep.subr.mxu0 0.0
    %7275 = vmatpush1.msra.mxu0 0.0
    %7276 = vmatprep.subr.mxu0 0.0
    %7277 = vmatpush1.msra.mxu0 0.0
    %7278 = vmatprep.subr.mxu0 0.0
    %7279 = vmatpush1.msra.mxu0 0.0
    %7280 = vmatprep.subr.mxu0 0.0
    %7281 = vmatpush1.msra.mxu0 0.0
    %7282 = vmatprep.subr.mxu0 0.0
    %7283 = vmatpush1.msra.mxu0 0.0
    %7284 = vmatprep.subr.mxu0 0.0
    %7285 = vmatpush1.msra.mxu0 0.0
    %7286 = vmatprep.subr.mxu0 0.0
    %7287 = vmatpush1.msra.mxu0 0.0
    %7288 = vmatprep.subr.mxu0 0.0
    %7289 = vmatpush1.msra.mxu0 0.0
    %7290 = vmatprep.subr.mxu0 0.0
    %7291 = vmatpush1.msra.mxu0 0.0
    %7292 = vmatprep.subr.mxu0 0.0
    %7293 = vmatpush1.msra.mxu0 0.0
    %7294 = vmatprep.subr.mxu0 0.0
    %7295 = vmatpush1.msra.mxu0 0.0
    %7296 = vmatprep.subr.mxu0 0.0
    %7297 = vmatpush1.msra.mxu0 0.0
    %7298 = vmatprep.subr.mxu0 0.0
    %7299 = vmatpush1.msra.mxu0 0.0
    %7300 = vmatprep.subr.mxu0 0.0
    %7301 = vmatpush1.msra.mxu0 0.0
    %7302 = vmatprep.subr.mxu0 0.0
    %7303 = vmatpush1.msra.mxu0 0.0
    %7304 = vmatprep.subr.mxu0 0.0
    %7305 = vmatpush1.msra.mxu0 0.0
    %7306 = vmatprep.subr.mxu0 0.0
    %7307 = vmatpush1.msra.mxu0 0.0
    %7308 = vmatprep.mubr.f32.mxu0 0.0
    %7309 = vmatmul.mubr.f32.gmra.mrb[0].mxu0 %v7197
    %v7310 = vpop.f32.mrb[0].mxu0
    %v7311 = vadd.f32 0.0, %v7310
    %v7312 = vpop.f32.mrb[0].mxu0
    %7313 = vmatprep.mubr.f32.mxu0 0.0
    %7314 = vmatmul.mubr.f32.gmra.mrb[0].mxu0 %v7200
    %v7315 = vpop.f32.mrb[0].mxu0
    %v7316 = vadd.f32 0.0, %v7315
    %v7317 = vpop.f32.mrb[0].mxu0
    %7318 = vmatprep.mubr.f32.mxu0 0.0
    %7319 = vmatmul.mubr.f32.gmra.mrb[0].mxu0 %v7203
    %v7320 = vpop.f32.mrb[0].mxu0
    %v7321 = vadd.f32 0.0, %v7320
    %v7322 = vpop.f32.mrb[0].mxu0
    %7323 = vmatprep.mubr.f32.mxu0 0.0
    %7324 = vmatmul.mubr.f32.gmra.mrb[0].mxu0 %v7206
    %v7325 = vpop.f32.mrb[0].mxu0
    %v7326 = vadd.f32 0.0, %v7325
    %v7327 = vpop.f32.mrb[0].mxu0
    %7328 = vmatprep.mubr.f32.mxu0 0.0
    %7329 = vmatmul.mubr.f32.gmra.mrb[0].mxu0 %v7209
    %v7330 = vpop.f32.mrb[0].mxu0
    %v7331 = vadd.f32 0.0, %v7330
    %v7332 = vpop.f32.mrb[0].mxu0
    %7333 = vmatprep.mubr.f32.mxu0 0.0
    %7334 = vmatmul.mubr.f32.gmra.mrb[0].mxu0 %v7212
    %v7335 = vpop.f32.mrb[0].mxu0
    %v7336 = vadd.f32 0.0, %v7335
    %v7337 = vpop.f32.mrb[0].mxu0
    %7338 = vmatprep.mubr.f32.mxu0 0.0
    %7339 = vmatmul.mubr.f32.gmra.mrb[0].mxu0 %v7215
    %v7340 = vpop.f32.mrb[0].mxu0
    %v7341 = vadd.f32 0.0, %v7340
    %v7342 = vpop.f32.mrb[0].mxu0
    %7343 = vmatprep.mubr.f32.mxu0 0.0
    %7344 = vmatmul.mubr.f32.gmra.mrb[0].mxu0 %v7218
    %v7345 = vpop.f32.mrb[0].mxu0
    %v7346 = vadd.f32 0.0, %v7345
    %v7347 = vpop.f32.mrb[0].mxu0
    %7348 = vmatprep.mubr.f32.mxu0 0.0
    %7349 = vmatmul.mubr.f32.gmra.mrb[0].mxu0 %v7221
    %v7350 = vpop.f32.mrb[0].mxu0
    %v7351 = vadd.f32 0.0, %v7350
    %v7352 = vpop.f32.mrb[0].mxu0
    %7353 = vmatprep.mubr.f32.mxu0 0.0
    %7354 = vmatmul.mubr.f32.gmra.mrb[0].mxu0 %v7224
    %v7355 = vpop.f32.mrb[0].mxu0
    %v7356 = vadd.f32 0.0, %v7355
    %v7357 = vpop.f32.mrb[0].mxu0
    %7358 = vmatprep.mubr.f32.mxu0 0.0
    %7359 = vmatmul.mubr.f32.gmra.mrb[0].mxu0 %v7227
    %v7360 = vpop.f32.mrb[0].mxu0
    %v7361 = vadd.f32 0.0, %v7360
    %v7362 = vpop.f32.mrb[0].mxu0
    %7363 = vmatprep.mubr.f32.mxu0 0.0
    %7364 = vmatmul.mubr.f32.gmra.mrb[0].mxu0 %v7230
    %v7365 = vpop.f32.mrb[0].mxu0
    %v7366 = vadd.f32 0.0, %v7365
    %v7367 = vpop.f32.mrb[0].mxu0
    %7368 = vmatprep.mubr.f32.mxu0 0.0
    %7369 = vmatmul.mubr.f32.gmra.mrb[0].mxu0 %v7233
    %v7370 = vpop.f32.mrb[0].mxu0
    %v7371 = vadd.f32 0.0, %v7370
    %v7372 = vpop.f32.mrb[0].mxu0
    %7373 = vmatprep.mubr.f32.mxu0 0.0
    %7374 = vmatmul.mubr.f32.gmra.mrb[0].mxu0 %v7236
    %v7375 = vpop.f32.mrb[0].mxu0
    %v7376 = vadd.f32 0.0, %v7375
    %v7377 = vpop.f32.mrb[0].mxu0
    %7378 = vmatprep.mubr.f32.mxu0 0.0
    %7379 = vmatmul.mubr.f32.gmra.mrb[0].mxu0 %v7239
    %v7380 = vpop.f32.mrb[0].mxu0
    %v7381 = vadd.f32 0.0, %v7380
    %v7382 = vpop.f32.mrb[0].mxu0
    %7383 = vmatprep.mubr.f32.mxu0 0.0
    %7384 = vmatmul.mubr.f32.gmra.mrb[0].mxu0 %v7242
    %v7385 = vpop.f32.mrb[0].mxu0
    %v7386 = vadd.f32 0.0, %v7385
    %v7387 = vpop.f32.mrb[0].mxu0
    %7388 = vdwg.mxu0
    %v7389 = vmul.f32 %v7311, 2.0
    %v7390 = vmul.f32 %v7316, 2.0
    %v7391 = vmul.f32 %v7321, 2.0
    %v7392 = vmul.f32 %v7326, 2.0
    %v7393 = vmul.f32 %v7331, 2.0
    %v7394 = vmul.f32 %v7336, 2.0
    %v7395 = vmul.f32 %v7341, 2.0
    %v7396 = vmul.f32 %v7346, 2.0
    %v7397 = vmul.f32 %v7351, 2.0
    %v7398 = vmul.f32 %v7356, 2.0
    %v7399 = vmul.f32 %v7361, 2.0
    %v7400 = vmul.f32 %v7366, 2.0
    %v7401 = vmul.f32 %v7371, 2.0
    %v7402 = vmul.f32 %v7376, 2.0
    %v7403 = vmul.f32 %v7381, 2.0
    %v7404 = vmul.f32 %v7386, 2.0
    %v7405 = vld [vmem:[%s6] sm:$0xff]
    %v7406 = vld [vmem:[%s6 + $0x8] sm:$0xff]
    %v7407 = vld [vmem:[%s6 + $0x10] sm:$0xff]
    %v7408 = vld [vmem:[%s6 + $0x18] sm:$0xff]
    %v7409 = vld [vmem:[%s6 + $0x20] sm:$0xff]
    %v7410 = vld [vmem:[%s6 + $0x28] sm:$0xff]
    %v7411 = vld [vmem:[%s6 + $0x30] sm:$0xff]
    %v7412 = vld [vmem:[%s6 + $0x38] sm:$0xff]
    %v7413 = vld [vmem:[%s6 + $0x40] sm:$0xff]
    %v7414 = vld [vmem:[%s6 + $0x48] sm:$0xff]
    %v7415 = vld [vmem:[%s6 + $0x50] sm:$0xff]
    %v7416 = vld [vmem:[%s6 + $0x58] sm:$0xff]
    %v7417 = vld [vmem:[%s6 + $0x60] sm:$0xff]
    %v7418 = vld [vmem:[%s6 + $0x68] sm:$0xff]
    %v7419 = vld [vmem:[%s6 + $0x70] sm:$0xff]
    %v7420 = vld [vmem:[%s6 + $0x78] sm:$0xff]
    %7422 = vset.pattern.permute.xlu0 0
    %7423 = vperm.xlu0 %7422, %v7405
    %v7424 = vpop.permute.xlu0 %7423
    %7427 = vset.pattern.permute.xlu0 0
    %7428 = vperm.xlu0 %7427, %v7406
    %v7429 = vpop.permute.xlu0 %7428
    %7432 = vset.pattern.permute.xlu0 0
    %7433 = vperm.xlu0 %7432, %v7407
    %v7434 = vpop.permute.xlu0 %7433
    %7437 = vset.pattern.permute.xlu0 0
    %7438 = vperm.xlu0 %7437, %v7408
    %v7439 = vpop.permute.xlu0 %7438
    %7442 = vset.pattern.permute.xlu0 0
    %7443 = vperm.xlu0 %7442, %v7409
    %v7444 = vpop.permute.xlu0 %7443
    %7447 = vset.pattern.permute.xlu0 0
    %7448 = vperm.xlu0 %7447, %v7410
    %v7449 = vpop.permute.xlu0 %7448
    %7452 = vset.pattern.permute.xlu0 0
    %7453 = vperm.xlu0 %7452, %v7411
    %v7454 = vpop.permute.xlu0 %7453
    %7457 = vset.pattern.permute.xlu0 0
    %7458 = vperm.xlu0 %7457, %v7412
    %v7459 = vpop.permute.xlu0 %7458
    %7462 = vset.pattern.permute.xlu0 0
    %7463 = vperm.xlu0 %7462, %v7413
    %v7464 = vpop.permute.xlu0 %7463
    %7467 = vset.pattern.permute.xlu0 0
    %7468 = vperm.xlu0 %7467, %v7414
    %v7469 = vpop.permute.xlu0 %7468
    %7472 = vset.pattern.permute.xlu0 0
    %7473 = vperm.xlu0 %7472, %v7415
    %v7474 = vpop.permute.xlu0 %7473
    %7477 = vset.pattern.permute.xlu0 0
    %7478 = vperm.xlu0 %7477, %v7416
    %v7479 = vpop.permute.xlu0 %7478
    %7482 = vset.pattern.permute.xlu0 0
    %7483 = vperm.xlu0 %7482, %v7417
    %v7484 = vpop.permute.xlu0 %7483
    %7487 = vset.pattern.permute.xlu0 0
    %7488 = vperm.xlu0 %7487, %v7418
    %v7489 = vpop.permute.xlu0 %7488
    %7492 = vset.pattern.permute.xlu0 0
    %7493 = vperm.xlu0 %7492, %v7419
    %v7494 = vpop.permute.xlu0 %7493
    %7497 = vset.pattern.permute.xlu0 0
    %7498 = vperm.xlu0 %7497, %v7420
    %v7499 = vpop.permute.xlu0 %7498
    %v7501 = vsub.f32 %v7389, %v7424
    %v7502 = vsub.f32 %v7390, %v7429
    %v7503 = vsub.f32 %v7391, %v7434
    %v7504 = vsub.f32 %v7392, %v7439
    %v7505 = vsub.f32 %v7393, %v7444
    %v7506 = vsub.f32 %v7394, %v7449
    %v7507 = vsub.f32 %v7395, %v7454
    %v7508 = vsub.f32 %v7396, %v7459
    %v7509 = vsub.f32 %v7397, %v7464
    %v7510 = vsub.f32 %v7398, %v7469
    %v7511 = vsub.f32 %v7399, %v7474
    %v7512 = vsub.f32 %v7400, %v7479
    %v7513 = vsub.f32 %v7401, %v7484
    %v7514 = vsub.f32 %v7402, %v7489
    %v7515 = vsub.f32 %v7403, %v7494
    %v7516 = vsub.f32 %v7404, %v7499
    %v7517 = vmax.f32 %v7501, %v7505
    %v7518 = vmax.f32 %v7502, %v7506
    %v7519 = vmax.f32 %v7503, %v7507
    %v7520 = vmax.f32 %v7504, %v7508
    %v7521 = vmax.f32 %v7517, %v7509
    %v7522 = vmax.f32 %v7518, %v7510
    %v7523 = vmax.f32 %v7519, %v7511
    %v7524 = vmax.f32 %v7520, %v7512
    %v7525 = vmax.f32 %v7521, %v7513
    %v7526 = vmax.f32 %v7522, %v7514
    %v7527 = vmax.f32 %v7523, %v7515
    %v7528 = vmax.f32 %v7524, %v7516
    %v7529 = vmax.f32 %v7525, %v7526
    %v7530 = vmax.f32 %v7527, %v7528
    %v7531 = vmax.f32 %v7529, %v7530
    %v7532 = vrot.slane %v7531, 4
    %v7533 = vmax.f32 %v7531, %v7532
    %v7534 = vrot.slane %v7533, 2
    %v7535 = vmax.f32 %v7533, %v7534
    %v7536 = vrot.slane %v7535, 1
    %v7537 = vmax.f32 %v7535, %v7536
    %vm7538 = vcmp.ge.f32.partialorder %v7501, %v7537
    %vm7539 = vcmp.ge.f32.partialorder %v7502, %v7537
    %vm7540 = vcmp.ge.f32.partialorder %v7503, %v7537
    %vm7541 = vcmp.ge.f32.partialorder %v7504, %v7537
    %vm7542 = vcmp.ge.f32.partialorder %v7505, %v7537
    %vm7543 = vcmp.ge.f32.partialorder %v7506, %v7537
    %vm7544 = vcmp.ge.f32.partialorder %v7507, %v7537
    %vm7545 = vcmp.ge.f32.partialorder %v7508, %v7537
    %vm7546 = vcmp.ge.f32.partialorder %v7509, %v7537
    %vm7547 = vcmp.ge.f32.partialorder %v7510, %v7537
    %vm7548 = vcmp.ge.f32.partialorder %v7511, %v7537
    %vm7549 = vcmp.ge.f32.partialorder %v7512, %v7537
    %vm7550 = vcmp.ge.f32.partialorder %v7513, %v7537
    %vm7551 = vcmp.ge.f32.partialorder %v7514, %v7537
    %vm7552 = vcmp.ge.f32.partialorder %v7515, %v7537
    %vm7553 = vcmp.ge.f32.partialorder %v7516, %v7537
    %v7554 = vsel %vm7538, %v5802, 128
    %v7555 = vsel %vm7539, %v5803, 128
    %v7556 = vsel %vm7540, %v5804, 128
    %v7557 = vsel %vm7541, %v5805, 128
    %v7558 = vsel %vm7542, %v5806, 128
    %v7559 = vsel %vm7543, %v5807, 128
    %v7560 = vsel %vm7544, %v5808, 128
    %v7561 = vsel %vm7545, %v5809, 128
    %v7562 = vsel %vm7546, %v5810, 128
    %v7563 = vsel %vm7547, %v5811, 128
    %v7564 = vsel %vm7548, %v5812, 128
    %v7565 = vsel %vm7549, %v5813, 128
    %v7566 = vsel %vm7550, %v5814, 128
    %v7567 = vsel %vm7551, %v5815, 128
    %v7568 = vsel %vm7552, %v5816, 128
    %v7569 = vsel %vm7553, %v5817, 128
    %vm7570 = vcmp.lt.s32.totalorder %v7554, %v7558
    %v7571 = vsel %vm7570, %v7554, %v7558
    %vm7572 = vcmp.lt.s32.totalorder %v7555, %v7559
    %v7573 = vsel %vm7572, %v7555, %v7559
    %vm7574 = vcmp.lt.s32.totalorder %v7556, %v7560
    %v7575 = vsel %vm7574, %v7556, %v7560
    %vm7576 = vcmp.lt.s32.totalorder %v7557, %v7561
    %v7577 = vsel %vm7576, %v7557, %v7561
    %vm7578 = vcmp.lt.s32.totalorder %v7571, %v7562
    %v7579 = vsel %vm7578, %v7571, %v7562
    %vm7580 = vcmp.lt.s32.totalorder %v7573, %v7563
    %v7581 = vsel %vm7580, %v7573, %v7563
    %vm7582 = vcmp.lt.s32.totalorder %v7575, %v7564
    %v7583 = vsel %vm7582, %v7575, %v7564
    %vm7584 = vcmp.lt.s32.totalorder %v7577, %v7565
    %v7585 = vsel %vm7584, %v7577, %v7565
    %vm7586 = vcmp.lt.s32.totalorder %v7579, %v7566
    %v7587 = vsel %vm7586, %v7579, %v7566
    %vm7588 = vcmp.lt.s32.totalorder %v7581, %v7567
    %v7589 = vsel %vm7588, %v7581, %v7567
    %vm7590 = vcmp.lt.s32.totalorder %v7583, %v7568
    %v7591 = vsel %vm7590, %v7583, %v7568
    %vm7592 = vcmp.lt.s32.totalorder %v7585, %v7569
    %v7593 = vsel %vm7592, %v7585, %v7569
    %vm7594 = vcmp.lt.s32.totalorder %v7587, %v7589
    %v7595 = vsel %vm7594, %v7587, %v7589
    %vm7596 = vcmp.lt.s32.totalorder %v7591, %v7593
    %v7597 = vsel %vm7596, %v7591, %v7593
    %vm7598 = vcmp.lt.s32.totalorder %v7595, %v7597
    %v7599 = vsel %vm7598, %v7595, %v7597
    %v7600 = vrot.slane %v7599, 4
    %vm7601 = vcmp.lt.s32.totalorder %v7599, %v7600
    %v7602 = vsel %vm7601, %v7599, %v7600
    %v7603 = vrot.slane %v7602, 2
    %vm7604 = vcmp.lt.s32.totalorder %v7602, %v7603
    %v7605 = vsel %vm7604, %v7602, %v7603
    %v7606 = vrot.slane %v7605, 1
    %vm7607 = vcmp.lt.s32.totalorder %v7605, %v7606
    %v7608 = vsel %vm7607, %v7605, %v7606
    %7609 = vst [vmem:[#allocation5 + $0x4] sm:$0x1] %v7608
    %v7610 = vld [vmem:[%s5] sm:$0xff]
    %v7611 = vld [vmem:[%s5 + $0x8] sm:$0xff]
    %v7612 = vld [vmem:[%s5 + $0x10] sm:$0xff]
    %v7613 = vld [vmem:[%s5 + $0x18] sm:$0xff]
    %v7614 = vld [vmem:[%s5 + $0x20] sm:$0xff]
    %v7615 = vld [vmem:[%s5 + $0x28] sm:$0xff]
    %v7616 = vld [vmem:[%s5 + $0x30] sm:$0xff]
    %v7617 = vld [vmem:[%s5 + $0x38] sm:$0xff]
    %v7618 = vld [vmem:[%s5 + $0x40] sm:$0xff]
    %v7619 = vld [vmem:[%s5 + $0x48] sm:$0xff]
    %v7620 = vld [vmem:[%s5 + $0x50] sm:$0xff]
    %v7621 = vld [vmem:[%s5 + $0x58] sm:$0xff]
    %v7622 = vld [vmem:[%s5 + $0x60] sm:$0xff]
    %v7623 = vld [vmem:[%s5 + $0x68] sm:$0xff]
    %v7624 = vld [vmem:[%s5 + $0x70] sm:$0xff]
    %v7625 = vld [vmem:[%s5 + $0x78] sm:$0xff]
    %v7627 = vsel %vm5458, %v7610, 0
    %v7630 = vsel %vm5458, %v7611, 0
    %v7633 = vsel %vm5458, %v7612, 0
    %v7636 = vsel %vm5458, %v7613, 0
    %v7639 = vsel %vm5458, %v7614, 0
    %v7642 = vsel %vm5458, %v7615, 0
    %v7645 = vsel %vm5458, %v7616, 0
    %v7648 = vsel %vm5458, %v7617, 0
    %v7651 = vsel %vm5458, %v7618, 0
    %v7654 = vsel %vm5458, %v7619, 0
    %v7657 = vsel %vm5458, %v7620, 0
    %v7660 = vsel %vm5458, %v7621, 0
    %v7663 = vsel %vm5458, %v7622, 0
    %v7666 = vsel %vm5458, %v7623, 0
    %v7669 = vsel %vm5458, %v7624, 0
    %v7672 = vsel %vm5458, %v7625, 0
    %7674 = vmatprep.subr.mxu0 0.0
    %7675 = vmatpush1.msra.mxu0 %v5268
    %7676 = vmatprep.subr.mxu0 0.0
    %7677 = vmatpush1.msra.mxu0 %v5271
    %7678 = vmatprep.subr.mxu0 0.0
    %7679 = vmatpush1.msra.mxu0 %v5276
    %7680 = vmatprep.subr.mxu0 0.0
    %7681 = vmatpush1.msra.mxu0 %v5279
    %7682 = vmatprep.subr.mxu0 0.0
    %7683 = vmatpush1.msra.mxu0 0.0
    %7684 = vmatprep.subr.mxu0 0.0
    %7685 = vmatpush1.msra.mxu0 0.0
    %7686 = vmatprep.subr.mxu0 0.0
    %7687 = vmatpush1.msra.mxu0 0.0
    %7688 = vmatprep.subr.mxu0 0.0
    %7689 = vmatpush1.msra.mxu0 0.0
    %7690 = vmatprep.subr.mxu0 0.0
    %7691 = vmatpush1.msra.mxu0 0.0
    %7692 = vmatprep.subr.mxu0 0.0
    %7693 = vmatpush1.msra.mxu0 0.0
    %7694 = vmatprep.subr.mxu0 0.0
    %7695 = vmatpush1.msra.mxu0 0.0
    %7696 = vmatprep.subr.mxu0 0.0
    %7697 = vmatpush1.msra.mxu0 0.0
    %7698 = vmatprep.subr.mxu0 0.0
    %7699 = vmatpush1.msra.mxu0 0.0
    %7700 = vmatprep.subr.mxu0 0.0
    %7701 = vmatpush1.msra.mxu0 0.0
    %7702 = vmatprep.subr.mxu0 0.0
    %7703 = vmatpush1.msra.mxu0 0.0
    %7704 = vmatprep.subr.mxu0 0.0
    %7705 = vmatpush1.msra.mxu0 0.0
    %7706 = vmatprep.subr.mxu0 0.0
    %7707 = vmatpush1.msra.mxu0 0.0
    %7708 = vmatprep.subr.mxu0 0.0
    %7709 = vmatpush1.msra.mxu0 0.0
    %7710 = vmatprep.subr.mxu0 0.0
    %7711 = vmatpush1.msra.mxu0 0.0
    %7712 = vmatprep.subr.mxu0 0.0
    %7713 = vmatpush1.msra.mxu0 0.0
    %7714 = vmatprep.subr.mxu0 0.0
    %7715 = vmatpush1.msra.mxu0 0.0
    %7716 = vmatprep.subr.mxu0 0.0
    %7717 = vmatpush1.msra.mxu0 0.0
    %7718 = vmatprep.subr.mxu0 0.0
    %7719 = vmatpush1.msra.mxu0 0.0
    %7720 = vmatprep.subr.mxu0 0.0
    %7721 = vmatpush1.msra.mxu0 0.0
    %7722 = vmatprep.subr.mxu0 0.0
    %7723 = vmatpush1.msra.mxu0 0.0
    %7724 = vmatprep.subr.mxu0 0.0
    %7725 = vmatpush1.msra.mxu0 0.0
    %7726 = vmatprep.subr.mxu0 0.0
    %7727 = vmatpush1.msra.mxu0 0.0
    %7728 = vmatprep.subr.mxu0 0.0
    %7729 = vmatpush1.msra.mxu0 0.0
    %7730 = vmatprep.subr.mxu0 0.0
    %7731 = vmatpush1.msra.mxu0 0.0
    %7732 = vmatprep.subr.mxu0 0.0
    %7733 = vmatpush1.msra.mxu0 0.0
    %7734 = vmatprep.subr.mxu0 0.0
    %7735 = vmatpush1.msra.mxu0 0.0
    %7736 = vmatprep.subr.mxu0 0.0
    %7737 = vmatpush1.msra.mxu0 0.0
    %7738 = vmatprep.mubr.f32.mxu0 0.0
    %7739 = vmatmul.mubr.f32.gmra.mrb[0].mxu0 %v7627
    %v7740 = vpop.f32.mrb[0].mxu0
    %v7741 = vadd.f32 0.0, %v7740
    %v7742 = vpop.f32.mrb[0].mxu0
    %7743 = vmatprep.mubr.f32.mxu0 0.0
    %7744 = vmatmul.mubr.f32.gmra.mrb[0].mxu0 %v7630
    %v7745 = vpop.f32.mrb[0].mxu0
    %v7746 = vadd.f32 0.0, %v7745
    %v7747 = vpop.f32.mrb[0].mxu0
    %7748 = vmatprep.mubr.f32.mxu0 0.0
    %7749 = vmatmul.mubr.f32.gmra.mrb[0].mxu0 %v7633
    %v7750 = vpop.f32.mrb[0].mxu0
    %v7751 = vadd.f32 0.0, %v7750
    %v7752 = vpop.f32.mrb[0].mxu0
    %7753 = vmatprep.mubr.f32.mxu0 0.0
    %7754 = vmatmul.mubr.f32.gmra.mrb[0].mxu0 %v7636
    %v7755 = vpop.f32.mrb[0].mxu0
    %v7756 = vadd.f32 0.0, %v7755
    %v7757 = vpop.f32.mrb[0].mxu0
    %7758 = vmatprep.mubr.f32.mxu0 0.0
    %7759 = vmatmul.mubr.f32.gmra.mrb[0].mxu0 %v7639
    %v7760 = vpop.f32.mrb[0].mxu0
    %v7761 = vadd.f32 0.0, %v7760
    %v7762 = vpop.f32.mrb[0].mxu0
    %7763 = vmatprep.mubr.f32.mxu0 0.0
    %7764 = vmatmul.mubr.f32.gmra.mrb[0].mxu0 %v7642
    %v7765 = vpop.f32.mrb[0].mxu0
    %v7766 = vadd.f32 0.0, %v7765
    %v7767 = vpop.f32.mrb[0].mxu0
    %7768 = vmatprep.mubr.f32.mxu0 0.0
    %7769 = vmatmul.mubr.f32.gmra.mrb[0].mxu0 %v7645
    %v7770 = vpop.f32.mrb[0].mxu0
    %v7771 = vadd.f32 0.0, %v7770
    %v7772 = vpop.f32.mrb[0].mxu0
    %7773 = vmatprep.mubr.f32.mxu0 0.0
    %7774 = vmatmul.mubr.f32.gmra.mrb[0].mxu0 %v7648
    %v7775 = vpop.f32.mrb[0].mxu0
    %v7776 = vadd.f32 0.0, %v7775
    %v7777 = vpop.f32.mrb[0].mxu0
    %7778 = vmatprep.mubr.f32.mxu0 0.0
    %7779 = vmatmul.mubr.f32.gmra.mrb[0].mxu0 %v7651
    %v7780 = vpop.f32.mrb[0].mxu0
    %v7781 = vadd.f32 0.0, %v7780
    %v7782 = vpop.f32.mrb[0].mxu0
    %7783 = vmatprep.mubr.f32.mxu0 0.0
    %7784 = vmatmul.mubr.f32.gmra.mrb[0].mxu0 %v7654
    %v7785 = vpop.f32.mrb[0].mxu0
    %v7786 = vadd.f32 0.0, %v7785
    %v7787 = vpop.f32.mrb[0].mxu0
    %7788 = vmatprep.mubr.f32.mxu0 0.0
    %7789 = vmatmul.mubr.f32.gmra.mrb[0].mxu0 %v7657
    %v7790 = vpop.f32.mrb[0].mxu0
    %v7791 = vadd.f32 0.0, %v7790
    %v7792 = vpop.f32.mrb[0].mxu0
    %7793 = vmatprep.mubr.f32.mxu0 0.0
    %7794 = vmatmul.mubr.f32.gmra.mrb[0].mxu0 %v7660
    %v7795 = vpop.f32.mrb[0].mxu0
    %v7796 = vadd.f32 0.0, %v7795
    %v7797 = vpop.f32.mrb[0].mxu0
    %7798 = vmatprep.mubr.f32.mxu0 0.0
    %7799 = vmatmul.mubr.f32.gmra.mrb[0].mxu0 %v7663
    %v7800 = vpop.f32.mrb[0].mxu0
    %v7801 = vadd.f32 0.0, %v7800
    %v7802 = vpop.f32.mrb[0].mxu0
    %7803 = vmatprep.mubr.f32.mxu0 0.0
    %7804 = vmatmul.mubr.f32.gmra.mrb[0].mxu0 %v7666
    %v7805 = vpop.f32.mrb[0].mxu0
    %v7806 = vadd.f32 0.0, %v7805
    %v7807 = vpop.f32.mrb[0].mxu0
    %7808 = vmatprep.mubr.f32.mxu0 0.0
    %7809 = vmatmul.mubr.f32.gmra.mrb[0].mxu0 %v7669
    %v7810 = vpop.f32.mrb[0].mxu0
    %v7811 = vadd.f32 0.0, %v7810
    %v7812 = vpop.f32.mrb[0].mxu0
    %7813 = vmatprep.mubr.f32.mxu0 0.0
    %7814 = vmatmul.mubr.f32.gmra.mrb[0].mxu0 %v7672
    %v7815 = vpop.f32.mrb[0].mxu0
    %v7816 = vadd.f32 0.0, %v7815
    %v7817 = vpop.f32.mrb[0].mxu0
    %7818 = vdwg.mxu0
    %v7819 = vmul.f32 %v7741, 2.0
    %v7820 = vmul.f32 %v7746, 2.0
    %v7821 = vmul.f32 %v7751, 2.0
    %v7822 = vmul.f32 %v7756, 2.0
    %v7823 = vmul.f32 %v7761, 2.0
    %v7824 = vmul.f32 %v7766, 2.0
    %v7825 = vmul.f32 %v7771, 2.0
    %v7826 = vmul.f32 %v7776, 2.0
    %v7827 = vmul.f32 %v7781, 2.0
    %v7828 = vmul.f32 %v7786, 2.0
    %v7829 = vmul.f32 %v7791, 2.0
    %v7830 = vmul.f32 %v7796, 2.0
    %v7831 = vmul.f32 %v7801, 2.0
    %v7832 = vmul.f32 %v7806, 2.0
    %v7833 = vmul.f32 %v7811, 2.0
    %v7834 = vmul.f32 %v7816, 2.0
    %v7835 = vld [vmem:[%s6] sm:$0xff]
    %v7836 = vld [vmem:[%s6 + $0x8] sm:$0xff]
    %v7837 = vld [vmem:[%s6 + $0x10] sm:$0xff]
    %v7838 = vld [vmem:[%s6 + $0x18] sm:$0xff]
    %v7839 = vld [vmem:[%s6 + $0x20] sm:$0xff]
    %v7840 = vld [vmem:[%s6 + $0x28] sm:$0xff]
    %v7841 = vld [vmem:[%s6 + $0x30] sm:$0xff]
    %v7842 = vld [vmem:[%s6 + $0x38] sm:$0xff]
    %v7843 = vld [vmem:[%s6 + $0x40] sm:$0xff]
    %v7844 = vld [vmem:[%s6 + $0x48] sm:$0xff]
    %v7845 = vld [vmem:[%s6 + $0x50] sm:$0xff]
    %v7846 = vld [vmem:[%s6 + $0x58] sm:$0xff]
    %v7847 = vld [vmem:[%s6 + $0x60] sm:$0xff]
    %v7848 = vld [vmem:[%s6 + $0x68] sm:$0xff]
    %v7849 = vld [vmem:[%s6 + $0x70] sm:$0xff]
    %v7850 = vld [vmem:[%s6 + $0x78] sm:$0xff]
    %7852 = vset.pattern.permute.xlu0 0
    %7853 = vperm.xlu0 %7852, %v7835
    %v7854 = vpop.permute.xlu0 %7853
    %7857 = vset.pattern.permute.xlu0 0
    %7858 = vperm.xlu0 %7857, %v7836
    %v7859 = vpop.permute.xlu0 %7858
    %7862 = vset.pattern.permute.xlu0 0
    %7863 = vperm.xlu0 %7862, %v7837
    %v7864 = vpop.permute.xlu0 %7863
    %7867 = vset.pattern.permute.xlu0 0
    %7868 = vperm.xlu0 %7867, %v7838
    %v7869 = vpop.permute.xlu0 %7868
    %7872 = vset.pattern.permute.xlu0 0
    %7873 = vperm.xlu0 %7872, %v7839
    %v7874 = vpop.permute.xlu0 %7873
    %7877 = vset.pattern.permute.xlu0 0
    %7878 = vperm.xlu0 %7877, %v7840
    %v7879 = vpop.permute.xlu0 %7878
    %7882 = vset.pattern.permute.xlu0 0
    %7883 = vperm.xlu0 %7882, %v7841
    %v7884 = vpop.permute.xlu0 %7883
    %7887 = vset.pattern.permute.xlu0 0
    %7888 = vperm.xlu0 %7887, %v7842
    %v7889 = vpop.permute.xlu0 %7888
    %7892 = vset.pattern.permute.xlu0 0
    %7893 = vperm.xlu0 %7892, %v7843
    %v7894 = vpop.permute.xlu0 %7893
    %7897 = vset.pattern.permute.xlu0 0
    %7898 = vperm.xlu0 %7897, %v7844
    %v7899 = vpop.permute.xlu0 %7898
    %7902 = vset.pattern.permute.xlu0 0
    %7903 = vperm.xlu0 %7902, %v7845
    %v7904 = vpop.permute.xlu0 %7903
    %7907 = vset.pattern.permute.xlu0 0
    %7908 = vperm.xlu0 %7907, %v7846
    %v7909 = vpop.permute.xlu0 %7908
    %7912 = vset.pattern.permute.xlu0 0
    %7913 = vperm.xlu0 %7912, %v7847
    %v7914 = vpop.permute.xlu0 %7913
    %7917 = vset.pattern.permute.xlu0 0
    %7918 = vperm.xlu0 %7917, %v7848
    %v7919 = vpop.permute.xlu0 %7918
    %7922 = vset.pattern.permute.xlu0 0
    %7923 = vperm.xlu0 %7922, %v7849
    %v7924 = vpop.permute.xlu0 %7923
    %7927 = vset.pattern.permute.xlu0 0
    %7928 = vperm.xlu0 %7927, %v7850
    %v7929 = vpop.permute.xlu0 %7928
    %v7931 = vsub.f32 %v7819, %v7854
    %v7932 = vsub.f32 %v7820, %v7859
    %v7933 = vsub.f32 %v7821, %v7864
    %v7934 = vsub.f32 %v7822, %v7869
    %v7935 = vsub.f32 %v7823, %v7874
    %v7936 = vsub.f32 %v7824, %v7879
    %v7937 = vsub.f32 %v7825, %v7884
    %v7938 = vsub.f32 %v7826, %v7889
    %v7939 = vsub.f32 %v7827, %v7894
    %v7940 = vsub.f32 %v7828, %v7899
    %v7941 = vsub.f32 %v7829, %v7904
    %v7942 = vsub.f32 %v7830, %v7909
    %v7943 = vsub.f32 %v7831, %v7914
    %v7944 = vsub.f32 %v7832, %v7919
    %v7945 = vsub.f32 %v7833, %v7924
    %v7946 = vsub.f32 %v7834, %v7929
    %v7947 = vmax.f32 %v7931, %v7935
    %v7948 = vmax.f32 %v7932, %v7936
    %v7949 = vmax.f32 %v7933, %v7937
    %v7950 = vmax.f32 %v7934, %v7938
    %v7951 = vmax.f32 %v7947, %v7939
    %v7952 = vmax.f32 %v7948, %v7940
    %v7953 = vmax.f32 %v7949, %v7941
    %v7954 = vmax.f32 %v7950, %v7942
    %v7955 = vmax.f32 %v7951, %v7943
    %v7956 = vmax.f32 %v7952, %v7944
    %v7957 = vmax.f32 %v7953, %v7945
    %v7958 = vmax.f32 %v7954, %v7946
    %v7959 = vmax.f32 %v7955, %v7956
    %v7960 = vmax.f32 %v7957, %v7958
    %v7961 = vmax.f32 %v7959, %v7960
    %v7962 = vrot.slane %v7961, 4
    %v7963 = vmax.f32 %v7961, %v7962
    %v7964 = vrot.slane %v7963, 2
    %v7965 = vmax.f32 %v7963, %v7964
    %v7966 = vrot.slane %v7965, 1
    %v7967 = vmax.f32 %v7965, %v7966
    %vm7968 = vcmp.ge.f32.partialorder %v7931, %v7967
    %vm7969 = vcmp.ge.f32.partialorder %v7932, %v7967
    %vm7970 = vcmp.ge.f32.partialorder %v7933, %v7967
    %vm7971 = vcmp.ge.f32.partialorder %v7934, %v7967
    %vm7972 = vcmp.ge.f32.partialorder %v7935, %v7967
    %vm7973 = vcmp.ge.f32.partialorder %v7936, %v7967
    %vm7974 = vcmp.ge.f32.partialorder %v7937, %v7967
    %vm7975 = vcmp.ge.f32.partialorder %v7938, %v7967
    %vm7976 = vcmp.ge.f32.partialorder %v7939, %v7967
    %vm7977 = vcmp.ge.f32.partialorder %v7940, %v7967
    %vm7978 = vcmp.ge.f32.partialorder %v7941, %v7967
    %vm7979 = vcmp.ge.f32.partialorder %v7942, %v7967
    %vm7980 = vcmp.ge.f32.partialorder %v7943, %v7967
    %vm7981 = vcmp.ge.f32.partialorder %v7944, %v7967
    %vm7982 = vcmp.ge.f32.partialorder %v7945, %v7967
    %vm7983 = vcmp.ge.f32.partialorder %v7946, %v7967
    %v7984 = vsel %vm7968, %v5802, 128
    %v7985 = vsel %vm7969, %v5803, 128
    %v7986 = vsel %vm7970, %v5804, 128
    %v7987 = vsel %vm7971, %v5805, 128
    %v7988 = vsel %vm7972, %v5806, 128
    %v7989 = vsel %vm7973, %v5807, 128
    %v7990 = vsel %vm7974, %v5808, 128
    %v7991 = vsel %vm7975, %v5809, 128
    %v7992 = vsel %vm7976, %v5810, 128
    %v7993 = vsel %vm7977, %v5811, 128
    %v7994 = vsel %vm7978, %v5812, 128
    %v7995 = vsel %vm7979, %v5813, 128
    %v7996 = vsel %vm7980, %v5814, 128
    %v7997 = vsel %vm7981, %v5815, 128
    %v7998 = vsel %vm7982, %v5816, 128
    %v7999 = vsel %vm7983, %v5817, 128
    %vm8000 = vcmp.lt.s32.totalorder %v7984, %v7988
    %v8001 = vsel %vm8000, %v7984, %v7988
    %vm8002 = vcmp.lt.s32.totalorder %v7985, %v7989
    %v8003 = vsel %vm8002, %v7985, %v7989
    %vm8004 = vcmp.lt.s32.totalorder %v7986, %v7990
    %v8005 = vsel %vm8004, %v7986, %v7990
    %vm8006 = vcmp.lt.s32.totalorder %v7987, %v7991
    %v8007 = vsel %vm8006, %v7987, %v7991
    %vm8008 = vcmp.lt.s32.totalorder %v8001, %v7992
    %v8009 = vsel %vm8008, %v8001, %v7992
    %vm8010 = vcmp.lt.s32.totalorder %v8003, %v7993
    %v8011 = vsel %vm8010, %v8003, %v7993
    %vm8012 = vcmp.lt.s32.totalorder %v8005, %v7994
    %v8013 = vsel %vm8012, %v8005, %v7994
    %vm8014 = vcmp.lt.s32.totalorder %v8007, %v7995
    %v8015 = vsel %vm8014, %v8007, %v7995
    %vm8016 = vcmp.lt.s32.totalorder %v8009, %v7996
    %v8017 = vsel %vm8016, %v8009, %v7996
    %vm8018 = vcmp.lt.s32.totalorder %v8011, %v7997
    %v8019 = vsel %vm8018, %v8011, %v7997
    %vm8020 = vcmp.lt.s32.totalorder %v8013, %v7998
    %v8021 = vsel %vm8020, %v8013, %v7998
    %vm8022 = vcmp.lt.s32.totalorder %v8015, %v7999
    %v8023 = vsel %vm8022, %v8015, %v7999
    %vm8024 = vcmp.lt.s32.totalorder %v8017, %v8019
    %v8025 = vsel %vm8024, %v8017, %v8019
    %vm8026 = vcmp.lt.s32.totalorder %v8021, %v8023
    %v8027 = vsel %vm8026, %v8021, %v8023
    %vm8028 = vcmp.lt.s32.totalorder %v8025, %v8027
    %v8029 = vsel %vm8028, %v8025, %v8027
    %v8030 = vrot.slane %v8029, 4
    %vm8031 = vcmp.lt.s32.totalorder %v8029, %v8030
    %v8032 = vsel %vm8031, %v8029, %v8030
    %v8033 = vrot.slane %v8032, 2
    %vm8034 = vcmp.lt.s32.totalorder %v8032, %v8033
    %v8035 = vsel %vm8034, %v8032, %v8033
    %v8036 = vrot.slane %v8035, 1
    %vm8037 = vcmp.lt.s32.totalorder %v8035, %v8036
    %v8038 = vsel %vm8037, %v8035, %v8036
    %8039 = vst [vmem:[#allocation5 + $0x5] sm:$0x1] %v8038
    %v8040 = vld [vmem:[%s5] sm:$0xff]
    %v8041 = vld [vmem:[%s5 + $0x8] sm:$0xff]
    %v8042 = vld [vmem:[%s5 + $0x10] sm:$0xff]
    %v8043 = vld [vmem:[%s5 + $0x18] sm:$0xff]
    %v8044 = vld [vmem:[%s5 + $0x20] sm:$0xff]
    %v8045 = vld [vmem:[%s5 + $0x28] sm:$0xff]
    %v8046 = vld [vmem:[%s5 + $0x30] sm:$0xff]
    %v8047 = vld [vmem:[%s5 + $0x38] sm:$0xff]
    %v8048 = vld [vmem:[%s5 + $0x40] sm:$0xff]
    %v8049 = vld [vmem:[%s5 + $0x48] sm:$0xff]
    %v8050 = vld [vmem:[%s5 + $0x50] sm:$0xff]
    %v8051 = vld [vmem:[%s5 + $0x58] sm:$0xff]
    %v8052 = vld [vmem:[%s5 + $0x60] sm:$0xff]
    %v8053 = vld [vmem:[%s5 + $0x68] sm:$0xff]
    %v8054 = vld [vmem:[%s5 + $0x70] sm:$0xff]
    %v8055 = vld [vmem:[%s5 + $0x78] sm:$0xff]
    %v8057 = vsel %vm5458, %v8040, 0
    %v8060 = vsel %vm5458, %v8041, 0
    %v8063 = vsel %vm5458, %v8042, 0
    %v8066 = vsel %vm5458, %v8043, 0
    %v8069 = vsel %vm5458, %v8044, 0
    %v8072 = vsel %vm5458, %v8045, 0
    %v8075 = vsel %vm5458, %v8046, 0
    %v8078 = vsel %vm5458, %v8047, 0
    %v8081 = vsel %vm5458, %v8048, 0
    %v8084 = vsel %vm5458, %v8049, 0
    %v8087 = vsel %vm5458, %v8050, 0
    %v8090 = vsel %vm5458, %v8051, 0
    %v8093 = vsel %vm5458, %v8052, 0
    %v8096 = vsel %vm5458, %v8053, 0
    %v8099 = vsel %vm5458, %v8054, 0
    %v8102 = vsel %vm5458, %v8055, 0
    %8104 = vmatprep.subr.mxu0 0.0
    %8105 = vmatpush1.msra.mxu0 %v5284
    %8106 = vmatprep.subr.mxu0 0.0
    %8107 = vmatpush1.msra.mxu0 %v5287
    %8108 = vmatprep.subr.mxu0 0.0
    %8109 = vmatpush1.msra.mxu0 %v5292
    %8110 = vmatprep.subr.mxu0 0.0
    %8111 = vmatpush1.msra.mxu0 %v5295
    %8112 = vmatprep.subr.mxu0 0.0
    %8113 = vmatpush1.msra.mxu0 0.0
    %8114 = vmatprep.subr.mxu0 0.0
    %8115 = vmatpush1.msra.mxu0 0.0
    %8116 = vmatprep.subr.mxu0 0.0
    %8117 = vmatpush1.msra.mxu0 0.0
    %8118 = vmatprep.subr.mxu0 0.0
    %8119 = vmatpush1.msra.mxu0 0.0
    %8120 = vmatprep.subr.mxu0 0.0
    %8121 = vmatpush1.msra.mxu0 0.0
    %8122 = vmatprep.subr.mxu0 0.0
    %8123 = vmatpush1.msra.mxu0 0.0
    %8124 = vmatprep.subr.mxu0 0.0
    %8125 = vmatpush1.msra.mxu0 0.0
    %8126 = vmatprep.subr.mxu0 0.0
    %8127 = vmatpush1.msra.mxu0 0.0
    %8128 = vmatprep.subr.mxu0 0.0
    %8129 = vmatpush1.msra.mxu0 0.0
    %8130 = vmatprep.subr.mxu0 0.0
    %8131 = vmatpush1.msra.mxu0 0.0
    %8132 = vmatprep.subr.mxu0 0.0
    %8133 = vmatpush1.msra.mxu0 0.0
    %8134 = vmatprep.subr.mxu0 0.0
    %8135 = vmatpush1.msra.mxu0 0.0
    %8136 = vmatprep.subr.mxu0 0.0
    %8137 = vmatpush1.msra.mxu0 0.0
    %8138 = vmatprep.subr.mxu0 0.0
    %8139 = vmatpush1.msra.mxu0 0.0
    %8140 = vmatprep.subr.mxu0 0.0
    %8141 = vmatpush1.msra.mxu0 0.0
    %8142 = vmatprep.subr.mxu0 0.0
    %8143 = vmatpush1.msra.mxu0 0.0
    %8144 = vmatprep.subr.mxu0 0.0
    %8145 = vmatpush1.msra.mxu0 0.0
    %8146 = vmatprep.subr.mxu0 0.0
    %8147 = vmatpush1.msra.mxu0 0.0
    %8148 = vmatprep.subr.mxu0 0.0
    %8149 = vmatpush1.msra.mxu0 0.0
    %8150 = vmatprep.subr.mxu0 0.0
    %8151 = vmatpush1.msra.mxu0 0.0
    %8152 = vmatprep.subr.mxu0 0.0
    %8153 = vmatpush1.msra.mxu0 0.0
    %8154 = vmatprep.subr.mxu0 0.0
    %8155 = vmatpush1.msra.mxu0 0.0
    %8156 = vmatprep.subr.mxu0 0.0
    %8157 = vmatpush1.msra.mxu0 0.0
    %8158 = vmatprep.subr.mxu0 0.0
    %8159 = vmatpush1.msra.mxu0 0.0
    %8160 = vmatprep.subr.mxu0 0.0
    %8161 = vmatpush1.msra.mxu0 0.0
    %8162 = vmatprep.subr.mxu0 0.0
    %8163 = vmatpush1.msra.mxu0 0.0
    %8164 = vmatprep.subr.mxu0 0.0
    %8165 = vmatpush1.msra.mxu0 0.0
    %8166 = vmatprep.subr.mxu0 0.0
    %8167 = vmatpush1.msra.mxu0 0.0
    %8168 = vmatprep.mubr.f32.mxu0 0.0
    %8169 = vmatmul.mubr.f32.gmra.mrb[0].mxu0 %v8057
    %v8170 = vpop.f32.mrb[0].mxu0
    %v8171 = vadd.f32 0.0, %v8170
    %v8172 = vpop.f32.mrb[0].mxu0
    %8173 = vmatprep.mubr.f32.mxu0 0.0
    %8174 = vmatmul.mubr.f32.gmra.mrb[0].mxu0 %v8060
    %v8175 = vpop.f32.mrb[0].mxu0
    %v8176 = vadd.f32 0.0, %v8175
    %v8177 = vpop.f32.mrb[0].mxu0
    %8178 = vmatprep.mubr.f32.mxu0 0.0
    %8179 = vmatmul.mubr.f32.gmra.mrb[0].mxu0 %v8063
    %v8180 = vpop.f32.mrb[0].mxu0
    %v8181 = vadd.f32 0.0, %v8180
    %v8182 = vpop.f32.mrb[0].mxu0
    %8183 = vmatprep.mubr.f32.mxu0 0.0
    %8184 = vmatmul.mubr.f32.gmra.mrb[0].mxu0 %v8066
    %v8185 = vpop.f32.mrb[0].mxu0
    %v8186 = vadd.f32 0.0, %v8185
    %v8187 = vpop.f32.mrb[0].mxu0
    %8188 = vmatprep.mubr.f32.mxu0 0.0
    %8189 = vmatmul.mubr.f32.gmra.mrb[0].mxu0 %v8069
    %v8190 = vpop.f32.mrb[0].mxu0
    %v8191 = vadd.f32 0.0, %v8190
    %v8192 = vpop.f32.mrb[0].mxu0
    %8193 = vmatprep.mubr.f32.mxu0 0.0
    %8194 = vmatmul.mubr.f32.gmra.mrb[0].mxu0 %v8072
    %v8195 = vpop.f32.mrb[0].mxu0
    %v8196 = vadd.f32 0.0, %v8195
    %v8197 = vpop.f32.mrb[0].mxu0
    %8198 = vmatprep.mubr.f32.mxu0 0.0
    %8199 = vmatmul.mubr.f32.gmra.mrb[0].mxu0 %v8075
    %v8200 = vpop.f32.mrb[0].mxu0
    %v8201 = vadd.f32 0.0, %v8200
    %v8202 = vpop.f32.mrb[0].mxu0
    %8203 = vmatprep.mubr.f32.mxu0 0.0
    %8204 = vmatmul.mubr.f32.gmra.mrb[0].mxu0 %v8078
    %v8205 = vpop.f32.mrb[0].mxu0
    %v8206 = vadd.f32 0.0, %v8205
    %v8207 = vpop.f32.mrb[0].mxu0
    %8208 = vmatprep.mubr.f32.mxu0 0.0
    %8209 = vmatmul.mubr.f32.gmra.mrb[0].mxu0 %v8081
    %v8210 = vpop.f32.mrb[0].mxu0
    %v8211 = vadd.f32 0.0, %v8210
    %v8212 = vpop.f32.mrb[0].mxu0
    %8213 = vmatprep.mubr.f32.mxu0 0.0
    %8214 = vmatmul.mubr.f32.gmra.mrb[0].mxu0 %v8084
    %v8215 = vpop.f32.mrb[0].mxu0
    %v8216 = vadd.f32 0.0, %v8215
    %v8217 = vpop.f32.mrb[0].mxu0
    %8218 = vmatprep.mubr.f32.mxu0 0.0
    %8219 = vmatmul.mubr.f32.gmra.mrb[0].mxu0 %v8087
    %v8220 = vpop.f32.mrb[0].mxu0
    %v8221 = vadd.f32 0.0, %v8220
    %v8222 = vpop.f32.mrb[0].mxu0
    %8223 = vmatprep.mubr.f32.mxu0 0.0
    %8224 = vmatmul.mubr.f32.gmra.mrb[0].mxu0 %v8090
    %v8225 = vpop.f32.mrb[0].mxu0
    %v8226 = vadd.f32 0.0, %v8225
    %v8227 = vpop.f32.mrb[0].mxu0
    %8228 = vmatprep.mubr.f32.mxu0 0.0
    %8229 = vmatmul.mubr.f32.gmra.mrb[0].mxu0 %v8093
    %v8230 = vpop.f32.mrb[0].mxu0
    %v8231 = vadd.f32 0.0, %v8230
    %v8232 = vpop.f32.mrb[0].mxu0
    %8233 = vmatprep.mubr.f32.mxu0 0.0
    %8234 = vmatmul.mubr.f32.gmra.mrb[0].mxu0 %v8096
    %v8235 = vpop.f32.mrb[0].mxu0
    %v8236 = vadd.f32 0.0, %v8235
    %v8237 = vpop.f32.mrb[0].mxu0
    %8238 = vmatprep.mubr.f32.mxu0 0.0
    %8239 = vmatmul.mubr.f32.gmra.mrb[0].mxu0 %v8099
    %v8240 = vpop.f32.mrb[0].mxu0
    %v8241 = vadd.f32 0.0, %v8240
    %v8242 = vpop.f32.mrb[0].mxu0
    %8243 = vmatprep.mubr.f32.mxu0 0.0
    %8244 = vmatmul.mubr.f32.gmra.mrb[0].mxu0 %v8102
    %v8245 = vpop.f32.mrb[0].mxu0
    %v8246 = vadd.f32 0.0, %v8245
    %v8247 = vpop.f32.mrb[0].mxu0
    %8248 = vdwg.mxu0
    %v8249 = vmul.f32 %v8171, 2.0
    %v8250 = vmul.f32 %v8176, 2.0
    %v8251 = vmul.f32 %v8181, 2.0
    %v8252 = vmul.f32 %v8186, 2.0
    %v8253 = vmul.f32 %v8191, 2.0
    %v8254 = vmul.f32 %v8196, 2.0
    %v8255 = vmul.f32 %v8201, 2.0
    %v8256 = vmul.f32 %v8206, 2.0
    %v8257 = vmul.f32 %v8211, 2.0
    %v8258 = vmul.f32 %v8216, 2.0
    %v8259 = vmul.f32 %v8221, 2.0
    %v8260 = vmul.f32 %v8226, 2.0
    %v8261 = vmul.f32 %v8231, 2.0
    %v8262 = vmul.f32 %v8236, 2.0
    %v8263 = vmul.f32 %v8241, 2.0
    %v8264 = vmul.f32 %v8246, 2.0
    %v8265 = vld [vmem:[%s6] sm:$0xff]
    %v8266 = vld [vmem:[%s6 + $0x8] sm:$0xff]
    %v8267 = vld [vmem:[%s6 + $0x10] sm:$0xff]
    %v8268 = vld [vmem:[%s6 + $0x18] sm:$0xff]
    %v8269 = vld [vmem:[%s6 + $0x20] sm:$0xff]
    %v8270 = vld [vmem:[%s6 + $0x28] sm:$0xff]
    %v8271 = vld [vmem:[%s6 + $0x30] sm:$0xff]
    %v8272 = vld [vmem:[%s6 + $0x38] sm:$0xff]
    %v8273 = vld [vmem:[%s6 + $0x40] sm:$0xff]
    %v8274 = vld [vmem:[%s6 + $0x48] sm:$0xff]
    %v8275 = vld [vmem:[%s6 + $0x50] sm:$0xff]
    %v8276 = vld [vmem:[%s6 + $0x58] sm:$0xff]
    %v8277 = vld [vmem:[%s6 + $0x60] sm:$0xff]
    %v8278 = vld [vmem:[%s6 + $0x68] sm:$0xff]
    %v8279 = vld [vmem:[%s6 + $0x70] sm:$0xff]
    %v8280 = vld [vmem:[%s6 + $0x78] sm:$0xff]
    %8282 = vset.pattern.permute.xlu0 0
    %8283 = vperm.xlu0 %8282, %v8265
    %v8284 = vpop.permute.xlu0 %8283
    %8287 = vset.pattern.permute.xlu0 0
    %8288 = vperm.xlu0 %8287, %v8266
    %v8289 = vpop.permute.xlu0 %8288
    %8292 = vset.pattern.permute.xlu0 0
    %8293 = vperm.xlu0 %8292, %v8267
    %v8294 = vpop.permute.xlu0 %8293
    %8297 = vset.pattern.permute.xlu0 0
    %8298 = vperm.xlu0 %8297, %v8268
    %v8299 = vpop.permute.xlu0 %8298
    %8302 = vset.pattern.permute.xlu0 0
    %8303 = vperm.xlu0 %8302, %v8269
    %v8304 = vpop.permute.xlu0 %8303
    %8307 = vset.pattern.permute.xlu0 0
    %8308 = vperm.xlu0 %8307, %v8270
    %v8309 = vpop.permute.xlu0 %8308
    %8312 = vset.pattern.permute.xlu0 0
    %8313 = vperm.xlu0 %8312, %v8271
    %v8314 = vpop.permute.xlu0 %8313
    %8317 = vset.pattern.permute.xlu0 0
    %8318 = vperm.xlu0 %8317, %v8272
    %v8319 = vpop.permute.xlu0 %8318
    %8322 = vset.pattern.permute.xlu0 0
    %8323 = vperm.xlu0 %8322, %v8273
    %v8324 = vpop.permute.xlu0 %8323
    %8327 = vset.pattern.permute.xlu0 0
    %8328 = vperm.xlu0 %8327, %v8274
    %v8329 = vpop.permute.xlu0 %8328
    %8332 = vset.pattern.permute.xlu0 0
    %8333 = vperm.xlu0 %8332, %v8275
    %v8334 = vpop.permute.xlu0 %8333
    %8337 = vset.pattern.permute.xlu0 0
    %8338 = vperm.xlu0 %8337, %v8276
    %v8339 = vpop.permute.xlu0 %8338
    %8342 = vset.pattern.permute.xlu0 0
    %8343 = vperm.xlu0 %8342, %v8277
    %v8344 = vpop.permute.xlu0 %8343
    %8347 = vset.pattern.permute.xlu0 0
    %8348 = vperm.xlu0 %8347, %v8278
    %v8349 = vpop.permute.xlu0 %8348
    %8352 = vset.pattern.permute.xlu0 0
    %8353 = vperm.xlu0 %8352, %v8279
    %v8354 = vpop.permute.xlu0 %8353
    %8357 = vset.pattern.permute.xlu0 0
    %8358 = vperm.xlu0 %8357, %v8280
    %v8359 = vpop.permute.xlu0 %8358
    %v8361 = vsub.f32 %v8249, %v8284
    %v8362 = vsub.f32 %v8250, %v8289
    %v8363 = vsub.f32 %v8251, %v8294
    %v8364 = vsub.f32 %v8252, %v8299
    %v8365 = vsub.f32 %v8253, %v8304
    %v8366 = vsub.f32 %v8254, %v8309
    %v8367 = vsub.f32 %v8255, %v8314
    %v8368 = vsub.f32 %v8256, %v8319
    %v8369 = vsub.f32 %v8257, %v8324
    %v8370 = vsub.f32 %v8258, %v8329
    %v8371 = vsub.f32 %v8259, %v8334
    %v8372 = vsub.f32 %v8260, %v8339
    %v8373 = vsub.f32 %v8261, %v8344
    %v8374 = vsub.f32 %v8262, %v8349
    %v8375 = vsub.f32 %v8263, %v8354
    %v8376 = vsub.f32 %v8264, %v8359
    %v8377 = vmax.f32 %v8361, %v8365
    %v8378 = vmax.f32 %v8362, %v8366
    %v8379 = vmax.f32 %v8363, %v8367
    %v8380 = vmax.f32 %v8364, %v8368
    %v8381 = vmax.f32 %v8377, %v8369
    %v8382 = vmax.f32 %v8378, %v8370
    %v8383 = vmax.f32 %v8379, %v8371
    %v8384 = vmax.f32 %v8380, %v8372
    %v8385 = vmax.f32 %v8381, %v8373
    %v8386 = vmax.f32 %v8382, %v8374
    %v8387 = vmax.f32 %v8383, %v8375
    %v8388 = vmax.f32 %v8384, %v8376
    %v8389 = vmax.f32 %v8385, %v8386
    %v8390 = vmax.f32 %v8387, %v8388
    %v8391 = vmax.f32 %v8389, %v8390
    %v8392 = vrot.slane %v8391, 4
    %v8393 = vmax.f32 %v8391, %v8392
    %v8394 = vrot.slane %v8393, 2
    %v8395 = vmax.f32 %v8393, %v8394
    %v8396 = vrot.slane %v8395, 1
    %v8397 = vmax.f32 %v8395, %v8396
    %vm8398 = vcmp.ge.f32.partialorder %v8361, %v8397
    %vm8399 = vcmp.ge.f32.partialorder %v8362, %v8397
    %vm8400 = vcmp.ge.f32.partialorder %v8363, %v8397
    %vm8401 = vcmp.ge.f32.partialorder %v8364, %v8397
    %vm8402 = vcmp.ge.f32.partialorder %v8365, %v8397
    %vm8403 = vcmp.ge.f32.partialorder %v8366, %v8397
    %vm8404 = vcmp.ge.f32.partialorder %v8367, %v8397
    %vm8405 = vcmp.ge.f32.partialorder %v8368, %v8397
    %vm8406 = vcmp.ge.f32.partialorder %v8369, %v8397
    %vm8407 = vcmp.ge.f32.partialorder %v8370, %v8397
    %vm8408 = vcmp.ge.f32.partialorder %v8371, %v8397
    %vm8409 = vcmp.ge.f32.partialorder %v8372, %v8397
    %vm8410 = vcmp.ge.f32.partialorder %v8373, %v8397
    %vm8411 = vcmp.ge.f32.partialorder %v8374, %v8397
    %vm8412 = vcmp.ge.f32.partialorder %v8375, %v8397
    %vm8413 = vcmp.ge.f32.partialorder %v8376, %v8397
    %v8414 = vsel %vm8398, %v5802, 128
    %v8415 = vsel %vm8399, %v5803, 128
    %v8416 = vsel %vm8400, %v5804, 128
    %v8417 = vsel %vm8401, %v5805, 128
    %v8418 = vsel %vm8402, %v5806, 128
    %v8419 = vsel %vm8403, %v5807, 128
    %v8420 = vsel %vm8404, %v5808, 128
    %v8421 = vsel %vm8405, %v5809, 128
    %v8422 = vsel %vm8406, %v5810, 128
    %v8423 = vsel %vm8407, %v5811, 128
    %v8424 = vsel %vm8408, %v5812, 128
    %v8425 = vsel %vm8409, %v5813, 128
    %v8426 = vsel %vm8410, %v5814, 128
    %v8427 = vsel %vm8411, %v5815, 128
    %v8428 = vsel %vm8412, %v5816, 128
    %v8429 = vsel %vm8413, %v5817, 128
    %vm8430 = vcmp.lt.s32.totalorder %v8414, %v8418
    %v8431 = vsel %vm8430, %v8414, %v8418
    %vm8432 = vcmp.lt.s32.totalorder %v8415, %v8419
    %v8433 = vsel %vm8432, %v8415, %v8419
    %vm8434 = vcmp.lt.s32.totalorder %v8416, %v8420
    %v8435 = vsel %vm8434, %v8416, %v8420
    %vm8436 = vcmp.lt.s32.totalorder %v8417, %v8421
    %v8437 = vsel %vm8436, %v8417, %v8421
    %vm8438 = vcmp.lt.s32.totalorder %v8431, %v8422
    %v8439 = vsel %vm8438, %v8431, %v8422
    %vm8440 = vcmp.lt.s32.totalorder %v8433, %v8423
    %v8441 = vsel %vm8440, %v8433, %v8423
    %vm8442 = vcmp.lt.s32.totalorder %v8435, %v8424
    %v8443 = vsel %vm8442, %v8435, %v8424
    %vm8444 = vcmp.lt.s32.totalorder %v8437, %v8425
    %v8445 = vsel %vm8444, %v8437, %v8425
    %vm8446 = vcmp.lt.s32.totalorder %v8439, %v8426
    %v8447 = vsel %vm8446, %v8439, %v8426
    %vm8448 = vcmp.lt.s32.totalorder %v8441, %v8427
    %v8449 = vsel %vm8448, %v8441, %v8427
    %vm8450 = vcmp.lt.s32.totalorder %v8443, %v8428
    %v8451 = vsel %vm8450, %v8443, %v8428
    %vm8452 = vcmp.lt.s32.totalorder %v8445, %v8429
    %v8453 = vsel %vm8452, %v8445, %v8429
    %vm8454 = vcmp.lt.s32.totalorder %v8447, %v8449
    %v8455 = vsel %vm8454, %v8447, %v8449
    %vm8456 = vcmp.lt.s32.totalorder %v8451, %v8453
    %v8457 = vsel %vm8456, %v8451, %v8453
    %vm8458 = vcmp.lt.s32.totalorder %v8455, %v8457
    %v8459 = vsel %vm8458, %v8455, %v8457
    %v8460 = vrot.slane %v8459, 4
    %vm8461 = vcmp.lt.s32.totalorder %v8459, %v8460
    %v8462 = vsel %vm8461, %v8459, %v8460
    %v8463 = vrot.slane %v8462, 2
    %vm8464 = vcmp.lt.s32.totalorder %v8462, %v8463
    %v8465 = vsel %vm8464, %v8462, %v8463
    %v8466 = vrot.slane %v8465, 1
    %vm8467 = vcmp.lt.s32.totalorder %v8465, %v8466
    %v8468 = vsel %vm8467, %v8465, %v8466
    %8469 = vst [vmem:[#allocation5 + $0x6] sm:$0x1] %v8468
    %v8470 = vld [vmem:[%s5] sm:$0xff]
    %v8471 = vld [vmem:[%s5 + $0x8] sm:$0xff]
    %v8472 = vld [vmem:[%s5 + $0x10] sm:$0xff]
    %v8473 = vld [vmem:[%s5 + $0x18] sm:$0xff]
    %v8474 = vld [vmem:[%s5 + $0x20] sm:$0xff]
    %v8475 = vld [vmem:[%s5 + $0x28] sm:$0xff]
    %v8476 = vld [vmem:[%s5 + $0x30] sm:$0xff]
    %v8477 = vld [vmem:[%s5 + $0x38] sm:$0xff]
    %v8478 = vld [vmem:[%s5 + $0x40] sm:$0xff]
    %v8479 = vld [vmem:[%s5 + $0x48] sm:$0xff]
    %v8480 = vld [vmem:[%s5 + $0x50] sm:$0xff]
    %v8481 = vld [vmem:[%s5 + $0x58] sm:$0xff]
    %v8482 = vld [vmem:[%s5 + $0x60] sm:$0xff]
    %v8483 = vld [vmem:[%s5 + $0x68] sm:$0xff]
    %v8484 = vld [vmem:[%s5 + $0x70] sm:$0xff]
    %v8485 = vld [vmem:[%s5 + $0x78] sm:$0xff]
    %v8487 = vsel %vm5458, %v8470, 0
    %v8490 = vsel %vm5458, %v8471, 0
    %v8493 = vsel %vm5458, %v8472, 0
    %v8496 = vsel %vm5458, %v8473, 0
    %v8499 = vsel %vm5458, %v8474, 0
    %v8502 = vsel %vm5458, %v8475, 0
    %v8505 = vsel %vm5458, %v8476, 0
    %v8508 = vsel %vm5458, %v8477, 0
    %v8511 = vsel %vm5458, %v8478, 0
    %v8514 = vsel %vm5458, %v8479, 0
    %v8517 = vsel %vm5458, %v8480, 0
    %v8520 = vsel %vm5458, %v8481, 0
    %v8523 = vsel %vm5458, %v8482, 0
    %v8526 = vsel %vm5458, %v8483, 0
    %v8529 = vsel %vm5458, %v8484, 0
    %v8532 = vsel %vm5458, %v8485, 0
    %8534 = vmatprep.subr.mxu0 0.0
    %8535 = vmatpush1.msra.mxu0 %v5300
    %8536 = vmatprep.subr.mxu0 0.0
    %8537 = vmatpush1.msra.mxu0 %v5303
    %8538 = vmatprep.subr.mxu0 0.0
    %8539 = vmatpush1.msra.mxu0 %v5308
    %8540 = vmatprep.subr.mxu0 0.0
    %8541 = vmatpush1.msra.mxu0 %v5311
    %8542 = vmatprep.subr.mxu0 0.0
    %8543 = vmatpush1.msra.mxu0 0.0
    %8544 = vmatprep.subr.mxu0 0.0
    %8545 = vmatpush1.msra.mxu0 0.0
    %8546 = vmatprep.subr.mxu0 0.0
    %8547 = vmatpush1.msra.mxu0 0.0
    %8548 = vmatprep.subr.mxu0 0.0
    %8549 = vmatpush1.msra.mxu0 0.0
    %8550 = vmatprep.subr.mxu0 0.0
    %8551 = vmatpush1.msra.mxu0 0.0
    %8552 = vmatprep.subr.mxu0 0.0
    %8553 = vmatpush1.msra.mxu0 0.0
    %8554 = vmatprep.subr.mxu0 0.0
    %8555 = vmatpush1.msra.mxu0 0.0
    %8556 = vmatprep.subr.mxu0 0.0
    %8557 = vmatpush1.msra.mxu0 0.0
    %8558 = vmatprep.subr.mxu0 0.0
    %8559 = vmatpush1.msra.mxu0 0.0
    %8560 = vmatprep.subr.mxu0 0.0
    %8561 = vmatpush1.msra.mxu0 0.0
    %8562 = vmatprep.subr.mxu0 0.0
    %8563 = vmatpush1.msra.mxu0 0.0
    %8564 = vmatprep.subr.mxu0 0.0
    %8565 = vmatpush1.msra.mxu0 0.0
    %8566 = vmatprep.subr.mxu0 0.0
    %8567 = vmatpush1.msra.mxu0 0.0
    %8568 = vmatprep.subr.mxu0 0.0
    %8569 = vmatpush1.msra.mxu0 0.0
    %8570 = vmatprep.subr.mxu0 0.0
    %8571 = vmatpush1.msra.mxu0 0.0
    %8572 = vmatprep.subr.mxu0 0.0
    %8573 = vmatpush1.msra.mxu0 0.0
    %8574 = vmatprep.subr.mxu0 0.0
    %8575 = vmatpush1.msra.mxu0 0.0
    %8576 = vmatprep.subr.mxu0 0.0
    %8577 = vmatpush1.msra.mxu0 0.0
    %8578 = vmatprep.subr.mxu0 0.0
    %8579 = vmatpush1.msra.mxu0 0.0
    %8580 = vmatprep.subr.mxu0 0.0
    %8581 = vmatpush1.msra.mxu0 0.0
    %8582 = vmatprep.subr.mxu0 0.0
    %8583 = vmatpush1.msra.mxu0 0.0
    %8584 = vmatprep.subr.mxu0 0.0
    %8585 = vmatpush1.msra.mxu0 0.0
    %8586 = vmatprep.subr.mxu0 0.0
    %8587 = vmatpush1.msra.mxu0 0.0
    %8588 = vmatprep.subr.mxu0 0.0
    %8589 = vmatpush1.msra.mxu0 0.0
    %8590 = vmatprep.subr.mxu0 0.0
    %8591 = vmatpush1.msra.mxu0 0.0
    %8592 = vmatprep.subr.mxu0 0.0
    %8593 = vmatpush1.msra.mxu0 0.0
    %8594 = vmatprep.subr.mxu0 0.0
    %8595 = vmatpush1.msra.mxu0 0.0
    %8596 = vmatprep.subr.mxu0 0.0
    %8597 = vmatpush1.msra.mxu0 0.0
    %8598 = vmatprep.mubr.f32.mxu0 0.0
    %8599 = vmatmul.mubr.f32.gmra.mrb[0].mxu0 %v8487
    %v8600 = vpop.f32.mrb[0].mxu0
    %v8601 = vadd.f32 0.0, %v8600
    %v8602 = vpop.f32.mrb[0].mxu0
    %8603 = vmatprep.mubr.f32.mxu0 0.0
    %8604 = vmatmul.mubr.f32.gmra.mrb[0].mxu0 %v8490
    %v8605 = vpop.f32.mrb[0].mxu0
    %v8606 = vadd.f32 0.0, %v8605
    %v8607 = vpop.f32.mrb[0].mxu0
    %8608 = vmatprep.mubr.f32.mxu0 0.0
    %8609 = vmatmul.mubr.f32.gmra.mrb[0].mxu0 %v8493
    %v8610 = vpop.f32.mrb[0].mxu0
    %v8611 = vadd.f32 0.0, %v8610
    %v8612 = vpop.f32.mrb[0].mxu0
    %8613 = vmatprep.mubr.f32.mxu0 0.0
    %8614 = vmatmul.mubr.f32.gmra.mrb[0].mxu0 %v8496
    %v8615 = vpop.f32.mrb[0].mxu0
    %v8616 = vadd.f32 0.0, %v8615
    %v8617 = vpop.f32.mrb[0].mxu0
    %8618 = vmatprep.mubr.f32.mxu0 0.0
    %8619 = vmatmul.mubr.f32.gmra.mrb[0].mxu0 %v8499
    %v8620 = vpop.f32.mrb[0].mxu0
    %v8621 = vadd.f32 0.0, %v8620
    %v8622 = vpop.f32.mrb[0].mxu0
    %8623 = vmatprep.mubr.f32.mxu0 0.0
    %8624 = vmatmul.mubr.f32.gmra.mrb[0].mxu0 %v8502
    %v8625 = vpop.f32.mrb[0].mxu0
    %v8626 = vadd.f32 0.0, %v8625
    %v8627 = vpop.f32.mrb[0].mxu0
    %8628 = vmatprep.mubr.f32.mxu0 0.0
    %8629 = vmatmul.mubr.f32.gmra.mrb[0].mxu0 %v8505
    %v8630 = vpop.f32.mrb[0].mxu0
    %v8631 = vadd.f32 0.0, %v8630
    %v8632 = vpop.f32.mrb[0].mxu0
    %8633 = vmatprep.mubr.f32.mxu0 0.0
    %8634 = vmatmul.mubr.f32.gmra.mrb[0].mxu0 %v8508
    %v8635 = vpop.f32.mrb[0].mxu0
    %v8636 = vadd.f32 0.0, %v8635
    %v8637 = vpop.f32.mrb[0].mxu0
    %8638 = vmatprep.mubr.f32.mxu0 0.0
    %8639 = vmatmul.mubr.f32.gmra.mrb[0].mxu0 %v8511
    %v8640 = vpop.f32.mrb[0].mxu0
    %v8641 = vadd.f32 0.0, %v8640
    %v8642 = vpop.f32.mrb[0].mxu0
    %8643 = vmatprep.mubr.f32.mxu0 0.0
    %8644 = vmatmul.mubr.f32.gmra.mrb[0].mxu0 %v8514
    %v8645 = vpop.f32.mrb[0].mxu0
    %v8646 = vadd.f32 0.0, %v8645
    %v8647 = vpop.f32.mrb[0].mxu0
    %8648 = vmatprep.mubr.f32.mxu0 0.0
    %8649 = vmatmul.mubr.f32.gmra.mrb[0].mxu0 %v8517
    %v8650 = vpop.f32.mrb[0].mxu0
    %v8651 = vadd.f32 0.0, %v8650
    %v8652 = vpop.f32.mrb[0].mxu0
    %8653 = vmatprep.mubr.f32.mxu0 0.0
    %8654 = vmatmul.mubr.f32.gmra.mrb[0].mxu0 %v8520
    %v8655 = vpop.f32.mrb[0].mxu0
    %v8656 = vadd.f32 0.0, %v8655
    %v8657 = vpop.f32.mrb[0].mxu0
    %8658 = vmatprep.mubr.f32.mxu0 0.0
    %8659 = vmatmul.mubr.f32.gmra.mrb[0].mxu0 %v8523
    %v8660 = vpop.f32.mrb[0].mxu0
    %v8661 = vadd.f32 0.0, %v8660
    %v8662 = vpop.f32.mrb[0].mxu0
    %8663 = vmatprep.mubr.f32.mxu0 0.0
    %8664 = vmatmul.mubr.f32.gmra.mrb[0].mxu0 %v8526
    %v8665 = vpop.f32.mrb[0].mxu0
    %v8666 = vadd.f32 0.0, %v8665
    %v8667 = vpop.f32.mrb[0].mxu0
    %8668 = vmatprep.mubr.f32.mxu0 0.0
    %8669 = vmatmul.mubr.f32.gmra.mrb[0].mxu0 %v8529
    %v8670 = vpop.f32.mrb[0].mxu0
    %v8671 = vadd.f32 0.0, %v8670
    %v8672 = vpop.f32.mrb[0].mxu0
    %8673 = vmatprep.mubr.f32.mxu0 0.0
    %8674 = vmatmul.mubr.f32.gmra.mrb[0].mxu0 %v8532
    %v8675 = vpop.f32.mrb[0].mxu0
    %v8676 = vadd.f32 0.0, %v8675
    %v8677 = vpop.f32.mrb[0].mxu0
    %8678 = vdwg.mxu0
    %v8679 = vmul.f32 %v8601, 2.0
    %v8680 = vmul.f32 %v8606, 2.0
    %v8681 = vmul.f32 %v8611, 2.0
    %v8682 = vmul.f32 %v8616, 2.0
    %v8683 = vmul.f32 %v8621, 2.0
    %v8684 = vmul.f32 %v8626, 2.0
    %v8685 = vmul.f32 %v8631, 2.0
    %v8686 = vmul.f32 %v8636, 2.0
    %v8687 = vmul.f32 %v8641, 2.0
    %v8688 = vmul.f32 %v8646, 2.0
    %v8689 = vmul.f32 %v8651, 2.0
    %v8690 = vmul.f32 %v8656, 2.0
    %v8691 = vmul.f32 %v8661, 2.0
    %v8692 = vmul.f32 %v8666, 2.0
    %v8693 = vmul.f32 %v8671, 2.0
    %v8694 = vmul.f32 %v8676, 2.0
    %v8695 = vld [vmem:[%s6] sm:$0xff]
    %v8696 = vld [vmem:[%s6 + $0x8] sm:$0xff]
    %v8697 = vld [vmem:[%s6 + $0x10] sm:$0xff]
    %v8698 = vld [vmem:[%s6 + $0x18] sm:$0xff]
    %v8699 = vld [vmem:[%s6 + $0x20] sm:$0xff]
    %v8700 = vld [vmem:[%s6 + $0x28] sm:$0xff]
    %v8701 = vld [vmem:[%s6 + $0x30] sm:$0xff]
    %v8702 = vld [vmem:[%s6 + $0x38] sm:$0xff]
    %v8703 = vld [vmem:[%s6 + $0x40] sm:$0xff]
    %v8704 = vld [vmem:[%s6 + $0x48] sm:$0xff]
    %v8705 = vld [vmem:[%s6 + $0x50] sm:$0xff]
    %v8706 = vld [vmem:[%s6 + $0x58] sm:$0xff]
    %v8707 = vld [vmem:[%s6 + $0x60] sm:$0xff]
    %v8708 = vld [vmem:[%s6 + $0x68] sm:$0xff]
    %v8709 = vld [vmem:[%s6 + $0x70] sm:$0xff]
    %v8710 = vld [vmem:[%s6 + $0x78] sm:$0xff]
    %8712 = vset.pattern.permute.xlu0 0
    %8713 = vperm.xlu0 %8712, %v8695
    %v8714 = vpop.permute.xlu0 %8713
    %8717 = vset.pattern.permute.xlu0 0
    %8718 = vperm.xlu0 %8717, %v8696
    %v8719 = vpop.permute.xlu0 %8718
    %8722 = vset.pattern.permute.xlu0 0
    %8723 = vperm.xlu0 %8722, %v8697
    %v8724 = vpop.permute.xlu0 %8723
    %8727 = vset.pattern.permute.xlu0 0
    %8728 = vperm.xlu0 %8727, %v8698
    %v8729 = vpop.permute.xlu0 %8728
    %8732 = vset.pattern.permute.xlu0 0
    %8733 = vperm.xlu0 %8732, %v8699
    %v8734 = vpop.permute.xlu0 %8733
    %8737 = vset.pattern.permute.xlu0 0
    %8738 = vperm.xlu0 %8737, %v8700
    %v8739 = vpop.permute.xlu0 %8738
    %8742 = vset.pattern.permute.xlu0 0
    %8743 = vperm.xlu0 %8742, %v8701
    %v8744 = vpop.permute.xlu0 %8743
    %8747 = vset.pattern.permute.xlu0 0
    %8748 = vperm.xlu0 %8747, %v8702
    %v8749 = vpop.permute.xlu0 %8748
    %8752 = vset.pattern.permute.xlu0 0
    %8753 = vperm.xlu0 %8752, %v8703
    %v8754 = vpop.permute.xlu0 %8753
    %8757 = vset.pattern.permute.xlu0 0
    %8758 = vperm.xlu0 %8757, %v8704
    %v8759 = vpop.permute.xlu0 %8758
    %8762 = vset.pattern.permute.xlu0 0
    %8763 = vperm.xlu0 %8762, %v8705
    %v8764 = vpop.permute.xlu0 %8763
    %8767 = vset.pattern.permute.xlu0 0
    %8768 = vperm.xlu0 %8767, %v8706
    %v8769 = vpop.permute.xlu0 %8768
    %8772 = vset.pattern.permute.xlu0 0
    %8773 = vperm.xlu0 %8772, %v8707
    %v8774 = vpop.permute.xlu0 %8773
    %8777 = vset.pattern.permute.xlu0 0
    %8778 = vperm.xlu0 %8777, %v8708
    %v8779 = vpop.permute.xlu0 %8778
    %8782 = vset.pattern.permute.xlu0 0
    %8783 = vperm.xlu0 %8782, %v8709
    %v8784 = vpop.permute.xlu0 %8783
    %8787 = vset.pattern.permute.xlu0 0
    %8788 = vperm.xlu0 %8787, %v8710
    %v8789 = vpop.permute.xlu0 %8788
    %v8791 = vsub.f32 %v8679, %v8714
    %v8792 = vsub.f32 %v8680, %v8719
    %v8793 = vsub.f32 %v8681, %v8724
    %v8794 = vsub.f32 %v8682, %v8729
    %v8795 = vsub.f32 %v8683, %v8734
    %v8796 = vsub.f32 %v8684, %v8739
    %v8797 = vsub.f32 %v8685, %v8744
    %v8798 = vsub.f32 %v8686, %v8749
    %v8799 = vsub.f32 %v8687, %v8754
    %v8800 = vsub.f32 %v8688, %v8759
    %v8801 = vsub.f32 %v8689, %v8764
    %v8802 = vsub.f32 %v8690, %v8769
    %v8803 = vsub.f32 %v8691, %v8774
    %v8804 = vsub.f32 %v8692, %v8779
    %v8805 = vsub.f32 %v8693, %v8784
    %v8806 = vsub.f32 %v8694, %v8789
    %v8807 = vmax.f32 %v8791, %v8795
    %v8808 = vmax.f32 %v8792, %v8796
    %v8809 = vmax.f32 %v8793, %v8797
    %v8810 = vmax.f32 %v8794, %v8798
    %v8811 = vmax.f32 %v8807, %v8799
    %v8812 = vmax.f32 %v8808, %v8800
    %v8813 = vmax.f32 %v8809, %v8801
    %v8814 = vmax.f32 %v8810, %v8802
    %v8815 = vmax.f32 %v8811, %v8803
    %v8816 = vmax.f32 %v8812, %v8804
    %v8817 = vmax.f32 %v8813, %v8805
    %v8818 = vmax.f32 %v8814, %v8806
    %v8819 = vmax.f32 %v8815, %v8816
    %v8820 = vmax.f32 %v8817, %v8818
    %v8821 = vmax.f32 %v8819, %v8820
    %v8822 = vrot.slane %v8821, 4
    %v8823 = vmax.f32 %v8821, %v8822
    %v8824 = vrot.slane %v8823, 2
    %v8825 = vmax.f32 %v8823, %v8824
    %v8826 = vrot.slane %v8825, 1
    %v8827 = vmax.f32 %v8825, %v8826
    %vm8828 = vcmp.ge.f32.partialorder %v8791, %v8827
    %vm8829 = vcmp.ge.f32.partialorder %v8792, %v8827
    %vm8830 = vcmp.ge.f32.partialorder %v8793, %v8827
    %vm8831 = vcmp.ge.f32.partialorder %v8794, %v8827
    %vm8832 = vcmp.ge.f32.partialorder %v8795, %v8827
    %vm8833 = vcmp.ge.f32.partialorder %v8796, %v8827
    %vm8834 = vcmp.ge.f32.partialorder %v8797, %v8827
    %vm8835 = vcmp.ge.f32.partialorder %v8798, %v8827
    %vm8836 = vcmp.ge.f32.partialorder %v8799, %v8827
    %vm8837 = vcmp.ge.f32.partialorder %v8800, %v8827
    %vm8838 = vcmp.ge.f32.partialorder %v8801, %v8827
    %vm8839 = vcmp.ge.f32.partialorder %v8802, %v8827
    %vm8840 = vcmp.ge.f32.partialorder %v8803, %v8827
    %vm8841 = vcmp.ge.f32.partialorder %v8804, %v8827
    %vm8842 = vcmp.ge.f32.partialorder %v8805, %v8827
    %vm8843 = vcmp.ge.f32.partialorder %v8806, %v8827
    %v8844 = vsel %vm8828, %v5802, 128
    %v8845 = vsel %vm8829, %v5803, 128
    %v8846 = vsel %vm8830, %v5804, 128
    %v8847 = vsel %vm8831, %v5805, 128
    %v8848 = vsel %vm8832, %v5806, 128
    %v8849 = vsel %vm8833, %v5807, 128
    %v8850 = vsel %vm8834, %v5808, 128
    %v8851 = vsel %vm8835, %v5809, 128
    %v8852 = vsel %vm8836, %v5810, 128
    %v8853 = vsel %vm8837, %v5811, 128
    %v8854 = vsel %vm8838, %v5812, 128
    %v8855 = vsel %vm8839, %v5813, 128
    %v8856 = vsel %vm8840, %v5814, 128
    %v8857 = vsel %vm8841, %v5815, 128
    %v8858 = vsel %vm8842, %v5816, 128
    %v8859 = vsel %vm8843, %v5817, 128
    %vm8860 = vcmp.lt.s32.totalorder %v8844, %v8848
    %v8861 = vsel %vm8860, %v8844, %v8848
    %vm8862 = vcmp.lt.s32.totalorder %v8845, %v8849
    %v8863 = vsel %vm8862, %v8845, %v8849
    %vm8864 = vcmp.lt.s32.totalorder %v8846, %v8850
    %v8865 = vsel %vm8864, %v8846, %v8850
    %vm8866 = vcmp.lt.s32.totalorder %v8847, %v8851
    %v8867 = vsel %vm8866, %v8847, %v8851
    %vm8868 = vcmp.lt.s32.totalorder %v8861, %v8852
    %v8869 = vsel %vm8868, %v8861, %v8852
    %vm8870 = vcmp.lt.s32.totalorder %v8863, %v8853
    %v8871 = vsel %vm8870, %v8863, %v8853
    %vm8872 = vcmp.lt.s32.totalorder %v8865, %v8854
    %v8873 = vsel %vm8872, %v8865, %v8854
    %vm8874 = vcmp.lt.s32.totalorder %v8867, %v8855
    %v8875 = vsel %vm8874, %v8867, %v8855
    %vm8876 = vcmp.lt.s32.totalorder %v8869, %v8856
    %v8877 = vsel %vm8876, %v8869, %v8856
    %vm8878 = vcmp.lt.s32.totalorder %v8871, %v8857
    %v8879 = vsel %vm8878, %v8871, %v8857
    %vm8880 = vcmp.lt.s32.totalorder %v8873, %v8858
    %v8881 = vsel %vm8880, %v8873, %v8858
    %vm8882 = vcmp.lt.s32.totalorder %v8875, %v8859
    %v8883 = vsel %vm8882, %v8875, %v8859
    %vm8884 = vcmp.lt.s32.totalorder %v8877, %v8879
    %v8885 = vsel %vm8884, %v8877, %v8879
    %vm8886 = vcmp.lt.s32.totalorder %v8881, %v8883
    %v8887 = vsel %vm8886, %v8881, %v8883
    %vm8888 = vcmp.lt.s32.totalorder %v8885, %v8887
    %v8889 = vsel %vm8888, %v8885, %v8887
    %v8890 = vrot.slane %v8889, 4
    %vm8891 = vcmp.lt.s32.totalorder %v8889, %v8890
    %v8892 = vsel %vm8891, %v8889, %v8890
    %v8893 = vrot.slane %v8892, 2
    %vm8894 = vcmp.lt.s32.totalorder %v8892, %v8893
    %v8895 = vsel %vm8894, %v8892, %v8893
    %v8896 = vrot.slane %v8895, 1
    %vm8897 = vcmp.lt.s32.totalorder %v8895, %v8896
    %v8898 = vsel %vm8897, %v8895, %v8896
    %8899 = vst [vmem:[#allocation5 + $0x7] sm:$0x1] %v8898
    %v8900 = vld [vmem:[%s5] sm:$0xff]
    %v8901 = vld [vmem:[%s5 + $0x8] sm:$0xff]
    %v8902 = vld [vmem:[%s5 + $0x10] sm:$0xff]
    %v8903 = vld [vmem:[%s5 + $0x18] sm:$0xff]
    %v8904 = vld [vmem:[%s5 + $0x20] sm:$0xff]
    %v8905 = vld [vmem:[%s5 + $0x28] sm:$0xff]
    %v8906 = vld [vmem:[%s5 + $0x30] sm:$0xff]
    %v8907 = vld [vmem:[%s5 + $0x38] sm:$0xff]
    %v8908 = vld [vmem:[%s5 + $0x40] sm:$0xff]
    %v8909 = vld [vmem:[%s5 + $0x48] sm:$0xff]
    %v8910 = vld [vmem:[%s5 + $0x50] sm:$0xff]
    %v8911 = vld [vmem:[%s5 + $0x58] sm:$0xff]
    %v8912 = vld [vmem:[%s5 + $0x60] sm:$0xff]
    %v8913 = vld [vmem:[%s5 + $0x68] sm:$0xff]
    %v8914 = vld [vmem:[%s5 + $0x70] sm:$0xff]
    %v8915 = vld [vmem:[%s5 + $0x78] sm:$0xff]
    %v8917 = vsel %vm5458, %v8900, 0
    %v8920 = vsel %vm5458, %v8901, 0
    %v8923 = vsel %vm5458, %v8902, 0
    %v8926 = vsel %vm5458, %v8903, 0
    %v8929 = vsel %vm5458, %v8904, 0
    %v8932 = vsel %vm5458, %v8905, 0
    %v8935 = vsel %vm5458, %v8906, 0
    %v8938 = vsel %vm5458, %v8907, 0
    %v8941 = vsel %vm5458, %v8908, 0
    %v8944 = vsel %vm5458, %v8909, 0
    %v8947 = vsel %vm5458, %v8910, 0
    %v8950 = vsel %vm5458, %v8911, 0
    %v8953 = vsel %vm5458, %v8912, 0
    %v8956 = vsel %vm5458, %v8913, 0
    %v8959 = vsel %vm5458, %v8914, 0
    %v8962 = vsel %vm5458, %v8915, 0
    %8964 = vmatprep.subr.mxu0 0.0
    %8965 = vmatpush1.msra.mxu0 %v5316
    %8966 = vmatprep.subr.mxu0 0.0
    %8967 = vmatpush1.msra.mxu0 %v5319
    %8968 = vmatprep.subr.mxu0 0.0
    %8969 = vmatpush1.msra.mxu0 %v5324
    %8970 = vmatprep.subr.mxu0 0.0
    %8971 = vmatpush1.msra.mxu0 %v5327
    %8972 = vmatprep.subr.mxu0 0.0
    %8973 = vmatpush1.msra.mxu0 0.0
    %8974 = vmatprep.subr.mxu0 0.0
    %8975 = vmatpush1.msra.mxu0 0.0
    %8976 = vmatprep.subr.mxu0 0.0
    %8977 = vmatpush1.msra.mxu0 0.0
    %8978 = vmatprep.subr.mxu0 0.0
    %8979 = vmatpush1.msra.mxu0 0.0
    %8980 = vmatprep.subr.mxu0 0.0
    %8981 = vmatpush1.msra.mxu0 0.0
    %8982 = vmatprep.subr.mxu0 0.0
    %8983 = vmatpush1.msra.mxu0 0.0
    %8984 = vmatprep.subr.mxu0 0.0
    %8985 = vmatpush1.msra.mxu0 0.0
    %8986 = vmatprep.subr.mxu0 0.0
    %8987 = vmatpush1.msra.mxu0 0.0
    %8988 = vmatprep.subr.mxu0 0.0
    %8989 = vmatpush1.msra.mxu0 0.0
    %8990 = vmatprep.subr.mxu0 0.0
    %8991 = vmatpush1.msra.mxu0 0.0
    %8992 = vmatprep.subr.mxu0 0.0
    %8993 = vmatpush1.msra.mxu0 0.0
    %8994 = vmatprep.subr.mxu0 0.0
    %8995 = vmatpush1.msra.mxu0 0.0
    %8996 = vmatprep.subr.mxu0 0.0
    %8997 = vmatpush1.msra.mxu0 0.0
    %8998 = vmatprep.subr.mxu0 0.0
    %8999 = vmatpush1.msra.mxu0 0.0
    %9000 = vmatprep.subr.mxu0 0.0
    %9001 = vmatpush1.msra.mxu0 0.0
    %9002 = vmatprep.subr.mxu0 0.0
    %9003 = vmatpush1.msra.mxu0 0.0
    %9004 = vmatprep.subr.mxu0 0.0
    %9005 = vmatpush1.msra.mxu0 0.0
    %9006 = vmatprep.subr.mxu0 0.0
    %9007 = vmatpush1.msra.mxu0 0.0
    %9008 = vmatprep.subr.mxu0 0.0
    %9009 = vmatpush1.msra.mxu0 0.0
    %9010 = vmatprep.subr.mxu0 0.0
    %9011 = vmatpush1.msra.mxu0 0.0
    %9012 = vmatprep.subr.mxu0 0.0
    %9013 = vmatpush1.msra.mxu0 0.0
    %9014 = vmatprep.subr.mxu0 0.0
    %9015 = vmatpush1.msra.mxu0 0.0
    %9016 = vmatprep.subr.mxu0 0.0
    %9017 = vmatpush1.msra.mxu0 0.0
    %9018 = vmatprep.subr.mxu0 0.0
    %9019 = vmatpush1.msra.mxu0 0.0
    %9020 = vmatprep.subr.mxu0 0.0
    %9021 = vmatpush1.msra.mxu0 0.0
    %9022 = vmatprep.subr.mxu0 0.0
    %9023 = vmatpush1.msra.mxu0 0.0
    %9024 = vmatprep.subr.mxu0 0.0
    %9025 = vmatpush1.msra.mxu0 0.0
    %9026 = vmatprep.subr.mxu0 0.0
    %9027 = vmatpush1.msra.mxu0 0.0
    %9028 = vmatprep.mubr.f32.mxu0 0.0
    %9029 = vmatmul.mubr.f32.gmra.mrb[0].mxu0 %v8917
    %v9030 = vpop.f32.mrb[0].mxu0
    %v9031 = vadd.f32 0.0, %v9030
    %v9032 = vpop.f32.mrb[0].mxu0
    %9033 = vmatprep.mubr.f32.mxu0 0.0
    %9034 = vmatmul.mubr.f32.gmra.mrb[0].mxu0 %v8920
    %v9035 = vpop.f32.mrb[0].mxu0
    %v9036 = vadd.f32 0.0, %v9035
    %v9037 = vpop.f32.mrb[0].mxu0
    %9038 = vmatprep.mubr.f32.mxu0 0.0
    %9039 = vmatmul.mubr.f32.gmra.mrb[0].mxu0 %v8923
    %v9040 = vpop.f32.mrb[0].mxu0
    %v9041 = vadd.f32 0.0, %v9040
    %v9042 = vpop.f32.mrb[0].mxu0
    %9043 = vmatprep.mubr.f32.mxu0 0.0
    %9044 = vmatmul.mubr.f32.gmra.mrb[0].mxu0 %v8926
    %v9045 = vpop.f32.mrb[0].mxu0
    %v9046 = vadd.f32 0.0, %v9045
    %v9047 = vpop.f32.mrb[0].mxu0
    %9048 = vmatprep.mubr.f32.mxu0 0.0
    %9049 = vmatmul.mubr.f32.gmra.mrb[0].mxu0 %v8929
    %v9050 = vpop.f32.mrb[0].mxu0
    %v9051 = vadd.f32 0.0, %v9050
    %v9052 = vpop.f32.mrb[0].mxu0
    %9053 = vmatprep.mubr.f32.mxu0 0.0
    %9054 = vmatmul.mubr.f32.gmra.mrb[0].mxu0 %v8932
    %v9055 = vpop.f32.mrb[0].mxu0
    %v9056 = vadd.f32 0.0, %v9055
    %v9057 = vpop.f32.mrb[0].mxu0
    %9058 = vmatprep.mubr.f32.mxu0 0.0
    %9059 = vmatmul.mubr.f32.gmra.mrb[0].mxu0 %v8935
    %v9060 = vpop.f32.mrb[0].mxu0
    %v9061 = vadd.f32 0.0, %v9060
    %v9062 = vpop.f32.mrb[0].mxu0
    %9063 = vmatprep.mubr.f32.mxu0 0.0
    %9064 = vmatmul.mubr.f32.gmra.mrb[0].mxu0 %v8938
    %v9065 = vpop.f32.mrb[0].mxu0
    %v9066 = vadd.f32 0.0, %v9065
    %v9067 = vpop.f32.mrb[0].mxu0
    %9068 = vmatprep.mubr.f32.mxu0 0.0
    %9069 = vmatmul.mubr.f32.gmra.mrb[0].mxu0 %v8941
    %v9070 = vpop.f32.mrb[0].mxu0
    %v9071 = vadd.f32 0.0, %v9070
    %v9072 = vpop.f32.mrb[0].mxu0
    %9073 = vmatprep.mubr.f32.mxu0 0.0
    %9074 = vmatmul.mubr.f32.gmra.mrb[0].mxu0 %v8944
    %v9075 = vpop.f32.mrb[0].mxu0
    %v9076 = vadd.f32 0.0, %v9075
    %v9077 = vpop.f32.mrb[0].mxu0
    %9078 = vmatprep.mubr.f32.mxu0 0.0
    %9079 = vmatmul.mubr.f32.gmra.mrb[0].mxu0 %v8947
    %v9080 = vpop.f32.mrb[0].mxu0
    %v9081 = vadd.f32 0.0, %v9080
    %v9082 = vpop.f32.mrb[0].mxu0
    %9083 = vmatprep.mubr.f32.mxu0 0.0
    %9084 = vmatmul.mubr.f32.gmra.mrb[0].mxu0 %v8950
    %v9085 = vpop.f32.mrb[0].mxu0
    %v9086 = vadd.f32 0.0, %v9085
    %v9087 = vpop.f32.mrb[0].mxu0
    %9088 = vmatprep.mubr.f32.mxu0 0.0
    %9089 = vmatmul.mubr.f32.gmra.mrb[0].mxu0 %v8953
    %v9090 = vpop.f32.mrb[0].mxu0
    %v9091 = vadd.f32 0.0, %v9090
    %v9092 = vpop.f32.mrb[0].mxu0
    %9093 = vmatprep.mubr.f32.mxu0 0.0
    %9094 = vmatmul.mubr.f32.gmra.mrb[0].mxu0 %v8956
    %v9095 = vpop.f32.mrb[0].mxu0
    %v9096 = vadd.f32 0.0, %v9095
    %v9097 = vpop.f32.mrb[0].mxu0
    %9098 = vmatprep.mubr.f32.mxu0 0.0
    %9099 = vmatmul.mubr.f32.gmra.mrb[0].mxu0 %v8959
    %v9100 = vpop.f32.mrb[0].mxu0
    %v9101 = vadd.f32 0.0, %v9100
    %v9102 = vpop.f32.mrb[0].mxu0
    %9103 = vmatprep.mubr.f32.mxu0 0.0
    %9104 = vmatmul.mubr.f32.gmra.mrb[0].mxu0 %v8962
    %v9105 = vpop.f32.mrb[0].mxu0
    %v9106 = vadd.f32 0.0, %v9105
    %v9107 = vpop.f32.mrb[0].mxu0
    %9108 = vdwg.mxu0
    %v9109 = vmul.f32 %v9031, 2.0
    %v9110 = vmul.f32 %v9036, 2.0
    %v9111 = vmul.f32 %v9041, 2.0
    %v9112 = vmul.f32 %v9046, 2.0
    %v9113 = vmul.f32 %v9051, 2.0
    %v9114 = vmul.f32 %v9056, 2.0
    %v9115 = vmul.f32 %v9061, 2.0
    %v9116 = vmul.f32 %v9066, 2.0
    %v9117 = vmul.f32 %v9071, 2.0
    %v9118 = vmul.f32 %v9076, 2.0
    %v9119 = vmul.f32 %v9081, 2.0
    %v9120 = vmul.f32 %v9086, 2.0
    %v9121 = vmul.f32 %v9091, 2.0
    %v9122 = vmul.f32 %v9096, 2.0
    %v9123 = vmul.f32 %v9101, 2.0
    %v9124 = vmul.f32 %v9106, 2.0
    %v9125 = vld [vmem:[%s6] sm:$0xff]
    %v9126 = vld [vmem:[%s6 + $0x8] sm:$0xff]
    %v9127 = vld [vmem:[%s6 + $0x10] sm:$0xff]
    %v9128 = vld [vmem:[%s6 + $0x18] sm:$0xff]
    %v9129 = vld [vmem:[%s6 + $0x20] sm:$0xff]
    %v9130 = vld [vmem:[%s6 + $0x28] sm:$0xff]
    %v9131 = vld [vmem:[%s6 + $0x30] sm:$0xff]
    %v9132 = vld [vmem:[%s6 + $0x38] sm:$0xff]
    %v9133 = vld [vmem:[%s6 + $0x40] sm:$0xff]
    %v9134 = vld [vmem:[%s6 + $0x48] sm:$0xff]
    %v9135 = vld [vmem:[%s6 + $0x50] sm:$0xff]
    %v9136 = vld [vmem:[%s6 + $0x58] sm:$0xff]
    %v9137 = vld [vmem:[%s6 + $0x60] sm:$0xff]
    %v9138 = vld [vmem:[%s6 + $0x68] sm:$0xff]
    %v9139 = vld [vmem:[%s6 + $0x70] sm:$0xff]
    %v9140 = vld [vmem:[%s6 + $0x78] sm:$0xff]
    %9142 = vset.pattern.permute.xlu0 0
    %9143 = vperm.xlu0 %9142, %v9125
    %v9144 = vpop.permute.xlu0 %9143
    %9147 = vset.pattern.permute.xlu0 0
    %9148 = vperm.xlu0 %9147, %v9126
    %v9149 = vpop.permute.xlu0 %9148
    %9152 = vset.pattern.permute.xlu0 0
    %9153 = vperm.xlu0 %9152, %v9127
    %v9154 = vpop.permute.xlu0 %9153
    %9157 = vset.pattern.permute.xlu0 0
    %9158 = vperm.xlu0 %9157, %v9128
    %v9159 = vpop.permute.xlu0 %9158
    %9162 = vset.pattern.permute.xlu0 0
    %9163 = vperm.xlu0 %9162, %v9129
    %v9164 = vpop.permute.xlu0 %9163
    %9167 = vset.pattern.permute.xlu0 0
    %9168 = vperm.xlu0 %9167, %v9130
    %v9169 = vpop.permute.xlu0 %9168
    %9172 = vset.pattern.permute.xlu0 0
    %9173 = vperm.xlu0 %9172, %v9131
    %v9174 = vpop.permute.xlu0 %9173
    %9177 = vset.pattern.permute.xlu0 0
    %9178 = vperm.xlu0 %9177, %v9132
    %v9179 = vpop.permute.xlu0 %9178
    %9182 = vset.pattern.permute.xlu0 0
    %9183 = vperm.xlu0 %9182, %v9133
    %v9184 = vpop.permute.xlu0 %9183
    %9187 = vset.pattern.permute.xlu0 0
    %9188 = vperm.xlu0 %9187, %v9134
    %v9189 = vpop.permute.xlu0 %9188
    %9192 = vset.pattern.permute.xlu0 0
    %9193 = vperm.xlu0 %9192, %v9135
    %v9194 = vpop.permute.xlu0 %9193
    %9197 = vset.pattern.permute.xlu0 0
    %9198 = vperm.xlu0 %9197, %v9136
    %v9199 = vpop.permute.xlu0 %9198
    %9202 = vset.pattern.permute.xlu0 0
    %9203 = vperm.xlu0 %9202, %v9137
    %v9204 = vpop.permute.xlu0 %9203
    %9207 = vset.pattern.permute.xlu0 0
    %9208 = vperm.xlu0 %9207, %v9138
    %v9209 = vpop.permute.xlu0 %9208
    %9212 = vset.pattern.permute.xlu0 0
    %9213 = vperm.xlu0 %9212, %v9139
    %v9214 = vpop.permute.xlu0 %9213
    %9217 = vset.pattern.permute.xlu0 0
    %9218 = vperm.xlu0 %9217, %v9140
    %v9219 = vpop.permute.xlu0 %9218
    %v9221 = vsub.f32 %v9109, %v9144
    %v9222 = vsub.f32 %v9110, %v9149
    %v9223 = vsub.f32 %v9111, %v9154
    %v9224 = vsub.f32 %v9112, %v9159
    %v9225 = vsub.f32 %v9113, %v9164
    %v9226 = vsub.f32 %v9114, %v9169
    %v9227 = vsub.f32 %v9115, %v9174
    %v9228 = vsub.f32 %v9116, %v9179
    %v9229 = vsub.f32 %v9117, %v9184
    %v9230 = vsub.f32 %v9118, %v9189
    %v9231 = vsub.f32 %v9119, %v9194
    %v9232 = vsub.f32 %v9120, %v9199
    %v9233 = vsub.f32 %v9121, %v9204
    %v9234 = vsub.f32 %v9122, %v9209
    %v9235 = vsub.f32 %v9123, %v9214
    %v9236 = vsub.f32 %v9124, %v9219
    %v9237 = vmax.f32 %v9221, %v9225
    %v9238 = vmax.f32 %v9222, %v9226
    %v9239 = vmax.f32 %v9223, %v9227
    %v9240 = vmax.f32 %v9224, %v9228
    %v9241 = vmax.f32 %v9237, %v9229
    %v9242 = vmax.f32 %v9238, %v9230
    %v9243 = vmax.f32 %v9239, %v9231
    %v9244 = vmax.f32 %v9240, %v9232
    %v9245 = vmax.f32 %v9241, %v9233
    %v9246 = vmax.f32 %v9242, %v9234
    %v9247 = vmax.f32 %v9243, %v9235
    %v9248 = vmax.f32 %v9244, %v9236
    %v9249 = vmax.f32 %v9245, %v9246
    %v9250 = vmax.f32 %v9247, %v9248
    %v9251 = vmax.f32 %v9249, %v9250
    %v9252 = vrot.slane %v9251, 4
    %v9253 = vmax.f32 %v9251, %v9252
    %v9254 = vrot.slane %v9253, 2
    %v9255 = vmax.f32 %v9253, %v9254
    %v9256 = vrot.slane %v9255, 1
    %v9257 = vmax.f32 %v9255, %v9256
    %vm9258 = vcmp.ge.f32.partialorder %v9221, %v9257
    %vm9259 = vcmp.ge.f32.partialorder %v9222, %v9257
    %vm9260 = vcmp.ge.f32.partialorder %v9223, %v9257
    %vm9261 = vcmp.ge.f32.partialorder %v9224, %v9257
    %vm9262 = vcmp.ge.f32.partialorder %v9225, %v9257
    %vm9263 = vcmp.ge.f32.partialorder %v9226, %v9257
    %vm9264 = vcmp.ge.f32.partialorder %v9227, %v9257
    %vm9265 = vcmp.ge.f32.partialorder %v9228, %v9257
    %vm9266 = vcmp.ge.f32.partialorder %v9229, %v9257
    %vm9267 = vcmp.ge.f32.partialorder %v9230, %v9257
    %vm9268 = vcmp.ge.f32.partialorder %v9231, %v9257
    %vm9269 = vcmp.ge.f32.partialorder %v9232, %v9257
    %vm9270 = vcmp.ge.f32.partialorder %v9233, %v9257
    %vm9271 = vcmp.ge.f32.partialorder %v9234, %v9257
    %vm9272 = vcmp.ge.f32.partialorder %v9235, %v9257
    %vm9273 = vcmp.ge.f32.partialorder %v9236, %v9257
    %v9274 = vsel %vm9258, %v5802, 128
    %v9275 = vsel %vm9259, %v5803, 128
    %v9276 = vsel %vm9260, %v5804, 128
    %v9277 = vsel %vm9261, %v5805, 128
    %v9278 = vsel %vm9262, %v5806, 128
    %v9279 = vsel %vm9263, %v5807, 128
    %v9280 = vsel %vm9264, %v5808, 128
    %v9281 = vsel %vm9265, %v5809, 128
    %v9282 = vsel %vm9266, %v5810, 128
    %v9283 = vsel %vm9267, %v5811, 128
    %v9284 = vsel %vm9268, %v5812, 128
    %v9285 = vsel %vm9269, %v5813, 128
    %v9286 = vsel %vm9270, %v5814, 128
    %v9287 = vsel %vm9271, %v5815, 128
    %v9288 = vsel %vm9272, %v5816, 128
    %v9289 = vsel %vm9273, %v5817, 128
    %vm9290 = vcmp.lt.s32.totalorder %v9274, %v9278
    %v9291 = vsel %vm9290, %v9274, %v9278
    %vm9292 = vcmp.lt.s32.totalorder %v9275, %v9279
    %v9293 = vsel %vm9292, %v9275, %v9279
    %vm9294 = vcmp.lt.s32.totalorder %v9276, %v9280
    %v9295 = vsel %vm9294, %v9276, %v9280
    %vm9296 = vcmp.lt.s32.totalorder %v9277, %v9281
    %v9297 = vsel %vm9296, %v9277, %v9281
    %vm9298 = vcmp.lt.s32.totalorder %v9291, %v9282
    %v9299 = vsel %vm9298, %v9291, %v9282
    %vm9300 = vcmp.lt.s32.totalorder %v9293, %v9283
    %v9301 = vsel %vm9300, %v9293, %v9283
    %vm9302 = vcmp.lt.s32.totalorder %v9295, %v9284
    %v9303 = vsel %vm9302, %v9295, %v9284
    %vm9304 = vcmp.lt.s32.totalorder %v9297, %v9285
    %v9305 = vsel %vm9304, %v9297, %v9285
    %vm9306 = vcmp.lt.s32.totalorder %v9299, %v9286
    %v9307 = vsel %vm9306, %v9299, %v9286
    %vm9308 = vcmp.lt.s32.totalorder %v9301, %v9287
    %v9309 = vsel %vm9308, %v9301, %v9287
    %vm9310 = vcmp.lt.s32.totalorder %v9303, %v9288
    %v9311 = vsel %vm9310, %v9303, %v9288
    %vm9312 = vcmp.lt.s32.totalorder %v9305, %v9289
    %v9313 = vsel %vm9312, %v9305, %v9289
    %vm9314 = vcmp.lt.s32.totalorder %v9307, %v9309
    %v9315 = vsel %vm9314, %v9307, %v9309
    %vm9316 = vcmp.lt.s32.totalorder %v9311, %v9313
    %v9317 = vsel %vm9316, %v9311, %v9313
    %vm9318 = vcmp.lt.s32.totalorder %v9315, %v9317
    %v9319 = vsel %vm9318, %v9315, %v9317
    %v9320 = vrot.slane %v9319, 4
    %vm9321 = vcmp.lt.s32.totalorder %v9319, %v9320
    %v9322 = vsel %vm9321, %v9319, %v9320
    %v9323 = vrot.slane %v9322, 2
    %vm9324 = vcmp.lt.s32.totalorder %v9322, %v9323
    %v9325 = vsel %vm9324, %v9322, %v9323
    %v9326 = vrot.slane %v9325, 1
    %vm9327 = vcmp.lt.s32.totalorder %v9325, %v9326
    %v9328 = vsel %vm9327, %v9325, %v9326
    %9329 = vst [vmem:[#allocation5 + $0x8] sm:$0x1] %v9328
    %v9330 = vld [vmem:[%s5] sm:$0xff]
    %v9331 = vld [vmem:[%s5 + $0x8] sm:$0xff]
    %v9332 = vld [vmem:[%s5 + $0x10] sm:$0xff]
    %v9333 = vld [vmem:[%s5 + $0x18] sm:$0xff]
    %v9334 = vld [vmem:[%s5 + $0x20] sm:$0xff]
    %v9335 = vld [vmem:[%s5 + $0x28] sm:$0xff]
    %v9336 = vld [vmem:[%s5 + $0x30] sm:$0xff]
    %v9337 = vld [vmem:[%s5 + $0x38] sm:$0xff]
    %v9338 = vld [vmem:[%s5 + $0x40] sm:$0xff]
    %v9339 = vld [vmem:[%s5 + $0x48] sm:$0xff]
    %v9340 = vld [vmem:[%s5 + $0x50] sm:$0xff]
    %v9341 = vld [vmem:[%s5 + $0x58] sm:$0xff]
    %v9342 = vld [vmem:[%s5 + $0x60] sm:$0xff]
    %v9343 = vld [vmem:[%s5 + $0x68] sm:$0xff]
    %v9344 = vld [vmem:[%s5 + $0x70] sm:$0xff]
    %v9345 = vld [vmem:[%s5 + $0x78] sm:$0xff]
    %v9347 = vsel %vm5458, %v9330, 0
    %v9350 = vsel %vm5458, %v9331, 0
    %v9353 = vsel %vm5458, %v9332, 0
    %v9356 = vsel %vm5458, %v9333, 0
    %v9359 = vsel %vm5458, %v9334, 0
    %v9362 = vsel %vm5458, %v9335, 0
    %v9365 = vsel %vm5458, %v9336, 0
    %v9368 = vsel %vm5458, %v9337, 0
    %v9371 = vsel %vm5458, %v9338, 0
    %v9374 = vsel %vm5458, %v9339, 0
    %v9377 = vsel %vm5458, %v9340, 0
    %v9380 = vsel %vm5458, %v9341, 0
    %v9383 = vsel %vm5458, %v9342, 0
    %v9386 = vsel %vm5458, %v9343, 0
    %v9389 = vsel %vm5458, %v9344, 0
    %v9392 = vsel %vm5458, %v9345, 0
    %9394 = vmatprep.subr.mxu0 0.0
    %9395 = vmatpush1.msra.mxu0 %v5332
    %9396 = vmatprep.subr.mxu0 0.0
    %9397 = vmatpush1.msra.mxu0 %v5335
    %9398 = vmatprep.subr.mxu0 0.0
    %9399 = vmatpush1.msra.mxu0 %v5340
    %9400 = vmatprep.subr.mxu0 0.0
    %9401 = vmatpush1.msra.mxu0 %v5343
    %9402 = vmatprep.subr.mxu0 0.0
    %9403 = vmatpush1.msra.mxu0 0.0
    %9404 = vmatprep.subr.mxu0 0.0
    %9405 = vmatpush1.msra.mxu0 0.0
    %9406 = vmatprep.subr.mxu0 0.0
    %9407 = vmatpush1.msra.mxu0 0.0
    %9408 = vmatprep.subr.mxu0 0.0
    %9409 = vmatpush1.msra.mxu0 0.0
    %9410 = vmatprep.subr.mxu0 0.0
    %9411 = vmatpush1.msra.mxu0 0.0
    %9412 = vmatprep.subr.mxu0 0.0
    %9413 = vmatpush1.msra.mxu0 0.0
    %9414 = vmatprep.subr.mxu0 0.0
    %9415 = vmatpush1.msra.mxu0 0.0
    %9416 = vmatprep.subr.mxu0 0.0
    %9417 = vmatpush1.msra.mxu0 0.0
    %9418 = vmatprep.subr.mxu0 0.0
    %9419 = vmatpush1.msra.mxu0 0.0
    %9420 = vmatprep.subr.mxu0 0.0
    %9421 = vmatpush1.msra.mxu0 0.0
    %9422 = vmatprep.subr.mxu0 0.0
    %9423 = vmatpush1.msra.mxu0 0.0
    %9424 = vmatprep.subr.mxu0 0.0
    %9425 = vmatpush1.msra.mxu0 0.0
    %9426 = vmatprep.subr.mxu0 0.0
    %9427 = vmatpush1.msra.mxu0 0.0
    %9428 = vmatprep.subr.mxu0 0.0
    %9429 = vmatpush1.msra.mxu0 0.0
    %9430 = vmatprep.subr.mxu0 0.0
    %9431 = vmatpush1.msra.mxu0 0.0
    %9432 = vmatprep.subr.mxu0 0.0
    %9433 = vmatpush1.msra.mxu0 0.0
    %9434 = vmatprep.subr.mxu0 0.0
    %9435 = vmatpush1.msra.mxu0 0.0
    %9436 = vmatprep.subr.mxu0 0.0
    %9437 = vmatpush1.msra.mxu0 0.0
    %9438 = vmatprep.subr.mxu0 0.0
    %9439 = vmatpush1.msra.mxu0 0.0
    %9440 = vmatprep.subr.mxu0 0.0
    %9441 = vmatpush1.msra.mxu0 0.0
    %9442 = vmatprep.subr.mxu0 0.0
    %9443 = vmatpush1.msra.mxu0 0.0
    %9444 = vmatprep.subr.mxu0 0.0
    %9445 = vmatpush1.msra.mxu0 0.0
    %9446 = vmatprep.subr.mxu0 0.0
    %9447 = vmatpush1.msra.mxu0 0.0
    %9448 = vmatprep.subr.mxu0 0.0
    %9449 = vmatpush1.msra.mxu0 0.0
    %9450 = vmatprep.subr.mxu0 0.0
    %9451 = vmatpush1.msra.mxu0 0.0
    %9452 = vmatprep.subr.mxu0 0.0
    %9453 = vmatpush1.msra.mxu0 0.0
    %9454 = vmatprep.subr.mxu0 0.0
    %9455 = vmatpush1.msra.mxu0 0.0
    %9456 = vmatprep.subr.mxu0 0.0
    %9457 = vmatpush1.msra.mxu0 0.0
    %9458 = vmatprep.mubr.f32.mxu0 0.0
    %9459 = vmatmul.mubr.f32.gmra.mrb[0].mxu0 %v9347
    %v9460 = vpop.f32.mrb[0].mxu0
    %v9461 = vadd.f32 0.0, %v9460
    %v9462 = vpop.f32.mrb[0].mxu0
    %9463 = vmatprep.mubr.f32.mxu0 0.0
    %9464 = vmatmul.mubr.f32.gmra.mrb[0].mxu0 %v9350
    %v9465 = vpop.f32.mrb[0].mxu0
    %v9466 = vadd.f32 0.0, %v9465
    %v9467 = vpop.f32.mrb[0].mxu0
    %9468 = vmatprep.mubr.f32.mxu0 0.0
    %9469 = vmatmul.mubr.f32.gmra.mrb[0].mxu0 %v9353
    %v9470 = vpop.f32.mrb[0].mxu0
    %v9471 = vadd.f32 0.0, %v9470
    %v9472 = vpop.f32.mrb[0].mxu0
    %9473 = vmatprep.mubr.f32.mxu0 0.0
    %9474 = vmatmul.mubr.f32.gmra.mrb[0].mxu0 %v9356
    %v9475 = vpop.f32.mrb[0].mxu0
    %v9476 = vadd.f32 0.0, %v9475
    %v9477 = vpop.f32.mrb[0].mxu0
    %9478 = vmatprep.mubr.f32.mxu0 0.0
    %9479 = vmatmul.mubr.f32.gmra.mrb[0].mxu0 %v9359
    %v9480 = vpop.f32.mrb[0].mxu0
    %v9481 = vadd.f32 0.0, %v9480
    %v9482 = vpop.f32.mrb[0].mxu0
    %9483 = vmatprep.mubr.f32.mxu0 0.0
    %9484 = vmatmul.mubr.f32.gmra.mrb[0].mxu0 %v9362
    %v9485 = vpop.f32.mrb[0].mxu0
    %v9486 = vadd.f32 0.0, %v9485
    %v9487 = vpop.f32.mrb[0].mxu0
    %9488 = vmatprep.mubr.f32.mxu0 0.0
    %9489 = vmatmul.mubr.f32.gmra.mrb[0].mxu0 %v9365
    %v9490 = vpop.f32.mrb[0].mxu0
    %v9491 = vadd.f32 0.0, %v9490
    %v9492 = vpop.f32.mrb[0].mxu0
    %9493 = vmatprep.mubr.f32.mxu0 0.0
    %9494 = vmatmul.mubr.f32.gmra.mrb[0].mxu0 %v9368
    %v9495 = vpop.f32.mrb[0].mxu0
    %v9496 = vadd.f32 0.0, %v9495
    %v9497 = vpop.f32.mrb[0].mxu0
    %9498 = vmatprep.mubr.f32.mxu0 0.0
    %9499 = vmatmul.mubr.f32.gmra.mrb[0].mxu0 %v9371
    %v9500 = vpop.f32.mrb[0].mxu0
    %v9501 = vadd.f32 0.0, %v9500
    %v9502 = vpop.f32.mrb[0].mxu0
    %9503 = vmatprep.mubr.f32.mxu0 0.0
    %9504 = vmatmul.mubr.f32.gmra.mrb[0].mxu0 %v9374
    %v9505 = vpop.f32.mrb[0].mxu0
    %v9506 = vadd.f32 0.0, %v9505
    %v9507 = vpop.f32.mrb[0].mxu0
    %9508 = vmatprep.mubr.f32.mxu0 0.0
    %9509 = vmatmul.mubr.f32.gmra.mrb[0].mxu0 %v9377
    %v9510 = vpop.f32.mrb[0].mxu0
    %v9511 = vadd.f32 0.0, %v9510
    %v9512 = vpop.f32.mrb[0].mxu0
    %9513 = vmatprep.mubr.f32.mxu0 0.0
    %9514 = vmatmul.mubr.f32.gmra.mrb[0].mxu0 %v9380
    %v9515 = vpop.f32.mrb[0].mxu0
    %v9516 = vadd.f32 0.0, %v9515
    %v9517 = vpop.f32.mrb[0].mxu0
    %9518 = vmatprep.mubr.f32.mxu0 0.0
    %9519 = vmatmul.mubr.f32.gmra.mrb[0].mxu0 %v9383
    %v9520 = vpop.f32.mrb[0].mxu0
    %v9521 = vadd.f32 0.0, %v9520
    %v9522 = vpop.f32.mrb[0].mxu0
    %9523 = vmatprep.mubr.f32.mxu0 0.0
    %9524 = vmatmul.mubr.f32.gmra.mrb[0].mxu0 %v9386
    %v9525 = vpop.f32.mrb[0].mxu0
    %v9526 = vadd.f32 0.0, %v9525
    %v9527 = vpop.f32.mrb[0].mxu0
    %9528 = vmatprep.mubr.f32.mxu0 0.0
    %9529 = vmatmul.mubr.f32.gmra.mrb[0].mxu0 %v9389
    %v9530 = vpop.f32.mrb[0].mxu0
    %v9531 = vadd.f32 0.0, %v9530
    %v9532 = vpop.f32.mrb[0].mxu0
    %9533 = vmatprep.mubr.f32.mxu0 0.0
    %9534 = vmatmul.mubr.f32.gmra.mrb[0].mxu0 %v9392
    %v9535 = vpop.f32.mrb[0].mxu0
    %v9536 = vadd.f32 0.0, %v9535
    %v9537 = vpop.f32.mrb[0].mxu0
    %9538 = vdwg.mxu0
    %v9539 = vmul.f32 %v9461, 2.0
    %v9540 = vmul.f32 %v9466, 2.0
    %v9541 = vmul.f32 %v9471, 2.0
    %v9542 = vmul.f32 %v9476, 2.0
    %v9543 = vmul.f32 %v9481, 2.0
    %v9544 = vmul.f32 %v9486, 2.0
    %v9545 = vmul.f32 %v9491, 2.0
    %v9546 = vmul.f32 %v9496, 2.0
    %v9547 = vmul.f32 %v9501, 2.0
    %v9548 = vmul.f32 %v9506, 2.0
    %v9549 = vmul.f32 %v9511, 2.0
    %v9550 = vmul.f32 %v9516, 2.0
    %v9551 = vmul.f32 %v9521, 2.0
    %v9552 = vmul.f32 %v9526, 2.0
    %v9553 = vmul.f32 %v9531, 2.0
    %v9554 = vmul.f32 %v9536, 2.0
    %v9555 = vld [vmem:[%s6] sm:$0xff]
    %v9556 = vld [vmem:[%s6 + $0x8] sm:$0xff]
    %v9557 = vld [vmem:[%s6 + $0x10] sm:$0xff]
    %v9558 = vld [vmem:[%s6 + $0x18] sm:$0xff]
    %v9559 = vld [vmem:[%s6 + $0x20] sm:$0xff]
    %v9560 = vld [vmem:[%s6 + $0x28] sm:$0xff]
    %v9561 = vld [vmem:[%s6 + $0x30] sm:$0xff]
    %v9562 = vld [vmem:[%s6 + $0x38] sm:$0xff]
    %v9563 = vld [vmem:[%s6 + $0x40] sm:$0xff]
    %v9564 = vld [vmem:[%s6 + $0x48] sm:$0xff]
    %v9565 = vld [vmem:[%s6 + $0x50] sm:$0xff]
    %v9566 = vld [vmem:[%s6 + $0x58] sm:$0xff]
    %v9567 = vld [vmem:[%s6 + $0x60] sm:$0xff]
    %v9568 = vld [vmem:[%s6 + $0x68] sm:$0xff]
    %v9569 = vld [vmem:[%s6 + $0x70] sm:$0xff]
    %v9570 = vld [vmem:[%s6 + $0x78] sm:$0xff]
    %9572 = vset.pattern.permute.xlu0 0
    %9573 = vperm.xlu0 %9572, %v9555
    %v9574 = vpop.permute.xlu0 %9573
    %9577 = vset.pattern.permute.xlu0 0
    %9578 = vperm.xlu0 %9577, %v9556
    %v9579 = vpop.permute.xlu0 %9578
    %9582 = vset.pattern.permute.xlu0 0
    %9583 = vperm.xlu0 %9582, %v9557
    %v9584 = vpop.permute.xlu0 %9583
    %9587 = vset.pattern.permute.xlu0 0
    %9588 = vperm.xlu0 %9587, %v9558
    %v9589 = vpop.permute.xlu0 %9588
    %9592 = vset.pattern.permute.xlu0 0
    %9593 = vperm.xlu0 %9592, %v9559
    %v9594 = vpop.permute.xlu0 %9593
    %9597 = vset.pattern.permute.xlu0 0
    %9598 = vperm.xlu0 %9597, %v9560
    %v9599 = vpop.permute.xlu0 %9598
    %9602 = vset.pattern.permute.xlu0 0
    %9603 = vperm.xlu0 %9602, %v9561
    %v9604 = vpop.permute.xlu0 %9603
    %9607 = vset.pattern.permute.xlu0 0
    %9608 = vperm.xlu0 %9607, %v9562
    %v9609 = vpop.permute.xlu0 %9608
    %9612 = vset.pattern.permute.xlu0 0
    %9613 = vperm.xlu0 %9612, %v9563
    %v9614 = vpop.permute.xlu0 %9613
    %9617 = vset.pattern.permute.xlu0 0
    %9618 = vperm.xlu0 %9617, %v9564
    %v9619 = vpop.permute.xlu0 %9618
    %9622 = vset.pattern.permute.xlu0 0
    %9623 = vperm.xlu0 %9622, %v9565
    %v9624 = vpop.permute.xlu0 %9623
    %9627 = vset.pattern.permute.xlu0 0
    %9628 = vperm.xlu0 %9627, %v9566
    %v9629 = vpop.permute.xlu0 %9628
    %9632 = vset.pattern.permute.xlu0 0
    %9633 = vperm.xlu0 %9632, %v9567
    %v9634 = vpop.permute.xlu0 %9633
    %9637 = vset.pattern.permute.xlu0 0
    %9638 = vperm.xlu0 %9637, %v9568
    %v9639 = vpop.permute.xlu0 %9638
    %9642 = vset.pattern.permute.xlu0 0
    %9643 = vperm.xlu0 %9642, %v9569
    %v9644 = vpop.permute.xlu0 %9643
    %9647 = vset.pattern.permute.xlu0 0
    %9648 = vperm.xlu0 %9647, %v9570
    %v9649 = vpop.permute.xlu0 %9648
    %v9651 = vsub.f32 %v9539, %v9574
    %v9652 = vsub.f32 %v9540, %v9579
    %v9653 = vsub.f32 %v9541, %v9584
    %v9654 = vsub.f32 %v9542, %v9589
    %v9655 = vsub.f32 %v9543, %v9594
    %v9656 = vsub.f32 %v9544, %v9599
    %v9657 = vsub.f32 %v9545, %v9604
    %v9658 = vsub.f32 %v9546, %v9609
    %v9659 = vsub.f32 %v9547, %v9614
    %v9660 = vsub.f32 %v9548, %v9619
    %v9661 = vsub.f32 %v9549, %v9624
    %v9662 = vsub.f32 %v9550, %v9629
    %v9663 = vsub.f32 %v9551, %v9634
    %v9664 = vsub.f32 %v9552, %v9639
    %v9665 = vsub.f32 %v9553, %v9644
    %v9666 = vsub.f32 %v9554, %v9649
    %v9667 = vmax.f32 %v9651, %v9655
    %v9668 = vmax.f32 %v9652, %v9656
    %v9669 = vmax.f32 %v9653, %v9657
    %v9670 = vmax.f32 %v9654, %v9658
    %v9671 = vmax.f32 %v9667, %v9659
    %v9672 = vmax.f32 %v9668, %v9660
    %v9673 = vmax.f32 %v9669, %v9661
    %v9674 = vmax.f32 %v9670, %v9662
    %v9675 = vmax.f32 %v9671, %v9663
    %v9676 = vmax.f32 %v9672, %v9664
    %v9677 = vmax.f32 %v9673, %v9665
    %v9678 = vmax.f32 %v9674, %v9666
    %v9679 = vmax.f32 %v9675, %v9676
    %v9680 = vmax.f32 %v9677, %v9678
    %v9681 = vmax.f32 %v9679, %v9680
    %v9682 = vrot.slane %v9681, 4
    %v9683 = vmax.f32 %v9681, %v9682
    %v9684 = vrot.slane %v9683, 2
    %v9685 = vmax.f32 %v9683, %v9684
    %v9686 = vrot.slane %v9685, 1
    %v9687 = vmax.f32 %v9685, %v9686
    %vm9688 = vcmp.ge.f32.partialorder %v9651, %v9687
    %vm9689 = vcmp.ge.f32.partialorder %v9652, %v9687
    %vm9690 = vcmp.ge.f32.partialorder %v9653, %v9687
    %vm9691 = vcmp.ge.f32.partialorder %v9654, %v9687
    %vm9692 = vcmp.ge.f32.partialorder %v9655, %v9687
    %vm9693 = vcmp.ge.f32.partialorder %v9656, %v9687
    %vm9694 = vcmp.ge.f32.partialorder %v9657, %v9687
    %vm9695 = vcmp.ge.f32.partialorder %v9658, %v9687
    %vm9696 = vcmp.ge.f32.partialorder %v9659, %v9687
    %vm9697 = vcmp.ge.f32.partialorder %v9660, %v9687
    %vm9698 = vcmp.ge.f32.partialorder %v9661, %v9687
    %vm9699 = vcmp.ge.f32.partialorder %v9662, %v9687
    %vm9700 = vcmp.ge.f32.partialorder %v9663, %v9687
    %vm9701 = vcmp.ge.f32.partialorder %v9664, %v9687
    %vm9702 = vcmp.ge.f32.partialorder %v9665, %v9687
    %vm9703 = vcmp.ge.f32.partialorder %v9666, %v9687
    %v9704 = vsel %vm9688, %v5802, 128
    %v9705 = vsel %vm9689, %v5803, 128
    %v9706 = vsel %vm9690, %v5804, 128
    %v9707 = vsel %vm9691, %v5805, 128
    %v9708 = vsel %vm9692, %v5806, 128
    %v9709 = vsel %vm9693, %v5807, 128
    %v9710 = vsel %vm9694, %v5808, 128
    %v9711 = vsel %vm9695, %v5809, 128
    %v9712 = vsel %vm9696, %v5810, 128
    %v9713 = vsel %vm9697, %v5811, 128
    %v9714 = vsel %vm9698, %v5812, 128
    %v9715 = vsel %vm9699, %v5813, 128
    %v9716 = vsel %vm9700, %v5814, 128
    %v9717 = vsel %vm9701, %v5815, 128
    %v9718 = vsel %vm9702, %v5816, 128
    %v9719 = vsel %vm9703, %v5817, 128
    %vm9720 = vcmp.lt.s32.totalorder %v9704, %v9708
    %v9721 = vsel %vm9720, %v9704, %v9708
    %vm9722 = vcmp.lt.s32.totalorder %v9705, %v9709
    %v9723 = vsel %vm9722, %v9705, %v9709
    %vm9724 = vcmp.lt.s32.totalorder %v9706, %v9710
    %v9725 = vsel %vm9724, %v9706, %v9710
    %vm9726 = vcmp.lt.s32.totalorder %v9707, %v9711
    %v9727 = vsel %vm9726, %v9707, %v9711
    %vm9728 = vcmp.lt.s32.totalorder %v9721, %v9712
    %v9729 = vsel %vm9728, %v9721, %v9712
    %vm9730 = vcmp.lt.s32.totalorder %v9723, %v9713
    %v9731 = vsel %vm9730, %v9723, %v9713
    %vm9732 = vcmp.lt.s32.totalorder %v9725, %v9714
    %v9733 = vsel %vm9732, %v9725, %v9714
    %vm9734 = vcmp.lt.s32.totalorder %v9727, %v9715
    %v9735 = vsel %vm9734, %v9727, %v9715
    %vm9736 = vcmp.lt.s32.totalorder %v9729, %v9716
    %v9737 = vsel %vm9736, %v9729, %v9716
    %vm9738 = vcmp.lt.s32.totalorder %v9731, %v9717
    %v9739 = vsel %vm9738, %v9731, %v9717
    %vm9740 = vcmp.lt.s32.totalorder %v9733, %v9718
    %v9741 = vsel %vm9740, %v9733, %v9718
    %vm9742 = vcmp.lt.s32.totalorder %v9735, %v9719
    %v9743 = vsel %vm9742, %v9735, %v9719
    %vm9744 = vcmp.lt.s32.totalorder %v9737, %v9739
    %v9745 = vsel %vm9744, %v9737, %v9739
    %vm9746 = vcmp.lt.s32.totalorder %v9741, %v9743
    %v9747 = vsel %vm9746, %v9741, %v9743
    %vm9748 = vcmp.lt.s32.totalorder %v9745, %v9747
    %v9749 = vsel %vm9748, %v9745, %v9747
    %v9750 = vrot.slane %v9749, 4
    %vm9751 = vcmp.lt.s32.totalorder %v9749, %v9750
    %v9752 = vsel %vm9751, %v9749, %v9750
    %v9753 = vrot.slane %v9752, 2
    %vm9754 = vcmp.lt.s32.totalorder %v9752, %v9753
    %v9755 = vsel %vm9754, %v9752, %v9753
    %v9756 = vrot.slane %v9755, 1
    %vm9757 = vcmp.lt.s32.totalorder %v9755, %v9756
    %v9758 = vsel %vm9757, %v9755, %v9756
    %9759 = vst [vmem:[#allocation5 + $0x9] sm:$0x1] %v9758
    %v9760 = vld [vmem:[%s5] sm:$0xff]
    %v9761 = vld [vmem:[%s5 + $0x8] sm:$0xff]
    %v9762 = vld [vmem:[%s5 + $0x10] sm:$0xff]
    %v9763 = vld [vmem:[%s5 + $0x18] sm:$0xff]
    %v9764 = vld [vmem:[%s5 + $0x20] sm:$0xff]
    %v9765 = vld [vmem:[%s5 + $0x28] sm:$0xff]
    %v9766 = vld [vmem:[%s5 + $0x30] sm:$0xff]
    %v9767 = vld [vmem:[%s5 + $0x38] sm:$0xff]
    %v9768 = vld [vmem:[%s5 + $0x40] sm:$0xff]
    %v9769 = vld [vmem:[%s5 + $0x48] sm:$0xff]
    %v9770 = vld [vmem:[%s5 + $0x50] sm:$0xff]
    %v9771 = vld [vmem:[%s5 + $0x58] sm:$0xff]
    %v9772 = vld [vmem:[%s5 + $0x60] sm:$0xff]
    %v9773 = vld [vmem:[%s5 + $0x68] sm:$0xff]
    %v9774 = vld [vmem:[%s5 + $0x70] sm:$0xff]
    %v9775 = vld [vmem:[%s5 + $0x78] sm:$0xff]
    %v9777 = vsel %vm5458, %v9760, 0
    %v9780 = vsel %vm5458, %v9761, 0
    %v9783 = vsel %vm5458, %v9762, 0
    %v9786 = vsel %vm5458, %v9763, 0
    %v9789 = vsel %vm5458, %v9764, 0
    %v9792 = vsel %vm5458, %v9765, 0
    %v9795 = vsel %vm5458, %v9766, 0
    %v9798 = vsel %vm5458, %v9767, 0
    %v9801 = vsel %vm5458, %v9768, 0
    %v9804 = vsel %vm5458, %v9769, 0
    %v9807 = vsel %vm5458, %v9770, 0
    %v9810 = vsel %vm5458, %v9771, 0
    %v9813 = vsel %vm5458, %v9772, 0
    %v9816 = vsel %vm5458, %v9773, 0
    %v9819 = vsel %vm5458, %v9774, 0
    %v9822 = vsel %vm5458, %v9775, 0
    %9824 = vmatprep.subr.mxu0 0.0
    %9825 = vmatpush1.msra.mxu0 %v5348
    %9826 = vmatprep.subr.mxu0 0.0
    %9827 = vmatpush1.msra.mxu0 %v5351
    %9828 = vmatprep.subr.mxu0 0.0
    %9829 = vmatpush1.msra.mxu0 %v5356
    %9830 = vmatprep.subr.mxu0 0.0
    %9831 = vmatpush1.msra.mxu0 %v5359
    %9832 = vmatprep.subr.mxu0 0.0
    %9833 = vmatpush1.msra.mxu0 0.0
    %9834 = vmatprep.subr.mxu0 0.0
    %9835 = vmatpush1.msra.mxu0 0.0
    %9836 = vmatprep.subr.mxu0 0.0
    %9837 = vmatpush1.msra.mxu0 0.0
    %9838 = vmatprep.subr.mxu0 0.0
    %9839 = vmatpush1.msra.mxu0 0.0
    %9840 = vmatprep.subr.mxu0 0.0
    %9841 = vmatpush1.msra.mxu0 0.0
    %9842 = vmatprep.subr.mxu0 0.0
    %9843 = vmatpush1.msra.mxu0 0.0
    %9844 = vmatprep.subr.mxu0 0.0
    %9845 = vmatpush1.msra.mxu0 0.0
    %9846 = vmatprep.subr.mxu0 0.0
    %9847 = vmatpush1.msra.mxu0 0.0
    %9848 = vmatprep.subr.mxu0 0.0
    %9849 = vmatpush1.msra.mxu0 0.0
    %9850 = vmatprep.subr.mxu0 0.0
    %9851 = vmatpush1.msra.mxu0 0.0
    %9852 = vmatprep.subr.mxu0 0.0
    %9853 = vmatpush1.msra.mxu0 0.0
    %9854 = vmatprep.subr.mxu0 0.0
    %9855 = vmatpush1.msra.mxu0 0.0
    %9856 = vmatprep.subr.mxu0 0.0
    %9857 = vmatpush1.msra.mxu0 0.0
    %9858 = vmatprep.subr.mxu0 0.0
    %9859 = vmatpush1.msra.mxu0 0.0
    %9860 = vmatprep.subr.mxu0 0.0
    %9861 = vmatpush1.msra.mxu0 0.0
    %9862 = vmatprep.subr.mxu0 0.0
    %9863 = vmatpush1.msra.mxu0 0.0
    %9864 = vmatprep.subr.mxu0 0.0
    %9865 = vmatpush1.msra.mxu0 0.0
    %9866 = vmatprep.subr.mxu0 0.0
    %9867 = vmatpush1.msra.mxu0 0.0
    %9868 = vmatprep.subr.mxu0 0.0
    %9869 = vmatpush1.msra.mxu0 0.0
    %9870 = vmatprep.subr.mxu0 0.0
    %9871 = vmatpush1.msra.mxu0 0.0
    %9872 = vmatprep.subr.mxu0 0.0
    %9873 = vmatpush1.msra.mxu0 0.0
    %9874 = vmatprep.subr.mxu0 0.0
    %9875 = vmatpush1.msra.mxu0 0.0
    %9876 = vmatprep.subr.mxu0 0.0
    %9877 = vmatpush1.msra.mxu0 0.0
    %9878 = vmatprep.subr.mxu0 0.0
    %9879 = vmatpush1.msra.mxu0 0.0
    %9880 = vmatprep.subr.mxu0 0.0
    %9881 = vmatpush1.msra.mxu0 0.0
    %9882 = vmatprep.subr.mxu0 0.0
    %9883 = vmatpush1.msra.mxu0 0.0
    %9884 = vmatprep.subr.mxu0 0.0
    %9885 = vmatpush1.msra.mxu0 0.0
    %9886 = vmatprep.subr.mxu0 0.0
    %9887 = vmatpush1.msra.mxu0 0.0
    %9888 = vmatprep.mubr.f32.mxu0 0.0
    %9889 = vmatmul.mubr.f32.gmra.mrb[0].mxu0 %v9777
    %v9890 = vpop.f32.mrb[0].mxu0
    %v9891 = vadd.f32 0.0, %v9890
    %v9892 = vpop.f32.mrb[0].mxu0
    %9893 = vmatprep.mubr.f32.mxu0 0.0
    %9894 = vmatmul.mubr.f32.gmra.mrb[0].mxu0 %v9780
    %v9895 = vpop.f32.mrb[0].mxu0
    %v9896 = vadd.f32 0.0, %v9895
    %v9897 = vpop.f32.mrb[0].mxu0
    %9898 = vmatprep.mubr.f32.mxu0 0.0
    %9899 = vmatmul.mubr.f32.gmra.mrb[0].mxu0 %v9783
    %v9900 = vpop.f32.mrb[0].mxu0
    %v9901 = vadd.f32 0.0, %v9900
    %v9902 = vpop.f32.mrb[0].mxu0
    %9903 = vmatprep.mubr.f32.mxu0 0.0
    %9904 = vmatmul.mubr.f32.gmra.mrb[0].mxu0 %v9786
    %v9905 = vpop.f32.mrb[0].mxu0
    %v9906 = vadd.f32 0.0, %v9905
    %v9907 = vpop.f32.mrb[0].mxu0
    %9908 = vmatprep.mubr.f32.mxu0 0.0
    %9909 = vmatmul.mubr.f32.gmra.mrb[0].mxu0 %v9789
    %v9910 = vpop.f32.mrb[0].mxu0
    %v9911 = vadd.f32 0.0, %v9910
    %v9912 = vpop.f32.mrb[0].mxu0
    %9913 = vmatprep.mubr.f32.mxu0 0.0
    %9914 = vmatmul.mubr.f32.gmra.mrb[0].mxu0 %v9792
    %v9915 = vpop.f32.mrb[0].mxu0
    %v9916 = vadd.f32 0.0, %v9915
    %v9917 = vpop.f32.mrb[0].mxu0
    %9918 = vmatprep.mubr.f32.mxu0 0.0
    %9919 = vmatmul.mubr.f32.gmra.mrb[0].mxu0 %v9795
    %v9920 = vpop.f32.mrb[0].mxu0
    %v9921 = vadd.f32 0.0, %v9920
    %v9922 = vpop.f32.mrb[0].mxu0
    %9923 = vmatprep.mubr.f32.mxu0 0.0
    %9924 = vmatmul.mubr.f32.gmra.mrb[0].mxu0 %v9798
    %v9925 = vpop.f32.mrb[0].mxu0
    %v9926 = vadd.f32 0.0, %v9925
    %v9927 = vpop.f32.mrb[0].mxu0
    %9928 = vmatprep.mubr.f32.mxu0 0.0
    %9929 = vmatmul.mubr.f32.gmra.mrb[0].mxu0 %v9801
    %v9930 = vpop.f32.mrb[0].mxu0
    %v9931 = vadd.f32 0.0, %v9930
    %v9932 = vpop.f32.mrb[0].mxu0
    %9933 = vmatprep.mubr.f32.mxu0 0.0
    %9934 = vmatmul.mubr.f32.gmra.mrb[0].mxu0 %v9804
    %v9935 = vpop.f32.mrb[0].mxu0
    %v9936 = vadd.f32 0.0, %v9935
    %v9937 = vpop.f32.mrb[0].mxu0
    %9938 = vmatprep.mubr.f32.mxu0 0.0
    %9939 = vmatmul.mubr.f32.gmra.mrb[0].mxu0 %v9807
    %v9940 = vpop.f32.mrb[0].mxu0
    %v9941 = vadd.f32 0.0, %v9940
    %v9942 = vpop.f32.mrb[0].mxu0
    %9943 = vmatprep.mubr.f32.mxu0 0.0
    %9944 = vmatmul.mubr.f32.gmra.mrb[0].mxu0 %v9810
    %v9945 = vpop.f32.mrb[0].mxu0
    %v9946 = vadd.f32 0.0, %v9945
    %v9947 = vpop.f32.mrb[0].mxu0
    %9948 = vmatprep.mubr.f32.mxu0 0.0
    %9949 = vmatmul.mubr.f32.gmra.mrb[0].mxu0 %v9813
    %v9950 = vpop.f32.mrb[0].mxu0
    %v9951 = vadd.f32 0.0, %v9950
    %v9952 = vpop.f32.mrb[0].mxu0
    %9953 = vmatprep.mubr.f32.mxu0 0.0
    %9954 = vmatmul.mubr.f32.gmra.mrb[0].mxu0 %v9816
    %v9955 = vpop.f32.mrb[0].mxu0
    %v9956 = vadd.f32 0.0, %v9955
    %v9957 = vpop.f32.mrb[0].mxu0
    %9958 = vmatprep.mubr.f32.mxu0 0.0
    %9959 = vmatmul.mubr.f32.gmra.mrb[0].mxu0 %v9819
    %v9960 = vpop.f32.mrb[0].mxu0
    %v9961 = vadd.f32 0.0, %v9960
    %v9962 = vpop.f32.mrb[0].mxu0
    %9963 = vmatprep.mubr.f32.mxu0 0.0
    %9964 = vmatmul.mubr.f32.gmra.mrb[0].mxu0 %v9822
    %v9965 = vpop.f32.mrb[0].mxu0
    %v9966 = vadd.f32 0.0, %v9965
    %v9967 = vpop.f32.mrb[0].mxu0
    %9968 = vdwg.mxu0
    %v9969 = vmul.f32 %v9891, 2.0
    %v9970 = vmul.f32 %v9896, 2.0
    %v9971 = vmul.f32 %v9901, 2.0
    %v9972 = vmul.f32 %v9906, 2.0
    %v9973 = vmul.f32 %v9911, 2.0
    %v9974 = vmul.f32 %v9916, 2.0
    %v9975 = vmul.f32 %v9921, 2.0
    %v9976 = vmul.f32 %v9926, 2.0
    %v9977 = vmul.f32 %v9931, 2.0
    %v9978 = vmul.f32 %v9936, 2.0
    %v9979 = vmul.f32 %v9941, 2.0
    %v9980 = vmul.f32 %v9946, 2.0
    %v9981 = vmul.f32 %v9951, 2.0
    %v9982 = vmul.f32 %v9956, 2.0
    %v9983 = vmul.f32 %v9961, 2.0
    %v9984 = vmul.f32 %v9966, 2.0
    %v9985 = vld [vmem:[%s6] sm:$0xff]
    %v9986 = vld [vmem:[%s6 + $0x8] sm:$0xff]
    %v9987 = vld [vmem:[%s6 + $0x10] sm:$0xff]
    %v9988 = vld [vmem:[%s6 + $0x18] sm:$0xff]
    %v9989 = vld [vmem:[%s6 + $0x20] sm:$0xff]
    %v9990 = vld [vmem:[%s6 + $0x28] sm:$0xff]
    %v9991 = vld [vmem:[%s6 + $0x30] sm:$0xff]
    %v9992 = vld [vmem:[%s6 + $0x38] sm:$0xff]
    %v9993 = vld [vmem:[%s6 + $0x40] sm:$0xff]
    %v9994 = vld [vmem:[%s6 + $0x48] sm:$0xff]
    %v9995 = vld [vmem:[%s6 + $0x50] sm:$0xff]
    %v9996 = vld [vmem:[%s6 + $0x58] sm:$0xff]
    %v9997 = vld [vmem:[%s6 + $0x60] sm:$0xff]
    %v9998 = vld [vmem:[%s6 + $0x68] sm:$0xff]
    %v9999 = vld [vmem:[%s6 + $0x70] sm:$0xff]
    %v10000 = vld [vmem:[%s6 + $0x78] sm:$0xff]
    %10002 = vset.pattern.permute.xlu0 0
    %10003 = vperm.xlu0 %10002, %v9985
    %v10004 = vpop.permute.xlu0 %10003
    %10007 = vset.pattern.permute.xlu0 0
    %10008 = vperm.xlu0 %10007, %v9986
    %v10009 = vpop.permute.xlu0 %10008
    %10012 = vset.pattern.permute.xlu0 0
    %10013 = vperm.xlu0 %10012, %v9987
    %v10014 = vpop.permute.xlu0 %10013
    %10017 = vset.pattern.permute.xlu0 0
    %10018 = vperm.xlu0 %10017, %v9988
    %v10019 = vpop.permute.xlu0 %10018
    %10022 = vset.pattern.permute.xlu0 0
    %10023 = vperm.xlu0 %10022, %v9989
    %v10024 = vpop.permute.xlu0 %10023
    %10027 = vset.pattern.permute.xlu0 0
    %10028 = vperm.xlu0 %10027, %v9990
    %v10029 = vpop.permute.xlu0 %10028
    %10032 = vset.pattern.permute.xlu0 0
    %10033 = vperm.xlu0 %10032, %v9991
    %v10034 = vpop.permute.xlu0 %10033
    %10037 = vset.pattern.permute.xlu0 0
    %10038 = vperm.xlu0 %10037, %v9992
    %v10039 = vpop.permute.xlu0 %10038
    %10042 = vset.pattern.permute.xlu0 0
    %10043 = vperm.xlu0 %10042, %v9993
    %v10044 = vpop.permute.xlu0 %10043
    %10047 = vset.pattern.permute.xlu0 0
    %10048 = vperm.xlu0 %10047, %v9994
    %v10049 = vpop.permute.xlu0 %10048
    %10052 = vset.pattern.permute.xlu0 0
    %10053 = vperm.xlu0 %10052, %v9995
    %v10054 = vpop.permute.xlu0 %10053
    %10057 = vset.pattern.permute.xlu0 0
    %10058 = vperm.xlu0 %10057, %v9996
    %v10059 = vpop.permute.xlu0 %10058
    %10062 = vset.pattern.permute.xlu0 0
    %10063 = vperm.xlu0 %10062, %v9997
    %v10064 = vpop.permute.xlu0 %10063
    %10067 = vset.pattern.permute.xlu0 0
    %10068 = vperm.xlu0 %10067, %v9998
    %v10069 = vpop.permute.xlu0 %10068
    %10072 = vset.pattern.permute.xlu0 0
    %10073 = vperm.xlu0 %10072, %v9999
    %v10074 = vpop.permute.xlu0 %10073
    %10077 = vset.pattern.permute.xlu0 0
    %10078 = vperm.xlu0 %10077, %v10000
    %v10079 = vpop.permute.xlu0 %10078
    %v10081 = vsub.f32 %v9969, %v10004
    %v10082 = vsub.f32 %v9970, %v10009
    %v10083 = vsub.f32 %v9971, %v10014
    %v10084 = vsub.f32 %v9972, %v10019
    %v10085 = vsub.f32 %v9973, %v10024
    %v10086 = vsub.f32 %v9974, %v10029
    %v10087 = vsub.f32 %v9975, %v10034
    %v10088 = vsub.f32 %v9976, %v10039
    %v10089 = vsub.f32 %v9977, %v10044
    %v10090 = vsub.f32 %v9978, %v10049
    %v10091 = vsub.f32 %v9979, %v10054
    %v10092 = vsub.f32 %v9980, %v10059
    %v10093 = vsub.f32 %v9981, %v10064
    %v10094 = vsub.f32 %v9982, %v10069
    %v10095 = vsub.f32 %v9983, %v10074
    %v10096 = vsub.f32 %v9984, %v10079
    %v10097 = vmax.f32 %v10081, %v10085
    %v10098 = vmax.f32 %v10082, %v10086
    %v10099 = vmax.f32 %v10083, %v10087
    %v10100 = vmax.f32 %v10084, %v10088
    %v10101 = vmax.f32 %v10097, %v10089
    %v10102 = vmax.f32 %v10098, %v10090
    %v10103 = vmax.f32 %v10099, %v10091
    %v10104 = vmax.f32 %v10100, %v10092
    %v10105 = vmax.f32 %v10101, %v10093
    %v10106 = vmax.f32 %v10102, %v10094
    %v10107 = vmax.f32 %v10103, %v10095
    %v10108 = vmax.f32 %v10104, %v10096
    %v10109 = vmax.f32 %v10105, %v10106
    %v10110 = vmax.f32 %v10107, %v10108
    %v10111 = vmax.f32 %v10109, %v10110
    %v10112 = vrot.slane %v10111, 4
    %v10113 = vmax.f32 %v10111, %v10112
    %v10114 = vrot.slane %v10113, 2
    %v10115 = vmax.f32 %v10113, %v10114
    %v10116 = vrot.slane %v10115, 1
    %v10117 = vmax.f32 %v10115, %v10116
    %vm10118 = vcmp.ge.f32.partialorder %v10081, %v10117
    %vm10119 = vcmp.ge.f32.partialorder %v10082, %v10117
    %vm10120 = vcmp.ge.f32.partialorder %v10083, %v10117
    %vm10121 = vcmp.ge.f32.partialorder %v10084, %v10117
    %vm10122 = vcmp.ge.f32.partialorder %v10085, %v10117
    %vm10123 = vcmp.ge.f32.partialorder %v10086, %v10117
    %vm10124 = vcmp.ge.f32.partialorder %v10087, %v10117
    %vm10125 = vcmp.ge.f32.partialorder %v10088, %v10117
    %vm10126 = vcmp.ge.f32.partialorder %v10089, %v10117
    %vm10127 = vcmp.ge.f32.partialorder %v10090, %v10117
    %vm10128 = vcmp.ge.f32.partialorder %v10091, %v10117
    %vm10129 = vcmp.ge.f32.partialorder %v10092, %v10117
    %vm10130 = vcmp.ge.f32.partialorder %v10093, %v10117
    %vm10131 = vcmp.ge.f32.partialorder %v10094, %v10117
    %vm10132 = vcmp.ge.f32.partialorder %v10095, %v10117
    %vm10133 = vcmp.ge.f32.partialorder %v10096, %v10117
    %v10134 = vsel %vm10118, %v5802, 128
    %v10135 = vsel %vm10119, %v5803, 128
    %v10136 = vsel %vm10120, %v5804, 128
    %v10137 = vsel %vm10121, %v5805, 128
    %v10138 = vsel %vm10122, %v5806, 128
    %v10139 = vsel %vm10123, %v5807, 128
    %v10140 = vsel %vm10124, %v5808, 128
    %v10141 = vsel %vm10125, %v5809, 128
    %v10142 = vsel %vm10126, %v5810, 128
    %v10143 = vsel %vm10127, %v5811, 128
    %v10144 = vsel %vm10128, %v5812, 128
    %v10145 = vsel %vm10129, %v5813, 128
    %v10146 = vsel %vm10130, %v5814, 128
    %v10147 = vsel %vm10131, %v5815, 128
    %v10148 = vsel %vm10132, %v5816, 128
    %v10149 = vsel %vm10133, %v5817, 128
    %vm10150 = vcmp.lt.s32.totalorder %v10134, %v10138
    %v10151 = vsel %vm10150, %v10134, %v10138
    %vm10152 = vcmp.lt.s32.totalorder %v10135, %v10139
    %v10153 = vsel %vm10152, %v10135, %v10139
    %vm10154 = vcmp.lt.s32.totalorder %v10136, %v10140
    %v10155 = vsel %vm10154, %v10136, %v10140
    %vm10156 = vcmp.lt.s32.totalorder %v10137, %v10141
    %v10157 = vsel %vm10156, %v10137, %v10141
    %vm10158 = vcmp.lt.s32.totalorder %v10151, %v10142
    %v10159 = vsel %vm10158, %v10151, %v10142
    %vm10160 = vcmp.lt.s32.totalorder %v10153, %v10143
    %v10161 = vsel %vm10160, %v10153, %v10143
    %vm10162 = vcmp.lt.s32.totalorder %v10155, %v10144
    %v10163 = vsel %vm10162, %v10155, %v10144
    %vm10164 = vcmp.lt.s32.totalorder %v10157, %v10145
    %v10165 = vsel %vm10164, %v10157, %v10145
    %vm10166 = vcmp.lt.s32.totalorder %v10159, %v10146
    %v10167 = vsel %vm10166, %v10159, %v10146
    %vm10168 = vcmp.lt.s32.totalorder %v10161, %v10147
    %v10169 = vsel %vm10168, %v10161, %v10147
    %vm10170 = vcmp.lt.s32.totalorder %v10163, %v10148
    %v10171 = vsel %vm10170, %v10163, %v10148
    %vm10172 = vcmp.lt.s32.totalorder %v10165, %v10149
    %v10173 = vsel %vm10172, %v10165, %v10149
    %vm10174 = vcmp.lt.s32.totalorder %v10167, %v10169
    %v10175 = vsel %vm10174, %v10167, %v10169
    %vm10176 = vcmp.lt.s32.totalorder %v10171, %v10173
    %v10177 = vsel %vm10176, %v10171, %v10173
    %vm10178 = vcmp.lt.s32.totalorder %v10175, %v10177
    %v10179 = vsel %vm10178, %v10175, %v10177
    %v10180 = vrot.slane %v10179, 4
    %vm10181 = vcmp.lt.s32.totalorder %v10179, %v10180
    %v10182 = vsel %vm10181, %v10179, %v10180
    %v10183 = vrot.slane %v10182, 2
    %vm10184 = vcmp.lt.s32.totalorder %v10182, %v10183
    %v10185 = vsel %vm10184, %v10182, %v10183
    %v10186 = vrot.slane %v10185, 1
    %vm10187 = vcmp.lt.s32.totalorder %v10185, %v10186
    %v10188 = vsel %vm10187, %v10185, %v10186
    %10189 = vst [vmem:[#allocation5 + $0xa] sm:$0x1] %v10188
    %v10190 = vld [vmem:[%s5] sm:$0xff]
    %v10191 = vld [vmem:[%s5 + $0x8] sm:$0xff]
    %v10192 = vld [vmem:[%s5 + $0x10] sm:$0xff]
    %v10193 = vld [vmem:[%s5 + $0x18] sm:$0xff]
    %v10194 = vld [vmem:[%s5 + $0x20] sm:$0xff]
    %v10195 = vld [vmem:[%s5 + $0x28] sm:$0xff]
    %v10196 = vld [vmem:[%s5 + $0x30] sm:$0xff]
    %v10197 = vld [vmem:[%s5 + $0x38] sm:$0xff]
    %v10198 = vld [vmem:[%s5 + $0x40] sm:$0xff]
    %v10199 = vld [vmem:[%s5 + $0x48] sm:$0xff]
    %v10200 = vld [vmem:[%s5 + $0x50] sm:$0xff]
    %v10201 = vld [vmem:[%s5 + $0x58] sm:$0xff]
    %v10202 = vld [vmem:[%s5 + $0x60] sm:$0xff]
    %v10203 = vld [vmem:[%s5 + $0x68] sm:$0xff]
    %v10204 = vld [vmem:[%s5 + $0x70] sm:$0xff]
    %v10205 = vld [vmem:[%s5 + $0x78] sm:$0xff]
    %v10207 = vsel %vm5458, %v10190, 0
    %v10210 = vsel %vm5458, %v10191, 0
    %v10213 = vsel %vm5458, %v10192, 0
    %v10216 = vsel %vm5458, %v10193, 0
    %v10219 = vsel %vm5458, %v10194, 0
    %v10222 = vsel %vm5458, %v10195, 0
    %v10225 = vsel %vm5458, %v10196, 0
    %v10228 = vsel %vm5458, %v10197, 0
    %v10231 = vsel %vm5458, %v10198, 0
    %v10234 = vsel %vm5458, %v10199, 0
    %v10237 = vsel %vm5458, %v10200, 0
    %v10240 = vsel %vm5458, %v10201, 0
    %v10243 = vsel %vm5458, %v10202, 0
    %v10246 = vsel %vm5458, %v10203, 0
    %v10249 = vsel %vm5458, %v10204, 0
    %v10252 = vsel %vm5458, %v10205, 0
    %10254 = vmatprep.subr.mxu0 0.0
    %10255 = vmatpush1.msra.mxu0 %v5364
    %10256 = vmatprep.subr.mxu0 0.0
    %10257 = vmatpush1.msra.mxu0 %v5367
    %10258 = vmatprep.subr.mxu0 0.0
    %10259 = vmatpush1.msra.mxu0 %v5372
    %10260 = vmatprep.subr.mxu0 0.0
    %10261 = vmatpush1.msra.mxu0 %v5375
    %10262 = vmatprep.subr.mxu0 0.0
    %10263 = vmatpush1.msra.mxu0 0.0
    %10264 = vmatprep.subr.mxu0 0.0
    %10265 = vmatpush1.msra.mxu0 0.0
    %10266 = vmatprep.subr.mxu0 0.0
    %10267 = vmatpush1.msra.mxu0 0.0
    %10268 = vmatprep.subr.mxu0 0.0
    %10269 = vmatpush1.msra.mxu0 0.0
    %10270 = vmatprep.subr.mxu0 0.0
    %10271 = vmatpush1.msra.mxu0 0.0
    %10272 = vmatprep.subr.mxu0 0.0
    %10273 = vmatpush1.msra.mxu0 0.0
    %10274 = vmatprep.subr.mxu0 0.0
    %10275 = vmatpush1.msra.mxu0 0.0
    %10276 = vmatprep.subr.mxu0 0.0
    %10277 = vmatpush1.msra.mxu0 0.0
    %10278 = vmatprep.subr.mxu0 0.0
    %10279 = vmatpush1.msra.mxu0 0.0
    %10280 = vmatprep.subr.mxu0 0.0
    %10281 = vmatpush1.msra.mxu0 0.0
    %10282 = vmatprep.subr.mxu0 0.0
    %10283 = vmatpush1.msra.mxu0 0.0
    %10284 = vmatprep.subr.mxu0 0.0
    %10285 = vmatpush1.msra.mxu0 0.0
    %10286 = vmatprep.subr.mxu0 0.0
    %10287 = vmatpush1.msra.mxu0 0.0
    %10288 = vmatprep.subr.mxu0 0.0
    %10289 = vmatpush1.msra.mxu0 0.0
    %10290 = vmatprep.subr.mxu0 0.0
    %10291 = vmatpush1.msra.mxu0 0.0
    %10292 = vmatprep.subr.mxu0 0.0
    %10293 = vmatpush1.msra.mxu0 0.0
    %10294 = vmatprep.subr.mxu0 0.0
    %10295 = vmatpush1.msra.mxu0 0.0
    %10296 = vmatprep.subr.mxu0 0.0
    %10297 = vmatpush1.msra.mxu0 0.0
    %10298 = vmatprep.subr.mxu0 0.0
    %10299 = vmatpush1.msra.mxu0 0.0
    %10300 = vmatprep.subr.mxu0 0.0
    %10301 = vmatpush1.msra.mxu0 0.0
    %10302 = vmatprep.subr.mxu0 0.0
    %10303 = vmatpush1.msra.mxu0 0.0
    %10304 = vmatprep.subr.mxu0 0.0
    %10305 = vmatpush1.msra.mxu0 0.0
    %10306 = vmatprep.subr.mxu0 0.0
    %10307 = vmatpush1.msra.mxu0 0.0
    %10308 = vmatprep.subr.mxu0 0.0
    %10309 = vmatpush1.msra.mxu0 0.0
    %10310 = vmatprep.subr.mxu0 0.0
    %10311 = vmatpush1.msra.mxu0 0.0
    %10312 = vmatprep.subr.mxu0 0.0
    %10313 = vmatpush1.msra.mxu0 0.0
    %10314 = vmatprep.subr.mxu0 0.0
    %10315 = vmatpush1.msra.mxu0 0.0
    %10316 = vmatprep.subr.mxu0 0.0
    %10317 = vmatpush1.msra.mxu0 0.0
    %10318 = vmatprep.mubr.f32.mxu0 0.0
    %10319 = vmatmul.mubr.f32.gmra.mrb[0].mxu0 %v10207
    %v10320 = vpop.f32.mrb[0].mxu0
    %v10321 = vadd.f32 0.0, %v10320
    %v10322 = vpop.f32.mrb[0].mxu0
    %10323 = vmatprep.mubr.f32.mxu0 0.0
    %10324 = vmatmul.mubr.f32.gmra.mrb[0].mxu0 %v10210
    %v10325 = vpop.f32.mrb[0].mxu0
    %v10326 = vadd.f32 0.0, %v10325
    %v10327 = vpop.f32.mrb[0].mxu0
    %10328 = vmatprep.mubr.f32.mxu0 0.0
    %10329 = vmatmul.mubr.f32.gmra.mrb[0].mxu0 %v10213
    %v10330 = vpop.f32.mrb[0].mxu0
    %v10331 = vadd.f32 0.0, %v10330
    %v10332 = vpop.f32.mrb[0].mxu0
    %10333 = vmatprep.mubr.f32.mxu0 0.0
    %10334 = vmatmul.mubr.f32.gmra.mrb[0].mxu0 %v10216
    %v10335 = vpop.f32.mrb[0].mxu0
    %v10336 = vadd.f32 0.0, %v10335
    %v10337 = vpop.f32.mrb[0].mxu0
    %10338 = vmatprep.mubr.f32.mxu0 0.0
    %10339 = vmatmul.mubr.f32.gmra.mrb[0].mxu0 %v10219
    %v10340 = vpop.f32.mrb[0].mxu0
    %v10341 = vadd.f32 0.0, %v10340
    %v10342 = vpop.f32.mrb[0].mxu0
    %10343 = vmatprep.mubr.f32.mxu0 0.0
    %10344 = vmatmul.mubr.f32.gmra.mrb[0].mxu0 %v10222
    %v10345 = vpop.f32.mrb[0].mxu0
    %v10346 = vadd.f32 0.0, %v10345
    %v10347 = vpop.f32.mrb[0].mxu0
    %10348 = vmatprep.mubr.f32.mxu0 0.0
    %10349 = vmatmul.mubr.f32.gmra.mrb[0].mxu0 %v10225
    %v10350 = vpop.f32.mrb[0].mxu0
    %v10351 = vadd.f32 0.0, %v10350
    %v10352 = vpop.f32.mrb[0].mxu0
    %10353 = vmatprep.mubr.f32.mxu0 0.0
    %10354 = vmatmul.mubr.f32.gmra.mrb[0].mxu0 %v10228
    %v10355 = vpop.f32.mrb[0].mxu0
    %v10356 = vadd.f32 0.0, %v10355
    %v10357 = vpop.f32.mrb[0].mxu0
    %10358 = vmatprep.mubr.f32.mxu0 0.0
    %10359 = vmatmul.mubr.f32.gmra.mrb[0].mxu0 %v10231
    %v10360 = vpop.f32.mrb[0].mxu0
    %v10361 = vadd.f32 0.0, %v10360
    %v10362 = vpop.f32.mrb[0].mxu0
    %10363 = vmatprep.mubr.f32.mxu0 0.0
    %10364 = vmatmul.mubr.f32.gmra.mrb[0].mxu0 %v10234
    %v10365 = vpop.f32.mrb[0].mxu0
    %v10366 = vadd.f32 0.0, %v10365
    %v10367 = vpop.f32.mrb[0].mxu0
    %10368 = vmatprep.mubr.f32.mxu0 0.0
    %10369 = vmatmul.mubr.f32.gmra.mrb[0].mxu0 %v10237
    %v10370 = vpop.f32.mrb[0].mxu0
    %v10371 = vadd.f32 0.0, %v10370
    %v10372 = vpop.f32.mrb[0].mxu0
    %10373 = vmatprep.mubr.f32.mxu0 0.0
    %10374 = vmatmul.mubr.f32.gmra.mrb[0].mxu0 %v10240
    %v10375 = vpop.f32.mrb[0].mxu0
    %v10376 = vadd.f32 0.0, %v10375
    %v10377 = vpop.f32.mrb[0].mxu0
    %10378 = vmatprep.mubr.f32.mxu0 0.0
    %10379 = vmatmul.mubr.f32.gmra.mrb[0].mxu0 %v10243
    %v10380 = vpop.f32.mrb[0].mxu0
    %v10381 = vadd.f32 0.0, %v10380
    %v10382 = vpop.f32.mrb[0].mxu0
    %10383 = vmatprep.mubr.f32.mxu0 0.0
    %10384 = vmatmul.mubr.f32.gmra.mrb[0].mxu0 %v10246
    %v10385 = vpop.f32.mrb[0].mxu0
    %v10386 = vadd.f32 0.0, %v10385
    %v10387 = vpop.f32.mrb[0].mxu0
    %10388 = vmatprep.mubr.f32.mxu0 0.0
    %10389 = vmatmul.mubr.f32.gmra.mrb[0].mxu0 %v10249
    %v10390 = vpop.f32.mrb[0].mxu0
    %v10391 = vadd.f32 0.0, %v10390
    %v10392 = vpop.f32.mrb[0].mxu0
    %10393 = vmatprep.mubr.f32.mxu0 0.0
    %10394 = vmatmul.mubr.f32.gmra.mrb[0].mxu0 %v10252
    %v10395 = vpop.f32.mrb[0].mxu0
    %v10396 = vadd.f32 0.0, %v10395
    %v10397 = vpop.f32.mrb[0].mxu0
    %10398 = vdwg.mxu0
    %v10399 = vmul.f32 %v10321, 2.0
    %v10400 = vmul.f32 %v10326, 2.0
    %v10401 = vmul.f32 %v10331, 2.0
    %v10402 = vmul.f32 %v10336, 2.0
    %v10403 = vmul.f32 %v10341, 2.0
    %v10404 = vmul.f32 %v10346, 2.0
    %v10405 = vmul.f32 %v10351, 2.0
    %v10406 = vmul.f32 %v10356, 2.0
    %v10407 = vmul.f32 %v10361, 2.0
    %v10408 = vmul.f32 %v10366, 2.0
    %v10409 = vmul.f32 %v10371, 2.0
    %v10410 = vmul.f32 %v10376, 2.0
    %v10411 = vmul.f32 %v10381, 2.0
    %v10412 = vmul.f32 %v10386, 2.0
    %v10413 = vmul.f32 %v10391, 2.0
    %v10414 = vmul.f32 %v10396, 2.0
    %v10415 = vld [vmem:[%s6] sm:$0xff]
    %v10416 = vld [vmem:[%s6 + $0x8] sm:$0xff]
    %v10417 = vld [vmem:[%s6 + $0x10] sm:$0xff]
    %v10418 = vld [vmem:[%s6 + $0x18] sm:$0xff]
    %v10419 = vld [vmem:[%s6 + $0x20] sm:$0xff]
    %v10420 = vld [vmem:[%s6 + $0x28] sm:$0xff]
    %v10421 = vld [vmem:[%s6 + $0x30] sm:$0xff]
    %v10422 = vld [vmem:[%s6 + $0x38] sm:$0xff]
    %v10423 = vld [vmem:[%s6 + $0x40] sm:$0xff]
    %v10424 = vld [vmem:[%s6 + $0x48] sm:$0xff]
    %v10425 = vld [vmem:[%s6 + $0x50] sm:$0xff]
    %v10426 = vld [vmem:[%s6 + $0x58] sm:$0xff]
    %v10427 = vld [vmem:[%s6 + $0x60] sm:$0xff]
    %v10428 = vld [vmem:[%s6 + $0x68] sm:$0xff]
    %v10429 = vld [vmem:[%s6 + $0x70] sm:$0xff]
    %v10430 = vld [vmem:[%s6 + $0x78] sm:$0xff]
    %10432 = vset.pattern.permute.xlu0 0
    %10433 = vperm.xlu0 %10432, %v10415
    %v10434 = vpop.permute.xlu0 %10433
    %10437 = vset.pattern.permute.xlu0 0
    %10438 = vperm.xlu0 %10437, %v10416
    %v10439 = vpop.permute.xlu0 %10438
    %10442 = vset.pattern.permute.xlu0 0
    %10443 = vperm.xlu0 %10442, %v10417
    %v10444 = vpop.permute.xlu0 %10443
    %10447 = vset.pattern.permute.xlu0 0
    %10448 = vperm.xlu0 %10447, %v10418
    %v10449 = vpop.permute.xlu0 %10448
    %10452 = vset.pattern.permute.xlu0 0
    %10453 = vperm.xlu0 %10452, %v10419
    %v10454 = vpop.permute.xlu0 %10453
    %10457 = vset.pattern.permute.xlu0 0
    %10458 = vperm.xlu0 %10457, %v10420
    %v10459 = vpop.permute.xlu0 %10458
    %10462 = vset.pattern.permute.xlu0 0
    %10463 = vperm.xlu0 %10462, %v10421
    %v10464 = vpop.permute.xlu0 %10463
    %10467 = vset.pattern.permute.xlu0 0
    %10468 = vperm.xlu0 %10467, %v10422
    %v10469 = vpop.permute.xlu0 %10468
    %10472 = vset.pattern.permute.xlu0 0
    %10473 = vperm.xlu0 %10472, %v10423
    %v10474 = vpop.permute.xlu0 %10473
    %10477 = vset.pattern.permute.xlu0 0
    %10478 = vperm.xlu0 %10477, %v10424
    %v10479 = vpop.permute.xlu0 %10478
    %10482 = vset.pattern.permute.xlu0 0
    %10483 = vperm.xlu0 %10482, %v10425
    %v10484 = vpop.permute.xlu0 %10483
    %10487 = vset.pattern.permute.xlu0 0
    %10488 = vperm.xlu0 %10487, %v10426
    %v10489 = vpop.permute.xlu0 %10488
    %10492 = vset.pattern.permute.xlu0 0
    %10493 = vperm.xlu0 %10492, %v10427
    %v10494 = vpop.permute.xlu0 %10493
    %10497 = vset.pattern.permute.xlu0 0
    %10498 = vperm.xlu0 %10497, %v10428
    %v10499 = vpop.permute.xlu0 %10498
    %10502 = vset.pattern.permute.xlu0 0
    %10503 = vperm.xlu0 %10502, %v10429
    %v10504 = vpop.permute.xlu0 %10503
    %10507 = vset.pattern.permute.xlu0 0
    %10508 = vperm.xlu0 %10507, %v10430
    %v10509 = vpop.permute.xlu0 %10508
    %v10511 = vsub.f32 %v10399, %v10434
    %v10512 = vsub.f32 %v10400, %v10439
    %v10513 = vsub.f32 %v10401, %v10444
    %v10514 = vsub.f32 %v10402, %v10449
    %v10515 = vsub.f32 %v10403, %v10454
    %v10516 = vsub.f32 %v10404, %v10459
    %v10517 = vsub.f32 %v10405, %v10464
    %v10518 = vsub.f32 %v10406, %v10469
    %v10519 = vsub.f32 %v10407, %v10474
    %v10520 = vsub.f32 %v10408, %v10479
    %v10521 = vsub.f32 %v10409, %v10484
    %v10522 = vsub.f32 %v10410, %v10489
    %v10523 = vsub.f32 %v10411, %v10494
    %v10524 = vsub.f32 %v10412, %v10499
    %v10525 = vsub.f32 %v10413, %v10504
    %v10526 = vsub.f32 %v10414, %v10509
    %v10527 = vmax.f32 %v10511, %v10515
    %v10528 = vmax.f32 %v10512, %v10516
    %v10529 = vmax.f32 %v10513, %v10517
    %v10530 = vmax.f32 %v10514, %v10518
    %v10531 = vmax.f32 %v10527, %v10519
    %v10532 = vmax.f32 %v10528, %v10520
    %v10533 = vmax.f32 %v10529, %v10521
    %v10534 = vmax.f32 %v10530, %v10522
    %v10535 = vmax.f32 %v10531, %v10523
    %v10536 = vmax.f32 %v10532, %v10524
    %v10537 = vmax.f32 %v10533, %v10525
    %v10538 = vmax.f32 %v10534, %v10526
    %v10539 = vmax.f32 %v10535, %v10536
    %v10540 = vmax.f32 %v10537, %v10538
    %v10541 = vmax.f32 %v10539, %v10540
    %v10542 = vrot.slane %v10541, 4
    %v10543 = vmax.f32 %v10541, %v10542
    %v10544 = vrot.slane %v10543, 2
    %v10545 = vmax.f32 %v10543, %v10544
    %v10546 = vrot.slane %v10545, 1
    %v10547 = vmax.f32 %v10545, %v10546
    %vm10548 = vcmp.ge.f32.partialorder %v10511, %v10547
    %vm10549 = vcmp.ge.f32.partialorder %v10512, %v10547
    %vm10550 = vcmp.ge.f32.partialorder %v10513, %v10547
    %vm10551 = vcmp.ge.f32.partialorder %v10514, %v10547
    %vm10552 = vcmp.ge.f32.partialorder %v10515, %v10547
    %vm10553 = vcmp.ge.f32.partialorder %v10516, %v10547
    %vm10554 = vcmp.ge.f32.partialorder %v10517, %v10547
    %vm10555 = vcmp.ge.f32.partialorder %v10518, %v10547
    %vm10556 = vcmp.ge.f32.partialorder %v10519, %v10547
    %vm10557 = vcmp.ge.f32.partialorder %v10520, %v10547
    %vm10558 = vcmp.ge.f32.partialorder %v10521, %v10547
    %vm10559 = vcmp.ge.f32.partialorder %v10522, %v10547
    %vm10560 = vcmp.ge.f32.partialorder %v10523, %v10547
    %vm10561 = vcmp.ge.f32.partialorder %v10524, %v10547
    %vm10562 = vcmp.ge.f32.partialorder %v10525, %v10547
    %vm10563 = vcmp.ge.f32.partialorder %v10526, %v10547
    %v10564 = vsel %vm10548, %v5802, 128
    %v10565 = vsel %vm10549, %v5803, 128
    %v10566 = vsel %vm10550, %v5804, 128
    %v10567 = vsel %vm10551, %v5805, 128
    %v10568 = vsel %vm10552, %v5806, 128
    %v10569 = vsel %vm10553, %v5807, 128
    %v10570 = vsel %vm10554, %v5808, 128
    %v10571 = vsel %vm10555, %v5809, 128
    %v10572 = vsel %vm10556, %v5810, 128
    %v10573 = vsel %vm10557, %v5811, 128
    %v10574 = vsel %vm10558, %v5812, 128
    %v10575 = vsel %vm10559, %v5813, 128
    %v10576 = vsel %vm10560, %v5814, 128
    %v10577 = vsel %vm10561, %v5815, 128
    %v10578 = vsel %vm10562, %v5816, 128
    %v10579 = vsel %vm10563, %v5817, 128
    %vm10580 = vcmp.lt.s32.totalorder %v10564, %v10568
    %v10581 = vsel %vm10580, %v10564, %v10568
    %vm10582 = vcmp.lt.s32.totalorder %v10565, %v10569
    %v10583 = vsel %vm10582, %v10565, %v10569
    %vm10584 = vcmp.lt.s32.totalorder %v10566, %v10570
    %v10585 = vsel %vm10584, %v10566, %v10570
    %vm10586 = vcmp.lt.s32.totalorder %v10567, %v10571
    %v10587 = vsel %vm10586, %v10567, %v10571
    %vm10588 = vcmp.lt.s32.totalorder %v10581, %v10572
    %v10589 = vsel %vm10588, %v10581, %v10572
    %vm10590 = vcmp.lt.s32.totalorder %v10583, %v10573
    %v10591 = vsel %vm10590, %v10583, %v10573
    %vm10592 = vcmp.lt.s32.totalorder %v10585, %v10574
    %v10593 = vsel %vm10592, %v10585, %v10574
    %vm10594 = vcmp.lt.s32.totalorder %v10587, %v10575
    %v10595 = vsel %vm10594, %v10587, %v10575
    %vm10596 = vcmp.lt.s32.totalorder %v10589, %v10576
    %v10597 = vsel %vm10596, %v10589, %v10576
    %vm10598 = vcmp.lt.s32.totalorder %v10591, %v10577
    %v10599 = vsel %vm10598, %v10591, %v10577
    %vm10600 = vcmp.lt.s32.totalorder %v10593, %v10578
    %v10601 = vsel %vm10600, %v10593, %v10578
    %vm10602 = vcmp.lt.s32.totalorder %v10595, %v10579
    %v10603 = vsel %vm10602, %v10595, %v10579
    %vm10604 = vcmp.lt.s32.totalorder %v10597, %v10599
    %v10605 = vsel %vm10604, %v10597, %v10599
    %vm10606 = vcmp.lt.s32.totalorder %v10601, %v10603
    %v10607 = vsel %vm10606, %v10601, %v10603
    %vm10608 = vcmp.lt.s32.totalorder %v10605, %v10607
    %v10609 = vsel %vm10608, %v10605, %v10607
    %v10610 = vrot.slane %v10609, 4
    %vm10611 = vcmp.lt.s32.totalorder %v10609, %v10610
    %v10612 = vsel %vm10611, %v10609, %v10610
    %v10613 = vrot.slane %v10612, 2
    %vm10614 = vcmp.lt.s32.totalorder %v10612, %v10613
    %v10615 = vsel %vm10614, %v10612, %v10613
    %v10616 = vrot.slane %v10615, 1
    %vm10617 = vcmp.lt.s32.totalorder %v10615, %v10616
    %v10618 = vsel %vm10617, %v10615, %v10616
    %10619 = vst [vmem:[#allocation5 + $0xb] sm:$0x1] %v10618
    %v10620 = vld [vmem:[%s5] sm:$0xff]
    %v10621 = vld [vmem:[%s5 + $0x8] sm:$0xff]
    %v10622 = vld [vmem:[%s5 + $0x10] sm:$0xff]
    %v10623 = vld [vmem:[%s5 + $0x18] sm:$0xff]
    %v10624 = vld [vmem:[%s5 + $0x20] sm:$0xff]
    %v10625 = vld [vmem:[%s5 + $0x28] sm:$0xff]
    %v10626 = vld [vmem:[%s5 + $0x30] sm:$0xff]
    %v10627 = vld [vmem:[%s5 + $0x38] sm:$0xff]
    %v10628 = vld [vmem:[%s5 + $0x40] sm:$0xff]
    %v10629 = vld [vmem:[%s5 + $0x48] sm:$0xff]
    %v10630 = vld [vmem:[%s5 + $0x50] sm:$0xff]
    %v10631 = vld [vmem:[%s5 + $0x58] sm:$0xff]
    %v10632 = vld [vmem:[%s5 + $0x60] sm:$0xff]
    %v10633 = vld [vmem:[%s5 + $0x68] sm:$0xff]
    %v10634 = vld [vmem:[%s5 + $0x70] sm:$0xff]
    %v10635 = vld [vmem:[%s5 + $0x78] sm:$0xff]
    %v10637 = vsel %vm5458, %v10620, 0
    %v10640 = vsel %vm5458, %v10621, 0
    %v10643 = vsel %vm5458, %v10622, 0
    %v10646 = vsel %vm5458, %v10623, 0
    %v10649 = vsel %vm5458, %v10624, 0
    %v10652 = vsel %vm5458, %v10625, 0
    %v10655 = vsel %vm5458, %v10626, 0
    %v10658 = vsel %vm5458, %v10627, 0
    %v10661 = vsel %vm5458, %v10628, 0
    %v10664 = vsel %vm5458, %v10629, 0
    %v10667 = vsel %vm5458, %v10630, 0
    %v10670 = vsel %vm5458, %v10631, 0
    %v10673 = vsel %vm5458, %v10632, 0
    %v10676 = vsel %vm5458, %v10633, 0
    %v10679 = vsel %vm5458, %v10634, 0
    %v10682 = vsel %vm5458, %v10635, 0
    %10684 = vmatprep.subr.mxu0 0.0
    %10685 = vmatpush1.msra.mxu0 %v5380
    %10686 = vmatprep.subr.mxu0 0.0
    %10687 = vmatpush1.msra.mxu0 %v5383
    %10688 = vmatprep.subr.mxu0 0.0
    %10689 = vmatpush1.msra.mxu0 %v5388
    %10690 = vmatprep.subr.mxu0 0.0
    %10691 = vmatpush1.msra.mxu0 %v5391
    %10692 = vmatprep.subr.mxu0 0.0
    %10693 = vmatpush1.msra.mxu0 0.0
    %10694 = vmatprep.subr.mxu0 0.0
    %10695 = vmatpush1.msra.mxu0 0.0
    %10696 = vmatprep.subr.mxu0 0.0
    %10697 = vmatpush1.msra.mxu0 0.0
    %10698 = vmatprep.subr.mxu0 0.0
    %10699 = vmatpush1.msra.mxu0 0.0
    %10700 = vmatprep.subr.mxu0 0.0
    %10701 = vmatpush1.msra.mxu0 0.0
    %10702 = vmatprep.subr.mxu0 0.0
    %10703 = vmatpush1.msra.mxu0 0.0
    %10704 = vmatprep.subr.mxu0 0.0
    %10705 = vmatpush1.msra.mxu0 0.0
    %10706 = vmatprep.subr.mxu0 0.0
    %10707 = vmatpush1.msra.mxu0 0.0
    %10708 = vmatprep.subr.mxu0 0.0
    %10709 = vmatpush1.msra.mxu0 0.0
    %10710 = vmatprep.subr.mxu0 0.0
    %10711 = vmatpush1.msra.mxu0 0.0
    %10712 = vmatprep.subr.mxu0 0.0
    %10713 = vmatpush1.msra.mxu0 0.0
    %10714 = vmatprep.subr.mxu0 0.0
    %10715 = vmatpush1.msra.mxu0 0.0
    %10716 = vmatprep.subr.mxu0 0.0
    %10717 = vmatpush1.msra.mxu0 0.0
    %10718 = vmatprep.subr.mxu0 0.0
    %10719 = vmatpush1.msra.mxu0 0.0
    %10720 = vmatprep.subr.mxu0 0.0
    %10721 = vmatpush1.msra.mxu0 0.0
    %10722 = vmatprep.subr.mxu0 0.0
    %10723 = vmatpush1.msra.mxu0 0.0
    %10724 = vmatprep.subr.mxu0 0.0
    %10725 = vmatpush1.msra.mxu0 0.0
    %10726 = vmatprep.subr.mxu0 0.0
    %10727 = vmatpush1.msra.mxu0 0.0
    %10728 = vmatprep.subr.mxu0 0.0
    %10729 = vmatpush1.msra.mxu0 0.0
    %10730 = vmatprep.subr.mxu0 0.0
    %10731 = vmatpush1.msra.mxu0 0.0
    %10732 = vmatprep.subr.mxu0 0.0
    %10733 = vmatpush1.msra.mxu0 0.0
    %10734 = vmatprep.subr.mxu0 0.0
    %10735 = vmatpush1.msra.mxu0 0.0
    %10736 = vmatprep.subr.mxu0 0.0
    %10737 = vmatpush1.msra.mxu0 0.0
    %10738 = vmatprep.subr.mxu0 0.0
    %10739 = vmatpush1.msra.mxu0 0.0
    %10740 = vmatprep.subr.mxu0 0.0
    %10741 = vmatpush1.msra.mxu0 0.0
    %10742 = vmatprep.subr.mxu0 0.0
    %10743 = vmatpush1.msra.mxu0 0.0
    %10744 = vmatprep.subr.mxu0 0.0
    %10745 = vmatpush1.msra.mxu0 0.0
    %10746 = vmatprep.subr.mxu0 0.0
    %10747 = vmatpush1.msra.mxu0 0.0
    %10748 = vmatprep.mubr.f32.mxu0 0.0
    %10749 = vmatmul.mubr.f32.gmra.mrb[0].mxu0 %v10637
    %v10750 = vpop.f32.mrb[0].mxu0
    %v10751 = vadd.f32 0.0, %v10750
    %v10752 = vpop.f32.mrb[0].mxu0
    %10753 = vmatprep.mubr.f32.mxu0 0.0
    %10754 = vmatmul.mubr.f32.gmra.mrb[0].mxu0 %v10640
    %v10755 = vpop.f32.mrb[0].mxu0
    %v10756 = vadd.f32 0.0, %v10755
    %v10757 = vpop.f32.mrb[0].mxu0
    %10758 = vmatprep.mubr.f32.mxu0 0.0
    %10759 = vmatmul.mubr.f32.gmra.mrb[0].mxu0 %v10643
    %v10760 = vpop.f32.mrb[0].mxu0
    %v10761 = vadd.f32 0.0, %v10760
    %v10762 = vpop.f32.mrb[0].mxu0
    %10763 = vmatprep.mubr.f32.mxu0 0.0
    %10764 = vmatmul.mubr.f32.gmra.mrb[0].mxu0 %v10646
    %v10765 = vpop.f32.mrb[0].mxu0
    %v10766 = vadd.f32 0.0, %v10765
    %v10767 = vpop.f32.mrb[0].mxu0
    %10768 = vmatprep.mubr.f32.mxu0 0.0
    %10769 = vmatmul.mubr.f32.gmra.mrb[0].mxu0 %v10649
    %v10770 = vpop.f32.mrb[0].mxu0
    %v10771 = vadd.f32 0.0, %v10770
    %v10772 = vpop.f32.mrb[0].mxu0
    %10773 = vmatprep.mubr.f32.mxu0 0.0
    %10774 = vmatmul.mubr.f32.gmra.mrb[0].mxu0 %v10652
    %v10775 = vpop.f32.mrb[0].mxu0
    %v10776 = vadd.f32 0.0, %v10775
    %v10777 = vpop.f32.mrb[0].mxu0
    %10778 = vmatprep.mubr.f32.mxu0 0.0
    %10779 = vmatmul.mubr.f32.gmra.mrb[0].mxu0 %v10655
    %v10780 = vpop.f32.mrb[0].mxu0
    %v10781 = vadd.f32 0.0, %v10780
    %v10782 = vpop.f32.mrb[0].mxu0
    %10783 = vmatprep.mubr.f32.mxu0 0.0
    %10784 = vmatmul.mubr.f32.gmra.mrb[0].mxu0 %v10658
    %v10785 = vpop.f32.mrb[0].mxu0
    %v10786 = vadd.f32 0.0, %v10785
    %v10787 = vpop.f32.mrb[0].mxu0
    %10788 = vmatprep.mubr.f32.mxu0 0.0
    %10789 = vmatmul.mubr.f32.gmra.mrb[0].mxu0 %v10661
    %v10790 = vpop.f32.mrb[0].mxu0
    %v10791 = vadd.f32 0.0, %v10790
    %v10792 = vpop.f32.mrb[0].mxu0
    %10793 = vmatprep.mubr.f32.mxu0 0.0
    %10794 = vmatmul.mubr.f32.gmra.mrb[0].mxu0 %v10664
    %v10795 = vpop.f32.mrb[0].mxu0
    %v10796 = vadd.f32 0.0, %v10795
    %v10797 = vpop.f32.mrb[0].mxu0
    %10798 = vmatprep.mubr.f32.mxu0 0.0
    %10799 = vmatmul.mubr.f32.gmra.mrb[0].mxu0 %v10667
    %v10800 = vpop.f32.mrb[0].mxu0
    %v10801 = vadd.f32 0.0, %v10800
    %v10802 = vpop.f32.mrb[0].mxu0
    %10803 = vmatprep.mubr.f32.mxu0 0.0
    %10804 = vmatmul.mubr.f32.gmra.mrb[0].mxu0 %v10670
    %v10805 = vpop.f32.mrb[0].mxu0
    %v10806 = vadd.f32 0.0, %v10805
    %v10807 = vpop.f32.mrb[0].mxu0
    %10808 = vmatprep.mubr.f32.mxu0 0.0
    %10809 = vmatmul.mubr.f32.gmra.mrb[0].mxu0 %v10673
    %v10810 = vpop.f32.mrb[0].mxu0
    %v10811 = vadd.f32 0.0, %v10810
    %v10812 = vpop.f32.mrb[0].mxu0
    %10813 = vmatprep.mubr.f32.mxu0 0.0
    %10814 = vmatmul.mubr.f32.gmra.mrb[0].mxu0 %v10676
    %v10815 = vpop.f32.mrb[0].mxu0
    %v10816 = vadd.f32 0.0, %v10815
    %v10817 = vpop.f32.mrb[0].mxu0
    %10818 = vmatprep.mubr.f32.mxu0 0.0
    %10819 = vmatmul.mubr.f32.gmra.mrb[0].mxu0 %v10679
    %v10820 = vpop.f32.mrb[0].mxu0
    %v10821 = vadd.f32 0.0, %v10820
    %v10822 = vpop.f32.mrb[0].mxu0
    %10823 = vmatprep.mubr.f32.mxu0 0.0
    %10824 = vmatmul.mubr.f32.gmra.mrb[0].mxu0 %v10682
    %v10825 = vpop.f32.mrb[0].mxu0
    %v10826 = vadd.f32 0.0, %v10825
    %v10827 = vpop.f32.mrb[0].mxu0
    %10828 = vdwg.mxu0
    %v10829 = vmul.f32 %v10751, 2.0
    %v10830 = vmul.f32 %v10756, 2.0
    %v10831 = vmul.f32 %v10761, 2.0
    %v10832 = vmul.f32 %v10766, 2.0
    %v10833 = vmul.f32 %v10771, 2.0
    %v10834 = vmul.f32 %v10776, 2.0
    %v10835 = vmul.f32 %v10781, 2.0
    %v10836 = vmul.f32 %v10786, 2.0
    %v10837 = vmul.f32 %v10791, 2.0
    %v10838 = vmul.f32 %v10796, 2.0
    %v10839 = vmul.f32 %v10801, 2.0
    %v10840 = vmul.f32 %v10806, 2.0
    %v10841 = vmul.f32 %v10811, 2.0
    %v10842 = vmul.f32 %v10816, 2.0
    %v10843 = vmul.f32 %v10821, 2.0
    %v10844 = vmul.f32 %v10826, 2.0
    %v10845 = vld [vmem:[%s6] sm:$0xff]
    %v10846 = vld [vmem:[%s6 + $0x8] sm:$0xff]
    %v10847 = vld [vmem:[%s6 + $0x10] sm:$0xff]
    %v10848 = vld [vmem:[%s6 + $0x18] sm:$0xff]
    %v10849 = vld [vmem:[%s6 + $0x20] sm:$0xff]
    %v10850 = vld [vmem:[%s6 + $0x28] sm:$0xff]
    %v10851 = vld [vmem:[%s6 + $0x30] sm:$0xff]
    %v10852 = vld [vmem:[%s6 + $0x38] sm:$0xff]
    %v10853 = vld [vmem:[%s6 + $0x40] sm:$0xff]
    %v10854 = vld [vmem:[%s6 + $0x48] sm:$0xff]
    %v10855 = vld [vmem:[%s6 + $0x50] sm:$0xff]
    %v10856 = vld [vmem:[%s6 + $0x58] sm:$0xff]
    %v10857 = vld [vmem:[%s6 + $0x60] sm:$0xff]
    %v10858 = vld [vmem:[%s6 + $0x68] sm:$0xff]
    %v10859 = vld [vmem:[%s6 + $0x70] sm:$0xff]
    %v10860 = vld [vmem:[%s6 + $0x78] sm:$0xff]
    %10862 = vset.pattern.permute.xlu0 0
    %10863 = vperm.xlu0 %10862, %v10845
    %v10864 = vpop.permute.xlu0 %10863
    %10867 = vset.pattern.permute.xlu0 0
    %10868 = vperm.xlu0 %10867, %v10846
    %v10869 = vpop.permute.xlu0 %10868
    %10872 = vset.pattern.permute.xlu0 0
    %10873 = vperm.xlu0 %10872, %v10847
    %v10874 = vpop.permute.xlu0 %10873
    %10877 = vset.pattern.permute.xlu0 0
    %10878 = vperm.xlu0 %10877, %v10848
    %v10879 = vpop.permute.xlu0 %10878
    %10882 = vset.pattern.permute.xlu0 0
    %10883 = vperm.xlu0 %10882, %v10849
    %v10884 = vpop.permute.xlu0 %10883
    %10887 = vset.pattern.permute.xlu0 0
    %10888 = vperm.xlu0 %10887, %v10850
    %v10889 = vpop.permute.xlu0 %10888
    %10892 = vset.pattern.permute.xlu0 0
    %10893 = vperm.xlu0 %10892, %v10851
    %v10894 = vpop.permute.xlu0 %10893
    %10897 = vset.pattern.permute.xlu0 0
    %10898 = vperm.xlu0 %10897, %v10852
    %v10899 = vpop.permute.xlu0 %10898
    %10902 = vset.pattern.permute.xlu0 0
    %10903 = vperm.xlu0 %10902, %v10853
    %v10904 = vpop.permute.xlu0 %10903
    %10907 = vset.pattern.permute.xlu0 0
    %10908 = vperm.xlu0 %10907, %v10854
    %v10909 = vpop.permute.xlu0 %10908
    %10912 = vset.pattern.permute.xlu0 0
    %10913 = vperm.xlu0 %10912, %v10855
    %v10914 = vpop.permute.xlu0 %10913
    %10917 = vset.pattern.permute.xlu0 0
    %10918 = vperm.xlu0 %10917, %v10856
    %v10919 = vpop.permute.xlu0 %10918
    %10922 = vset.pattern.permute.xlu0 0
    %10923 = vperm.xlu0 %10922, %v10857
    %v10924 = vpop.permute.xlu0 %10923
    %10927 = vset.pattern.permute.xlu0 0
    %10928 = vperm.xlu0 %10927, %v10858
    %v10929 = vpop.permute.xlu0 %10928
    %10932 = vset.pattern.permute.xlu0 0
    %10933 = vperm.xlu0 %10932, %v10859
    %v10934 = vpop.permute.xlu0 %10933
    %10937 = vset.pattern.permute.xlu0 0
    %10938 = vperm.xlu0 %10937, %v10860
    %v10939 = vpop.permute.xlu0 %10938
    %v10941 = vsub.f32 %v10829, %v10864
    %v10942 = vsub.f32 %v10830, %v10869
    %v10943 = vsub.f32 %v10831, %v10874
    %v10944 = vsub.f32 %v10832, %v10879
    %v10945 = vsub.f32 %v10833, %v10884
    %v10946 = vsub.f32 %v10834, %v10889
    %v10947 = vsub.f32 %v10835, %v10894
    %v10948 = vsub.f32 %v10836, %v10899
    %v10949 = vsub.f32 %v10837, %v10904
    %v10950 = vsub.f32 %v10838, %v10909
    %v10951 = vsub.f32 %v10839, %v10914
    %v10952 = vsub.f32 %v10840, %v10919
    %v10953 = vsub.f32 %v10841, %v10924
    %v10954 = vsub.f32 %v10842, %v10929
    %v10955 = vsub.f32 %v10843, %v10934
    %v10956 = vsub.f32 %v10844, %v10939
    %v10957 = vmax.f32 %v10941, %v10945
    %v10958 = vmax.f32 %v10942, %v10946
    %v10959 = vmax.f32 %v10943, %v10947
    %v10960 = vmax.f32 %v10944, %v10948
    %v10961 = vmax.f32 %v10957, %v10949
    %v10962 = vmax.f32 %v10958, %v10950
    %v10963 = vmax.f32 %v10959, %v10951
    %v10964 = vmax.f32 %v10960, %v10952
    %v10965 = vmax.f32 %v10961, %v10953
    %v10966 = vmax.f32 %v10962, %v10954
    %v10967 = vmax.f32 %v10963, %v10955
    %v10968 = vmax.f32 %v10964, %v10956
    %v10969 = vmax.f32 %v10965, %v10966
    %v10970 = vmax.f32 %v10967, %v10968
    %v10971 = vmax.f32 %v10969, %v10970
    %v10972 = vrot.slane %v10971, 4
    %v10973 = vmax.f32 %v10971, %v10972
    %v10974 = vrot.slane %v10973, 2
    %v10975 = vmax.f32 %v10973, %v10974
    %v10976 = vrot.slane %v10975, 1
    %v10977 = vmax.f32 %v10975, %v10976
    %vm10978 = vcmp.ge.f32.partialorder %v10941, %v10977
    %vm10979 = vcmp.ge.f32.partialorder %v10942, %v10977
    %vm10980 = vcmp.ge.f32.partialorder %v10943, %v10977
    %vm10981 = vcmp.ge.f32.partialorder %v10944, %v10977
    %vm10982 = vcmp.ge.f32.partialorder %v10945, %v10977
    %vm10983 = vcmp.ge.f32.partialorder %v10946, %v10977
    %vm10984 = vcmp.ge.f32.partialorder %v10947, %v10977
    %vm10985 = vcmp.ge.f32.partialorder %v10948, %v10977
    %vm10986 = vcmp.ge.f32.partialorder %v10949, %v10977
    %vm10987 = vcmp.ge.f32.partialorder %v10950, %v10977
    %vm10988 = vcmp.ge.f32.partialorder %v10951, %v10977
    %vm10989 = vcmp.ge.f32.partialorder %v10952, %v10977
    %vm10990 = vcmp.ge.f32.partialorder %v10953, %v10977
    %vm10991 = vcmp.ge.f32.partialorder %v10954, %v10977
    %vm10992 = vcmp.ge.f32.partialorder %v10955, %v10977
    %vm10993 = vcmp.ge.f32.partialorder %v10956, %v10977
    %v10994 = vsel %vm10978, %v5802, 128
    %v10995 = vsel %vm10979, %v5803, 128
    %v10996 = vsel %vm10980, %v5804, 128
    %v10997 = vsel %vm10981, %v5805, 128
    %v10998 = vsel %vm10982, %v5806, 128
    %v10999 = vsel %vm10983, %v5807, 128
    %v11000 = vsel %vm10984, %v5808, 128
    %v11001 = vsel %vm10985, %v5809, 128
    %v11002 = vsel %vm10986, %v5810, 128
    %v11003 = vsel %vm10987, %v5811, 128
    %v11004 = vsel %vm10988, %v5812, 128
    %v11005 = vsel %vm10989, %v5813, 128
    %v11006 = vsel %vm10990, %v5814, 128
    %v11007 = vsel %vm10991, %v5815, 128
    %v11008 = vsel %vm10992, %v5816, 128
    %v11009 = vsel %vm10993, %v5817, 128
    %vm11010 = vcmp.lt.s32.totalorder %v10994, %v10998
    %v11011 = vsel %vm11010, %v10994, %v10998
    %vm11012 = vcmp.lt.s32.totalorder %v10995, %v10999
    %v11013 = vsel %vm11012, %v10995, %v10999
    %vm11014 = vcmp.lt.s32.totalorder %v10996, %v11000
    %v11015 = vsel %vm11014, %v10996, %v11000
    %vm11016 = vcmp.lt.s32.totalorder %v10997, %v11001
    %v11017 = vsel %vm11016, %v10997, %v11001
    %vm11018 = vcmp.lt.s32.totalorder %v11011, %v11002
    %v11019 = vsel %vm11018, %v11011, %v11002
    %vm11020 = vcmp.lt.s32.totalorder %v11013, %v11003
    %v11021 = vsel %vm11020, %v11013, %v11003
    %vm11022 = vcmp.lt.s32.totalorder %v11015, %v11004
    %v11023 = vsel %vm11022, %v11015, %v11004
    %vm11024 = vcmp.lt.s32.totalorder %v11017, %v11005
    %v11025 = vsel %vm11024, %v11017, %v11005
    %vm11026 = vcmp.lt.s32.totalorder %v11019, %v11006
    %v11027 = vsel %vm11026, %v11019, %v11006
    %vm11028 = vcmp.lt.s32.totalorder %v11021, %v11007
    %v11029 = vsel %vm11028, %v11021, %v11007
    %vm11030 = vcmp.lt.s32.totalorder %v11023, %v11008
    %v11031 = vsel %vm11030, %v11023, %v11008
    %vm11032 = vcmp.lt.s32.totalorder %v11025, %v11009
    %v11033 = vsel %vm11032, %v11025, %v11009
    %vm11034 = vcmp.lt.s32.totalorder %v11027, %v11029
    %v11035 = vsel %vm11034, %v11027, %v11029
    %vm11036 = vcmp.lt.s32.totalorder %v11031, %v11033
    %v11037 = vsel %vm11036, %v11031, %v11033
    %vm11038 = vcmp.lt.s32.totalorder %v11035, %v11037
    %v11039 = vsel %vm11038, %v11035, %v11037
    %v11040 = vrot.slane %v11039, 4
    %vm11041 = vcmp.lt.s32.totalorder %v11039, %v11040
    %v11042 = vsel %vm11041, %v11039, %v11040
    %v11043 = vrot.slane %v11042, 2
    %vm11044 = vcmp.lt.s32.totalorder %v11042, %v11043
    %v11045 = vsel %vm11044, %v11042, %v11043
    %v11046 = vrot.slane %v11045, 1
    %vm11047 = vcmp.lt.s32.totalorder %v11045, %v11046
    %v11048 = vsel %vm11047, %v11045, %v11046
    %11049 = vst [vmem:[#allocation5 + $0xc] sm:$0x1] %v11048
    %v11050 = vld [vmem:[%s5] sm:$0xff]
    %v11051 = vld [vmem:[%s5 + $0x8] sm:$0xff]
    %v11052 = vld [vmem:[%s5 + $0x10] sm:$0xff]
    %v11053 = vld [vmem:[%s5 + $0x18] sm:$0xff]
    %v11054 = vld [vmem:[%s5 + $0x20] sm:$0xff]
    %v11055 = vld [vmem:[%s5 + $0x28] sm:$0xff]
    %v11056 = vld [vmem:[%s5 + $0x30] sm:$0xff]
    %v11057 = vld [vmem:[%s5 + $0x38] sm:$0xff]
    %v11058 = vld [vmem:[%s5 + $0x40] sm:$0xff]
    %v11059 = vld [vmem:[%s5 + $0x48] sm:$0xff]
    %v11060 = vld [vmem:[%s5 + $0x50] sm:$0xff]
    %v11061 = vld [vmem:[%s5 + $0x58] sm:$0xff]
    %v11062 = vld [vmem:[%s5 + $0x60] sm:$0xff]
    %v11063 = vld [vmem:[%s5 + $0x68] sm:$0xff]
    %v11064 = vld [vmem:[%s5 + $0x70] sm:$0xff]
    %v11065 = vld [vmem:[%s5 + $0x78] sm:$0xff]
    %v11067 = vsel %vm5458, %v11050, 0
    %v11070 = vsel %vm5458, %v11051, 0
    %v11073 = vsel %vm5458, %v11052, 0
    %v11076 = vsel %vm5458, %v11053, 0
    %v11079 = vsel %vm5458, %v11054, 0
    %v11082 = vsel %vm5458, %v11055, 0
    %v11085 = vsel %vm5458, %v11056, 0
    %v11088 = vsel %vm5458, %v11057, 0
    %v11091 = vsel %vm5458, %v11058, 0
    %v11094 = vsel %vm5458, %v11059, 0
    %v11097 = vsel %vm5458, %v11060, 0
    %v11100 = vsel %vm5458, %v11061, 0
    %v11103 = vsel %vm5458, %v11062, 0
    %v11106 = vsel %vm5458, %v11063, 0
    %v11109 = vsel %vm5458, %v11064, 0
    %v11112 = vsel %vm5458, %v11065, 0
    %11114 = vmatprep.subr.mxu0 0.0
    %11115 = vmatpush1.msra.mxu0 %v5396
    %11116 = vmatprep.subr.mxu0 0.0
    %11117 = vmatpush1.msra.mxu0 %v5399
    %11118 = vmatprep.subr.mxu0 0.0
    %11119 = vmatpush1.msra.mxu0 %v5404
    %11120 = vmatprep.subr.mxu0 0.0
    %11121 = vmatpush1.msra.mxu0 %v5407
    %11122 = vmatprep.subr.mxu0 0.0
    %11123 = vmatpush1.msra.mxu0 0.0
    %11124 = vmatprep.subr.mxu0 0.0
    %11125 = vmatpush1.msra.mxu0 0.0
    %11126 = vmatprep.subr.mxu0 0.0
    %11127 = vmatpush1.msra.mxu0 0.0
    %11128 = vmatprep.subr.mxu0 0.0
    %11129 = vmatpush1.msra.mxu0 0.0
    %11130 = vmatprep.subr.mxu0 0.0
    %11131 = vmatpush1.msra.mxu0 0.0
    %11132 = vmatprep.subr.mxu0 0.0
    %11133 = vmatpush1.msra.mxu0 0.0
    %11134 = vmatprep.subr.mxu0 0.0
    %11135 = vmatpush1.msra.mxu0 0.0
    %11136 = vmatprep.subr.mxu0 0.0
    %11137 = vmatpush1.msra.mxu0 0.0
    %11138 = vmatprep.subr.mxu0 0.0
    %11139 = vmatpush1.msra.mxu0 0.0
    %11140 = vmatprep.subr.mxu0 0.0
    %11141 = vmatpush1.msra.mxu0 0.0
    %11142 = vmatprep.subr.mxu0 0.0
    %11143 = vmatpush1.msra.mxu0 0.0
    %11144 = vmatprep.subr.mxu0 0.0
    %11145 = vmatpush1.msra.mxu0 0.0
    %11146 = vmatprep.subr.mxu0 0.0
    %11147 = vmatpush1.msra.mxu0 0.0
    %11148 = vmatprep.subr.mxu0 0.0
    %11149 = vmatpush1.msra.mxu0 0.0
    %11150 = vmatprep.subr.mxu0 0.0
    %11151 = vmatpush1.msra.mxu0 0.0
    %11152 = vmatprep.subr.mxu0 0.0
    %11153 = vmatpush1.msra.mxu0 0.0
    %11154 = vmatprep.subr.mxu0 0.0
    %11155 = vmatpush1.msra.mxu0 0.0
    %11156 = vmatprep.subr.mxu0 0.0
    %11157 = vmatpush1.msra.mxu0 0.0
    %11158 = vmatprep.subr.mxu0 0.0
    %11159 = vmatpush1.msra.mxu0 0.0
    %11160 = vmatprep.subr.mxu0 0.0
    %11161 = vmatpush1.msra.mxu0 0.0
    %11162 = vmatprep.subr.mxu0 0.0
    %11163 = vmatpush1.msra.mxu0 0.0
    %11164 = vmatprep.subr.mxu0 0.0
    %11165 = vmatpush1.msra.mxu0 0.0
    %11166 = vmatprep.subr.mxu0 0.0
    %11167 = vmatpush1.msra.mxu0 0.0
    %11168 = vmatprep.subr.mxu0 0.0
    %11169 = vmatpush1.msra.mxu0 0.0
    %11170 = vmatprep.subr.mxu0 0.0
    %11171 = vmatpush1.msra.mxu0 0.0
    %11172 = vmatprep.subr.mxu0 0.0
    %11173 = vmatpush1.msra.mxu0 0.0
    %11174 = vmatprep.subr.mxu0 0.0
    %11175 = vmatpush1.msra.mxu0 0.0
    %11176 = vmatprep.subr.mxu0 0.0
    %11177 = vmatpush1.msra.mxu0 0.0
    %11178 = vmatprep.mubr.f32.mxu0 0.0
    %11179 = vmatmul.mubr.f32.gmra.mrb[0].mxu0 %v11067
    %v11180 = vpop.f32.mrb[0].mxu0
    %v11181 = vadd.f32 0.0, %v11180
    %v11182 = vpop.f32.mrb[0].mxu0
    %11183 = vmatprep.mubr.f32.mxu0 0.0
    %11184 = vmatmul.mubr.f32.gmra.mrb[0].mxu0 %v11070
    %v11185 = vpop.f32.mrb[0].mxu0
    %v11186 = vadd.f32 0.0, %v11185
    %v11187 = vpop.f32.mrb[0].mxu0
    %11188 = vmatprep.mubr.f32.mxu0 0.0
    %11189 = vmatmul.mubr.f32.gmra.mrb[0].mxu0 %v11073
    %v11190 = vpop.f32.mrb[0].mxu0
    %v11191 = vadd.f32 0.0, %v11190
    %v11192 = vpop.f32.mrb[0].mxu0
    %11193 = vmatprep.mubr.f32.mxu0 0.0
    %11194 = vmatmul.mubr.f32.gmra.mrb[0].mxu0 %v11076
    %v11195 = vpop.f32.mrb[0].mxu0
    %v11196 = vadd.f32 0.0, %v11195
    %v11197 = vpop.f32.mrb[0].mxu0
    %11198 = vmatprep.mubr.f32.mxu0 0.0
    %11199 = vmatmul.mubr.f32.gmra.mrb[0].mxu0 %v11079
    %v11200 = vpop.f32.mrb[0].mxu0
    %v11201 = vadd.f32 0.0, %v11200
    %v11202 = vpop.f32.mrb[0].mxu0
    %11203 = vmatprep.mubr.f32.mxu0 0.0
    %11204 = vmatmul.mubr.f32.gmra.mrb[0].mxu0 %v11082
    %v11205 = vpop.f32.mrb[0].mxu0
    %v11206 = vadd.f32 0.0, %v11205
    %v11207 = vpop.f32.mrb[0].mxu0
    %11208 = vmatprep.mubr.f32.mxu0 0.0
    %11209 = vmatmul.mubr.f32.gmra.mrb[0].mxu0 %v11085
    %v11210 = vpop.f32.mrb[0].mxu0
    %v11211 = vadd.f32 0.0, %v11210
    %v11212 = vpop.f32.mrb[0].mxu0
    %11213 = vmatprep.mubr.f32.mxu0 0.0
    %11214 = vmatmul.mubr.f32.gmra.mrb[0].mxu0 %v11088
    %v11215 = vpop.f32.mrb[0].mxu0
    %v11216 = vadd.f32 0.0, %v11215
    %v11217 = vpop.f32.mrb[0].mxu0
    %11218 = vmatprep.mubr.f32.mxu0 0.0
    %11219 = vmatmul.mubr.f32.gmra.mrb[0].mxu0 %v11091
    %v11220 = vpop.f32.mrb[0].mxu0
    %v11221 = vadd.f32 0.0, %v11220
    %v11222 = vpop.f32.mrb[0].mxu0
    %11223 = vmatprep.mubr.f32.mxu0 0.0
    %11224 = vmatmul.mubr.f32.gmra.mrb[0].mxu0 %v11094
    %v11225 = vpop.f32.mrb[0].mxu0
    %v11226 = vadd.f32 0.0, %v11225
    %v11227 = vpop.f32.mrb[0].mxu0
    %11228 = vmatprep.mubr.f32.mxu0 0.0
    %11229 = vmatmul.mubr.f32.gmra.mrb[0].mxu0 %v11097
    %v11230 = vpop.f32.mrb[0].mxu0
    %v11231 = vadd.f32 0.0, %v11230
    %v11232 = vpop.f32.mrb[0].mxu0
    %11233 = vmatprep.mubr.f32.mxu0 0.0
    %11234 = vmatmul.mubr.f32.gmra.mrb[0].mxu0 %v11100
    %v11235 = vpop.f32.mrb[0].mxu0
    %v11236 = vadd.f32 0.0, %v11235
    %v11237 = vpop.f32.mrb[0].mxu0
    %11238 = vmatprep.mubr.f32.mxu0 0.0
    %11239 = vmatmul.mubr.f32.gmra.mrb[0].mxu0 %v11103
    %v11240 = vpop.f32.mrb[0].mxu0
    %v11241 = vadd.f32 0.0, %v11240
    %v11242 = vpop.f32.mrb[0].mxu0
    %11243 = vmatprep.mubr.f32.mxu0 0.0
    %11244 = vmatmul.mubr.f32.gmra.mrb[0].mxu0 %v11106
    %v11245 = vpop.f32.mrb[0].mxu0
    %v11246 = vadd.f32 0.0, %v11245
    %v11247 = vpop.f32.mrb[0].mxu0
    %11248 = vmatprep.mubr.f32.mxu0 0.0
    %11249 = vmatmul.mubr.f32.gmra.mrb[0].mxu0 %v11109
    %v11250 = vpop.f32.mrb[0].mxu0
    %v11251 = vadd.f32 0.0, %v11250
    %v11252 = vpop.f32.mrb[0].mxu0
    %11253 = vmatprep.mubr.f32.mxu0 0.0
    %11254 = vmatmul.mubr.f32.gmra.mrb[0].mxu0 %v11112
    %v11255 = vpop.f32.mrb[0].mxu0
    %v11256 = vadd.f32 0.0, %v11255
    %v11257 = vpop.f32.mrb[0].mxu0
    %11258 = vdwg.mxu0
    %v11259 = vmul.f32 %v11181, 2.0
    %v11260 = vmul.f32 %v11186, 2.0
    %v11261 = vmul.f32 %v11191, 2.0
    %v11262 = vmul.f32 %v11196, 2.0
    %v11263 = vmul.f32 %v11201, 2.0
    %v11264 = vmul.f32 %v11206, 2.0
    %v11265 = vmul.f32 %v11211, 2.0
    %v11266 = vmul.f32 %v11216, 2.0
    %v11267 = vmul.f32 %v11221, 2.0
    %v11268 = vmul.f32 %v11226, 2.0
    %v11269 = vmul.f32 %v11231, 2.0
    %v11270 = vmul.f32 %v11236, 2.0
    %v11271 = vmul.f32 %v11241, 2.0
    %v11272 = vmul.f32 %v11246, 2.0
    %v11273 = vmul.f32 %v11251, 2.0
    %v11274 = vmul.f32 %v11256, 2.0
    %v11275 = vld [vmem:[%s6] sm:$0xff]
    %v11276 = vld [vmem:[%s6 + $0x8] sm:$0xff]
    %v11277 = vld [vmem:[%s6 + $0x10] sm:$0xff]
    %v11278 = vld [vmem:[%s6 + $0x18] sm:$0xff]
    %v11279 = vld [vmem:[%s6 + $0x20] sm:$0xff]
    %v11280 = vld [vmem:[%s6 + $0x28] sm:$0xff]
    %v11281 = vld [vmem:[%s6 + $0x30] sm:$0xff]
    %v11282 = vld [vmem:[%s6 + $0x38] sm:$0xff]
    %v11283 = vld [vmem:[%s6 + $0x40] sm:$0xff]
    %v11284 = vld [vmem:[%s6 + $0x48] sm:$0xff]
    %v11285 = vld [vmem:[%s6 + $0x50] sm:$0xff]
    %v11286 = vld [vmem:[%s6 + $0x58] sm:$0xff]
    %v11287 = vld [vmem:[%s6 + $0x60] sm:$0xff]
    %v11288 = vld [vmem:[%s6 + $0x68] sm:$0xff]
    %v11289 = vld [vmem:[%s6 + $0x70] sm:$0xff]
    %v11290 = vld [vmem:[%s6 + $0x78] sm:$0xff]
    %11292 = vset.pattern.permute.xlu0 0
    %11293 = vperm.xlu0 %11292, %v11275
    %v11294 = vpop.permute.xlu0 %11293
    %11297 = vset.pattern.permute.xlu0 0
    %11298 = vperm.xlu0 %11297, %v11276
    %v11299 = vpop.permute.xlu0 %11298
    %11302 = vset.pattern.permute.xlu0 0
    %11303 = vperm.xlu0 %11302, %v11277
    %v11304 = vpop.permute.xlu0 %11303
    %11307 = vset.pattern.permute.xlu0 0
    %11308 = vperm.xlu0 %11307, %v11278
    %v11309 = vpop.permute.xlu0 %11308
    %11312 = vset.pattern.permute.xlu0 0
    %11313 = vperm.xlu0 %11312, %v11279
    %v11314 = vpop.permute.xlu0 %11313
    %11317 = vset.pattern.permute.xlu0 0
    %11318 = vperm.xlu0 %11317, %v11280
    %v11319 = vpop.permute.xlu0 %11318
    %11322 = vset.pattern.permute.xlu0 0
    %11323 = vperm.xlu0 %11322, %v11281
    %v11324 = vpop.permute.xlu0 %11323
    %11327 = vset.pattern.permute.xlu0 0
    %11328 = vperm.xlu0 %11327, %v11282
    %v11329 = vpop.permute.xlu0 %11328
    %11332 = vset.pattern.permute.xlu0 0
    %11333 = vperm.xlu0 %11332, %v11283
    %v11334 = vpop.permute.xlu0 %11333
    %11337 = vset.pattern.permute.xlu0 0
    %11338 = vperm.xlu0 %11337, %v11284
    %v11339 = vpop.permute.xlu0 %11338
    %11342 = vset.pattern.permute.xlu0 0
    %11343 = vperm.xlu0 %11342, %v11285
    %v11344 = vpop.permute.xlu0 %11343
    %11347 = vset.pattern.permute.xlu0 0
    %11348 = vperm.xlu0 %11347, %v11286
    %v11349 = vpop.permute.xlu0 %11348
    %11352 = vset.pattern.permute.xlu0 0
    %11353 = vperm.xlu0 %11352, %v11287
    %v11354 = vpop.permute.xlu0 %11353
    %11357 = vset.pattern.permute.xlu0 0
    %11358 = vperm.xlu0 %11357, %v11288
    %v11359 = vpop.permute.xlu0 %11358
    %11362 = vset.pattern.permute.xlu0 0
    %11363 = vperm.xlu0 %11362, %v11289
    %v11364 = vpop.permute.xlu0 %11363
    %11367 = vset.pattern.permute.xlu0 0
    %11368 = vperm.xlu0 %11367, %v11290
    %v11369 = vpop.permute.xlu0 %11368
    %v11371 = vsub.f32 %v11259, %v11294
    %v11372 = vsub.f32 %v11260, %v11299
    %v11373 = vsub.f32 %v11261, %v11304
    %v11374 = vsub.f32 %v11262, %v11309
    %v11375 = vsub.f32 %v11263, %v11314
    %v11376 = vsub.f32 %v11264, %v11319
    %v11377 = vsub.f32 %v11265, %v11324
    %v11378 = vsub.f32 %v11266, %v11329
    %v11379 = vsub.f32 %v11267, %v11334
    %v11380 = vsub.f32 %v11268, %v11339
    %v11381 = vsub.f32 %v11269, %v11344
    %v11382 = vsub.f32 %v11270, %v11349
    %v11383 = vsub.f32 %v11271, %v11354
    %v11384 = vsub.f32 %v11272, %v11359
    %v11385 = vsub.f32 %v11273, %v11364
    %v11386 = vsub.f32 %v11274, %v11369
    %v11387 = vmax.f32 %v11371, %v11375
    %v11388 = vmax.f32 %v11372, %v11376
    %v11389 = vmax.f32 %v11373, %v11377
    %v11390 = vmax.f32 %v11374, %v11378
    %v11391 = vmax.f32 %v11387, %v11379
    %v11392 = vmax.f32 %v11388, %v11380
    %v11393 = vmax.f32 %v11389, %v11381
    %v11394 = vmax.f32 %v11390, %v11382
    %v11395 = vmax.f32 %v11391, %v11383
    %v11396 = vmax.f32 %v11392, %v11384
    %v11397 = vmax.f32 %v11393, %v11385
    %v11398 = vmax.f32 %v11394, %v11386
    %v11399 = vmax.f32 %v11395, %v11396
    %v11400 = vmax.f32 %v11397, %v11398
    %v11401 = vmax.f32 %v11399, %v11400
    %v11402 = vrot.slane %v11401, 4
    %v11403 = vmax.f32 %v11401, %v11402
    %v11404 = vrot.slane %v11403, 2
    %v11405 = vmax.f32 %v11403, %v11404
    %v11406 = vrot.slane %v11405, 1
    %v11407 = vmax.f32 %v11405, %v11406
    %vm11408 = vcmp.ge.f32.partialorder %v11371, %v11407
    %vm11409 = vcmp.ge.f32.partialorder %v11372, %v11407
    %vm11410 = vcmp.ge.f32.partialorder %v11373, %v11407
    %vm11411 = vcmp.ge.f32.partialorder %v11374, %v11407
    %vm11412 = vcmp.ge.f32.partialorder %v11375, %v11407
    %vm11413 = vcmp.ge.f32.partialorder %v11376, %v11407
    %vm11414 = vcmp.ge.f32.partialorder %v11377, %v11407
    %vm11415 = vcmp.ge.f32.partialorder %v11378, %v11407
    %vm11416 = vcmp.ge.f32.partialorder %v11379, %v11407
    %vm11417 = vcmp.ge.f32.partialorder %v11380, %v11407
    %vm11418 = vcmp.ge.f32.partialorder %v11381, %v11407
    %vm11419 = vcmp.ge.f32.partialorder %v11382, %v11407
    %vm11420 = vcmp.ge.f32.partialorder %v11383, %v11407
    %vm11421 = vcmp.ge.f32.partialorder %v11384, %v11407
    %vm11422 = vcmp.ge.f32.partialorder %v11385, %v11407
    %vm11423 = vcmp.ge.f32.partialorder %v11386, %v11407
    %v11424 = vsel %vm11408, %v5802, 128
    %v11425 = vsel %vm11409, %v5803, 128
    %v11426 = vsel %vm11410, %v5804, 128
    %v11427 = vsel %vm11411, %v5805, 128
    %v11428 = vsel %vm11412, %v5806, 128
    %v11429 = vsel %vm11413, %v5807, 128
    %v11430 = vsel %vm11414, %v5808, 128
    %v11431 = vsel %vm11415, %v5809, 128
    %v11432 = vsel %vm11416, %v5810, 128
    %v11433 = vsel %vm11417, %v5811, 128
    %v11434 = vsel %vm11418, %v5812, 128
    %v11435 = vsel %vm11419, %v5813, 128
    %v11436 = vsel %vm11420, %v5814, 128
    %v11437 = vsel %vm11421, %v5815, 128
    %v11438 = vsel %vm11422, %v5816, 128
    %v11439 = vsel %vm11423, %v5817, 128
    %vm11440 = vcmp.lt.s32.totalorder %v11424, %v11428
    %v11441 = vsel %vm11440, %v11424, %v11428
    %vm11442 = vcmp.lt.s32.totalorder %v11425, %v11429
    %v11443 = vsel %vm11442, %v11425, %v11429
    %vm11444 = vcmp.lt.s32.totalorder %v11426, %v11430
    %v11445 = vsel %vm11444, %v11426, %v11430
    %vm11446 = vcmp.lt.s32.totalorder %v11427, %v11431
    %v11447 = vsel %vm11446, %v11427, %v11431
    %vm11448 = vcmp.lt.s32.totalorder %v11441, %v11432
    %v11449 = vsel %vm11448, %v11441, %v11432
    %vm11450 = vcmp.lt.s32.totalorder %v11443, %v11433
    %v11451 = vsel %vm11450, %v11443, %v11433
    %vm11452 = vcmp.lt.s32.totalorder %v11445, %v11434
    %v11453 = vsel %vm11452, %v11445, %v11434
    %vm11454 = vcmp.lt.s32.totalorder %v11447, %v11435
    %v11455 = vsel %vm11454, %v11447, %v11435
    %vm11456 = vcmp.lt.s32.totalorder %v11449, %v11436
    %v11457 = vsel %vm11456, %v11449, %v11436
    %vm11458 = vcmp.lt.s32.totalorder %v11451, %v11437
    %v11459 = vsel %vm11458, %v11451, %v11437
    %vm11460 = vcmp.lt.s32.totalorder %v11453, %v11438
    %v11461 = vsel %vm11460, %v11453, %v11438
    %vm11462 = vcmp.lt.s32.totalorder %v11455, %v11439
    %v11463 = vsel %vm11462, %v11455, %v11439
    %vm11464 = vcmp.lt.s32.totalorder %v11457, %v11459
    %v11465 = vsel %vm11464, %v11457, %v11459
    %vm11466 = vcmp.lt.s32.totalorder %v11461, %v11463
    %v11467 = vsel %vm11466, %v11461, %v11463
    %vm11468 = vcmp.lt.s32.totalorder %v11465, %v11467
    %v11469 = vsel %vm11468, %v11465, %v11467
    %v11470 = vrot.slane %v11469, 4
    %vm11471 = vcmp.lt.s32.totalorder %v11469, %v11470
    %v11472 = vsel %vm11471, %v11469, %v11470
    %v11473 = vrot.slane %v11472, 2
    %vm11474 = vcmp.lt.s32.totalorder %v11472, %v11473
    %v11475 = vsel %vm11474, %v11472, %v11473
    %v11476 = vrot.slane %v11475, 1
    %vm11477 = vcmp.lt.s32.totalorder %v11475, %v11476
    %v11478 = vsel %vm11477, %v11475, %v11476
    %11479 = vst [vmem:[#allocation5 + $0xd] sm:$0x1] %v11478
    %v11480 = vld [vmem:[%s5] sm:$0xff]
    %v11481 = vld [vmem:[%s5 + $0x8] sm:$0xff]
    %v11482 = vld [vmem:[%s5 + $0x10] sm:$0xff]
    %v11483 = vld [vmem:[%s5 + $0x18] sm:$0xff]
    %v11484 = vld [vmem:[%s5 + $0x20] sm:$0xff]
    %v11485 = vld [vmem:[%s5 + $0x28] sm:$0xff]
    %v11486 = vld [vmem:[%s5 + $0x30] sm:$0xff]
    %v11487 = vld [vmem:[%s5 + $0x38] sm:$0xff]
    %v11488 = vld [vmem:[%s5 + $0x40] sm:$0xff]
    %v11489 = vld [vmem:[%s5 + $0x48] sm:$0xff]
    %v11490 = vld [vmem:[%s5 + $0x50] sm:$0xff]
    %v11491 = vld [vmem:[%s5 + $0x58] sm:$0xff]
    %v11492 = vld [vmem:[%s5 + $0x60] sm:$0xff]
    %v11493 = vld [vmem:[%s5 + $0x68] sm:$0xff]
    %v11494 = vld [vmem:[%s5 + $0x70] sm:$0xff]
    %v11495 = vld [vmem:[%s5 + $0x78] sm:$0xff]
    %v11497 = vsel %vm5458, %v11480, 0
    %v11500 = vsel %vm5458, %v11481, 0
    %v11503 = vsel %vm5458, %v11482, 0
    %v11506 = vsel %vm5458, %v11483, 0
    %v11509 = vsel %vm5458, %v11484, 0
    %v11512 = vsel %vm5458, %v11485, 0
    %v11515 = vsel %vm5458, %v11486, 0
    %v11518 = vsel %vm5458, %v11487, 0
    %v11521 = vsel %vm5458, %v11488, 0
    %v11524 = vsel %vm5458, %v11489, 0
    %v11527 = vsel %vm5458, %v11490, 0
    %v11530 = vsel %vm5458, %v11491, 0
    %v11533 = vsel %vm5458, %v11492, 0
    %v11536 = vsel %vm5458, %v11493, 0
    %v11539 = vsel %vm5458, %v11494, 0
    %v11542 = vsel %vm5458, %v11495, 0
    %11544 = vmatprep.subr.mxu0 0.0
    %11545 = vmatpush1.msra.mxu0 %v5412
    %11546 = vmatprep.subr.mxu0 0.0
    %11547 = vmatpush1.msra.mxu0 %v5415
    %11548 = vmatprep.subr.mxu0 0.0
    %11549 = vmatpush1.msra.mxu0 %v5420
    %11550 = vmatprep.subr.mxu0 0.0
    %11551 = vmatpush1.msra.mxu0 %v5423
    %11552 = vmatprep.subr.mxu0 0.0
    %11553 = vmatpush1.msra.mxu0 0.0
    %11554 = vmatprep.subr.mxu0 0.0
    %11555 = vmatpush1.msra.mxu0 0.0
    %11556 = vmatprep.subr.mxu0 0.0
    %11557 = vmatpush1.msra.mxu0 0.0
    %11558 = vmatprep.subr.mxu0 0.0
    %11559 = vmatpush1.msra.mxu0 0.0
    %11560 = vmatprep.subr.mxu0 0.0
    %11561 = vmatpush1.msra.mxu0 0.0
    %11562 = vmatprep.subr.mxu0 0.0
    %11563 = vmatpush1.msra.mxu0 0.0
    %11564 = vmatprep.subr.mxu0 0.0
    %11565 = vmatpush1.msra.mxu0 0.0
    %11566 = vmatprep.subr.mxu0 0.0
    %11567 = vmatpush1.msra.mxu0 0.0
    %11568 = vmatprep.subr.mxu0 0.0
    %11569 = vmatpush1.msra.mxu0 0.0
    %11570 = vmatprep.subr.mxu0 0.0
    %11571 = vmatpush1.msra.mxu0 0.0
    %11572 = vmatprep.subr.mxu0 0.0
    %11573 = vmatpush1.msra.mxu0 0.0
    %11574 = vmatprep.subr.mxu0 0.0
    %11575 = vmatpush1.msra.mxu0 0.0
    %11576 = vmatprep.subr.mxu0 0.0
    %11577 = vmatpush1.msra.mxu0 0.0
    %11578 = vmatprep.subr.mxu0 0.0
    %11579 = vmatpush1.msra.mxu0 0.0
    %11580 = vmatprep.subr.mxu0 0.0
    %11581 = vmatpush1.msra.mxu0 0.0
    %11582 = vmatprep.subr.mxu0 0.0
    %11583 = vmatpush1.msra.mxu0 0.0
    %11584 = vmatprep.subr.mxu0 0.0
    %11585 = vmatpush1.msra.mxu0 0.0
    %11586 = vmatprep.subr.mxu0 0.0
    %11587 = vmatpush1.msra.mxu0 0.0
    %11588 = vmatprep.subr.mxu0 0.0
    %11589 = vmatpush1.msra.mxu0 0.0
    %11590 = vmatprep.subr.mxu0 0.0
    %11591 = vmatpush1.msra.mxu0 0.0
    %11592 = vmatprep.subr.mxu0 0.0
    %11593 = vmatpush1.msra.mxu0 0.0
    %11594 = vmatprep.subr.mxu0 0.0
    %11595 = vmatpush1.msra.mxu0 0.0
    %11596 = vmatprep.subr.mxu0 0.0
    %11597 = vmatpush1.msra.mxu0 0.0
    %11598 = vmatprep.subr.mxu0 0.0
    %11599 = vmatpush1.msra.mxu0 0.0
    %11600 = vmatprep.subr.mxu0 0.0
    %11601 = vmatpush1.msra.mxu0 0.0
    %11602 = vmatprep.subr.mxu0 0.0
    %11603 = vmatpush1.msra.mxu0 0.0
    %11604 = vmatprep.subr.mxu0 0.0
    %11605 = vmatpush1.msra.mxu0 0.0
    %11606 = vmatprep.subr.mxu0 0.0
    %11607 = vmatpush1.msra.mxu0 0.0
    %11608 = vmatprep.mubr.f32.mxu0 0.0
    %11609 = vmatmul.mubr.f32.gmra.mrb[0].mxu0 %v11497
    %v11610 = vpop.f32.mrb[0].mxu0
    %v11611 = vadd.f32 0.0, %v11610
    %v11612 = vpop.f32.mrb[0].mxu0
    %11613 = vmatprep.mubr.f32.mxu0 0.0
    %11614 = vmatmul.mubr.f32.gmra.mrb[0].mxu0 %v11500
    %v11615 = vpop.f32.mrb[0].mxu0
    %v11616 = vadd.f32 0.0, %v11615
    %v11617 = vpop.f32.mrb[0].mxu0
    %11618 = vmatprep.mubr.f32.mxu0 0.0
    %11619 = vmatmul.mubr.f32.gmra.mrb[0].mxu0 %v11503
    %v11620 = vpop.f32.mrb[0].mxu0
    %v11621 = vadd.f32 0.0, %v11620
    %v11622 = vpop.f32.mrb[0].mxu0
    %11623 = vmatprep.mubr.f32.mxu0 0.0
    %11624 = vmatmul.mubr.f32.gmra.mrb[0].mxu0 %v11506
    %v11625 = vpop.f32.mrb[0].mxu0
    %v11626 = vadd.f32 0.0, %v11625
    %v11627 = vpop.f32.mrb[0].mxu0
    %11628 = vmatprep.mubr.f32.mxu0 0.0
    %11629 = vmatmul.mubr.f32.gmra.mrb[0].mxu0 %v11509
    %v11630 = vpop.f32.mrb[0].mxu0
    %v11631 = vadd.f32 0.0, %v11630
    %v11632 = vpop.f32.mrb[0].mxu0
    %11633 = vmatprep.mubr.f32.mxu0 0.0
    %11634 = vmatmul.mubr.f32.gmra.mrb[0].mxu0 %v11512
    %v11635 = vpop.f32.mrb[0].mxu0
    %v11636 = vadd.f32 0.0, %v11635
    %v11637 = vpop.f32.mrb[0].mxu0
    %11638 = vmatprep.mubr.f32.mxu0 0.0
    %11639 = vmatmul.mubr.f32.gmra.mrb[0].mxu0 %v11515
    %v11640 = vpop.f32.mrb[0].mxu0
    %v11641 = vadd.f32 0.0, %v11640
    %v11642 = vpop.f32.mrb[0].mxu0
    %11643 = vmatprep.mubr.f32.mxu0 0.0
    %11644 = vmatmul.mubr.f32.gmra.mrb[0].mxu0 %v11518
    %v11645 = vpop.f32.mrb[0].mxu0
    %v11646 = vadd.f32 0.0, %v11645
    %v11647 = vpop.f32.mrb[0].mxu0
    %11648 = vmatprep.mubr.f32.mxu0 0.0
    %11649 = vmatmul.mubr.f32.gmra.mrb[0].mxu0 %v11521
    %v11650 = vpop.f32.mrb[0].mxu0
    %v11651 = vadd.f32 0.0, %v11650
    %v11652 = vpop.f32.mrb[0].mxu0
    %11653 = vmatprep.mubr.f32.mxu0 0.0
    %11654 = vmatmul.mubr.f32.gmra.mrb[0].mxu0 %v11524
    %v11655 = vpop.f32.mrb[0].mxu0
    %v11656 = vadd.f32 0.0, %v11655
    %v11657 = vpop.f32.mrb[0].mxu0
    %11658 = vmatprep.mubr.f32.mxu0 0.0
    %11659 = vmatmul.mubr.f32.gmra.mrb[0].mxu0 %v11527
    %v11660 = vpop.f32.mrb[0].mxu0
    %v11661 = vadd.f32 0.0, %v11660
    %v11662 = vpop.f32.mrb[0].mxu0
    %11663 = vmatprep.mubr.f32.mxu0 0.0
    %11664 = vmatmul.mubr.f32.gmra.mrb[0].mxu0 %v11530
    %v11665 = vpop.f32.mrb[0].mxu0
    %v11666 = vadd.f32 0.0, %v11665
    %v11667 = vpop.f32.mrb[0].mxu0
    %11668 = vmatprep.mubr.f32.mxu0 0.0
    %11669 = vmatmul.mubr.f32.gmra.mrb[0].mxu0 %v11533
    %v11670 = vpop.f32.mrb[0].mxu0
    %v11671 = vadd.f32 0.0, %v11670
    %v11672 = vpop.f32.mrb[0].mxu0
    %11673 = vmatprep.mubr.f32.mxu0 0.0
    %11674 = vmatmul.mubr.f32.gmra.mrb[0].mxu0 %v11536
    %v11675 = vpop.f32.mrb[0].mxu0
    %v11676 = vadd.f32 0.0, %v11675
    %v11677 = vpop.f32.mrb[0].mxu0
    %11678 = vmatprep.mubr.f32.mxu0 0.0
    %11679 = vmatmul.mubr.f32.gmra.mrb[0].mxu0 %v11539
    %v11680 = vpop.f32.mrb[0].mxu0
    %v11681 = vadd.f32 0.0, %v11680
    %v11682 = vpop.f32.mrb[0].mxu0
    %11683 = vmatprep.mubr.f32.mxu0 0.0
    %11684 = vmatmul.mubr.f32.gmra.mrb[0].mxu0 %v11542
    %v11685 = vpop.f32.mrb[0].mxu0
    %v11686 = vadd.f32 0.0, %v11685
    %v11687 = vpop.f32.mrb[0].mxu0
    %11688 = vdwg.mxu0
    %v11689 = vmul.f32 %v11611, 2.0
    %v11690 = vmul.f32 %v11616, 2.0
    %v11691 = vmul.f32 %v11621, 2.0
    %v11692 = vmul.f32 %v11626, 2.0
    %v11693 = vmul.f32 %v11631, 2.0
    %v11694 = vmul.f32 %v11636, 2.0
    %v11695 = vmul.f32 %v11641, 2.0
    %v11696 = vmul.f32 %v11646, 2.0
    %v11697 = vmul.f32 %v11651, 2.0
    %v11698 = vmul.f32 %v11656, 2.0
    %v11699 = vmul.f32 %v11661, 2.0
    %v11700 = vmul.f32 %v11666, 2.0
    %v11701 = vmul.f32 %v11671, 2.0
    %v11702 = vmul.f32 %v11676, 2.0
    %v11703 = vmul.f32 %v11681, 2.0
    %v11704 = vmul.f32 %v11686, 2.0
    %v11705 = vld [vmem:[%s6] sm:$0xff]
    %v11706 = vld [vmem:[%s6 + $0x8] sm:$0xff]
    %v11707 = vld [vmem:[%s6 + $0x10] sm:$0xff]
    %v11708 = vld [vmem:[%s6 + $0x18] sm:$0xff]
    %v11709 = vld [vmem:[%s6 + $0x20] sm:$0xff]
    %v11710 = vld [vmem:[%s6 + $0x28] sm:$0xff]
    %v11711 = vld [vmem:[%s6 + $0x30] sm:$0xff]
    %v11712 = vld [vmem:[%s6 + $0x38] sm:$0xff]
    %v11713 = vld [vmem:[%s6 + $0x40] sm:$0xff]
    %v11714 = vld [vmem:[%s6 + $0x48] sm:$0xff]
    %v11715 = vld [vmem:[%s6 + $0x50] sm:$0xff]
    %v11716 = vld [vmem:[%s6 + $0x58] sm:$0xff]
    %v11717 = vld [vmem:[%s6 + $0x60] sm:$0xff]
    %v11718 = vld [vmem:[%s6 + $0x68] sm:$0xff]
    %v11719 = vld [vmem:[%s6 + $0x70] sm:$0xff]
    %v11720 = vld [vmem:[%s6 + $0x78] sm:$0xff]
    %11722 = vset.pattern.permute.xlu0 0
    %11723 = vperm.xlu0 %11722, %v11705
    %v11724 = vpop.permute.xlu0 %11723
    %11727 = vset.pattern.permute.xlu0 0
    %11728 = vperm.xlu0 %11727, %v11706
    %v11729 = vpop.permute.xlu0 %11728
    %11732 = vset.pattern.permute.xlu0 0
    %11733 = vperm.xlu0 %11732, %v11707
    %v11734 = vpop.permute.xlu0 %11733
    %11737 = vset.pattern.permute.xlu0 0
    %11738 = vperm.xlu0 %11737, %v11708
    %v11739 = vpop.permute.xlu0 %11738
    %11742 = vset.pattern.permute.xlu0 0
    %11743 = vperm.xlu0 %11742, %v11709
    %v11744 = vpop.permute.xlu0 %11743
    %11747 = vset.pattern.permute.xlu0 0
    %11748 = vperm.xlu0 %11747, %v11710
    %v11749 = vpop.permute.xlu0 %11748
    %11752 = vset.pattern.permute.xlu0 0
    %11753 = vperm.xlu0 %11752, %v11711
    %v11754 = vpop.permute.xlu0 %11753
    %11757 = vset.pattern.permute.xlu0 0
    %11758 = vperm.xlu0 %11757, %v11712
    %v11759 = vpop.permute.xlu0 %11758
    %11762 = vset.pattern.permute.xlu0 0
    %11763 = vperm.xlu0 %11762, %v11713
    %v11764 = vpop.permute.xlu0 %11763
    %11767 = vset.pattern.permute.xlu0 0
    %11768 = vperm.xlu0 %11767, %v11714
    %v11769 = vpop.permute.xlu0 %11768
    %11772 = vset.pattern.permute.xlu0 0
    %11773 = vperm.xlu0 %11772, %v11715
    %v11774 = vpop.permute.xlu0 %11773
    %11777 = vset.pattern.permute.xlu0 0
    %11778 = vperm.xlu0 %11777, %v11716
    %v11779 = vpop.permute.xlu0 %11778
    %11782 = vset.pattern.permute.xlu0 0
    %11783 = vperm.xlu0 %11782, %v11717
    %v11784 = vpop.permute.xlu0 %11783
    %11787 = vset.pattern.permute.xlu0 0
    %11788 = vperm.xlu0 %11787, %v11718
    %v11789 = vpop.permute.xlu0 %11788
    %11792 = vset.pattern.permute.xlu0 0
    %11793 = vperm.xlu0 %11792, %v11719
    %v11794 = vpop.permute.xlu0 %11793
    %11797 = vset.pattern.permute.xlu0 0
    %11798 = vperm.xlu0 %11797, %v11720
    %v11799 = vpop.permute.xlu0 %11798
    %v11801 = vsub.f32 %v11689, %v11724
    %v11802 = vsub.f32 %v11690, %v11729
    %v11803 = vsub.f32 %v11691, %v11734
    %v11804 = vsub.f32 %v11692, %v11739
    %v11805 = vsub.f32 %v11693, %v11744
    %v11806 = vsub.f32 %v11694, %v11749
    %v11807 = vsub.f32 %v11695, %v11754
    %v11808 = vsub.f32 %v11696, %v11759
    %v11809 = vsub.f32 %v11697, %v11764
    %v11810 = vsub.f32 %v11698, %v11769
    %v11811 = vsub.f32 %v11699, %v11774
    %v11812 = vsub.f32 %v11700, %v11779
    %v11813 = vsub.f32 %v11701, %v11784
    %v11814 = vsub.f32 %v11702, %v11789
    %v11815 = vsub.f32 %v11703, %v11794
    %v11816 = vsub.f32 %v11704, %v11799
    %v11817 = vmax.f32 %v11801, %v11805
    %v11818 = vmax.f32 %v11802, %v11806
    %v11819 = vmax.f32 %v11803, %v11807
    %v11820 = vmax.f32 %v11804, %v11808
    %v11821 = vmax.f32 %v11817, %v11809
    %v11822 = vmax.f32 %v11818, %v11810
    %v11823 = vmax.f32 %v11819, %v11811
    %v11824 = vmax.f32 %v11820, %v11812
    %v11825 = vmax.f32 %v11821, %v11813
    %v11826 = vmax.f32 %v11822, %v11814
    %v11827 = vmax.f32 %v11823, %v11815
    %v11828 = vmax.f32 %v11824, %v11816
    %v11829 = vmax.f32 %v11825, %v11826
    %v11830 = vmax.f32 %v11827, %v11828
    %v11831 = vmax.f32 %v11829, %v11830
    %v11832 = vrot.slane %v11831, 4
    %v11833 = vmax.f32 %v11831, %v11832
    %v11834 = vrot.slane %v11833, 2
    %v11835 = vmax.f32 %v11833, %v11834
    %v11836 = vrot.slane %v11835, 1
    %v11837 = vmax.f32 %v11835, %v11836
    %vm11838 = vcmp.ge.f32.partialorder %v11801, %v11837
    %vm11839 = vcmp.ge.f32.partialorder %v11802, %v11837
    %vm11840 = vcmp.ge.f32.partialorder %v11803, %v11837
    %vm11841 = vcmp.ge.f32.partialorder %v11804, %v11837
    %vm11842 = vcmp.ge.f32.partialorder %v11805, %v11837
    %vm11843 = vcmp.ge.f32.partialorder %v11806, %v11837
    %vm11844 = vcmp.ge.f32.partialorder %v11807, %v11837
    %vm11845 = vcmp.ge.f32.partialorder %v11808, %v11837
    %vm11846 = vcmp.ge.f32.partialorder %v11809, %v11837
    %vm11847 = vcmp.ge.f32.partialorder %v11810, %v11837
    %vm11848 = vcmp.ge.f32.partialorder %v11811, %v11837
    %vm11849 = vcmp.ge.f32.partialorder %v11812, %v11837
    %vm11850 = vcmp.ge.f32.partialorder %v11813, %v11837
    %vm11851 = vcmp.ge.f32.partialorder %v11814, %v11837
    %vm11852 = vcmp.ge.f32.partialorder %v11815, %v11837
    %vm11853 = vcmp.ge.f32.partialorder %v11816, %v11837
    %v11854 = vsel %vm11838, %v5802, 128
    %v11855 = vsel %vm11839, %v5803, 128
    %v11856 = vsel %vm11840, %v5804, 128
    %v11857 = vsel %vm11841, %v5805, 128
    %v11858 = vsel %vm11842, %v5806, 128
    %v11859 = vsel %vm11843, %v5807, 128
    %v11860 = vsel %vm11844, %v5808, 128
    %v11861 = vsel %vm11845, %v5809, 128
    %v11862 = vsel %vm11846, %v5810, 128
    %v11863 = vsel %vm11847, %v5811, 128
    %v11864 = vsel %vm11848, %v5812, 128
    %v11865 = vsel %vm11849, %v5813, 128
    %v11866 = vsel %vm11850, %v5814, 128
    %v11867 = vsel %vm11851, %v5815, 128
    %v11868 = vsel %vm11852, %v5816, 128
    %v11869 = vsel %vm11853, %v5817, 128
    %vm11870 = vcmp.lt.s32.totalorder %v11854, %v11858
    %v11871 = vsel %vm11870, %v11854, %v11858
    %vm11872 = vcmp.lt.s32.totalorder %v11855, %v11859
    %v11873 = vsel %vm11872, %v11855, %v11859
    %vm11874 = vcmp.lt.s32.totalorder %v11856, %v11860
    %v11875 = vsel %vm11874, %v11856, %v11860
    %vm11876 = vcmp.lt.s32.totalorder %v11857, %v11861
    %v11877 = vsel %vm11876, %v11857, %v11861
    %vm11878 = vcmp.lt.s32.totalorder %v11871, %v11862
    %v11879 = vsel %vm11878, %v11871, %v11862
    %vm11880 = vcmp.lt.s32.totalorder %v11873, %v11863
    %v11881 = vsel %vm11880, %v11873, %v11863
    %vm11882 = vcmp.lt.s32.totalorder %v11875, %v11864
    %v11883 = vsel %vm11882, %v11875, %v11864
    %vm11884 = vcmp.lt.s32.totalorder %v11877, %v11865
    %v11885 = vsel %vm11884, %v11877, %v11865
    %vm11886 = vcmp.lt.s32.totalorder %v11879, %v11866
    %v11887 = vsel %vm11886, %v11879, %v11866
    %vm11888 = vcmp.lt.s32.totalorder %v11881, %v11867
    %v11889 = vsel %vm11888, %v11881, %v11867
    %vm11890 = vcmp.lt.s32.totalorder %v11883, %v11868
    %v11891 = vsel %vm11890, %v11883, %v11868
    %vm11892 = vcmp.lt.s32.totalorder %v11885, %v11869
    %v11893 = vsel %vm11892, %v11885, %v11869
    %vm11894 = vcmp.lt.s32.totalorder %v11887, %v11889
    %v11895 = vsel %vm11894, %v11887, %v11889
    %vm11896 = vcmp.lt.s32.totalorder %v11891, %v11893
    %v11897 = vsel %vm11896, %v11891, %v11893
    %vm11898 = vcmp.lt.s32.totalorder %v11895, %v11897
    %v11899 = vsel %vm11898, %v11895, %v11897
    %v11900 = vrot.slane %v11899, 4
    %vm11901 = vcmp.lt.s32.totalorder %v11899, %v11900
    %v11902 = vsel %vm11901, %v11899, %v11900
    %v11903 = vrot.slane %v11902, 2
    %vm11904 = vcmp.lt.s32.totalorder %v11902, %v11903
    %v11905 = vsel %vm11904, %v11902, %v11903
    %v11906 = vrot.slane %v11905, 1
    %vm11907 = vcmp.lt.s32.totalorder %v11905, %v11906
    %v11908 = vsel %vm11907, %v11905, %v11906
    %11909 = vst [vmem:[#allocation5 + $0xe] sm:$0x1] %v11908
    %v11910 = vld [vmem:[%s5] sm:$0xff]
    %v11911 = vld [vmem:[%s5 + $0x8] sm:$0xff]
    %v11912 = vld [vmem:[%s5 + $0x10] sm:$0xff]
    %v11913 = vld [vmem:[%s5 + $0x18] sm:$0xff]
    %v11914 = vld [vmem:[%s5 + $0x20] sm:$0xff]
    %v11915 = vld [vmem:[%s5 + $0x28] sm:$0xff]
    %v11916 = vld [vmem:[%s5 + $0x30] sm:$0xff]
    %v11917 = vld [vmem:[%s5 + $0x38] sm:$0xff]
    %v11918 = vld [vmem:[%s5 + $0x40] sm:$0xff]
    %v11919 = vld [vmem:[%s5 + $0x48] sm:$0xff]
    %v11920 = vld [vmem:[%s5 + $0x50] sm:$0xff]
    %v11921 = vld [vmem:[%s5 + $0x58] sm:$0xff]
    %v11922 = vld [vmem:[%s5 + $0x60] sm:$0xff]
    %v11923 = vld [vmem:[%s5 + $0x68] sm:$0xff]
    %v11924 = vld [vmem:[%s5 + $0x70] sm:$0xff]
    %v11925 = vld [vmem:[%s5 + $0x78] sm:$0xff]
    %v11927 = vsel %vm5458, %v11910, 0
    %v11930 = vsel %vm5458, %v11911, 0
    %v11933 = vsel %vm5458, %v11912, 0
    %v11936 = vsel %vm5458, %v11913, 0
    %v11939 = vsel %vm5458, %v11914, 0
    %v11942 = vsel %vm5458, %v11915, 0
    %v11945 = vsel %vm5458, %v11916, 0
    %v11948 = vsel %vm5458, %v11917, 0
    %v11951 = vsel %vm5458, %v11918, 0
    %v11954 = vsel %vm5458, %v11919, 0
    %v11957 = vsel %vm5458, %v11920, 0
    %v11960 = vsel %vm5458, %v11921, 0
    %v11963 = vsel %vm5458, %v11922, 0
    %v11966 = vsel %vm5458, %v11923, 0
    %v11969 = vsel %vm5458, %v11924, 0
    %v11972 = vsel %vm5458, %v11925, 0
    %11974 = vmatprep.subr.mxu0 0.0
    %11975 = vmatpush1.msra.mxu0 %v5428
    %11976 = vmatprep.subr.mxu0 0.0
    %11977 = vmatpush1.msra.mxu0 %v5431
    %11978 = vmatprep.subr.mxu0 0.0
    %11979 = vmatpush1.msra.mxu0 %v5436
    %11980 = vmatprep.subr.mxu0 0.0
    %11981 = vmatpush1.msra.mxu0 %v5439
    %11982 = vmatprep.subr.mxu0 0.0
    %11983 = vmatpush1.msra.mxu0 0.0
    %11984 = vmatprep.subr.mxu0 0.0
    %11985 = vmatpush1.msra.mxu0 0.0
    %11986 = vmatprep.subr.mxu0 0.0
    %11987 = vmatpush1.msra.mxu0 0.0
    %11988 = vmatprep.subr.mxu0 0.0
    %11989 = vmatpush1.msra.mxu0 0.0
    %11990 = vmatprep.subr.mxu0 0.0
    %11991 = vmatpush1.msra.mxu0 0.0
    %11992 = vmatprep.subr.mxu0 0.0
    %11993 = vmatpush1.msra.mxu0 0.0
    %11994 = vmatprep.subr.mxu0 0.0
    %11995 = vmatpush1.msra.mxu0 0.0
    %11996 = vmatprep.subr.mxu0 0.0
    %11997 = vmatpush1.msra.mxu0 0.0
    %11998 = vmatprep.subr.mxu0 0.0
    %11999 = vmatpush1.msra.mxu0 0.0
    %12000 = vmatprep.subr.mxu0 0.0
    %12001 = vmatpush1.msra.mxu0 0.0
    %12002 = vmatprep.subr.mxu0 0.0
    %12003 = vmatpush1.msra.mxu0 0.0
    %12004 = vmatprep.subr.mxu0 0.0
    %12005 = vmatpush1.msra.mxu0 0.0
    %12006 = vmatprep.subr.mxu0 0.0
    %12007 = vmatpush1.msra.mxu0 0.0
    %12008 = vmatprep.subr.mxu0 0.0
    %12009 = vmatpush1.msra.mxu0 0.0
    %12010 = vmatprep.subr.mxu0 0.0
    %12011 = vmatpush1.msra.mxu0 0.0
    %12012 = vmatprep.subr.mxu0 0.0
    %12013 = vmatpush1.msra.mxu0 0.0
    %12014 = vmatprep.subr.mxu0 0.0
    %12015 = vmatpush1.msra.mxu0 0.0
    %12016 = vmatprep.subr.mxu0 0.0
    %12017 = vmatpush1.msra.mxu0 0.0
    %12018 = vmatprep.subr.mxu0 0.0
    %12019 = vmatpush1.msra.mxu0 0.0
    %12020 = vmatprep.subr.mxu0 0.0
    %12021 = vmatpush1.msra.mxu0 0.0
    %12022 = vmatprep.subr.mxu0 0.0
    %12023 = vmatpush1.msra.mxu0 0.0
    %12024 = vmatprep.subr.mxu0 0.0
    %12025 = vmatpush1.msra.mxu0 0.0
    %12026 = vmatprep.subr.mxu0 0.0
    %12027 = vmatpush1.msra.mxu0 0.0
    %12028 = vmatprep.subr.mxu0 0.0
    %12029 = vmatpush1.msra.mxu0 0.0
    %12030 = vmatprep.subr.mxu0 0.0
    %12031 = vmatpush1.msra.mxu0 0.0
    %12032 = vmatprep.subr.mxu0 0.0
    %12033 = vmatpush1.msra.mxu0 0.0
    %12034 = vmatprep.subr.mxu0 0.0
    %12035 = vmatpush1.msra.mxu0 0.0
    %12036 = vmatprep.subr.mxu0 0.0
    %12037 = vmatpush1.msra.mxu0 0.0
    %12038 = vmatprep.mubr.f32.mxu0 0.0
    %12039 = vmatmul.mubr.f32.gmra.mrb[0].mxu0 %v11927
    %v12040 = vpop.f32.mrb[0].mxu0
    %v12041 = vadd.f32 0.0, %v12040
    %v12042 = vpop.f32.mrb[0].mxu0
    %12043 = vmatprep.mubr.f32.mxu0 0.0
    %12044 = vmatmul.mubr.f32.gmra.mrb[0].mxu0 %v11930
    %v12045 = vpop.f32.mrb[0].mxu0
    %v12046 = vadd.f32 0.0, %v12045
    %v12047 = vpop.f32.mrb[0].mxu0
    %12048 = vmatprep.mubr.f32.mxu0 0.0
    %12049 = vmatmul.mubr.f32.gmra.mrb[0].mxu0 %v11933
    %v12050 = vpop.f32.mrb[0].mxu0
    %v12051 = vadd.f32 0.0, %v12050
    %v12052 = vpop.f32.mrb[0].mxu0
    %12053 = vmatprep.mubr.f32.mxu0 0.0
    %12054 = vmatmul.mubr.f32.gmra.mrb[0].mxu0 %v11936
    %v12055 = vpop.f32.mrb[0].mxu0
    %v12056 = vadd.f32 0.0, %v12055
    %v12057 = vpop.f32.mrb[0].mxu0
    %12058 = vmatprep.mubr.f32.mxu0 0.0
    %12059 = vmatmul.mubr.f32.gmra.mrb[0].mxu0 %v11939
    %v12060 = vpop.f32.mrb[0].mxu0
    %v12061 = vadd.f32 0.0, %v12060
    %v12062 = vpop.f32.mrb[0].mxu0
    %12063 = vmatprep.mubr.f32.mxu0 0.0
    %12064 = vmatmul.mubr.f32.gmra.mrb[0].mxu0 %v11942
    %v12065 = vpop.f32.mrb[0].mxu0
    %v12066 = vadd.f32 0.0, %v12065
    %v12067 = vpop.f32.mrb[0].mxu0
    %12068 = vmatprep.mubr.f32.mxu0 0.0
    %12069 = vmatmul.mubr.f32.gmra.mrb[0].mxu0 %v11945
    %v12070 = vpop.f32.mrb[0].mxu0
    %v12071 = vadd.f32 0.0, %v12070
    %v12072 = vpop.f32.mrb[0].mxu0
    %12073 = vmatprep.mubr.f32.mxu0 0.0
    %12074 = vmatmul.mubr.f32.gmra.mrb[0].mxu0 %v11948
    %v12075 = vpop.f32.mrb[0].mxu0
    %v12076 = vadd.f32 0.0, %v12075
    %v12077 = vpop.f32.mrb[0].mxu0
    %12078 = vmatprep.mubr.f32.mxu0 0.0
    %12079 = vmatmul.mubr.f32.gmra.mrb[0].mxu0 %v11951
    %v12080 = vpop.f32.mrb[0].mxu0
    %v12081 = vadd.f32 0.0, %v12080
    %v12082 = vpop.f32.mrb[0].mxu0
    %12083 = vmatprep.mubr.f32.mxu0 0.0
    %12084 = vmatmul.mubr.f32.gmra.mrb[0].mxu0 %v11954
    %v12085 = vpop.f32.mrb[0].mxu0
    %v12086 = vadd.f32 0.0, %v12085
    %v12087 = vpop.f32.mrb[0].mxu0
    %12088 = vmatprep.mubr.f32.mxu0 0.0
    %12089 = vmatmul.mubr.f32.gmra.mrb[0].mxu0 %v11957
    %v12090 = vpop.f32.mrb[0].mxu0
    %v12091 = vadd.f32 0.0, %v12090
    %v12092 = vpop.f32.mrb[0].mxu0
    %12093 = vmatprep.mubr.f32.mxu0 0.0
    %12094 = vmatmul.mubr.f32.gmra.mrb[0].mxu0 %v11960
    %v12095 = vpop.f32.mrb[0].mxu0
    %v12096 = vadd.f32 0.0, %v12095
    %v12097 = vpop.f32.mrb[0].mxu0
    %12098 = vmatprep.mubr.f32.mxu0 0.0
    %12099 = vmatmul.mubr.f32.gmra.mrb[0].mxu0 %v11963
    %v12100 = vpop.f32.mrb[0].mxu0
    %v12101 = vadd.f32 0.0, %v12100
    %v12102 = vpop.f32.mrb[0].mxu0
    %12103 = vmatprep.mubr.f32.mxu0 0.0
    %12104 = vmatmul.mubr.f32.gmra.mrb[0].mxu0 %v11966
    %v12105 = vpop.f32.mrb[0].mxu0
    %v12106 = vadd.f32 0.0, %v12105
    %v12107 = vpop.f32.mrb[0].mxu0
    %12108 = vmatprep.mubr.f32.mxu0 0.0
    %12109 = vmatmul.mubr.f32.gmra.mrb[0].mxu0 %v11969
    %v12110 = vpop.f32.mrb[0].mxu0
    %v12111 = vadd.f32 0.0, %v12110
    %v12112 = vpop.f32.mrb[0].mxu0
    %12113 = vmatprep.mubr.f32.mxu0 0.0
    %12114 = vmatmul.mubr.f32.gmra.mrb[0].mxu0 %v11972
    %v12115 = vpop.f32.mrb[0].mxu0
    %v12116 = vadd.f32 0.0, %v12115
    %v12117 = vpop.f32.mrb[0].mxu0
    %12118 = vdwg.mxu0
    %v12119 = vmul.f32 %v12041, 2.0
    %v12120 = vmul.f32 %v12046, 2.0
    %v12121 = vmul.f32 %v12051, 2.0
    %v12122 = vmul.f32 %v12056, 2.0
    %v12123 = vmul.f32 %v12061, 2.0
    %v12124 = vmul.f32 %v12066, 2.0
    %v12125 = vmul.f32 %v12071, 2.0
    %v12126 = vmul.f32 %v12076, 2.0
    %v12127 = vmul.f32 %v12081, 2.0
    %v12128 = vmul.f32 %v12086, 2.0
    %v12129 = vmul.f32 %v12091, 2.0
    %v12130 = vmul.f32 %v12096, 2.0
    %v12131 = vmul.f32 %v12101, 2.0
    %v12132 = vmul.f32 %v12106, 2.0
    %v12133 = vmul.f32 %v12111, 2.0
    %v12134 = vmul.f32 %v12116, 2.0
    %v12135 = vld [vmem:[%s6] sm:$0xff]
    %v12136 = vld [vmem:[%s6 + $0x8] sm:$0xff]
    %v12137 = vld [vmem:[%s6 + $0x10] sm:$0xff]
    %v12138 = vld [vmem:[%s6 + $0x18] sm:$0xff]
    %v12139 = vld [vmem:[%s6 + $0x20] sm:$0xff]
    %v12140 = vld [vmem:[%s6 + $0x28] sm:$0xff]
    %v12141 = vld [vmem:[%s6 + $0x30] sm:$0xff]
    %v12142 = vld [vmem:[%s6 + $0x38] sm:$0xff]
    %v12143 = vld [vmem:[%s6 + $0x40] sm:$0xff]
    %v12144 = vld [vmem:[%s6 + $0x48] sm:$0xff]
    %v12145 = vld [vmem:[%s6 + $0x50] sm:$0xff]
    %v12146 = vld [vmem:[%s6 + $0x58] sm:$0xff]
    %v12147 = vld [vmem:[%s6 + $0x60] sm:$0xff]
    %v12148 = vld [vmem:[%s6 + $0x68] sm:$0xff]
    %v12149 = vld [vmem:[%s6 + $0x70] sm:$0xff]
    %v12150 = vld [vmem:[%s6 + $0x78] sm:$0xff]
    %12152 = vset.pattern.permute.xlu0 0
    %12153 = vperm.xlu0 %12152, %v12135
    %v12154 = vpop.permute.xlu0 %12153
    %12157 = vset.pattern.permute.xlu0 0
    %12158 = vperm.xlu0 %12157, %v12136
    %v12159 = vpop.permute.xlu0 %12158
    %12162 = vset.pattern.permute.xlu0 0
    %12163 = vperm.xlu0 %12162, %v12137
    %v12164 = vpop.permute.xlu0 %12163
    %12167 = vset.pattern.permute.xlu0 0
    %12168 = vperm.xlu0 %12167, %v12138
    %v12169 = vpop.permute.xlu0 %12168
    %12172 = vset.pattern.permute.xlu0 0
    %12173 = vperm.xlu0 %12172, %v12139
    %v12174 = vpop.permute.xlu0 %12173
    %12177 = vset.pattern.permute.xlu0 0
    %12178 = vperm.xlu0 %12177, %v12140
    %v12179 = vpop.permute.xlu0 %12178
    %12182 = vset.pattern.permute.xlu0 0
    %12183 = vperm.xlu0 %12182, %v12141
    %v12184 = vpop.permute.xlu0 %12183
    %12187 = vset.pattern.permute.xlu0 0
    %12188 = vperm.xlu0 %12187, %v12142
    %v12189 = vpop.permute.xlu0 %12188
    %12192 = vset.pattern.permute.xlu0 0
    %12193 = vperm.xlu0 %12192, %v12143
    %v12194 = vpop.permute.xlu0 %12193
    %12197 = vset.pattern.permute.xlu0 0
    %12198 = vperm.xlu0 %12197, %v12144
    %v12199 = vpop.permute.xlu0 %12198
    %12202 = vset.pattern.permute.xlu0 0
    %12203 = vperm.xlu0 %12202, %v12145
    %v12204 = vpop.permute.xlu0 %12203
    %12207 = vset.pattern.permute.xlu0 0
    %12208 = vperm.xlu0 %12207, %v12146
    %v12209 = vpop.permute.xlu0 %12208
    %12212 = vset.pattern.permute.xlu0 0
    %12213 = vperm.xlu0 %12212, %v12147
    %v12214 = vpop.permute.xlu0 %12213
    %12217 = vset.pattern.permute.xlu0 0
    %12218 = vperm.xlu0 %12217, %v12148
    %v12219 = vpop.permute.xlu0 %12218
    %12222 = vset.pattern.permute.xlu0 0
    %12223 = vperm.xlu0 %12222, %v12149
    %v12224 = vpop.permute.xlu0 %12223
    %12227 = vset.pattern.permute.xlu0 0
    %12228 = vperm.xlu0 %12227, %v12150
    %v12229 = vpop.permute.xlu0 %12228
    %v12231 = vsub.f32 %v12119, %v12154
    %v12232 = vsub.f32 %v12120, %v12159
    %v12233 = vsub.f32 %v12121, %v12164
    %v12234 = vsub.f32 %v12122, %v12169
    %v12235 = vsub.f32 %v12123, %v12174
    %v12236 = vsub.f32 %v12124, %v12179
    %v12237 = vsub.f32 %v12125, %v12184
    %v12238 = vsub.f32 %v12126, %v12189
    %v12239 = vsub.f32 %v12127, %v12194
    %v12240 = vsub.f32 %v12128, %v12199
    %v12241 = vsub.f32 %v12129, %v12204
    %v12242 = vsub.f32 %v12130, %v12209
    %v12243 = vsub.f32 %v12131, %v12214
    %v12244 = vsub.f32 %v12132, %v12219
    %v12245 = vsub.f32 %v12133, %v12224
    %v12246 = vsub.f32 %v12134, %v12229
    %v12247 = vmax.f32 %v12231, %v12235
    %v12248 = vmax.f32 %v12232, %v12236
    %v12249 = vmax.f32 %v12233, %v12237
    %v12250 = vmax.f32 %v12234, %v12238
    %v12251 = vmax.f32 %v12247, %v12239
    %v12252 = vmax.f32 %v12248, %v12240
    %v12253 = vmax.f32 %v12249, %v12241
    %v12254 = vmax.f32 %v12250, %v12242
    %v12255 = vmax.f32 %v12251, %v12243
    %v12256 = vmax.f32 %v12252, %v12244
    %v12257 = vmax.f32 %v12253, %v12245
    %v12258 = vmax.f32 %v12254, %v12246
    %v12259 = vmax.f32 %v12255, %v12256
    %v12260 = vmax.f32 %v12257, %v12258
    %v12261 = vmax.f32 %v12259, %v12260
    %v12262 = vrot.slane %v12261, 4
    %v12263 = vmax.f32 %v12261, %v12262
    %v12264 = vrot.slane %v12263, 2
    %v12265 = vmax.f32 %v12263, %v12264
    %v12266 = vrot.slane %v12265, 1
    %v12267 = vmax.f32 %v12265, %v12266
    %vm12268 = vcmp.ge.f32.partialorder %v12231, %v12267
    %vm12269 = vcmp.ge.f32.partialorder %v12232, %v12267
    %vm12270 = vcmp.ge.f32.partialorder %v12233, %v12267
    %vm12271 = vcmp.ge.f32.partialorder %v12234, %v12267
    %vm12272 = vcmp.ge.f32.partialorder %v12235, %v12267
    %vm12273 = vcmp.ge.f32.partialorder %v12236, %v12267
    %vm12274 = vcmp.ge.f32.partialorder %v12237, %v12267
    %vm12275 = vcmp.ge.f32.partialorder %v12238, %v12267
    %vm12276 = vcmp.ge.f32.partialorder %v12239, %v12267
    %vm12277 = vcmp.ge.f32.partialorder %v12240, %v12267
    %vm12278 = vcmp.ge.f32.partialorder %v12241, %v12267
    %vm12279 = vcmp.ge.f32.partialorder %v12242, %v12267
    %vm12280 = vcmp.ge.f32.partialorder %v12243, %v12267
    %vm12281 = vcmp.ge.f32.partialorder %v12244, %v12267
    %vm12282 = vcmp.ge.f32.partialorder %v12245, %v12267
    %vm12283 = vcmp.ge.f32.partialorder %v12246, %v12267
    %v12284 = vsel %vm12268, %v5802, 128
    %v12285 = vsel %vm12269, %v5803, 128
    %v12286 = vsel %vm12270, %v5804, 128
    %v12287 = vsel %vm12271, %v5805, 128
    %v12288 = vsel %vm12272, %v5806, 128
    %v12289 = vsel %vm12273, %v5807, 128
    %v12290 = vsel %vm12274, %v5808, 128
    %v12291 = vsel %vm12275, %v5809, 128
    %v12292 = vsel %vm12276, %v5810, 128
    %v12293 = vsel %vm12277, %v5811, 128
    %v12294 = vsel %vm12278, %v5812, 128
    %v12295 = vsel %vm12279, %v5813, 128
    %v12296 = vsel %vm12280, %v5814, 128
    %v12297 = vsel %vm12281, %v5815, 128
    %v12298 = vsel %vm12282, %v5816, 128
    %v12299 = vsel %vm12283, %v5817, 128
    %vm12300 = vcmp.lt.s32.totalorder %v12284, %v12288
    %v12301 = vsel %vm12300, %v12284, %v12288
    %vm12302 = vcmp.lt.s32.totalorder %v12285, %v12289
    %v12303 = vsel %vm12302, %v12285, %v12289
    %vm12304 = vcmp.lt.s32.totalorder %v12286, %v12290
    %v12305 = vsel %vm12304, %v12286, %v12290
    %vm12306 = vcmp.lt.s32.totalorder %v12287, %v12291
    %v12307 = vsel %vm12306, %v12287, %v12291
    %vm12308 = vcmp.lt.s32.totalorder %v12301, %v12292
    %v12309 = vsel %vm12308, %v12301, %v12292
    %vm12310 = vcmp.lt.s32.totalorder %v12303, %v12293
    %v12311 = vsel %vm12310, %v12303, %v12293
    %vm12312 = vcmp.lt.s32.totalorder %v12305, %v12294
    %v12313 = vsel %vm12312, %v12305, %v12294
    %vm12314 = vcmp.lt.s32.totalorder %v12307, %v12295
    %v12315 = vsel %vm12314, %v12307, %v12295
    %vm12316 = vcmp.lt.s32.totalorder %v12309, %v12296
    %v12317 = vsel %vm12316, %v12309, %v12296
    %vm12318 = vcmp.lt.s32.totalorder %v12311, %v12297
    %v12319 = vsel %vm12318, %v12311, %v12297
    %vm12320 = vcmp.lt.s32.totalorder %v12313, %v12298
    %v12321 = vsel %vm12320, %v12313, %v12298
    %vm12322 = vcmp.lt.s32.totalorder %v12315, %v12299
    %v12323 = vsel %vm12322, %v12315, %v12299
    %vm12324 = vcmp.lt.s32.totalorder %v12317, %v12319
    %v12325 = vsel %vm12324, %v12317, %v12319
    %vm12326 = vcmp.lt.s32.totalorder %v12321, %v12323
    %v12327 = vsel %vm12326, %v12321, %v12323
    %vm12328 = vcmp.lt.s32.totalorder %v12325, %v12327
    %v12329 = vsel %vm12328, %v12325, %v12327
    %v12330 = vrot.slane %v12329, 4
    %vm12331 = vcmp.lt.s32.totalorder %v12329, %v12330
    %v12332 = vsel %vm12331, %v12329, %v12330
    %v12333 = vrot.slane %v12332, 2
    %vm12334 = vcmp.lt.s32.totalorder %v12332, %v12333
    %v12335 = vsel %vm12334, %v12332, %v12333
    %v12336 = vrot.slane %v12335, 1
    %vm12337 = vcmp.lt.s32.totalorder %v12335, %v12336
    %v12338 = vsel %vm12337, %v12335, %v12336
    %12339 = vst [vmem:[#allocation5 + $0xf] sm:$0x1] %v12338
    %12340 = vst [vmem:[#allocation6] sm:$0xff] %v5188
    %12341 = vst [vmem:[#allocation6 + $0x8] sm:$0xff] %v5191
    %12342 = vst [vmem:[#allocation6 + $0x10] sm:$0xff] %v5196
    %12343 = vst [vmem:[#allocation6 + $0x18] sm:$0xff] %v5199
    %12344 = vst [vmem:[#allocation6 + $0x20] sm:$0xff] %v5204
    %12345 = vst [vmem:[#allocation6 + $0x28] sm:$0xff] %v5207
    %12346 = vst [vmem:[#allocation6 + $0x30] sm:$0xff] %v5212
    %12347 = vst [vmem:[#allocation6 + $0x38] sm:$0xff] %v5215
    %12348 = vst [vmem:[#allocation6 + $0x40] sm:$0xff] %v5220
    %12349 = vst [vmem:[#allocation6 + $0x48] sm:$0xff] %v5223
    %12350 = vst [vmem:[#allocation6 + $0x50] sm:$0xff] %v5228
    %12351 = vst [vmem:[#allocation6 + $0x58] sm:$0xff] %v5231
    %12352 = vst [vmem:[#allocation6 + $0x60] sm:$0xff] %v5236
    %12353 = vst [vmem:[#allocation6 + $0x68] sm:$0xff] %v5239
    %12354 = vst [vmem:[#allocation6 + $0x70] sm:$0xff] %v5244
    %12355 = vst [vmem:[#allocation6 + $0x78] sm:$0xff] %v5247
    %12356 = vst [vmem:[#allocation6 + $0x80] sm:$0xff] %v5252
    %12357 = vst [vmem:[#allocation6 + $0x88] sm:$0xff] %v5255
    %12358 = vst [vmem:[#allocation6 + $0x90] sm:$0xff] %v5260
    %12359 = vst [vmem:[#allocation6 + $0x98] sm:$0xff] %v5263
    %12360 = vst [vmem:[#allocation6 + $0xa0] sm:$0xff] %v5268
    %12361 = vst [vmem:[#allocation6 + $0xa8] sm:$0xff] %v5271
    %12362 = vst [vmem:[#allocation6 + $0xb0] sm:$0xff] %v5276
    %12363 = vst [vmem:[#allocation6 + $0xb8] sm:$0xff] %v5279
    %12364 = vst [vmem:[#allocation6 + $0xc0] sm:$0xff] %v5284
    %12365 = vst [vmem:[#allocation6 + $0xc8] sm:$0xff] %v5287
    %12366 = vst [vmem:[#allocation6 + $0xd0] sm:$0xff] %v5292
    %12367 = vst [vmem:[#allocation6 + $0xd8] sm:$0xff] %v5295
    %12368 = vst [vmem:[#allocation6 + $0xe0] sm:$0xff] %v5300
    %12369 = vst [vmem:[#allocation6 + $0xe8] sm:$0xff] %v5303
    %12370 = vst [vmem:[#allocation6 + $0xf0] sm:$0xff] %v5308
    %12371 = vst [vmem:[#allocation6 + $0xf8] sm:$0xff] %v5311
    %12372 = vst [vmem:[#allocation6 + $0x100] sm:$0xff] %v5316
    %12373 = vst [vmem:[#allocation6 + $0x108] sm:$0xff] %v5319
    %12374 = vst [vmem:[#allocation6 + $0x110] sm:$0xff] %v5324
    %12375 = vst [vmem:[#allocation6 + $0x118] sm:$0xff] %v5327
    %12376 = vst [vmem:[#allocation6 + $0x120] sm:$0xff] %v5332
    %12377 = vst [vmem:[#allocation6 + $0x128] sm:$0xff] %v5335
    %12378 = vst [vmem:[#allocation6 + $0x130] sm:$0xff] %v5340
    %12379 = vst [vmem:[#allocation6 + $0x138] sm:$0xff] %v5343
    %12380 = vst [vmem:[#allocation6 + $0x140] sm:$0xff] %v5348
    %12381 = vst [vmem:[#allocation6 + $0x148] sm:$0xff] %v5351
    %12382 = vst [vmem:[#allocation6 + $0x150] sm:$0xff] %v5356
    %12383 = vst [vmem:[#allocation6 + $0x158] sm:$0xff] %v5359
    %12384 = vst [vmem:[#allocation6 + $0x160] sm:$0xff] %v5364
    %12385 = vst [vmem:[#allocation6 + $0x168] sm:$0xff] %v5367
    %12386 = vst [vmem:[#allocation6 + $0x170] sm:$0xff] %v5372
    %12387 = vst [vmem:[#allocation6 + $0x178] sm:$0xff] %v5375
    %12388 = vst [vmem:[#allocation6 + $0x180] sm:$0xff] %v5380
    %12389 = vst [vmem:[#allocation6 + $0x188] sm:$0xff] %v5383
    %12390 = vst [vmem:[#allocation6 + $0x190] sm:$0xff] %v5388
    %12391 = vst [vmem:[#allocation6 + $0x198] sm:$0xff] %v5391
    %12392 = vst [vmem:[#allocation6 + $0x1a0] sm:$0xff] %v5396
    %12393 = vst [vmem:[#allocation6 + $0x1a8] sm:$0xff] %v5399
    %12394 = vst [vmem:[#allocation6 + $0x1b0] sm:$0xff] %v5404
    %12395 = vst [vmem:[#allocation6 + $0x1b8] sm:$0xff] %v5407
    %12396 = vst [vmem:[#allocation6 + $0x1c0] sm:$0xff] %v5412
    %12397 = vst [vmem:[#allocation6 + $0x1c8] sm:$0xff] %v5415
    %12398 = vst [vmem:[#allocation6 + $0x1d0] sm:$0xff] %v5420
    %12399 = vst [vmem:[#allocation6 + $0x1d8] sm:$0xff] %v5423
    %12400 = vst [vmem:[#allocation6 + $0x1e0] sm:$0xff] %v5428
    %12401 = vst [vmem:[#allocation6 + $0x1e8] sm:$0xff] %v5431
    %12402 = vst [vmem:[#allocation6 + $0x1f0] sm:$0xff] %v5436
    %12403 = vst [vmem:[#allocation6 + $0x1f8] sm:$0xff] %v5439
    // Predicated region
    $region34: #{tpu_custom_call.1} parent=1 // pred_check
      _
    $region35: #{tpu_custom_call.1} parent=1 // pred_check_branch
      %12405 = sbr.rel (0) target = $region37
    $region36: #{tpu_custom_call.1} parent=1 // pred_region
      %s12407 = ssub.s32 256, 256
      %12408 = vsyncadd [#allocation4], %s12407
      %s12409 = sshll.u32 [#allocation5], 4
      %s12410 = int_to_ptr.vmem [resolvable:$true] %s12409
      %12415 = dma.vmem_to_hbm [thread:$0]  %s12410, 256, %s7, [#allocation4], 128, 128, 8
    $region37: #{tpu_custom_call.1} parent=1 // pred_fallthru
      _
    // Predicated region
    $region38: #{tpu_custom_call.1} parent=1 // pred_check
      _
    $region39: #{tpu_custom_call.1} parent=1 // pred_check_branch
      %12417 = sbr.rel (0) target = $region41
    $region40: #{tpu_custom_call.1} parent=1 // pred_region
      %s12419 = ssub.s32 8192, 8192
      %12420 = vsyncadd [#allocation7], %s12419
      %s12421 = sshll.u32 [#allocation6], 4
      %s12422 = int_to_ptr.vmem [resolvable:$true] %s12421
      %12427 = dma.vmem_to_hbm [thread:$0]  %s12422, 8192, %s8, [#allocation7], 128, 128, 8
    $region41: #{tpu_custom_call.1} parent=1 // pred_fallthru
      _
    // Predicated region
    $region42: #{tpu_custom_call.1} parent=1 // pred_check
      _
    $region43: #{tpu_custom_call.1} parent=1 // pred_check_branch
      %12429 = sbr.rel (0) target = $region45
    $region44: #{tpu_custom_call.1} parent=1 // pred_region
      %12430 = dma.done [#allocation4], 256
    $region45: #{tpu_custom_call.1} parent=1 // pred_fallthru
      _
    // Predicated region
    $region46: #{tpu_custom_call.1} parent=1 // pred_check
      _
    $region47: #{tpu_custom_call.1} parent=1 // pred_check_branch
      %12432 = sbr.rel (0) target = $region49
    $region48: #{tpu_custom_call.1} parent=1 // pred_region
      %12433 = dma.done [#allocation7], 8192
    $region49: #{tpu_custom_call.1} parent=1 // pred_fallthru
      _
    %12434 = vsyncpa [#allocation3], 1
    %12435 = vsyncpa [#allocation4], 1
    %12436 = vsyncpa [#allocation7], 1

</llo_original>
